<compile_context>
chip_gen: v7x
topology: tpu7x:2x2x1
jax: 0.10.0
libtpu: 0.0.40
codegen_flags: <defaults>
</compile_context>

<pallas_src>
import jax
import jax.numpy as jnp
import numpy as np
from jax.experimental import pallas as pl
from jax.experimental.pallas import tpu as pltpu

BN_EPS = 1e-5


def _vmem_limit_bytes():
    """~64 MiB on 128 MiB parts (v5e/v6e), ~32 MiB on v7x (64 MiB physical)."""
    try:
        cap = int(pltpu.get_tpu_info().vmem_capacity_bytes)
    except Exception:
        cap = 128 * 1024 * 1024
    return int(min(96 * 1024 * 1024, max(32 * 1024 * 1024, cap // 2)))


_VMEM_LIMIT = _vmem_limit_bytes()


def _conv_core(xin, w_ref, y_ref, stats_ref, pad_scr):
    """3x3 conv (stride 1, pad 1) on one image via 3 kh-chunked im2col matmuls
    on the MXU (bf16 operands, f32 accumulation), plus per-image centered BN
    partial statistics.

    xin      : (H, W, C)   f32 activation (already pre-activated for conv2)
    w_ref    : (3, 3*C, Cout)  bf16 weights, rows ordered (kw, ci) per kh
    y_ref    : (1, H, W, Cout) bf16 un-normalized conv output
    stats_ref: (1, 2, Cout)    f32 per-image [sum, centered_sum_sq] over H*W
    pad_scr  : (H+2, W+2, C)   bf16 VMEM scratch (halo built in-kernel)
    """
    H, W, C = xin.shape
    Cout = w_ref.shape[-1]
    Hp, Wp = H + 2, W + 2
    M = H * W

    # Build the padded tile (bf16 -> halves scratch traffic and gives bf16
    # patches for free).  Halo re-zeroed every step: program_id==0 gating is
    # unsafe under megacore "parallel" sharding (per-core scratch, non-zero
    # starting program_id on core 1).
    pad_scr[0:1, :, :] = jnp.zeros((1, Wp, C), pad_scr.dtype)
    pad_scr[Hp - 1:Hp, :, :] = jnp.zeros((1, Wp, C), pad_scr.dtype)
    pad_scr[1:Hp - 1, 0:1, :] = jnp.zeros((H, 1, C), pad_scr.dtype)
    pad_scr[1:Hp - 1, Wp - 1:Wp, :] = jnp.zeros((H, 1, C), pad_scr.dtype)
    pad_scr[1:Hp - 1, 1:Wp - 1, :] = xin.astype(pad_scr.dtype)
    # TODO(synk): DMA the input block straight into the interior / use
    # pltpu.roll for the kw taps to drop the sublane-offset relayouts.

    # kh-chunked fat-K im2col: three (M, 3C) x (3C, Cout) bf16 MXU matmuls
    # accumulated into a single f32 accumulator (3x smaller patches buffer
    # than a (M, 9C) concat, no long accumulator chain).
    acc = jnp.zeros((M, Cout), jnp.float32)
    for kh in range(3):
        taps = [pad_scr[kh:kh + H, kw:kw + W, :] for kw in range(3)]
        patches = jnp.concatenate(taps, axis=-1).reshape(M, 3 * C)
        acc = acc + jnp.dot(patches, w_ref[kh],
                            preferred_element_type=jnp.float32)

    # Per-image BN partials, centered by the per-image mean (combined across
    # the batch with a numerically stable parallel-variance formula in the
    # wrapper).
    s = jnp.sum(acc, axis=0, keepdims=True)            # (1, Cout)
    mu = s * (1.0 / M)
    d = acc - mu
    cssq = jnp.sum(d * d, axis=0, keepdims=True)       # (1, Cout)
    stats_ref[0] = jnp.concatenate([s, cssq], axis=0)

    y_ref[0] = acc.reshape(H, W, Cout).astype(y_ref.dtype)


def _conv1_kernel(x_ref, w_ref, y_ref, stats_ref, pad_scr):
    _conv_core(x_ref[0].astype(jnp.float32), w_ref, y_ref, stats_ref, pad_scr)


def _conv2_kernel(y1_ref, scale_ref, shift_ref, w_ref, y_ref, stats_ref, pad_scr):
    C = y1_ref.shape[-1]
    # Fused BN (single FMA, gamma/beta folded into scale/shift) + ReLU.
    a = jnp.maximum(
        y1_ref[0].astype(jnp.float32) * scale_ref[...].reshape(1, 1, C)
        + shift_ref[...].reshape(1, 1, C),
        0.0,
    )
    _conv_core(a, w_ref, y_ref, stats_ref, pad_scr)


def _finalize_kernel(y2_ref, x_ref, scale_ref, shift_ref, out_ref):
    # Lane-dense elementwise pass on (rows, W*C) blocks.
    out = jnp.maximum(
        y2_ref[...].astype(jnp.float32) * scale_ref[...] + shift_ref[...]
        + x_ref[...],
        0.0,
    )
    out_ref[...] = out.astype(out_ref.dtype)


def _fold_bn(stats, gamma, beta, hw):
    """Combine per-image [sum, centered_sum_sq] partials into folded BN
    scale/shift using the parallel-variance formula (biased variance)."""
    n_img = stats.shape[0]
    count = float(n_img * hw)
    sums = stats[:, 0, :]                         # (N, C)
    cssq = stats[:, 1, :]                         # (N, C)
    means_i = sums / float(hw)
    mean = jnp.sum(sums, axis=0) / count
    var = (jnp.sum(cssq, axis=0)
           + float(hw) * jnp.sum((means_i - mean) ** 2, axis=0)) / count
    scale = gamma * jax.lax.rsqrt(var + BN_EPS)
    shift = beta - mean * scale
    return scale, shift


def _pick_row_block(rows, row_bytes, target_bytes=2 << 20):
    """Largest multiple-of-8 divisor of `rows` with block <= ~target_bytes;
    falls back to the full extent (exempt from the 8-divisibility rule)."""
    cap = max(8, target_bytes // max(row_bytes, 1))
    best = 0
    for d in range(8, min(rows, cap) + 1, 8):
        if rows % d == 0:
            best = d
    return best if best else rows


def block_forward(x_nchw, w1_oihw, w2_oihw, gamma2, beta2):
    """Pallas implementation of Block.forward (stride=1, i_downsample=None)."""
    N, Cin, H, W = x_nchw.shape
    Cout = w1_oihw.shape[0]
    assert Cin == Cout, "residual add without i_downsample needs Cin == Cout"

    xf32 = x_nchw.astype(jnp.float32)
    x_nhwc = jnp.transpose(xf32, (0, 2, 3, 1))  # NCHW -> NHWC

    # PyTorch OIHW -> kh-chunked im2col weight matrices, cast once to bf16
    # (MXU is bf16-native on v5e/v6e/v7x; accumulation stays f32 in-kernel).
    w1mat = jnp.transpose(w1_oihw, (2, 3, 1, 0)).reshape(3, 3 * Cin, Cout).astype(jnp.bfloat16)
    w2mat = jnp.transpose(w2_oihw, (2, 3, 1, 0)).reshape(3, 3 * Cout, Cout).astype(jnp.bfloat16)
    gamma = gamma2.astype(jnp.float32)
    beta = beta2.astype(jnp.float32)
    hw = H * W

    cparams_conv = pltpu.CompilerParams(
        dimension_semantics=("parallel",), vmem_limit_bytes=_VMEM_LIMIT)

    # ---- pass 1: conv1 + per-image partial BN stats -------------------------
    y1, stats1 = pl.pallas_call(
        _conv1_kernel,
        out_shape=(jax.ShapeDtypeStruct((N, H, W, Cout), jnp.bfloat16),
                   jax.ShapeDtypeStruct((N, 2, Cout), jnp.float32)),
        grid=(N,),
        in_specs=[
            pl.BlockSpec((1, H, W, Cin), lambda n: (n, 0, 0, 0)),
            pl.BlockSpec((3, 3 * Cin, Cout), lambda n: (0, 0, 0)),
        ],
        out_specs=(pl.BlockSpec((1, H, W, Cout), lambda n: (n, 0, 0, 0)),
                   pl.BlockSpec((1, 2, Cout), lambda n: (n, 0, 0))),
        scratch_shapes=[pltpu.VMEM((H + 2, W + 2, Cin), jnp.bfloat16)],
        compiler_params=cparams_conv,
    )(x_nhwc, w1mat)

    scale1, shift1 = _fold_bn(stats1, gamma, beta, hw)  # tiny JAX glue

    # ---- pass 2: fused BN+ReLU -> conv2 + per-image partial BN stats --------
    y2, stats2 = pl.pallas_call(
        _conv2_kernel,
        out_shape=(jax.ShapeDtypeStruct((N, H, W, Cout), jnp.bfloat16),
                   jax.ShapeDtypeStruct((N, 2, Cout), jnp.float32)),
        grid=(N,),
        in_specs=[
            pl.BlockSpec((1, H, W, Cout), lambda n: (n, 0, 0, 0)),
            pl.BlockSpec((1, Cout), lambda n: (0, 0)),
            pl.BlockSpec((1, Cout), lambda n: (0, 0)),
            pl.BlockSpec((3, 3 * Cout, Cout), lambda n: (0, 0, 0)),
        ],
        out_specs=(pl.BlockSpec((1, H, W, Cout), lambda n: (n, 0, 0, 0)),
                   pl.BlockSpec((1, 2, Cout), lambda n: (n, 0, 0))),
        scratch_shapes=[pltpu.VMEM((H + 2, W + 2, Cout), jnp.bfloat16)],
        compiler_params=cparams_conv,
    )(y1, scale1.reshape(1, Cout), shift1.reshape(1, Cout), w2mat)

    scale2, shift2 = _fold_bn(stats2, gamma, beta, hw)

    # ---- pass 3: lane-dense BN + residual add + ReLU -------------------------
    WC = W * Cout
    rows = N * H
    BR = _pick_row_block(rows, WC * 4)         # ~2 MiB row blocks
    y2f = y2.reshape(rows, WC)                 # free contiguous reshapes
    xf = x_nhwc.reshape(rows, WC)
    scale2t = jnp.tile(scale2, W).reshape(1, WC)   # per-lane BN pattern
    shift2t = jnp.tile(shift2, W).reshape(1, WC)

    outf = pl.pallas_call(
        _finalize_kernel,
        out_shape=jax.ShapeDtypeStruct((rows, WC), jnp.float32),
        grid=(rows // BR,),
        in_specs=[
            pl.BlockSpec((BR, WC), lambda r: (r, 0)),
            pl.BlockSpec((BR, WC), lambda r: (r, 0)),
            pl.BlockSpec((1, WC), lambda r: (0, 0)),
            pl.BlockSpec((1, WC), lambda r: (0, 0)),
        ],
        out_specs=pl.BlockSpec((BR, WC), lambda r: (r, 0)),
        compiler_params=pltpu.CompilerParams(
            dimension_semantics=("parallel",), vmem_limit_bytes=_VMEM_LIMIT),
    )(y2f, xf, scale2t, shift2t)

    out_nhwc = outf.reshape(N, H, W, Cout)
    return jnp.transpose(out_nhwc, (0, 3, 1, 2))  # back to NCHW


def block_reference(x, w1, w2, gamma, beta):
    """Pure-JAX f32 reference matching the PyTorch module (training-mode BN)."""
    def conv(a, w):
        return jax.lax.conv_general_dilated(
            a, w, window_strides=(1, 1), padding=((1, 1), (1, 1)),
            dimension_numbers=("NCHW", "OIHW", "NCHW"))

    def bn2(a):
        mean = jnp.mean(a, axis=(0, 2, 3), keepdims=True)
        var = jnp.mean((a - mean) ** 2, axis=(0, 2, 3), keepdims=True)
        g = gamma.reshape(1, -1, 1, 1)
        b = beta.reshape(1, -1, 1, 1)
        return (a - mean) * jax.lax.rsqrt(var + BN_EPS) * g + b

    identity = x
    y = jax.nn.relu(bn2(conv(x, w1)))
    y = bn2(conv(y, w2))
    return jax.nn.relu(y + identity)


if __name__ == "__main__":
    key = jax.random.PRNGKey(0)
    k1, k2, k3, k4, k5 = jax.random.split(key, 5)

    N, C, H, W = 2, 4, 16, 16  # in_channels == out_channels == 4, stride = 1
    x = jax.random.normal(k1, (N, C, H, W), jnp.float32)
    conv1_w = 0.1 * jax.random.normal(k2, (C, C, 3, 3), jnp.float32)  # OIHW
    conv2_w = 0.1 * jax.random.normal(k3, (C, C, 3, 3), jnp.float32)  # OIHW
    bn2_gamma = 1.0 + 0.1 * jax.random.normal(k4, (C,), jnp.float32)
    bn2_beta = 0.1 * jax.random.normal(k5, (C,), jnp.float32)

    fwd = jax.jit(block_forward)
    out = fwd(x, conv1_w, conv2_w, bn2_gamma, bn2_beta)
    jax.block_until_ready(out)

    ref = block_reference(x, conv1_w, conv2_w, bn2_gamma, bn2_beta)
    # Tolerance sized for bf16 MXU operands / bf16 intermediates vs f32 ref
    # (BN normalization amplifies the ~0.2% bf16 rounding); structural errors
    # would be O(0.1-1) and still fail this check.
    np.testing.assert_allclose(np.asarray(out), np.asarray(ref), rtol=4e-2, atol=4e-2)

    print("KERNEL_OK")
</pallas_src>

<mosaic_0001>
module attributes {stable_mosaic.version = 11 : i64} {
  func.func @_conv1_kernel(%arg0: i32, %arg1: memref<1x16x16x4xf32, #tpu.memory_space<vmem>>, %arg2: memref<3x12x4xbf16, #tpu.memory_space<vmem>>, %arg3: memref<1x16x16x4xbf16, #tpu.memory_space<vmem>>, %arg4: memref<1x2x4xf32, #tpu.memory_space<vmem>>, %arg5: memref<18x18x4xbf16, #tpu.memory_space<vmem>>) attributes {dimension_semantics = [#tpu.dimension_semantics<parallel>], iteration_bounds = array<i64: 2>, scalar_prefetch = 0 : i64, scratch_operands = 1 : i64, tpu.core_type = #tpu.core_type<tc>, window_params = [{transform_indices = @transform_0, window_bounds = array<i64: 1, 16, 16, 4>}, {pipeline_mode = #tpu.pipeline_mode<synchronous>, transform_indices = @transform_1, window_bounds = array<i64: 3, 12, 4>}, {transform_indices = @transform_2, window_bounds = array<i64: 1, 16, 16, 4>}, {transform_indices = @transform_3, window_bounds = array<i64: 1, 2, 4>}]} {
    %c0 = arith.constant 0 : index
    %c0_0 = arith.constant 0 : index
    %c0_1 = arith.constant 0 : index
    %c0_2 = arith.constant 0 : index
    %0 = vector.load %arg1[%c0, %c0_0, %c0_1, %c0_2] : memref<1x16x16x4xf32, #tpu.memory_space<vmem>>, vector<1x16x16x4xf32>
    %1 = vector.shape_cast %0 : vector<1x16x16x4xf32> to vector<16x16x4xf32>
    %cst = arith.constant 0.000000e+00 : bf16
    %2 = vector.broadcast %cst : bf16 to vector<1x18x4xbf16>
    %c0_3 = arith.constant 0 : index
    %c0_4 = arith.constant 0 : index
    %c0_5 = arith.constant 0 : index
    %3 = vector.load %arg5[%c0_3, %c0_4, %c0_5] : memref<18x18x4xbf16, #tpu.memory_space<vmem>>, vector<1x18x4xbf16>
    tpu.vector_store %arg5[%c0_3, %c0_4, %c0_5], %2 {strides = array<i32>} : memref<18x18x4xbf16, #tpu.memory_space<vmem>>, vector<1x18x4xbf16>,
    %cst_6 = arith.constant 0.000000e+00 : bf16
    %4 = vector.broadcast %cst_6 : bf16 to vector<1x18x4xbf16>
    %c17 = arith.constant 17 : index
    %c0_7 = arith.constant 0 : index
    %c0_8 = arith.constant 0 : index
    %5 = vector.load %arg5[%c17, %c0_7, %c0_8] : memref<18x18x4xbf16, #tpu.memory_space<vmem>>, vector<1x18x4xbf16>
    tpu.vector_store %arg5[%c17, %c0_7, %c0_8], %4 {strides = array<i32>} : memref<18x18x4xbf16, #tpu.memory_space<vmem>>, vector<1x18x4xbf16>,
    %cst_9 = arith.constant 0.000000e+00 : bf16
    %6 = vector.broadcast %cst_9 : bf16 to vector<16x1x4xbf16>
    %c1 = arith.constant 1 : index
    %c0_10 = arith.constant 0 : index
    %c0_11 = arith.constant 0 : index
    %7 = vector.load %arg5[%c1, %c0_10, %c0_11] : memref<18x18x4xbf16, #tpu.memory_space<vmem>>, vector<16x1x4xbf16>
    tpu.vector_store %arg5[%c1, %c0_10, %c0_11], %6 {strides = array<i32>} : memref<18x18x4xbf16, #tpu.memory_space<vmem>>, vector<16x1x4xbf16>,
    %cst_12 = arith.constant 0.000000e+00 : bf16
    %8 = vector.broadcast %cst_12 : bf16 to vector<16x1x4xbf16>
    %c1_13 = arith.constant 1 : index
    %c17_14 = arith.constant 17 : index
    %c0_15 = arith.constant 0 : index
    %9 = vector.load %arg5[%c1_13, %c17_14, %c0_15] : memref<18x18x4xbf16, #tpu.memory_space<vmem>>, vector<16x1x4xbf16>
    tpu.vector_store %arg5[%c1_13, %c17_14, %c0_15], %8 {strides = array<i32>} : memref<18x18x4xbf16, #tpu.memory_space<vmem>>, vector<16x1x4xbf16>,
    %10 = arith.truncf %1 : vector<16x16x4xf32> to vector<16x16x4xbf16>
    %c1_16 = arith.constant 1 : index
    %c1_17 = arith.constant 1 : index
    %c0_18 = arith.constant 0 : index
    %11 = vector.load %arg5[%c1_16, %c1_17, %c0_18] : memref<18x18x4xbf16, #tpu.memory_space<vmem>>, vector<16x16x4xbf16>
    tpu.vector_store %arg5[%c1_16, %c1_17, %c0_18], %10 {strides = array<i32>} : memref<18x18x4xbf16, #tpu.memory_space<vmem>>, vector<16x16x4xbf16>,
    %cst_19 = arith.constant 0.000000e+00 : f32
    %12 = vector.broadcast %cst_19 : f32 to vector<256x4xf32>
    %c0_20 = arith.constant 0 : index
    %c0_21 = arith.constant 0 : index
    %c0_22 = arith.constant 0 : index
    %13 = vector.load %arg5[%c0_20, %c0_21, %c0_22] : memref<18x18x4xbf16, #tpu.memory_space<vmem>>, vector<16x16x4xbf16>
    %c0_23 = arith.constant 0 : index
    %c1_24 = arith.constant 1 : index
    %c0_25 = arith.constant 0 : index
    %14 = vector.load %arg5[%c0_23, %c1_24, %c0_25] : memref<18x18x4xbf16, #tpu.memory_space<vmem>>, vector<16x16x4xbf16>
    %c0_26 = arith.constant 0 : index
    %c2 = arith.constant 2 : index
    %c0_27 = arith.constant 0 : index
    %15 = vector.load %arg5[%c0_26, %c2, %c0_27] : memref<18x18x4xbf16, #tpu.memory_space<vmem>>, vector<16x16x4xbf16>
    %16 = tpu.concatenate %13, %14, %15 in 2 : vector<16x16x4xbf16>, vector<16x16x4xbf16>, vector<16x16x4xbf16> -> vector<16x16x12xbf16>
    %17 = vector.shape_cast %16 : vector<16x16x12xbf16> to vector<256x12xbf16>
    %c0_28 = arith.constant 0 : index
    %c0_29 = arith.constant 0 : index
    %c0_30 = arith.constant 0 : index
    %18 = vector.load %arg2[%c0_28, %c0_29, %c0_30] : memref<3x12x4xbf16, #tpu.memory_space<vmem>>, vector<1x12x4xbf16>
    %19 = vector.shape_cast %18 : vector<1x12x4xbf16> to vector<12x4xbf16>
    %cst_31 = arith.constant dense<0.000000e+00> : vector<256x4xf32>
    %20 = tpu.matmul %17, %19, %cst_31 {dimension_numbers = #tpu.dot_dimension_numbers<[1], [0], [0], [1], [0, 0, 1, 1], [], []>} : vector<256x12xbf16>, vector<12x4xbf16>, vector<256x4xf32> -> vector<256x4xf32>
    %21 = arith.addf %12, %20 : vector<256x4xf32>
    %c1_32 = arith.constant 1 : index
    %c0_33 = arith.constant 0 : index
    %c0_34 = arith.constant 0 : index
    %22 = vector.load %arg5[%c1_32, %c0_33, %c0_34] : memref<18x18x4xbf16, #tpu.memory_space<vmem>>, vector<16x16x4xbf16>
    %c1_35 = arith.constant 1 : index
    %c1_36 = arith.constant 1 : index
    %c0_37 = arith.constant 0 : index
    %23 = vector.load %arg5[%c1_35, %c1_36, %c0_37] : memref<18x18x4xbf16, #tpu.memory_space<vmem>>, vector<16x16x4xbf16>
    %c1_38 = arith.constant 1 : index
    %c2_39 = arith.constant 2 : index
    %c0_40 = arith.constant 0 : index
    %24 = vector.load %arg5[%c1_38, %c2_39, %c0_40] : memref<18x18x4xbf16, #tpu.memory_space<vmem>>, vector<16x16x4xbf16>
    %25 = tpu.concatenate %22, %23, %24 in 2 : vector<16x16x4xbf16>, vector<16x16x4xbf16>, vector<16x16x4xbf16> -> vector<16x16x12xbf16>
    %26 = vector.shape_cast %25 : vector<16x16x12xbf16> to vector<256x12xbf16>
    %c1_41 = arith.constant 1 : index
    %c0_42 = arith.constant 0 : index
    %c0_43 = arith.constant 0 : index
    %27 = vector.load %arg2[%c1_41, %c0_42, %c0_43] : memref<3x12x4xbf16, #tpu.memory_space<vmem>>, vector<1x12x4xbf16>
    %28 = vector.shape_cast %27 : vector<1x12x4xbf16> to vector<12x4xbf16>
    %cst_44 = arith.constant dense<0.000000e+00> : vector<256x4xf32>
    %29 = tpu.matmul %26, %28, %cst_44 {dimension_numbers = #tpu.dot_dimension_numbers<[1], [0], [0], [1], [0, 0, 1, 1], [], []>} : vector<256x12xbf16>, vector<12x4xbf16>, vector<256x4xf32> -> vector<256x4xf32>
    %30 = arith.addf %21, %29 : vector<256x4xf32>
    %c2_45 = arith.constant 2 : index
    %c0_46 = arith.constant 0 : index
    %c0_47 = arith.constant 0 : index
    %31 = vector.load %arg5[%c2_45, %c0_46, %c0_47] : memref<18x18x4xbf16, #tpu.memory_space<vmem>>, vector<16x16x4xbf16>
    %c2_48 = arith.constant 2 : index
    %c1_49 = arith.constant 1 : index
    %c0_50 = arith.constant 0 : index
    %32 = vector.load %arg5[%c2_48, %c1_49, %c0_50] : memref<18x18x4xbf16, #tpu.memory_space<vmem>>, vector<16x16x4xbf16>
    %c2_51 = arith.constant 2 : index
    %c2_52 = arith.constant 2 : index
    %c0_53 = arith.constant 0 : index
    %33 = vector.load %arg5[%c2_51, %c2_52, %c0_53] : memref<18x18x4xbf16, #tpu.memory_space<vmem>>, vector<16x16x4xbf16>
    %34 = tpu.concatenate %31, %32, %33 in 2 : vector<16x16x4xbf16>, vector<16x16x4xbf16>, vector<16x16x4xbf16> -> vector<16x16x12xbf16>
    %35 = vector.shape_cast %34 : vector<16x16x12xbf16> to vector<256x12xbf16>
    %c2_54 = arith.constant 2 : index
    %c0_55 = arith.constant 0 : index
    %c0_56 = arith.constant 0 : index
    %36 = vector.load %arg2[%c2_54, %c0_55, %c0_56] : memref<3x12x4xbf16, #tpu.memory_space<vmem>>, vector<1x12x4xbf16>
    %37 = vector.shape_cast %36 : vector<1x12x4xbf16> to vector<12x4xbf16>
    %cst_57 = arith.constant dense<0.000000e+00> : vector<256x4xf32>
    %38 = tpu.matmul %35, %37, %cst_57 {dimension_numbers = #tpu.dot_dimension_numbers<[1], [0], [0], [1], [0, 0, 1, 1], [], []>} : vector<256x12xbf16>, vector<12x4xbf16>, vector<256x4xf32> -> vector<256x4xf32>
    %39 = arith.addf %30, %38 : vector<256x4xf32>
    %cst_58 = arith.constant dense<0.000000e+00> : vector<4xf32>
    %40 = vector.multi_reduction <add>, %39, %cst_58 [0] : vector<256x4xf32> to vector<4xf32>
    %41 = vector.shape_cast %40 : vector<4xf32> to vector<1x4xf32>
    %cst_59 = arith.constant 3.906250e-03 : f32
    %42 = vector.broadcast %cst_59 : f32 to vector<1x4xf32>
    %43 = arith.mulf %41, %42 : vector<1x4xf32>
    %44 = vector.broadcast %43 : vector<1x4xf32> to vector<256x4xf32>
    %45 = arith.subf %39, %44 : vector<256x4xf32>
    %46 = arith.mulf %45, %45 : vector<256x4xf32>
    %cst_60 = arith.constant dense<0.000000e+00> : vector<4xf32>
    %47 = vector.multi_reduction <add>, %46, %cst_60 [0] : vector<256x4xf32> to vector<4xf32>
    %48 = vector.shape_cast %47 : vector<4xf32> to vector<1x4xf32>
    %49 = tpu.concatenate %41, %48 in 0 : vector<1x4xf32>, vector<1x4xf32> -> vector<2x4xf32>
    %c0_61 = arith.constant 0 : index
    %c0_62 = arith.constant 0 : index
    %c0_63 = arith.constant 0 : index
    %50 = vector.load %arg4[%c0_61, %c0_62, %c0_63] : memref<1x2x4xf32, #tpu.memory_space<vmem>>, vector<1x2x4xf32>
    %51 = vector.shape_cast %50 : vector<1x2x4xf32> to vector<2x4xf32>
    %52 = vector.shape_cast %49 : vector<2x4xf32> to vector<1x2x4xf32>
    tpu.vector_store %arg4[%c0_61, %c0_62, %c0_63], %52 {strides = array<i32>} : memref<1x2x4xf32, #tpu.memory_space<vmem>>, vector<1x2x4xf32>,
    %53 = vector.shape_cast %39 : vector<256x4xf32> to vector<16x16x4xf32>
    %54 = arith.truncf %53 : vector<16x16x4xf32> to vector<16x16x4xbf16>
    %c0_64 = arith.constant 0 : index
    %c0_65 = arith.constant 0 : index
    %c0_66 = arith.constant 0 : index
    %c0_67 = arith.constant 0 : index
    %55 = vector.load %arg3[%c0_64, %c0_65, %c0_66, %c0_67] : memref<1x16x16x4xbf16, #tpu.memory_space<vmem>>, vector<1x16x16x4xbf16>
    %56 = vector.shape_cast %55 : vector<1x16x16x4xbf16> to vector<16x16x4xbf16>
    %57 = vector.shape_cast %54 : vector<16x16x4xbf16> to vector<1x16x16x4xbf16>
    tpu.vector_store %arg3[%c0_64, %c0_65, %c0_66, %c0_67], %57 {strides = array<i32>} : memref<1x16x16x4xbf16, #tpu.memory_space<vmem>>, vector<1x16x16x4xbf16>,
    return
  }
  func.func @transform_0(%arg0: i32) -> (i32, i32, i32, i32) {
    %c0_i32 = arith.constant 0 : i32
    %c0_i32_0 = arith.constant 0 : i32
    %c0_i32_1 = arith.constant 0 : i32
    %c0_i32_2 = arith.constant 0 : i32
    return %arg0, %c0_i32, %c0_i32_0, %c0_i32_1 : i32, i32, i32, i32
  }
  func.func @transform_1(%arg0: i32) -> (i32, i32, i32) {
    %c0_i32 = arith.constant 0 : i32
    %c0_i32_0 = arith.constant 0 : i32
    %c0_i32_1 = arith.constant 0 : i32
    %c0_i32_2 = arith.constant 0 : i32
    return %c0_i32, %c0_i32_0, %c0_i32_1 : i32, i32, i32
  }
  func.func @transform_2(%arg0: i32) -> (i32, i32, i32, i32) {
    %c0_i32 = arith.constant 0 : i32
    %c0_i32_0 = arith.constant 0 : i32
    %c0_i32_1 = arith.constant 0 : i32
    %c0_i32_2 = arith.constant 0 : i32
    return %arg0, %c0_i32, %c0_i32_0, %c0_i32_1 : i32, i32, i32, i32
  }
  func.func @transform_3(%arg0: i32) -> (i32, i32, i32) {
    %c0_i32 = arith.constant 0 : i32
    %c0_i32_0 = arith.constant 0 : i32
    %c0_i32_1 = arith.constant 0 : i32
    return %arg0, %c0_i32, %c0_i32_0 : i32, i32, i32
  }
}

module attributes {stable_mosaic.version = 11 : i64} {
  func.func @_conv2_kernel(%arg0: i32, %arg1: memref<1x16x16x4xbf16, #tpu.memory_space<vmem>>, %arg2: memref<1x4xf32, #tpu.memory_space<vmem>>, %arg3: memref<1x4xf32, #tpu.memory_space<vmem>>, %arg4: memref<3x12x4xbf16, #tpu.memory_space<vmem>>, %arg5: memref<1x16x16x4xbf16, #tpu.memory_space<vmem>>, %arg6: memref<1x2x4xf32, #tpu.memory_space<vmem>>, %arg7: memref<18x18x4xbf16, #tpu.memory_space<vmem>>) attributes {dimension_semantics = [#tpu.dimension_semantics<parallel>], iteration_bounds = array<i64: 2>, scalar_prefetch = 0 : i64, scratch_operands = 1 : i64, tpu.core_type = #tpu.core_type<tc>, window_params = [{transform_indices = @transform_0, window_bounds = array<i64: 1, 16, 16, 4>}, {pipeline_mode = #tpu.pipeline_mode<synchronous>, transform_indices = @transform_1, window_bounds = array<i64: 1, 4>}, {pipeline_mode = #tpu.pipeline_mode<synchronous>, transform_indices = @transform_2, window_bounds = array<i64: 1, 4>}, {pipeline_mode = #tpu.pipeline_mode<synchronous>, transform_indices = @transform_3, window_bounds = array<i64: 3, 12, 4>}, {transform_indices = @transform_4, window_bounds = array<i64: 1, 16, 16, 4>}, {transform_indices = @transform_5, window_bounds = array<i64: 1, 2, 4>}]} {
    %c0 = arith.constant 0 : index
    %c0_0 = arith.constant 0 : index
    %c0_1 = arith.constant 0 : index
    %c0_2 = arith.constant 0 : index
    %0 = vector.load %arg1[%c0, %c0_0, %c0_1, %c0_2] : memref<1x16x16x4xbf16, #tpu.memory_space<vmem>>, vector<1x16x16x4xbf16>
    %1 = vector.shape_cast %0 : vector<1x16x16x4xbf16> to vector<16x16x4xbf16>
    %2 = arith.extf %1 : vector<16x16x4xbf16> to vector<16x16x4xf32>
    %c0_3 = arith.constant 0 : index
    %c0_4 = arith.constant 0 : index
    %3 = vector.load %arg2[%c0_3, %c0_4] : memref<1x4xf32, #tpu.memory_space<vmem>>, vector<1x4xf32>
    %4 = vector.shape_cast %3 : vector<1x4xf32> to vector<1x1x4xf32>
    %5 = vector.broadcast %4 : vector<1x1x4xf32> to vector<16x16x4xf32>
    %6 = arith.mulf %2, %5 : vector<16x16x4xf32>
    %c0_5 = arith.constant 0 : index
    %c0_6 = arith.constant 0 : index
    %7 = vector.load %arg3[%c0_5, %c0_6] : memref<1x4xf32, #tpu.memory_space<vmem>>, vector<1x4xf32>
    %8 = vector.shape_cast %7 : vector<1x4xf32> to vector<1x1x4xf32>
    %9 = vector.broadcast %8 : vector<1x1x4xf32> to vector<16x16x4xf32>
    %10 = arith.addf %6, %9 : vector<16x16x4xf32>
    %cst = arith.constant 0.000000e+00 : f32
    %11 = vector.broadcast %cst : f32 to vector<16x16x4xf32>
    %12 = arith.maximumf %10, %11 : vector<16x16x4xf32>
    %cst_7 = arith.constant 0.000000e+00 : bf16
    %13 = vector.broadcast %cst_7 : bf16 to vector<1x18x4xbf16>
    %c0_8 = arith.constant 0 : index
    %c0_9 = arith.constant 0 : index
    %c0_10 = arith.constant 0 : index
    %14 = vector.load %arg7[%c0_8, %c0_9, %c0_10] : memref<18x18x4xbf16, #tpu.memory_space<vmem>>, vector<1x18x4xbf16>
    tpu.vector_store %arg7[%c0_8, %c0_9, %c0_10], %13 {strides = array<i32>} : memref<18x18x4xbf16, #tpu.memory_space<vmem>>, vector<1x18x4xbf16>,
    %cst_11 = arith.constant 0.000000e+00 : bf16
    %15 = vector.broadcast %cst_11 : bf16 to vector<1x18x4xbf16>
    %c17 = arith.constant 17 : index
    %c0_12 = arith.constant 0 : index
    %c0_13 = arith.constant 0 : index
    %16 = vector.load %arg7[%c17, %c0_12, %c0_13] : memref<18x18x4xbf16, #tpu.memory_space<vmem>>, vector<1x18x4xbf16>
    tpu.vector_store %arg7[%c17, %c0_12, %c0_13], %15 {strides = array<i32>} : memref<18x18x4xbf16, #tpu.memory_space<vmem>>, vector<1x18x4xbf16>,
    %cst_14 = arith.constant 0.000000e+00 : bf16
    %17 = vector.broadcast %cst_14 : bf16 to vector<16x1x4xbf16>
    %c1 = arith.constant 1 : index
    %c0_15 = arith.constant 0 : index
    %c0_16 = arith.constant 0 : index
    %18 = vector.load %arg7[%c1, %c0_15, %c0_16] : memref<18x18x4xbf16, #tpu.memory_space<vmem>>, vector<16x1x4xbf16>
    tpu.vector_store %arg7[%c1, %c0_15, %c0_16], %17 {strides = array<i32>} : memref<18x18x4xbf16, #tpu.memory_space<vmem>>, vector<16x1x4xbf16>,
    %cst_17 = arith.constant 0.000000e+00 : bf16
    %19 = vector.broadcast %cst_17 : bf16 to vector<16x1x4xbf16>
    %c1_18 = arith.constant 1 : index
    %c17_19 = arith.constant 17 : index
    %c0_20 = arith.constant 0 : index
    %20 = vector.load %arg7[%c1_18, %c17_19, %c0_20] : memref<18x18x4xbf16, #tpu.memory_space<vmem>>, vector<16x1x4xbf16>
    tpu.vector_store %arg7[%c1_18, %c17_19, %c0_20], %19 {strides = array<i32>} : memref<18x18x4xbf16, #tpu.memory_space<vmem>>, vector<16x1x4xbf16>,
    %21 = arith.truncf %12 : vector<16x16x4xf32> to vector<16x16x4xbf16>
    %c1_21 = arith.constant 1 : index
    %c1_22 = arith.constant 1 : index
    %c0_23 = arith.constant 0 : index
    %22 = vector.load %arg7[%c1_21, %c1_22, %c0_23] : memref<18x18x4xbf16, #tpu.memory_space<vmem>>, vector<16x16x4xbf16>
    tpu.vector_store %arg7[%c1_21, %c1_22, %c0_23], %21 {strides = array<i32>} : memref<18x18x4xbf16, #tpu.memory_space<vmem>>, vector<16x16x4xbf16>,
    %cst_24 = arith.constant 0.000000e+00 : f32
    %23 = vector.broadcast %cst_24 : f32 to vector<256x4xf32>
    %c0_25 = arith.constant 0 : index
    %c0_26 = arith.constant 0 : index
    %c0_27 = arith.constant 0 : index
    %24 = vector.load %arg7[%c0_25, %c0_26, %c0_27] : memref<18x18x4xbf16, #tpu.memory_space<vmem>>, vector<16x16x4xbf16>
    %c0_28 = arith.constant 0 : index
    %c1_29 = arith.constant 1 : index
    %c0_30 = arith.constant 0 : index
    %25 = vector.load %arg7[%c0_28, %c1_29, %c0_30] : memref<18x18x4xbf16, #tpu.memory_space<vmem>>, vector<16x16x4xbf16>
    %c0_31 = arith.constant 0 : index
    %c2 = arith.constant 2 : index
    %c0_32 = arith.constant 0 : index
    %26 = vector.load %arg7[%c0_31, %c2, %c0_32] : memref<18x18x4xbf16, #tpu.memory_space<vmem>>, vector<16x16x4xbf16>
    %27 = tpu.concatenate %24, %25, %26 in 2 : vector<16x16x4xbf16>, vector<16x16x4xbf16>, vector<16x16x4xbf16> -> vector<16x16x12xbf16>
    %28 = vector.shape_cast %27 : vector<16x16x12xbf16> to vector<256x12xbf16>
    %c0_33 = arith.constant 0 : index
    %c0_34 = arith.constant 0 : index
    %c0_35 = arith.constant 0 : index
    %29 = vector.load %arg4[%c0_33, %c0_34, %c0_35] : memref<3x12x4xbf16, #tpu.memory_space<vmem>>, vector<1x12x4xbf16>
    %30 = vector.shape_cast %29 : vector<1x12x4xbf16> to vector<12x4xbf16>
    %cst_36 = arith.constant dense<0.000000e+00> : vector<256x4xf32>
    %31 = tpu.matmul %28, %30, %cst_36 {dimension_numbers = #tpu.dot_dimension_numbers<[1], [0], [0], [1], [0, 0, 1, 1], [], []>} : vector<256x12xbf16>, vector<12x4xbf16>, vector<256x4xf32> -> vector<256x4xf32>
    %32 = arith.addf %23, %31 : vector<256x4xf32>
    %c1_37 = arith.constant 1 : index
    %c0_38 = arith.constant 0 : index
    %c0_39 = arith.constant 0 : index
    %33 = vector.load %arg7[%c1_37, %c0_38, %c0_39] : memref<18x18x4xbf16, #tpu.memory_space<vmem>>, vector<16x16x4xbf16>
    %c1_40 = arith.constant 1 : index
    %c1_41 = arith.constant 1 : index
    %c0_42 = arith.constant 0 : index
    %34 = vector.load %arg7[%c1_40, %c1_41, %c0_42] : memref<18x18x4xbf16, #tpu.memory_space<vmem>>, vector<16x16x4xbf16>
    %c1_43 = arith.constant 1 : index
    %c2_44 = arith.constant 2 : index
    %c0_45 = arith.constant 0 : index
    %35 = vector.load %arg7[%c1_43, %c2_44, %c0_45] : memref<18x18x4xbf16, #tpu.memory_space<vmem>>, vector<16x16x4xbf16>
    %36 = tpu.concatenate %33, %34, %35 in 2 : vector<16x16x4xbf16>, vector<16x16x4xbf16>, vector<16x16x4xbf16> -> vector<16x16x12xbf16>
    %37 = vector.shape_cast %36 : vector<16x16x12xbf16> to vector<256x12xbf16>
    %c1_46 = arith.constant 1 : index
    %c0_47 = arith.constant 0 : index
    %c0_48 = arith.constant 0 : index
    %38 = vector.load %arg4[%c1_46, %c0_47, %c0_48] : memref<3x12x4xbf16, #tpu.memory_space<vmem>>, vector<1x12x4xbf16>
    %39 = vector.shape_cast %38 : vector<1x12x4xbf16> to vector<12x4xbf16>
    %cst_49 = arith.constant dense<0.000000e+00> : vector<256x4xf32>
    %40 = tpu.matmul %37, %39, %cst_49 {dimension_numbers = #tpu.dot_dimension_numbers<[1], [0], [0], [1], [0, 0, 1, 1], [], []>} : vector<256x12xbf16>, vector<12x4xbf16>, vector<256x4xf32> -> vector<256x4xf32>
    %41 = arith.addf %32, %40 : vector<256x4xf32>
    %c2_50 = arith.constant 2 : index
    %c0_51 = arith.constant 0 : index
    %c0_52 = arith.constant 0 : index
    %42 = vector.load %arg7[%c2_50, %c0_51, %c0_52] : memref<18x18x4xbf16, #tpu.memory_space<vmem>>, vector<16x16x4xbf16>
    %c2_53 = arith.constant 2 : index
    %c1_54 = arith.constant 1 : index
    %c0_55 = arith.constant 0 : index
    %43 = vector.load %arg7[%c2_53, %c1_54, %c0_55] : memref<18x18x4xbf16, #tpu.memory_space<vmem>>, vector<16x16x4xbf16>
    %c2_56 = arith.constant 2 : index
    %c2_57 = arith.constant 2 : index
    %c0_58 = arith.constant 0 : index
    %44 = vector.load %arg7[%c2_56, %c2_57, %c0_58] : memref<18x18x4xbf16, #tpu.memory_space<vmem>>, vector<16x16x4xbf16>
    %45 = tpu.concatenate %42, %43, %44 in 2 : vector<16x16x4xbf16>, vector<16x16x4xbf16>, vector<16x16x4xbf16> -> vector<16x16x12xbf16>
    %46 = vector.shape_cast %45 : vector<16x16x12xbf16> to vector<256x12xbf16>
    %c2_59 = arith.constant 2 : index
    %c0_60 = arith.constant 0 : index
    %c0_61 = arith.constant 0 : index
    %47 = vector.load %arg4[%c2_59, %c0_60, %c0_61] : memref<3x12x4xbf16, #tpu.memory_space<vmem>>, vector<1x12x4xbf16>
    %48 = vector.shape_cast %47 : vector<1x12x4xbf16> to vector<12x4xbf16>
    %cst_62 = arith.constant dense<0.000000e+00> : vector<256x4xf32>
    %49 = tpu.matmul %46, %48, %cst_62 {dimension_numbers = #tpu.dot_dimension_numbers<[1], [0], [0], [1], [0, 0, 1, 1], [], []>} : vector<256x12xbf16>, vector<12x4xbf16>, vector<256x4xf32> -> vector<256x4xf32>
    %50 = arith.addf %41, %49 : vector<256x4xf32>
    %cst_63 = arith.constant dense<0.000000e+00> : vector<4xf32>
    %51 = vector.multi_reduction <add>, %50, %cst_63 [0] : vector<256x4xf32> to vector<4xf32>
    %52 = vector.shape_cast %51 : vector<4xf32> to vector<1x4xf32>
    %cst_64 = arith.constant 3.906250e-03 : f32
    %53 = vector.broadcast %cst_64 : f32 to vector<1x4xf32>
    %54 = arith.mulf %52, %53 : vector<1x4xf32>
    %55 = vector.broadcast %54 : vector<1x4xf32> to vector<256x4xf32>
    %56 = arith.subf %50, %55 : vector<256x4xf32>
    %57 = arith.mulf %56, %56 : vector<256x4xf32>
    %cst_65 = arith.constant dense<0.000000e+00> : vector<4xf32>
    %58 = vector.multi_reduction <add>, %57, %cst_65 [0] : vector<256x4xf32> to vector<4xf32>
    %59 = vector.shape_cast %58 : vector<4xf32> to vector<1x4xf32>
    %60 = tpu.concatenate %52, %59 in 0 : vector<1x4xf32>, vector<1x4xf32> -> vector<2x4xf32>
    %c0_66 = arith.constant 0 : index
    %c0_67 = arith.constant 0 : index
    %c0_68 = arith.constant 0 : index
    %61 = vector.load %arg6[%c0_66, %c0_67, %c0_68] : memref<1x2x4xf32, #tpu.memory_space<vmem>>, vector<1x2x4xf32>
    %62 = vector.shape_cast %61 : vector<1x2x4xf32> to vector<2x4xf32>
    %63 = vector.shape_cast %60 : vector<2x4xf32> to vector<1x2x4xf32>
    tpu.vector_store %arg6[%c0_66, %c0_67, %c0_68], %63 {strides = array<i32>} : memref<1x2x4xf32, #tpu.memory_space<vmem>>, vector<1x2x4xf32>,
    %64 = vector.shape_cast %50 : vector<256x4xf32> to vector<16x16x4xf32>
    %65 = arith.truncf %64 : vector<16x16x4xf32> to vector<16x16x4xbf16>
    %c0_69 = arith.constant 0 : index
    %c0_70 = arith.constant 0 : index
    %c0_71 = arith.constant 0 : index
    %c0_72 = arith.constant 0 : index
    %66 = vector.load %arg5[%c0_69, %c0_70, %c0_71, %c0_72] : memref<1x16x16x4xbf16, #tpu.memory_space<vmem>>, vector<1x16x16x4xbf16>
    %67 = vector.shape_cast %66 : vector<1x16x16x4xbf16> to vector<16x16x4xbf16>
    %68 = vector.shape_cast %65 : vector<16x16x4xbf16> to vector<1x16x16x4xbf16>
    tpu.vector_store %arg5[%c0_69, %c0_70, %c0_71, %c0_72], %68 {strides = array<i32>} : memref<1x16x16x4xbf16, #tpu.memory_space<vmem>>, vector<1x16x16x4xbf16>,
    return
  }
  func.func @transform_0(%arg0: i32) -> (i32, i32, i32, i32) {
    %c0_i32 = arith.constant 0 : i32
    %c0_i32_0 = arith.constant 0 : i32
    %c0_i32_1 = arith.constant 0 : i32
    %c0_i32_2 = arith.constant 0 : i32
    return %arg0, %c0_i32, %c0_i32_0, %c0_i32_1 : i32, i32, i32, i32
  }
  func.func @transform_1(%arg0: i32) -> (i32, i32) {
    %c0_i32 = arith.constant 0 : i32
    %c0_i32_0 = arith.constant 0 : i32
    %c0_i32_1 = arith.constant 0 : i32
    return %c0_i32, %c0_i32_0 : i32, i32
  }
  func.func @transform_2(%arg0: i32) -> (i32, i32) {
    %c0_i32 = arith.constant 0 : i32
    %c0_i32_0 = arith.constant 0 : i32
    %c0_i32_1 = arith.constant 0 : i32
    return %c0_i32, %c0_i32_0 : i32, i32
  }
  func.func @transform_3(%arg0: i32) -> (i32, i32, i32) {
    %c0_i32 = arith.constant 0 : i32
    %c0_i32_0 = arith.constant 0 : i32
    %c0_i32_1 = arith.constant 0 : i32
    %c0_i32_2 = arith.constant 0 : i32
    return %c0_i32, %c0_i32_0, %c0_i32_1 : i32, i32, i32
  }
  func.func @transform_4(%arg0: i32) -> (i32, i32, i32, i32) {
    %c0_i32 = arith.constant 0 : i32
    %c0_i32_0 = arith.constant 0 : i32
    %c0_i32_1 = arith.constant 0 : i32
    %c0_i32_2 = arith.constant 0 : i32
    return %arg0, %c0_i32, %c0_i32_0, %c0_i32_1 : i32, i32, i32, i32
  }
  func.func @transform_5(%arg0: i32) -> (i32, i32, i32) {
    %c0_i32 = arith.constant 0 : i32
    %c0_i32_0 = arith.constant 0 : i32
    %c0_i32_1 = arith.constant 0 : i32
    return %arg0, %c0_i32, %c0_i32_0 : i32, i32, i32
  }
}

module attributes {stable_mosaic.version = 11 : i64} {
  func.func @_finalize_kernel(%arg0: i32, %arg1: memref<32x64xbf16, #tpu.memory_space<vmem>>, %arg2: memref<32x64xf32, #tpu.memory_space<vmem>>, %arg3: memref<1x64xf32, #tpu.memory_space<vmem>>, %arg4: memref<1x64xf32, #tpu.memory_space<vmem>>, %arg5: memref<32x64xf32, #tpu.memory_space<vmem>>) attributes {dimension_semantics = [#tpu.dimension_semantics<parallel>], iteration_bounds = array<i64: 1>, scalar_prefetch = 0 : i64, scratch_operands = 0 : i64, tpu.core_type = #tpu.core_type<tc>, window_params = [{transform_indices = @transform_0, window_bounds = array<i64: 32, 64>}, {transform_indices = @transform_1, window_bounds = array<i64: 32, 64>}, {pipeline_mode = #tpu.pipeline_mode<synchronous>, transform_indices = @transform_2, window_bounds = array<i64: 1, 64>}, {pipeline_mode = #tpu.pipeline_mode<synchronous>, transform_indices = @transform_3, window_bounds = array<i64: 1, 64>}, {transform_indices = @transform_4, window_bounds = array<i64: 32, 64>}]} {
    %c0 = arith.constant 0 : index
    %c0_0 = arith.constant 0 : index
    %0 = vector.load %arg1[%c0, %c0_0] : memref<32x64xbf16, #tpu.memory_space<vmem>>, vector<32x64xbf16>
    %1 = arith.extf %0 : vector<32x64xbf16> to vector<32x64xf32>
    %c0_1 = arith.constant 0 : index
    %c0_2 = arith.constant 0 : index
    %2 = vector.load %arg3[%c0_1, %c0_2] : memref<1x64xf32, #tpu.memory_space<vmem>>, vector<1x64xf32>
    %3 = vector.broadcast %2 : vector<1x64xf32> to vector<32x64xf32>
    %4 = arith.mulf %1, %3 : vector<32x64xf32>
    %c0_3 = arith.constant 0 : index
    %c0_4 = arith.constant 0 : index
    %5 = vector.load %arg4[%c0_3, %c0_4] : memref<1x64xf32, #tpu.memory_space<vmem>>, vector<1x64xf32>
    %6 = vector.broadcast %5 : vector<1x64xf32> to vector<32x64xf32>
    %7 = arith.addf %4, %6 : vector<32x64xf32>
    %c0_5 = arith.constant 0 : index
    %c0_6 = arith.constant 0 : index
    %8 = vector.load %arg2[%c0_5, %c0_6] : memref<32x64xf32, #tpu.memory_space<vmem>>, vector<32x64xf32>
    %9 = arith.addf %7, %8 : vector<32x64xf32>
    %cst = arith.constant 0.000000e+00 : f32
    %10 = vector.broadcast %cst : f32 to vector<32x64xf32>
    %11 = arith.maximumf %9, %10 : vector<32x64xf32>
    %c0_7 = arith.constant 0 : index
    %c0_8 = arith.constant 0 : index
    %12 = vector.load %arg5[%c0_7, %c0_8] : memref<32x64xf32, #tpu.memory_space<vmem>>, vector<32x64xf32>
    tpu.vector_store %arg5[%c0_7, %c0_8], %11 {strides = array<i32>} : memref<32x64xf32, #tpu.memory_space<vmem>>, vector<32x64xf32>,
    return
  }
  func.func @transform_0(%arg0: i32) -> (i32, i32) {
    %c0_i32 = arith.constant 0 : i32
    %c0_i32_0 = arith.constant 0 : i32
    return %arg0, %c0_i32 : i32, i32
  }
  func.func @transform_1(%arg0: i32) -> (i32, i32) {
    %c0_i32 = arith.constant 0 : i32
    %c0_i32_0 = arith.constant 0 : i32
    return %arg0, %c0_i32 : i32, i32
  }
  func.func @transform_2(%arg0: i32) -> (i32, i32) {
    %c0_i32 = arith.constant 0 : i32
    %c0_i32_0 = arith.constant 0 : i32
    %c0_i32_1 = arith.constant 0 : i32
    return %c0_i32, %c0_i32_0 : i32, i32
  }
  func.func @transform_3(%arg0: i32) -> (i32, i32) {
    %c0_i32 = arith.constant 0 : i32
    %c0_i32_0 = arith.constant 0 : i32
    %c0_i32_1 = arith.constant 0 : i32
    return %c0_i32, %c0_i32_0 : i32, i32
  }
  func.func @transform_4(%arg0: i32) -> (i32, i32) {
    %c0_i32 = arith.constant 0 : i32
    %c0_i32_0 = arith.constant 0 : i32
    return %arg0, %c0_i32 : i32, i32
  }
}

</mosaic_0001>

<llo_original>
// kernel: tile.13
$region0: #{tile.13}
  #allocation0 [shape = 's32[1]{0}', space=sflag, size = 0x4, scoped, tag = 'scoped memory for tile.13']
  %s0 = inlined_call_operand.vmem [shape: f32[4], index: 0, kind: input, shape index: {}]
  %s1 = inlined_call_operand.vmem [shape: f32[16,4], index: 1, kind: output, shape index: {}]
  // Predicated region
  $region2: #{tile.13} parent=0 // pred_check
    _
  $region3: #{tile.13} parent=0 // pred_check_branch
    %3 = sbr.rel (0) target = $region5
  $region4: #{tile.13} parent=0 // pred_region
    _
  $region5: #{tile.13} parent=0 // pred_fallthru
    _
  %v4 = vld [vmem:[%s0] ss:$0 sm:$0xff]
  %5 = vst [vmem:[%s1] sm:$0xff] %v4
  %s6 = scalar_lea.vmem %s1, 8
  %7 = vst [vmem:[%s6] sm:$0xff] %v4

// kernel: tile.14
$region0: #{tile.14}
  %s0 = inlined_call_operand.vmem [shape: f32[16,4], index: 0, kind: input, shape index: {}]
  %s1 = inlined_call_operand.hbm [shape: f32[1,64], index: 1, kind: output, shape index: {}]
  $region1: #{tile.14} parent=0
    #allocation0 [shape = 'u8[512]{0}', space=vmem, size = 0x400, scoped, tag = 'operand span for operand 1']
    #allocation1 [shape = 's32[1]{0}', space=sflag, size = 0x4, scoped, tag = 'scoped memory for tile.14']
    #allocation2 [shape = 'u8[4096]{0}', space=vmem, size = 0x1000, scoped, tag = 'scoped mem for output reshape']
    %2 = vsyncpa [#allocation1], 0
    %v3 = vld [vmem:[%s0] sm:$0x1]
    %vm4 = vcmask 31744
    %5 = vst.msk [vmem:[#allocation2] sm:$0x1] %vm4, %v3
    %s6 = scalar_lea.vmem %s0, 15
    %v7 = vld [vmem:[%s6] sm:$0x1]
    %8 = vrot.lane.b32.xlu0 %v7, 60
    %v9 = vpop.permute.xlu0 %8
    %vm10 = vcmask 523744
    %11 = vst.msk [vmem:[#allocation2] sm:$0x1] %vm10, %v9
    %s12 = scalar_lea.vmem %s0, 14
    %v13 = vld [vmem:[%s12] sm:$0x1]
    %14 = vrot.lane.b32.xlu0 %v13, 56
    %v15 = vpop.permute.xlu0 %14
    %vm16 = vcmask 490944
    %17 = vst.msk [vmem:[#allocation2] sm:$0x1] %vm16, %v15
    %s18 = scalar_lea.vmem %s0, 13
    %v19 = vld [vmem:[%s18] sm:$0x1]
    %20 = vrot.lane.b32.xlu0 %v19, 52
    %v21 = vpop.permute.xlu0 %20
    %vm22 = vcmask 458144
    %23 = vst.msk [vmem:[#allocation2] sm:$0x1] %vm22, %v21
    %s24 = scalar_lea.vmem %s0, 12
    %v25 = vld [vmem:[%s24] sm:$0x1]
    %26 = vrot.lane.b32.xlu0 %v25, 48
    %v27 = vpop.permute.xlu0 %26
    %vm28 = vcmask 425344
    %29 = vst.msk [vmem:[#allocation2] sm:$0x1] %vm28, %v27
    %s30 = scalar_lea.vmem %s0, 11
    %v31 = vld [vmem:[%s30] sm:$0x1]
    %32 = vrot.lane.b32.xlu0 %v31, 44
    %v33 = vpop.permute.xlu0 %32
    %vm34 = vcmask 392544
    %35 = vst.msk [vmem:[#allocation2] sm:$0x1] %vm34, %v33
    %s36 = scalar_lea.vmem %s0, 10
    %v37 = vld [vmem:[%s36] sm:$0x1]
    %38 = vrot.lane.b32.xlu0 %v37, 40
    %v39 = vpop.permute.xlu0 %38
    %vm40 = vcmask 359744
    %41 = vst.msk [vmem:[#allocation2] sm:$0x1] %vm40, %v39
    %s42 = scalar_lea.vmem %s0, 9
    %v43 = vld [vmem:[%s42] sm:$0x1]
    %44 = vrot.lane.b32.xlu0 %v43, 36
    %v45 = vpop.permute.xlu0 %44
    %vm46 = vcmask 326944
    %47 = vst.msk [vmem:[#allocation2] sm:$0x1] %vm46, %v45
    %s48 = scalar_lea.vmem %s0, 8
    %v49 = vld [vmem:[%s48] sm:$0x1]
    %50 = vrot.lane.b32.xlu0 %v49, 32
    %v51 = vpop.permute.xlu0 %50
    %vm52 = vcmask 294144
    %53 = vst.msk [vmem:[#allocation2] sm:$0x1] %vm52, %v51
    %s54 = scalar_lea.vmem %s0, 7
    %v55 = vld [vmem:[%s54] sm:$0x1]
    %56 = vrot.lane.b32.xlu0 %v55, 28
    %v57 = vpop.permute.xlu0 %56
    %vm58 = vcmask 261344
    %59 = vst.msk [vmem:[#allocation2] sm:$0x1] %vm58, %v57
    %s60 = scalar_lea.vmem %s0, 6
    %v61 = vld [vmem:[%s60] sm:$0x1]
    %62 = vrot.lane.b32.xlu0 %v61, 24
    %v63 = vpop.permute.xlu0 %62
    %vm64 = vcmask 228544
    %65 = vst.msk [vmem:[#allocation2] sm:$0x1] %vm64, %v63
    %s66 = scalar_lea.vmem %s0, 5
    %v67 = vld [vmem:[%s66] sm:$0x1]
    %68 = vrot.lane.b32.xlu0 %v67, 20
    %v69 = vpop.permute.xlu0 %68
    %vm70 = vcmask 195744
    %71 = vst.msk [vmem:[#allocation2] sm:$0x1] %vm70, %v69
    %s72 = scalar_lea.vmem %s0, 4
    %v73 = vld [vmem:[%s72] sm:$0x1]
    %74 = vrot.lane.b32.xlu0 %v73, 16
    %v75 = vpop.permute.xlu0 %74
    %vm76 = vcmask 162944
    %77 = vst.msk [vmem:[#allocation2] sm:$0x1] %vm76, %v75
    %s78 = scalar_lea.vmem %s0, 3
    %v79 = vld [vmem:[%s78] sm:$0x1]
    %80 = vrot.lane.b32.xlu0 %v79, 12
    %v81 = vpop.permute.xlu0 %80
    %vm82 = vcmask 130144
    %83 = vst.msk [vmem:[#allocation2] sm:$0x1] %vm82, %v81
    %s84 = scalar_lea.vmem %s0, 2
    %v85 = vld [vmem:[%s84] sm:$0x1]
    %86 = vrot.lane.b32.xlu0 %v85, 8
    %v87 = vpop.permute.xlu0 %86
    %vm88 = vcmask 97344
    %89 = vst.msk [vmem:[#allocation2] sm:$0x1] %vm88, %v87
    %s90 = scalar_lea.vmem %s0, 1
    %v91 = vld [vmem:[%s90] sm:$0x1]
    %92 = vrot.lane.b32.xlu0 %v91, 4
    %v93 = vpop.permute.xlu0 %92
    %vm94 = vcmask 64544
    %95 = vst.msk [vmem:[#allocation2] sm:$0x1] %vm94, %v93
    %s97 = sshllo.u32 0, 1
    %v99 = vld [vmem:[#allocation2] sm:%s97]
    %s100 = sshllo.u32 0, 1
    %101 = vst [vmem:[#allocation0] sm:%s100] %v99
    %s103 = ssub.s32 16, 16
    %104 = vsyncadd [#allocation1], %s103
    %s106 = sshll.u32 [#allocation0], 4
    %s107 = int_to_ptr.vmem [resolvable:$true] %s106
    %109 = dma.vmem_to_hbm [thread:$0]  %s107, 16, %s1, [#allocation1]
    %110 = dma.done [#allocation1], 16
    %111 = vsyncpa [#allocation1], 1

// kernel: block_forward.5
$region0: #{block_forward.5}
  #allocation0 [shape = 'u32[]', space=smem, size = 0x4, offset = 0x4, fixed_abs, tag = 'smem constant byte address 0x4 - core index']
  #allocation1 [shape = 'u32[144,128]{1,0:T(1,128)}', space=vmem, size = 0x12000, scoped, tag = 'internal scratch']
  %s0 = inlined_call_operand.hbm [shape: bf16[32,64], index: 0, kind: input, shape index: {}]
  %s1 = inlined_call_operand.hbm [shape: f32[32,64], index: 1, kind: input, shape index: {}]
  %s2 = inlined_call_operand.hbm [shape: f32[1,64], index: 2, kind: input, shape index: {}]
  %s3 = inlined_call_operand.hbm [shape: f32[1,64], index: 3, kind: input, shape index: {}]
  %s4 = inlined_call_operand.hbm [shape: f32[32,64], index: 4, kind: output, shape index: {}]
  %s5 = sld [smem:[#allocation0]]
  $region42: #{block_forward.5} parent=0
    _
  %s7 = ssub.s32 1, %s5
  %s8 = scalar_select 0, %s7, %s5
  $region1: #{block_forward.5} parent=0
    #allocation2 [shape = 'u8[8192]{0}', space=vmem, size = 0x2000, scoped, tag = 'input window, operand 0, single buffered']
    #allocation3 [shape = 's32[1]{0}', space=sflag, size = 0x4, scoped, tag = 'scoped memory for block_forward.5']
    #allocation4 [shape = 's32[1]{0}', space=sflag, size = 0x4, scoped, tag = 'scoped memory for block_forward.5']
    #allocation5 [shape = 'u8[16384]{0}', space=vmem, size = 0x4000, scoped, tag = 'input window, operand 1, single buffered']
    #allocation6 [shape = 's32[1]{0}', space=sflag, size = 0x4, scoped, tag = 'scoped memory for block_forward.5']
    #allocation7 [shape = 'u8[512]{0}', space=vmem, size = 0x400, scoped, tag = 'input window, operand 2, single buffered']
    #allocation8 [shape = 'u8[512]{0}', space=vmem, size = 0x400, scoped, tag = 'input window, operand 3, single buffered']
    #allocation9 [shape = 's32[1]{0}', space=sflag, size = 0x4, scoped, tag = 'scoped memory for block_forward.5']
    #allocation10 [shape = 'u8[16384]{0}', space=vmem, size = 0x4000, scoped, tag = 'output window, operand 0, single buffered']
    %9 = vsyncpa [#allocation3], 0
    %10 = vsyncpa [#allocation6], 0
    %11 = vsyncpa [#allocation9], 0
    %12 = vsyncpa [#allocation4], 0
    // Predicated region
    $region2: #{block_forward.5} parent=1 // pred_check
      _
    $region3: #{block_forward.5} parent=1 // pred_check_branch
      %14 = sbr.rel (0) target = $region5
    $region4: #{block_forward.5} parent=1 // pred_region
      %s16 = ssub.s32 256, 256
      %17 = vsyncadd [#allocation3], %s16
      %s18 = sshll.u32 [#allocation2], 4
      %s19 = int_to_ptr.vmem [resolvable:$true] %s18
      %24 = dma.hbm_to_vmem [thread:$0]  %s0, 256, %s19, [#allocation3], 64, 64, 4
    $region5: #{block_forward.5} parent=1 // pred_fallthru
      _
    // Predicated region
    $region6: #{block_forward.5} parent=1 // pred_check
      _
    $region7: #{block_forward.5} parent=1 // pred_check_branch
      %26 = sbr.rel (0) target = $region9
    $region8: #{block_forward.5} parent=1 // pred_region
      %s28 = ssub.s32 512, 512
      %29 = vsyncadd [#allocation6], %s28
      %s30 = sshll.u32 [#allocation5], 4
      %s31 = int_to_ptr.vmem [resolvable:$true] %s30
      %36 = dma.hbm_to_vmem [thread:$0]  %s1, 512, %s31, [#allocation6], 128, 128, 8
    $region9: #{block_forward.5} parent=1 // pred_fallthru
      _
    // Predicated region
    $region10: #{block_forward.5} parent=1 // pred_check
      _
    $region11: #{block_forward.5} parent=1 // pred_check_branch
      %38 = sbr.rel (0) target = $region13
    $region12: #{block_forward.5} parent=1 // pred_region
      %s40 = ssub.s32 16, 16
      %41 = vsyncadd [#allocation6], %s40
      %s43 = sshll.u32 [#allocation7], 4
      %s44 = int_to_ptr.vmem [resolvable:$true] %s43
      %46 = dma.hbm_to_vmem [thread:$0]  %s2, 16, %s44, [#allocation6]
    $region13: #{block_forward.5} parent=1 // pred_fallthru
      _
    // Predicated region
    $region14: #{block_forward.5} parent=1 // pred_check
      _
    $region15: #{block_forward.5} parent=1 // pred_check_branch
      %48 = sbr.rel (0) target = $region17
    $region16: #{block_forward.5} parent=1 // pred_region
      %s50 = ssub.s32 16, 16
      %51 = vsyncadd [#allocation9], %s50
      %s53 = sshll.u32 [#allocation8], 4
      %s54 = int_to_ptr.vmem [resolvable:$true] %s53
      %56 = dma.hbm_to_vmem [thread:$0]  %s3, 16, %s54, [#allocation9]
    $region17: #{block_forward.5} parent=1 // pred_fallthru
      _
    // Predicated region
    $region18: #{block_forward.5} parent=1 // pred_check
      _
    $region19: #{block_forward.5} parent=1 // pred_check_branch
      %58 = sbr.rel (0) target = $region21
    $region20: #{block_forward.5} parent=1 // pred_region
      %59 = dma.done [#allocation3], 256
    $region21: #{block_forward.5} parent=1 // pred_fallthru
      _
    // Predicated region
    $region22: #{block_forward.5} parent=1 // pred_check
      _
    $region23: #{block_forward.5} parent=1 // pred_check_branch
      %61 = sbr.rel (0) target = $region25
    $region24: #{block_forward.5} parent=1 // pred_region
      %62 = dma.done [#allocation6], 512
    $region25: #{block_forward.5} parent=1 // pred_fallthru
      _
    // Predicated region
    $region26: #{block_forward.5} parent=1 // pred_check
      _
    $region27: #{block_forward.5} parent=1 // pred_check_branch
      %64 = sbr.rel (0) target = $region29
    $region28: #{block_forward.5} parent=1 // pred_region
      %65 = dma.done [#allocation6], 16
    $region29: #{block_forward.5} parent=1 // pred_fallthru
      _
    // Predicated region
    $region30: #{block_forward.5} parent=1 // pred_check
      _
    $region31: #{block_forward.5} parent=1 // pred_check_branch
      %67 = sbr.rel (0) target = $region33
    $region32: #{block_forward.5} parent=1 // pred_region
      %68 = dma.done [#allocation9], 16
    $region33: #{block_forward.5} parent=1 // pred_fallthru
      _
    %v69 = vld [vmem:[#allocation2] sm:$0xf]
    %v70 = vld [vmem:[#allocation2 + $0x4] sm:$0xf]
    %v71 = vld [vmem:[#allocation2 + $0x8] sm:$0xf]
    %v72 = vld [vmem:[#allocation2 + $0xc] sm:$0xf]
    %v73 = vunpack.c.l.bf16 %v69
    %v74 = vunpack.c.l.bf16 %v70
    %v75 = vunpack.c.l.bf16 %v71
    %v76 = vunpack.c.l.bf16 %v72
    %v77 = vld [vmem:[#allocation7] sm:$0x1]
    %v79 = vlaneseq
    %v80 = vshrl.u32 %v79, 7
    %v81 = vsub.s32 0, %v80
    %v82 = vrot.slane %v77, %v81
    %v84 = vmul.f32 %v73, %v82
    %v85 = vmul.f32 %v74, %v82
    %v86 = vmul.f32 %v75, %v82
    %v87 = vmul.f32 %v76, %v82
    %v88 = vld [vmem:[#allocation8] sm:$0x1]
    %v90 = vlaneseq
    %v91 = vshrl.u32 %v90, 7
    %v92 = vsub.s32 0, %v91
    %v93 = vrot.slane %v88, %v92
    %v95 = vadd.f32 %v84, %v93
    %v96 = vadd.f32 %v85, %v93
    %v97 = vadd.f32 %v86, %v93
    %v98 = vadd.f32 %v87, %v93
    %v99 = vld [vmem:[#allocation5] sm:$0xff]
    %v100 = vld [vmem:[#allocation5 + $0x8] sm:$0xff]
    %v101 = vld [vmem:[#allocation5 + $0x10] sm:$0xff]
    %v102 = vld [vmem:[#allocation5 + $0x18] sm:$0xff]
    %v103 = vadd.f32 %v95, %v99
    %v104 = vadd.f32 %v96, %v100
    %v105 = vadd.f32 %v97, %v101
    %v106 = vadd.f32 %v98, %v102
    %v107 = vmax.f32 %v103, 0.0
    %v108 = vmax.f32 %v104, 0.0
    %v109 = vmax.f32 %v105, 0.0
    %v110 = vmax.f32 %v106, 0.0
    %vm111 = vcmask 523264
    %112 = vst.msk [vmem:[#allocation10] sm:$0xff] %vm111, %v107
    %113 = vst.msk [vmem:[#allocation10 + $0x8] sm:$0xff] %vm111, %v108
    %114 = vst.msk [vmem:[#allocation10 + $0x10] sm:$0xff] %vm111, %v109
    %115 = vst.msk [vmem:[#allocation10 + $0x18] sm:$0xff] %vm111, %v110
    // Predicated region
    $region34: #{block_forward.5} parent=1 // pred_check
      _
    $region35: #{block_forward.5} parent=1 // pred_check_branch
      %117 = sbr.rel (0) target = $region37
    $region36: #{block_forward.5} parent=1 // pred_region
      %s119 = ssub.s32 512, 512
      %120 = vsyncadd [#allocation4], %s119
      %s121 = sshll.u32 [#allocation10], 4
      %s122 = int_to_ptr.vmem [resolvable:$true] %s121
      %127 = dma.vmem_to_hbm [thread:$0]  %s122, 512, %s4, [#allocation4], 128, 128, 8
    $region37: #{block_forward.5} parent=1 // pred_fallthru
      _
    // Predicated region
    $region38: #{block_forward.5} parent=1 // pred_check
      _
    $region39: #{block_forward.5} parent=1 // pred_check_branch
      %129 = sbr.rel (0) target = $region41
    $region40: #{block_forward.5} parent=1 // pred_region
      %130 = dma.done [#allocation4], 512
    $region41: #{block_forward.5} parent=1 // pred_fallthru
      _
    %131 = vsyncpa [#allocation3], 1
    %132 = vsyncpa [#allocation6], 1
    %133 = vsyncpa [#allocation9], 1
    %134 = vsyncpa [#allocation4], 1

// kernel: block_forward.3
$region0: #{block_forward.3}
  #allocation0 [shape = 'u32[]', space=smem, size = 0x4, offset = 0x4, fixed_abs, tag = 'smem constant byte address 0x4 - core index']
  #allocation1 [shape = 'u32[144,128]{1,0:T(1,128)}', space=vmem, size = 0x12000, scoped, tag = 'internal scratch']
  #allocation2 [shape = 'bf16[18,18,4]{2,1,0:T(8,128)(2,1)}', space=vmem, size = 0x1b000, scoped, tag = 'scratch operand']
  %s0 = inlined_call_operand.hbm [shape: f32[2,16,16,4], index: 0, kind: input, shape index: {}]
  %s1 = inlined_call_operand.hbm [shape: bf16[3,12,4], index: 1, kind: input, shape index: {}]
  %s2 = inlined_call_operand.hbm [shape: bf16[2,16,16,4], index: 2, kind: output, shape index: {0}]
  %s3 = inlined_call_operand.hbm [shape: f32[2,2,4], index: 3, kind: output, shape index: {1}]
  %4 = xla_tuple %s2, %s3
  %s5 = sld [smem:[#allocation0]]
  $region57: #{block_forward.3} parent=0
    _
  %s7 = ssub.s32 1, %s5
  %s8 = scalar_select 0, %s7, %s5
  $region1: #{block_forward.3} parent=0
    #allocation3 [shape = 'u8[262144]{0}', space=vmem, size = 0x40000, scoped, tag = 'input window, operand 0']
    #allocation4 [shape = 's32[2]{0}', space=sflag, size = 0x8, scoped, tag = 'scoped memory for block_forward.3']
    #allocation5 [shape = 's32[2]{0}', space=sflag, size = 0x8, scoped, tag = 'scoped memory for block_forward.3']
    #allocation6 [shape = 'u8[12288]{0}', space=vmem, size = 0x3000, scoped, tag = 'input window, operand 1, single buffered']
    #allocation7 [shape = 's32[1]{0}', space=sflag, size = 0x4, scoped, tag = 'scoped memory for block_forward.3']
    #allocation8 [shape = 'u8[131072]{0}', space=vmem, size = 0x20000, scoped, tag = 'output window, operand 0']
    #allocation9 [shape = 'u8[2048]{0}', space=vmem, size = 0x800, scoped, tag = 'output window, operand 1']
    #allocation10 [shape = 's32[2]{0}', space=sflag, size = 0x8, scoped, tag = 'scoped memory for block_forward.3']
    %9 = vsyncpa [#allocation4], 0
    %s10 = scalar_lea.sflag [#allocation4], 1
    %11 = vsyncpa %s10, 0
    %12 = vsyncpa [#allocation7], 0
    %13 = vsyncpa [#allocation5], 0
    %s14 = scalar_lea.sflag [#allocation5], 1
    %15 = vsyncpa %s14, 0
    %16 = vsyncpa [#allocation10], 0
    %s17 = scalar_lea.sflag [#allocation10], 1
    %18 = vsyncpa %s17, 0
    loop: start=0, step=1, limit=4
    $region2: #{block_forward.3} parent=1 // loop_pre_header
      _
    $region3: #{block_forward.3} parent=1 // loop_header
      %s20 = sphi 0, %s24
      %p21 = scmp.ge.s32.totalorder %s20, 4
      %s30 = sphi 0, %s32
      %s33 = sphi 0, %s30
      %s34 = sphi 0, %s33
      %s50 = sphi 0, %s34
      %s54 = sphi 0, %s54
      %s56 = sphi 0, %s54
      %s57 = sphi 0, %s56
      %s71 = sphi 0, %s57
      %s77 = sphi 0, %s79
      %s80 = sphi 0, %s77
      %s81 = sphi 0, %s80
      %s97 = sphi 0, %s81
      %s103 = sphi 0, %s105
      %s106 = sphi 0, %s103
      %s107 = sphi 0, %s106
      %s123 = sphi 0, %s107
    $region4: #{block_forward.3} parent=1 // loop_header_branch
      %23 = sbr.rel (%p21) target = $region8
    $region5: #{block_forward.3} parent=1 // loop_body
      %s25 = ssub.s32 %s20, 1
      %s26 = ssub.s32 %s20, 2
      %s27 = sadd.s32 %s20, 1
      %s28 = ssub.s32 %s20, %s27
      %p29 = scmp.eq.s32.totalorder %s28, 0
      %s31 = sadd.s32 %s30, 1
      %s32 = scalar_select %p29, %s30, %s31
      %p35 = pneg %p29
      %p36 = scmp.eq.s32.totalorder %s20, 1
      %p37 = por %p35, %p36
      %p38 = scmp.ne.s32.totalorder %s30, %s33
      %p39 = scmp.eq.s32.totalorder %s20, 0
      %p40 = por %p38, %p39
      %p41 = scmp.ne.s32.totalorder %s30, %s33
      %p42 = scmp.eq.s32.totalorder %s25, 1
      %p43 = por %p41, %p42
      %p44 = scmp.ne.s32.totalorder %s33, %s34
      %p45 = scmp.eq.s32.totalorder %s25, 0
      %p46 = por %p44, %p45
      %p47 = scmp.ne.s32.totalorder %s33, %s34
      %p48 = scmp.eq.s32.totalorder %s26, 1
      %p49 = por %p47, %p48
      %p51 = scmp.ne.s32.totalorder %s34, %s50
      %p52 = scmp.eq.s32.totalorder %s26, 0
      %p53 = por %p51, %p52
      %s55 = sadd.s32 %s54, 1
      %p58 = scmp.eq.s32.totalorder %s20, 1
      %p59 = scmp.ne.s32.totalorder %s54, %s56
      %p60 = scmp.eq.s32.totalorder %s20, 0
      %p61 = por %p59, %p60
      %p62 = scmp.ne.s32.totalorder %s54, %s56
      %p63 = scmp.eq.s32.totalorder %s25, 1
      %p64 = por %p62, %p63
      %p65 = scmp.ne.s32.totalorder %s56, %s57
      %p66 = scmp.eq.s32.totalorder %s25, 0
      %p67 = por %p65, %p66
      %p68 = scmp.ne.s32.totalorder %s56, %s57
      %p69 = scmp.eq.s32.totalorder %s26, 1
      %p70 = por %p68, %p69
      %p72 = scmp.ne.s32.totalorder %s57, %s71
      %p73 = scmp.eq.s32.totalorder %s26, 0
      %p74 = por %p72, %p73
      %s75 = ssub.s32 %s20, %s27
      %p76 = scmp.eq.s32.totalorder %s75, 0
      %s78 = sadd.s32 %s77, 1
      %s79 = scalar_select %p76, %s77, %s78
      %p82 = pneg %p76
      %p83 = scmp.eq.s32.totalorder %s20, 1
      %p84 = por %p82, %p83
      %p85 = scmp.ne.s32.totalorder %s77, %s80
      %p86 = scmp.eq.s32.totalorder %s20, 0
      %p87 = por %p85, %p86
      %p88 = scmp.ne.s32.totalorder %s77, %s80
      %p89 = scmp.eq.s32.totalorder %s25, 1
      %p90 = por %p88, %p89
      %p91 = scmp.ne.s32.totalorder %s80, %s81
      %p92 = scmp.eq.s32.totalorder %s25, 0
      %p93 = por %p91, %p92
      %p94 = scmp.ne.s32.totalorder %s80, %s81
      %p95 = scmp.eq.s32.totalorder %s26, 1
      %p96 = por %p94, %p95
      %p98 = scmp.ne.s32.totalorder %s81, %s97
      %p99 = scmp.eq.s32.totalorder %s26, 0
      %p100 = por %p98, %p99
      %s101 = ssub.s32 %s20, %s27
      %p102 = scmp.eq.s32.totalorder %s101, 0
      %s104 = sadd.s32 %s103, 1
      %s105 = scalar_select %p102, %s103, %s104
      %p108 = pneg %p102
      %p109 = scmp.eq.s32.totalorder %s20, 1
      %p110 = por %p108, %p109
      %p111 = scmp.ne.s32.totalorder %s103, %s106
      %p112 = scmp.eq.s32.totalorder %s20, 0
      %p113 = por %p111, %p112
      %p114 = scmp.ne.s32.totalorder %s103, %s106
      %p115 = scmp.eq.s32.totalorder %s25, 1
      %p116 = por %p114, %p115
      %p117 = scmp.ne.s32.totalorder %s106, %s107
      %p118 = scmp.eq.s32.totalorder %s25, 0
      %p119 = por %p117, %p118
      %p120 = scmp.ne.s32.totalorder %s106, %s107
      %p121 = scmp.eq.s32.totalorder %s26, 1
      %p122 = por %p120, %p121
      %p124 = scmp.ne.s32.totalorder %s107, %s123
      %p125 = scmp.eq.s32.totalorder %s26, 0
      %p126 = por %p124, %p125
      %p127 = scmp.le.s32.totalorder 1, %s20
      %p128 = scmp.lt.s32.totalorder %s20, 3
      %p129 = pnand %p127, %p128
      %p130 = pneg %p129
      // Predicated region
      $region9: #{block_forward.3} parent=5 // pred_check
        _
      $region10: #{block_forward.3} parent=5 // pred_check_branch
        %132 = sbr.rel (%p129) target = $region12
      $region11: #{block_forward.3} parent=5 // pred_region
        %s133 = ssub.s32 %s20, 1
        // Predicated region
        $region13: #{block_forward.3} parent=11 // pred_check
          %p134 = pneg %p67
        $region14: #{block_forward.3} parent=11 // pred_check_branch
          %136 = sbr.rel (%p134) target = $region16
        $region15: #{block_forward.3} parent=11 // pred_region
          %s138 = ssub.s32 384, 384
          %139 = vsyncadd [#allocation7], %s138
          %s140 = sshll.u32 [#allocation6], 4
          %s141 = int_to_ptr.vmem [resolvable:$true] %s140
          %146 = dma.hbm_to_vmem [thread:$0]  %s1, 384, %s141, [#allocation7], 64, 64, 4
        $region16: #{block_forward.3} parent=11 // pred_fallthru
          _
      $region12: #{block_forward.3} parent=5 // pred_fallthru
        _
      %p147 = scmp.lt.s32.totalorder %s20, 2
      // Predicated region
      $region17: #{block_forward.3} parent=5 // pred_check
        %p148 = pneg %p147
      $region18: #{block_forward.3} parent=5 // pred_check_branch
        %150 = sbr.rel (%p148) target = $region20
      $region19: #{block_forward.3} parent=5 // pred_region
        // Predicated region
        $region21: #{block_forward.3} parent=19 // pred_check
          %p151 = pneg %p40
        $region22: #{block_forward.3} parent=19 // pred_check_branch
          %153 = sbr.rel (%p151) target = $region24
        $region23: #{block_forward.3} parent=19 // pred_region
          %s154 = sand.u32 %s30, 1
          %s155 = scalar_lea.sflag [#allocation4], %s154
          %s156 = sand.u32 %s30, 1
          %s157 = smul.addr %s156, 256
          %s158 = scalar_lea.vmem [#allocation3], %s157
          %s160 = ssub.s32 4096, 4096
          %161 = vsyncadd %s155, %s160
          %s162 = smul.addr %s20, 32
          %s163 = smul.addr %s162, 128
          %s164 = scalar_lea.hbm %s0, %s163
          %s165 = sshll.u32 %s158, 4
          %s166 = int_to_ptr.vmem [resolvable:$true] %s165
          %171 = dma.hbm_to_vmem [thread:$0]  %s164, 4096, %s166, %s155, 128, 128, 8
        $region24: #{block_forward.3} parent=19 // pred_fallthru
          _
      $region20: #{block_forward.3} parent=5 // pred_fallthru
        _
      %p172 = scmp.le.s32.totalorder 1, %s20
      %p173 = scmp.lt.s32.totalorder %s20, 3
      %p174 = pnand %p172, %p173
      %p175 = pneg %p174
      // Predicated region
      $region25: #{block_forward.3} parent=5 // pred_check
        _
      $region26: #{block_forward.3} parent=5 // pred_check_branch
        %177 = sbr.rel (%p174) target = $region28
      $region27: #{block_forward.3} parent=5 // pred_region
        %s178 = ssub.s32 %s20, 1
        %s179 = sand.u32 %s33, 1
        %s180 = scalar_lea.sflag [#allocation4], %s179
        %s181 = sand.u32 %s33, 1
        %s182 = smul.addr %s181, 256
        %s183 = scalar_lea.vmem [#allocation3], %s182
        // Predicated region
        $region29: #{block_forward.3} parent=27 // pred_check
          %p184 = pneg %p46
        $region30: #{block_forward.3} parent=27 // pred_check_branch
          %186 = sbr.rel (%p184) target = $region32
        $region31: #{block_forward.3} parent=27 // pred_region
          %187 = dma.done %s180, 4096
        $region32: #{block_forward.3} parent=27 // pred_fallthru
          _
        // Predicated region
        $region33: #{block_forward.3} parent=27 // pred_check
          %p188 = pneg %p67
        $region34: #{block_forward.3} parent=27 // pred_check_branch
          %190 = sbr.rel (%p188) target = $region36
        $region35: #{block_forward.3} parent=27 // pred_region
          %191 = dma.done [#allocation7], 384
        $region36: #{block_forward.3} parent=27 // pred_fallthru
          _
        %s192 = sand.u32 %s33, 1
        %s193 = scalar_lea.sflag [#allocation4], %s192
        %s194 = sand.u32 %s33, 1
        %s195 = smul.addr %s194, 256
        %s196 = scalar_lea.vmem [#allocation3], %s195
        %p197 = pneg %p46
        %p198 = pneg %p43
        %p199 = pneg %p67
        %p200 = pneg %p64
        %p201 = pneg %p93
        %p202 = pneg %p90
        %s203 = sand.u32 %s80, 1
        %s204 = scalar_lea.sflag [#allocation5], %s203
        %s205 = sand.u32 %s80, 1
        %s206 = smul.addr %s205, 128
        %s207 = scalar_lea.vmem [#allocation8], %s206
        %p208 = pneg %p119
        %p209 = pneg %p116
        %s210 = sand.u32 %s106, 1
        %s211 = scalar_lea.sflag [#allocation10], %s210
        %s212 = sand.u32 %s106, 1
        %s213 = smul.addr %s212, 2
        %s214 = scalar_lea.vmem [#allocation9], %s213
        %v216 = vld [vmem:[%s183] sm:$0xff]
        %v217 = vld [vmem:[%s183 + $0x8] sm:$0xff]
        %v218 = vld [vmem:[%s183 + $0x10] sm:$0xff]
        %v219 = vld [vmem:[%s183 + $0x18] sm:$0xff]
        %v220 = vld [vmem:[%s183 + $0x20] sm:$0xff]
        %v221 = vld [vmem:[%s183 + $0x28] sm:$0xff]
        %v222 = vld [vmem:[%s183 + $0x30] sm:$0xff]
        %v223 = vld [vmem:[%s183 + $0x38] sm:$0xff]
        %v224 = vld [vmem:[%s183 + $0x40] sm:$0xff]
        %v225 = vld [vmem:[%s183 + $0x48] sm:$0xff]
        %v226 = vld [vmem:[%s183 + $0x50] sm:$0xff]
        %v227 = vld [vmem:[%s183 + $0x58] sm:$0xff]
        %v228 = vld [vmem:[%s183 + $0x60] sm:$0xff]
        %v229 = vld [vmem:[%s183 + $0x68] sm:$0xff]
        %v230 = vld [vmem:[%s183 + $0x70] sm:$0xff]
        %v231 = vld [vmem:[%s183 + $0x78] sm:$0xff]
        %v232 = vld [vmem:[%s183 + $0x80] sm:$0xff]
        %v233 = vld [vmem:[%s183 + $0x88] sm:$0xff]
        %v234 = vld [vmem:[%s183 + $0x90] sm:$0xff]
        %v235 = vld [vmem:[%s183 + $0x98] sm:$0xff]
        %v236 = vld [vmem:[%s183 + $0xa0] sm:$0xff]
        %v237 = vld [vmem:[%s183 + $0xa8] sm:$0xff]
        %v238 = vld [vmem:[%s183 + $0xb0] sm:$0xff]
        %v239 = vld [vmem:[%s183 + $0xb8] sm:$0xff]
        %v240 = vld [vmem:[%s183 + $0xc0] sm:$0xff]
        %v241 = vld [vmem:[%s183 + $0xc8] sm:$0xff]
        %v242 = vld [vmem:[%s183 + $0xd0] sm:$0xff]
        %v243 = vld [vmem:[%s183 + $0xd8] sm:$0xff]
        %v244 = vld [vmem:[%s183 + $0xe0] sm:$0xff]
        %v245 = vld [vmem:[%s183 + $0xe8] sm:$0xff]
        %v246 = vld [vmem:[%s183 + $0xf0] sm:$0xff]
        %v247 = vld [vmem:[%s183 + $0xf8] sm:$0xff]
        %vm248 = vcmask 27648
        %249 = vst.msk [vmem:[#allocation2] sm:$0xf] %vm248, 0
        %250 = vst.msk [vmem:[#allocation2 + $0x4] sm:$0xf] %vm248, 0
        %vm251 = vcmask 24576
        %252 = vst.msk [vmem:[#allocation2 + $0x8] sm:$0x1] %vm251, 0
        %s253 = scalar_lea.vmem [#allocation2], 204
        %254 = vst.msk [vmem:[%s253] sm:$0xf] %vm248, 0
        %255 = vst.msk [vmem:[%s253 + $0x4] sm:$0xf] %vm248, 0
        %256 = vst.msk [vmem:[%s253 + $0x8] sm:$0x1] %vm251, 0
        %s257 = scalar_lea.vmem [#allocation2], 12
        %vm258 = vcmask 24576
        %vm259 = vsmask.f32 256
        %vm260 = vmand %vm258, %vm259
        %v261 = vld [vmem:[%s257] sm:$0x1]
        %v262 = vsel %vm260, 0, %v261
        %263 = vst [vmem:[%s257] sm:$0x1] %v262
        %v264 = vld [vmem:[%s257 + $0xc] sm:$0x1]
        %v265 = vsel %vm260, 0, %v264
        %266 = vst [vmem:[%s257 + $0xc] sm:$0x1] %v265
        %v267 = vld [vmem:[%s257 + $0x18] sm:$0x1]
        %v268 = vsel %vm260, 0, %v267
        %269 = vst [vmem:[%s257 + $0x18] sm:$0x1] %v268
        %v270 = vld [vmem:[%s257 + $0x24] sm:$0x1]
        %v271 = vsel %vm260, 0, %v270
        %272 = vst [vmem:[%s257 + $0x24] sm:$0x1] %v271
        %v273 = vld [vmem:[%s257 + $0x30] sm:$0x1]
        %v274 = vsel %vm260, 0, %v273
        %275 = vst [vmem:[%s257 + $0x30] sm:$0x1] %v274
        %v276 = vld [vmem:[%s257 + $0x3c] sm:$0x1]
        %v277 = vsel %vm260, 0, %v276
        %278 = vst [vmem:[%s257 + $0x3c] sm:$0x1] %v277
        %v279 = vld [vmem:[%s257 + $0x48] sm:$0x1]
        %v280 = vsel %vm260, 0, %v279
        %281 = vst [vmem:[%s257 + $0x48] sm:$0x1] %v280
        %v282 = vld [vmem:[%s257 + $0x54] sm:$0x1]
        %v283 = vsel %vm260, 0, %v282
        %284 = vst [vmem:[%s257 + $0x54] sm:$0x1] %v283
        %v285 = vld [vmem:[%s257 + $0x60] sm:$0x1]
        %v286 = vsel %vm260, 0, %v285
        %287 = vst [vmem:[%s257 + $0x60] sm:$0x1] %v286
        %v288 = vld [vmem:[%s257 + $0x6c] sm:$0x1]
        %v289 = vsel %vm260, 0, %v288
        %290 = vst [vmem:[%s257 + $0x6c] sm:$0x1] %v289
        %v291 = vld [vmem:[%s257 + $0x78] sm:$0x1]
        %v292 = vsel %vm260, 0, %v291
        %293 = vst [vmem:[%s257 + $0x78] sm:$0x1] %v292
        %v294 = vld [vmem:[%s257 + $0x84] sm:$0x1]
        %v295 = vsel %vm260, 0, %v294
        %296 = vst [vmem:[%s257 + $0x84] sm:$0x1] %v295
        %v297 = vld [vmem:[%s257 + $0x90] sm:$0x1]
        %v298 = vsel %vm260, 0, %v297
        %299 = vst [vmem:[%s257 + $0x90] sm:$0x1] %v298
        %v300 = vld [vmem:[%s257 + $0x9c] sm:$0x1]
        %v301 = vsel %vm260, 0, %v300
        %302 = vst [vmem:[%s257 + $0x9c] sm:$0x1] %v301
        %v303 = vld [vmem:[%s257 + $0xa8] sm:$0x1]
        %v304 = vsel %vm260, 0, %v303
        %305 = vst [vmem:[%s257 + $0xa8] sm:$0x1] %v304
        %v306 = vld [vmem:[%s257 + $0xb4] sm:$0x1]
        %v307 = vsel %vm260, 0, %v306
        %308 = vst [vmem:[%s257 + $0xb4] sm:$0x1] %v307
        %vm309 = vsmask.f32 7938
        %vm310 = vmand %vm258, %vm309
        %v311 = vld [vmem:[%s257 + $0x8] sm:$0x1]
        %v312 = vsel %vm310, 0, %v311
        %313 = vst [vmem:[%s257 + $0x8] sm:$0x1] %v312
        %v314 = vld [vmem:[%s257 + $0x14] sm:$0x1]
        %v315 = vsel %vm310, 0, %v314
        %316 = vst [vmem:[%s257 + $0x14] sm:$0x1] %v315
        %v317 = vld [vmem:[%s257 + $0x20] sm:$0x1]
        %v318 = vsel %vm310, 0, %v317
        %319 = vst [vmem:[%s257 + $0x20] sm:$0x1] %v318
        %v320 = vld [vmem:[%s257 + $0x2c] sm:$0x1]
        %v321 = vsel %vm310, 0, %v320
        %322 = vst [vmem:[%s257 + $0x2c] sm:$0x1] %v321
        %v323 = vld [vmem:[%s257 + $0x38] sm:$0x1]
        %v324 = vsel %vm310, 0, %v323
        %325 = vst [vmem:[%s257 + $0x38] sm:$0x1] %v324
        %v326 = vld [vmem:[%s257 + $0x44] sm:$0x1]
        %v327 = vsel %vm310, 0, %v326
        %328 = vst [vmem:[%s257 + $0x44] sm:$0x1] %v327
        %v329 = vld [vmem:[%s257 + $0x50] sm:$0x1]
        %v330 = vsel %vm310, 0, %v329
        %331 = vst [vmem:[%s257 + $0x50] sm:$0x1] %v330
        %v332 = vld [vmem:[%s257 + $0x5c] sm:$0x1]
        %v333 = vsel %vm310, 0, %v332
        %334 = vst [vmem:[%s257 + $0x5c] sm:$0x1] %v333
        %v335 = vld [vmem:[%s257 + $0x68] sm:$0x1]
        %v336 = vsel %vm310, 0, %v335
        %337 = vst [vmem:[%s257 + $0x68] sm:$0x1] %v336
        %v338 = vld [vmem:[%s257 + $0x74] sm:$0x1]
        %v339 = vsel %vm310, 0, %v338
        %340 = vst [vmem:[%s257 + $0x74] sm:$0x1] %v339
        %v341 = vld [vmem:[%s257 + $0x80] sm:$0x1]
        %v342 = vsel %vm310, 0, %v341
        %343 = vst [vmem:[%s257 + $0x80] sm:$0x1] %v342
        %v344 = vld [vmem:[%s257 + $0x8c] sm:$0x1]
        %v345 = vsel %vm310, 0, %v344
        %346 = vst [vmem:[%s257 + $0x8c] sm:$0x1] %v345
        %v347 = vld [vmem:[%s257 + $0x98] sm:$0x1]
        %v348 = vsel %vm310, 0, %v347
        %349 = vst [vmem:[%s257 + $0x98] sm:$0x1] %v348
        %v350 = vld [vmem:[%s257 + $0xa4] sm:$0x1]
        %v351 = vsel %vm310, 0, %v350
        %352 = vst [vmem:[%s257 + $0xa4] sm:$0x1] %v351
        %v353 = vld [vmem:[%s257 + $0xb0] sm:$0x1]
        %v354 = vsel %vm310, 0, %v353
        %355 = vst [vmem:[%s257 + $0xb0] sm:$0x1] %v354
        %v356 = vld [vmem:[%s257 + $0xbc] sm:$0x1]
        %v357 = vsel %vm310, 0, %v356
        %358 = vst [vmem:[%s257 + $0xbc] sm:$0x1] %v357
        %v359 = vpack.c.bf16 %v217, %v216
        %v360 = vpack.c.bf16 %v219, %v218
        %v361 = vpack.c.bf16 %v221, %v220
        %v362 = vpack.c.bf16 %v223, %v222
        %v363 = vpack.c.bf16 %v225, %v224
        %v364 = vpack.c.bf16 %v227, %v226
        %v365 = vpack.c.bf16 %v229, %v228
        %v366 = vpack.c.bf16 %v231, %v230
        %v367 = vpack.c.bf16 %v233, %v232
        %v368 = vpack.c.bf16 %v235, %v234
        %v369 = vpack.c.bf16 %v237, %v236
        %v370 = vpack.c.bf16 %v239, %v238
        %v371 = vpack.c.bf16 %v241, %v240
        %v372 = vpack.c.bf16 %v243, %v242
        %v373 = vpack.c.bf16 %v245, %v244
        %v374 = vpack.c.bf16 %v247, %v246
        %v391 = vunpack.c.l.b16 %v359
        %v392 = vunpack.c.h.b16 %v359
        %v393 = vunpack.c.l.b16 %v360
        %v394 = vunpack.c.h.b16 %v360
        %v395 = vunpack.c.l.b16 %v361
        %v396 = vunpack.c.h.b16 %v361
        %v397 = vunpack.c.l.b16 %v362
        %v398 = vunpack.c.h.b16 %v362
        %v399 = vunpack.c.l.b16 %v363
        %v400 = vunpack.c.h.b16 %v363
        %v401 = vunpack.c.l.b16 %v364
        %v402 = vunpack.c.h.b16 %v364
        %v403 = vunpack.c.l.b16 %v365
        %v404 = vunpack.c.h.b16 %v365
        %v405 = vunpack.c.l.b16 %v366
        %v406 = vunpack.c.h.b16 %v366
        %v407 = vunpack.c.l.b16 %v367
        %v408 = vunpack.c.h.b16 %v367
        %v409 = vunpack.c.l.b16 %v368
        %v410 = vunpack.c.h.b16 %v368
        %v411 = vunpack.c.l.b16 %v369
        %v412 = vunpack.c.h.b16 %v369
        %v413 = vunpack.c.l.b16 %v370
        %v414 = vunpack.c.h.b16 %v370
        %v415 = vunpack.c.l.b16 %v371
        %v416 = vunpack.c.h.b16 %v371
        %v417 = vunpack.c.l.b16 %v372
        %v418 = vunpack.c.h.b16 %v372
        %v419 = vunpack.c.l.b16 %v373
        %v420 = vunpack.c.h.b16 %v373
        %v421 = vunpack.c.l.b16 %v374
        %v422 = vunpack.c.h.b16 %v374
        %v423 = vpack.c.b16 %v391, %v391
        %v424 = vpack.c.b16 %v392, %v392
        %v425 = vpack.c.b16 %v393, %v393
        %v426 = vpack.c.b16 %v394, %v394
        %v427 = vpack.c.b16 %v395, %v395
        %v428 = vpack.c.b16 %v396, %v396
        %v429 = vpack.c.b16 %v397, %v397
        %v430 = vpack.c.b16 %v398, %v398
        %v431 = vpack.c.b16 %v399, %v399
        %v432 = vpack.c.b16 %v400, %v400
        %v433 = vpack.c.b16 %v401, %v401
        %v434 = vpack.c.b16 %v402, %v402
        %v435 = vpack.c.b16 %v403, %v403
        %v436 = vpack.c.b16 %v404, %v404
        %v437 = vpack.c.b16 %v405, %v405
        %v438 = vpack.c.b16 %v406, %v406
        %v439 = vpack.c.b16 %v407, %v407
        %v440 = vpack.c.b16 %v408, %v408
        %v441 = vpack.c.b16 %v409, %v409
        %v442 = vpack.c.b16 %v410, %v410
        %v443 = vpack.c.b16 %v411, %v411
        %v444 = vpack.c.b16 %v412, %v412
        %v445 = vpack.c.b16 %v413, %v413
        %v446 = vpack.c.b16 %v414, %v414
        %v447 = vpack.c.b16 %v415, %v415
        %v448 = vpack.c.b16 %v416, %v416
        %v449 = vpack.c.b16 %v417, %v417
        %v450 = vpack.c.b16 %v418, %v418
        %v451 = vpack.c.b16 %v419, %v419
        %v452 = vpack.c.b16 %v420, %v420
        %v453 = vpack.c.b16 %v421, %v421
        %v454 = vpack.c.b16 %v422, %v422
        %vm455 = vsmask.f32 4368
        %vm456 = vmor %vm259, %vm455
        %v458 = vshrl.u32 %v423, 16
        %v460 = vrot.slane %v458, 7
        %v461 = vshll.u32 %v423, 16
        %v463 = vor.u32 %v460, %v461
        %v464 = vrot.slane %v460, 4
        %v466 = vshrl.u32 %v424, 16
        %v468 = vrot.slane %v466, 7
        %v469 = vshll.u32 %v424, 16
        %v471 = vor.u32 %v468, %v469
        %v472 = vsel %vm456, %v464, %v471
        %v473 = vrot.slane %v468, 4
        %v475 = vshrl.u32 %v425, 16
        %v477 = vrot.slane %v475, 7
        %v478 = vshll.u32 %v425, 16
        %v480 = vor.u32 %v477, %v478
        %v481 = vrot.slane %v477, 4
        %v483 = vshrl.u32 %v426, 16
        %v485 = vrot.slane %v483, 7
        %v486 = vshll.u32 %v426, 16
        %v488 = vor.u32 %v485, %v486
        %v489 = vsel %vm456, %v481, %v488
        %v490 = vrot.slane %v485, 4
        %v492 = vshrl.u32 %v427, 16
        %v494 = vrot.slane %v492, 7
        %v495 = vshll.u32 %v427, 16
        %v497 = vor.u32 %v494, %v495
        %v498 = vrot.slane %v494, 4
        %v500 = vshrl.u32 %v428, 16
        %v502 = vrot.slane %v500, 7
        %v503 = vshll.u32 %v428, 16
        %v505 = vor.u32 %v502, %v503
        %v506 = vsel %vm456, %v498, %v505
        %v507 = vrot.slane %v502, 4
        %v509 = vshrl.u32 %v429, 16
        %v511 = vrot.slane %v509, 7
        %v512 = vshll.u32 %v429, 16
        %v514 = vor.u32 %v511, %v512
        %v515 = vrot.slane %v511, 4
        %v517 = vshrl.u32 %v430, 16
        %v519 = vrot.slane %v517, 7
        %v520 = vshll.u32 %v430, 16
        %v522 = vor.u32 %v519, %v520
        %v523 = vsel %vm456, %v515, %v522
        %v524 = vrot.slane %v519, 4
        %v526 = vshrl.u32 %v431, 16
        %v528 = vrot.slane %v526, 7
        %v529 = vshll.u32 %v431, 16
        %v531 = vor.u32 %v528, %v529
        %v532 = vrot.slane %v528, 4
        %v534 = vshrl.u32 %v432, 16
        %v536 = vrot.slane %v534, 7
        %v537 = vshll.u32 %v432, 16
        %v539 = vor.u32 %v536, %v537
        %v540 = vsel %vm456, %v532, %v539
        %v541 = vrot.slane %v536, 4
        %v543 = vshrl.u32 %v433, 16
        %v545 = vrot.slane %v543, 7
        %v546 = vshll.u32 %v433, 16
        %v548 = vor.u32 %v545, %v546
        %v549 = vrot.slane %v545, 4
        %v551 = vshrl.u32 %v434, 16
        %v553 = vrot.slane %v551, 7
        %v554 = vshll.u32 %v434, 16
        %v556 = vor.u32 %v553, %v554
        %v557 = vsel %vm456, %v549, %v556
        %v558 = vrot.slane %v553, 4
        %v560 = vshrl.u32 %v435, 16
        %v562 = vrot.slane %v560, 7
        %v563 = vshll.u32 %v435, 16
        %v565 = vor.u32 %v562, %v563
        %v566 = vrot.slane %v562, 4
        %v568 = vshrl.u32 %v436, 16
        %v570 = vrot.slane %v568, 7
        %v571 = vshll.u32 %v436, 16
        %v573 = vor.u32 %v570, %v571
        %v574 = vsel %vm456, %v566, %v573
        %v575 = vrot.slane %v570, 4
        %v577 = vshrl.u32 %v437, 16
        %v579 = vrot.slane %v577, 7
        %v580 = vshll.u32 %v437, 16
        %v582 = vor.u32 %v579, %v580
        %v583 = vrot.slane %v579, 4
        %v585 = vshrl.u32 %v438, 16
        %v587 = vrot.slane %v585, 7
        %v588 = vshll.u32 %v438, 16
        %v590 = vor.u32 %v587, %v588
        %v591 = vsel %vm456, %v583, %v590
        %v592 = vrot.slane %v587, 4
        %v594 = vshrl.u32 %v439, 16
        %v596 = vrot.slane %v594, 7
        %v597 = vshll.u32 %v439, 16
        %v599 = vor.u32 %v596, %v597
        %v600 = vrot.slane %v596, 4
        %v602 = vshrl.u32 %v440, 16
        %v604 = vrot.slane %v602, 7
        %v605 = vshll.u32 %v440, 16
        %v607 = vor.u32 %v604, %v605
        %v608 = vsel %vm456, %v600, %v607
        %v609 = vrot.slane %v604, 4
        %v611 = vshrl.u32 %v441, 16
        %v613 = vrot.slane %v611, 7
        %v614 = vshll.u32 %v441, 16
        %v616 = vor.u32 %v613, %v614
        %v617 = vrot.slane %v613, 4
        %v619 = vshrl.u32 %v442, 16
        %v621 = vrot.slane %v619, 7
        %v622 = vshll.u32 %v442, 16
        %v624 = vor.u32 %v621, %v622
        %v625 = vsel %vm456, %v617, %v624
        %v626 = vrot.slane %v621, 4
        %v628 = vshrl.u32 %v443, 16
        %v630 = vrot.slane %v628, 7
        %v631 = vshll.u32 %v443, 16
        %v633 = vor.u32 %v630, %v631
        %v634 = vrot.slane %v630, 4
        %v636 = vshrl.u32 %v444, 16
        %v638 = vrot.slane %v636, 7
        %v639 = vshll.u32 %v444, 16
        %v641 = vor.u32 %v638, %v639
        %v642 = vsel %vm456, %v634, %v641
        %v643 = vrot.slane %v638, 4
        %v645 = vshrl.u32 %v445, 16
        %v647 = vrot.slane %v645, 7
        %v648 = vshll.u32 %v445, 16
        %v650 = vor.u32 %v647, %v648
        %v651 = vrot.slane %v647, 4
        %v653 = vshrl.u32 %v446, 16
        %v655 = vrot.slane %v653, 7
        %v656 = vshll.u32 %v446, 16
        %v658 = vor.u32 %v655, %v656
        %v659 = vsel %vm456, %v651, %v658
        %v660 = vrot.slane %v655, 4
        %v662 = vshrl.u32 %v447, 16
        %v664 = vrot.slane %v662, 7
        %v665 = vshll.u32 %v447, 16
        %v667 = vor.u32 %v664, %v665
        %v668 = vrot.slane %v664, 4
        %v670 = vshrl.u32 %v448, 16
        %v672 = vrot.slane %v670, 7
        %v673 = vshll.u32 %v448, 16
        %v675 = vor.u32 %v672, %v673
        %v676 = vsel %vm456, %v668, %v675
        %v677 = vrot.slane %v672, 4
        %v679 = vshrl.u32 %v449, 16
        %v681 = vrot.slane %v679, 7
        %v682 = vshll.u32 %v449, 16
        %v684 = vor.u32 %v681, %v682
        %v685 = vrot.slane %v681, 4
        %v687 = vshrl.u32 %v450, 16
        %v689 = vrot.slane %v687, 7
        %v690 = vshll.u32 %v450, 16
        %v692 = vor.u32 %v689, %v690
        %v693 = vsel %vm456, %v685, %v692
        %v694 = vrot.slane %v689, 4
        %v696 = vshrl.u32 %v451, 16
        %v698 = vrot.slane %v696, 7
        %v699 = vshll.u32 %v451, 16
        %v701 = vor.u32 %v698, %v699
        %v702 = vrot.slane %v698, 4
        %v704 = vshrl.u32 %v452, 16
        %v706 = vrot.slane %v704, 7
        %v707 = vshll.u32 %v452, 16
        %v709 = vor.u32 %v706, %v707
        %v710 = vsel %vm456, %v702, %v709
        %v711 = vrot.slane %v706, 4
        %v713 = vshrl.u32 %v453, 16
        %v715 = vrot.slane %v713, 7
        %v716 = vshll.u32 %v453, 16
        %v718 = vor.u32 %v715, %v716
        %v719 = vrot.slane %v715, 4
        %v721 = vshrl.u32 %v454, 16
        %v723 = vrot.slane %v721, 7
        %v724 = vshll.u32 %v454, 16
        %v726 = vor.u32 %v723, %v724
        %v727 = vsel %vm456, %v719, %v726
        %v728 = vrot.slane %v723, 4
        %vm777 = vcmask 27648
        %vm778 = vmand %vm777, %vm309
        %v779 = vld [vmem:[%s257] sm:$0xf]
        %v780 = vsel %vm778, %v463, %v779
        %781 = vst [vmem:[%s257] sm:$0xf] %v780
        %782 = vst.msk [vmem:[%s257 + $0x4] sm:$0xf] %vm248, %v472
        %v783 = vld [vmem:[%s257 + $0x8] sm:$0x1]
        %v784 = vsel %vm260, %v473, %v783
        %785 = vst [vmem:[%s257 + $0x8] sm:$0x1] %v784
        %v786 = vld [vmem:[%s257 + $0xc] sm:$0xf]
        %v787 = vsel %vm778, %v480, %v786
        %788 = vst [vmem:[%s257 + $0xc] sm:$0xf] %v787
        %789 = vst.msk [vmem:[%s257 + $0x10] sm:$0xf] %vm248, %v489
        %v790 = vld [vmem:[%s257 + $0x14] sm:$0x1]
        %v791 = vsel %vm260, %v490, %v790
        %792 = vst [vmem:[%s257 + $0x14] sm:$0x1] %v791
        %v793 = vld [vmem:[%s257 + $0x18] sm:$0xf]
        %v794 = vsel %vm778, %v497, %v793
        %795 = vst [vmem:[%s257 + $0x18] sm:$0xf] %v794
        %796 = vst.msk [vmem:[%s257 + $0x1c] sm:$0xf] %vm248, %v506
        %v797 = vld [vmem:[%s257 + $0x20] sm:$0x1]
        %v798 = vsel %vm260, %v507, %v797
        %799 = vst [vmem:[%s257 + $0x20] sm:$0x1] %v798
        %v800 = vld [vmem:[%s257 + $0x24] sm:$0xf]
        %v801 = vsel %vm778, %v514, %v800
        %802 = vst [vmem:[%s257 + $0x24] sm:$0xf] %v801
        %803 = vst.msk [vmem:[%s257 + $0x28] sm:$0xf] %vm248, %v523
        %v804 = vld [vmem:[%s257 + $0x2c] sm:$0x1]
        %v805 = vsel %vm260, %v524, %v804
        %806 = vst [vmem:[%s257 + $0x2c] sm:$0x1] %v805
        %v807 = vld [vmem:[%s257 + $0x30] sm:$0xf]
        %v808 = vsel %vm778, %v531, %v807
        %809 = vst [vmem:[%s257 + $0x30] sm:$0xf] %v808
        %810 = vst.msk [vmem:[%s257 + $0x34] sm:$0xf] %vm248, %v540
        %v811 = vld [vmem:[%s257 + $0x38] sm:$0x1]
        %v812 = vsel %vm260, %v541, %v811
        %813 = vst [vmem:[%s257 + $0x38] sm:$0x1] %v812
        %v814 = vld [vmem:[%s257 + $0x3c] sm:$0xf]
        %v815 = vsel %vm778, %v548, %v814
        %816 = vst [vmem:[%s257 + $0x3c] sm:$0xf] %v815
        %817 = vst.msk [vmem:[%s257 + $0x40] sm:$0xf] %vm248, %v557
        %v818 = vld [vmem:[%s257 + $0x44] sm:$0x1]
        %v819 = vsel %vm260, %v558, %v818
        %820 = vst [vmem:[%s257 + $0x44] sm:$0x1] %v819
        %v821 = vld [vmem:[%s257 + $0x48] sm:$0xf]
        %v822 = vsel %vm778, %v565, %v821
        %823 = vst [vmem:[%s257 + $0x48] sm:$0xf] %v822
        %824 = vst.msk [vmem:[%s257 + $0x4c] sm:$0xf] %vm248, %v574
        %v825 = vld [vmem:[%s257 + $0x50] sm:$0x1]
        %v826 = vsel %vm260, %v575, %v825
        %827 = vst [vmem:[%s257 + $0x50] sm:$0x1] %v826
        %v828 = vld [vmem:[%s257 + $0x54] sm:$0xf]
        %v829 = vsel %vm778, %v582, %v828
        %830 = vst [vmem:[%s257 + $0x54] sm:$0xf] %v829
        %831 = vst.msk [vmem:[%s257 + $0x58] sm:$0xf] %vm248, %v591
        %v832 = vld [vmem:[%s257 + $0x5c] sm:$0x1]
        %v833 = vsel %vm260, %v592, %v832
        %834 = vst [vmem:[%s257 + $0x5c] sm:$0x1] %v833
        %v835 = vld [vmem:[%s257 + $0x60] sm:$0xf]
        %v836 = vsel %vm778, %v599, %v835
        %837 = vst [vmem:[%s257 + $0x60] sm:$0xf] %v836
        %838 = vst.msk [vmem:[%s257 + $0x64] sm:$0xf] %vm248, %v608
        %v839 = vld [vmem:[%s257 + $0x68] sm:$0x1]
        %v840 = vsel %vm260, %v609, %v839
        %841 = vst [vmem:[%s257 + $0x68] sm:$0x1] %v840
        %v842 = vld [vmem:[%s257 + $0x6c] sm:$0xf]
        %v843 = vsel %vm778, %v616, %v842
        %844 = vst [vmem:[%s257 + $0x6c] sm:$0xf] %v843
        %845 = vst.msk [vmem:[%s257 + $0x70] sm:$0xf] %vm248, %v625
        %v846 = vld [vmem:[%s257 + $0x74] sm:$0x1]
        %v847 = vsel %vm260, %v626, %v846
        %848 = vst [vmem:[%s257 + $0x74] sm:$0x1] %v847
        %v849 = vld [vmem:[%s257 + $0x78] sm:$0xf]
        %v850 = vsel %vm778, %v633, %v849
        %851 = vst [vmem:[%s257 + $0x78] sm:$0xf] %v850
        %852 = vst.msk [vmem:[%s257 + $0x7c] sm:$0xf] %vm248, %v642
        %v853 = vld [vmem:[%s257 + $0x80] sm:$0x1]
        %v854 = vsel %vm260, %v643, %v853
        %855 = vst [vmem:[%s257 + $0x80] sm:$0x1] %v854
        %v856 = vld [vmem:[%s257 + $0x84] sm:$0xf]
        %v857 = vsel %vm778, %v650, %v856
        %858 = vst [vmem:[%s257 + $0x84] sm:$0xf] %v857
        %859 = vst.msk [vmem:[%s257 + $0x88] sm:$0xf] %vm248, %v659
        %v860 = vld [vmem:[%s257 + $0x8c] sm:$0x1]
        %v861 = vsel %vm260, %v660, %v860
        %862 = vst [vmem:[%s257 + $0x8c] sm:$0x1] %v861
        %v863 = vld [vmem:[%s257 + $0x90] sm:$0xf]
        %v864 = vsel %vm778, %v667, %v863
        %865 = vst [vmem:[%s257 + $0x90] sm:$0xf] %v864
        %866 = vst.msk [vmem:[%s257 + $0x94] sm:$0xf] %vm248, %v676
        %v867 = vld [vmem:[%s257 + $0x98] sm:$0x1]
        %v868 = vsel %vm260, %v677, %v867
        %869 = vst [vmem:[%s257 + $0x98] sm:$0x1] %v868
        %v870 = vld [vmem:[%s257 + $0x9c] sm:$0xf]
        %v871 = vsel %vm778, %v684, %v870
        %872 = vst [vmem:[%s257 + $0x9c] sm:$0xf] %v871
        %873 = vst.msk [vmem:[%s257 + $0xa0] sm:$0xf] %vm248, %v693
        %v874 = vld [vmem:[%s257 + $0xa4] sm:$0x1]
        %v875 = vsel %vm260, %v694, %v874
        %876 = vst [vmem:[%s257 + $0xa4] sm:$0x1] %v875
        %v877 = vld [vmem:[%s257 + $0xa8] sm:$0xf]
        %v878 = vsel %vm778, %v701, %v877
        %879 = vst [vmem:[%s257 + $0xa8] sm:$0xf] %v878
        %880 = vst.msk [vmem:[%s257 + $0xac] sm:$0xf] %vm248, %v710
        %v881 = vld [vmem:[%s257 + $0xb0] sm:$0x1]
        %v882 = vsel %vm260, %v711, %v881
        %883 = vst [vmem:[%s257 + $0xb0] sm:$0x1] %v882
        %v884 = vld [vmem:[%s257 + $0xb4] sm:$0xf]
        %v885 = vsel %vm778, %v718, %v884
        %886 = vst [vmem:[%s257 + $0xb4] sm:$0xf] %v885
        %887 = vst.msk [vmem:[%s257 + $0xb8] sm:$0xf] %vm248, %v727
        %v888 = vld [vmem:[%s257 + $0xbc] sm:$0x1]
        %v889 = vsel %vm260, %v728, %v888
        %890 = vst [vmem:[%s257 + $0xbc] sm:$0x1] %v889
        %v891 = vld [vmem:[#allocation2] sm:$0xf]
        %v892 = vld [vmem:[#allocation2 + $0x4] sm:$0xf]
        %v893 = vld [vmem:[#allocation2 + $0xc] sm:$0xf]
        %v894 = vld [vmem:[#allocation2 + $0x10] sm:$0xf]
        %v895 = vld [vmem:[#allocation2 + $0x18] sm:$0xf]
        %v896 = vld [vmem:[#allocation2 + $0x1c] sm:$0xf]
        %v897 = vld [vmem:[#allocation2 + $0x24] sm:$0xf]
        %v898 = vld [vmem:[#allocation2 + $0x28] sm:$0xf]
        %v899 = vld [vmem:[#allocation2 + $0x30] sm:$0xf]
        %v900 = vld [vmem:[#allocation2 + $0x34] sm:$0xf]
        %v901 = vld [vmem:[#allocation2 + $0x3c] sm:$0xf]
        %v902 = vld [vmem:[#allocation2 + $0x40] sm:$0xf]
        %v903 = vld [vmem:[#allocation2 + $0x48] sm:$0xf]
        %v904 = vld [vmem:[#allocation2 + $0x4c] sm:$0xf]
        %v905 = vld [vmem:[#allocation2 + $0x54] sm:$0xf]
        %v906 = vld [vmem:[#allocation2 + $0x58] sm:$0xf]
        %v907 = vld [vmem:[#allocation2 + $0x60] sm:$0xf]
        %v908 = vld [vmem:[#allocation2 + $0x64] sm:$0xf]
        %v909 = vld [vmem:[#allocation2 + $0x6c] sm:$0xf]
        %v910 = vld [vmem:[#allocation2 + $0x70] sm:$0xf]
        %v911 = vld [vmem:[#allocation2 + $0x78] sm:$0xf]
        %v912 = vld [vmem:[#allocation2 + $0x7c] sm:$0xf]
        %v913 = vld [vmem:[#allocation2 + $0x84] sm:$0xf]
        %v914 = vld [vmem:[#allocation2 + $0x88] sm:$0xf]
        %v915 = vld [vmem:[#allocation2 + $0x90] sm:$0xf]
        %v916 = vld [vmem:[#allocation2 + $0x94] sm:$0xf]
        %v917 = vld [vmem:[#allocation2 + $0x9c] sm:$0xf]
        %v918 = vld [vmem:[#allocation2 + $0xa0] sm:$0xf]
        %v919 = vld [vmem:[#allocation2 + $0xa8] sm:$0xf]
        %v920 = vld [vmem:[#allocation2 + $0xac] sm:$0xf]
        %v921 = vld [vmem:[#allocation2 + $0xb4] sm:$0xf]
        %v922 = vld [vmem:[#allocation2 + $0xb8] sm:$0xf]
        %v923 = vld [vmem:[#allocation2 + $0x8] sm:$0x1]
        %v924 = vld [vmem:[#allocation2 + $0x14] sm:$0x1]
        %v925 = vld [vmem:[#allocation2 + $0x20] sm:$0x1]
        %v926 = vld [vmem:[#allocation2 + $0x2c] sm:$0x1]
        %v927 = vld [vmem:[#allocation2 + $0x38] sm:$0x1]
        %v928 = vld [vmem:[#allocation2 + $0x44] sm:$0x1]
        %v929 = vld [vmem:[#allocation2 + $0x50] sm:$0x1]
        %v930 = vld [vmem:[#allocation2 + $0x5c] sm:$0x1]
        %v931 = vld [vmem:[#allocation2 + $0x68] sm:$0x1]
        %v932 = vld [vmem:[#allocation2 + $0x74] sm:$0x1]
        %v933 = vld [vmem:[#allocation2 + $0x80] sm:$0x1]
        %v934 = vld [vmem:[#allocation2 + $0x8c] sm:$0x1]
        %v935 = vld [vmem:[#allocation2 + $0x98] sm:$0x1]
        %v936 = vld [vmem:[#allocation2 + $0xa4] sm:$0x1]
        %v937 = vld [vmem:[#allocation2 + $0xb0] sm:$0x1]
        %v938 = vld [vmem:[#allocation2 + $0xbc] sm:$0x1]
        %v939 = vld [vmem:[#allocation2] sm:$0xe]
        %v940 = vld [vmem:[#allocation2 + $0xc] sm:$0xe]
        %v941 = vld [vmem:[#allocation2 + $0x18] sm:$0xe]
        %v942 = vld [vmem:[#allocation2 + $0x24] sm:$0xe]
        %v943 = vld [vmem:[#allocation2 + $0x30] sm:$0xe]
        %v944 = vld [vmem:[#allocation2 + $0x3c] sm:$0xe]
        %v945 = vld [vmem:[#allocation2 + $0x48] sm:$0xe]
        %v946 = vld [vmem:[#allocation2 + $0x54] sm:$0xe]
        %v947 = vld [vmem:[#allocation2 + $0x60] sm:$0xe]
        %v948 = vld [vmem:[#allocation2 + $0x6c] sm:$0xe]
        %v949 = vld [vmem:[#allocation2 + $0x78] sm:$0xe]
        %v950 = vld [vmem:[#allocation2 + $0x84] sm:$0xe]
        %v951 = vld [vmem:[#allocation2 + $0x90] sm:$0xe]
        %v952 = vld [vmem:[#allocation2 + $0x9c] sm:$0xe]
        %v953 = vld [vmem:[#allocation2 + $0xa8] sm:$0xe]
        %v954 = vld [vmem:[#allocation2 + $0xb4] sm:$0xe]
        %v987 = vunpack.c.l.b16 %v891
        %v988 = vunpack.c.l.b16 %v892
        %v989 = vunpack.c.l.b16 %v893
        %v990 = vunpack.c.l.b16 %v894
        %v991 = vunpack.c.l.b16 %v895
        %v992 = vunpack.c.l.b16 %v896
        %v993 = vunpack.c.l.b16 %v897
        %v994 = vunpack.c.l.b16 %v898
        %v995 = vunpack.c.l.b16 %v899
        %v996 = vunpack.c.l.b16 %v900
        %v997 = vunpack.c.l.b16 %v901
        %v998 = vunpack.c.l.b16 %v902
        %v999 = vunpack.c.l.b16 %v903
        %v1000 = vunpack.c.l.b16 %v904
        %v1001 = vunpack.c.l.b16 %v905
        %v1002 = vunpack.c.l.b16 %v906
        %v1003 = vunpack.c.l.b16 %v907
        %v1004 = vunpack.c.l.b16 %v908
        %v1005 = vunpack.c.l.b16 %v909
        %v1006 = vunpack.c.l.b16 %v910
        %v1007 = vunpack.c.l.b16 %v911
        %v1008 = vunpack.c.l.b16 %v912
        %v1009 = vunpack.c.l.b16 %v913
        %v1010 = vunpack.c.l.b16 %v914
        %v1011 = vunpack.c.l.b16 %v915
        %v1012 = vunpack.c.l.b16 %v916
        %v1013 = vunpack.c.l.b16 %v917
        %v1014 = vunpack.c.l.b16 %v918
        %v1015 = vunpack.c.l.b16 %v919
        %v1016 = vunpack.c.l.b16 %v920
        %v1017 = vunpack.c.l.b16 %v921
        %v1018 = vunpack.c.l.b16 %v922
        %v1019 = vpack.c.b16 %v988, %v987
        %v1020 = vpack.c.b16 %v990, %v989
        %v1021 = vpack.c.b16 %v992, %v991
        %v1022 = vpack.c.b16 %v994, %v993
        %v1023 = vpack.c.b16 %v996, %v995
        %v1024 = vpack.c.b16 %v998, %v997
        %v1025 = vpack.c.b16 %v1000, %v999
        %v1026 = vpack.c.b16 %v1002, %v1001
        %v1027 = vpack.c.b16 %v1004, %v1003
        %v1028 = vpack.c.b16 %v1006, %v1005
        %v1029 = vpack.c.b16 %v1008, %v1007
        %v1030 = vpack.c.b16 %v1010, %v1009
        %v1031 = vpack.c.b16 %v1012, %v1011
        %v1032 = vpack.c.b16 %v1014, %v1013
        %v1033 = vpack.c.b16 %v1016, %v1015
        %v1034 = vpack.c.b16 %v1018, %v1017
        %v1051 = vunpack.c.l.b16 %v923
        %v1052 = vunpack.c.l.b16 %v924
        %v1053 = vunpack.c.l.b16 %v925
        %v1054 = vunpack.c.l.b16 %v926
        %v1055 = vunpack.c.l.b16 %v927
        %v1056 = vunpack.c.l.b16 %v928
        %v1057 = vunpack.c.l.b16 %v929
        %v1058 = vunpack.c.l.b16 %v930
        %v1059 = vunpack.c.l.b16 %v931
        %v1060 = vunpack.c.l.b16 %v932
        %v1061 = vunpack.c.l.b16 %v933
        %v1062 = vunpack.c.l.b16 %v934
        %v1063 = vunpack.c.l.b16 %v935
        %v1064 = vunpack.c.l.b16 %v936
        %v1065 = vunpack.c.l.b16 %v937
        %v1066 = vunpack.c.l.b16 %v938
        %v1067 = vpack.c.b16 %v1051, %v1051
        %v1068 = vpack.c.b16 %v1052, %v1052
        %v1069 = vpack.c.b16 %v1053, %v1053
        %v1070 = vpack.c.b16 %v1054, %v1054
        %v1071 = vpack.c.b16 %v1055, %v1055
        %v1072 = vpack.c.b16 %v1056, %v1056
        %v1073 = vpack.c.b16 %v1057, %v1057
        %v1074 = vpack.c.b16 %v1058, %v1058
        %v1075 = vpack.c.b16 %v1059, %v1059
        %v1076 = vpack.c.b16 %v1060, %v1060
        %v1077 = vpack.c.b16 %v1061, %v1061
        %v1078 = vpack.c.b16 %v1062, %v1062
        %v1079 = vpack.c.b16 %v1063, %v1063
        %v1080 = vpack.c.b16 %v1064, %v1064
        %v1081 = vpack.c.b16 %v1065, %v1065
        %v1082 = vpack.c.b16 %v1066, %v1066
        %vm1083 = vsmask.f32 7424
        %v1085 = vshrl.u32 %v1019, 16
        %v1087 = vshll.u32 %v1019, 16
        %v1089 = vrot.slane %v1087, 1
        %v1090 = vor.u32 %v1085, %v1089
        %v1092 = vshll.u32 %v1067, 16
        %v1094 = vrot.slane %v1092, 1
        %v1095 = vsel %vm1083, %v1090, %v1094
        %v1097 = vshrl.u32 %v1020, 16
        %v1099 = vshll.u32 %v1020, 16
        %v1101 = vrot.slane %v1099, 1
        %v1102 = vor.u32 %v1097, %v1101
        %v1104 = vshll.u32 %v1068, 16
        %v1106 = vrot.slane %v1104, 1
        %v1107 = vsel %vm1083, %v1102, %v1106
        %v1109 = vshrl.u32 %v1021, 16
        %v1111 = vshll.u32 %v1021, 16
        %v1113 = vrot.slane %v1111, 1
        %v1114 = vor.u32 %v1109, %v1113
        %v1116 = vshll.u32 %v1069, 16
        %v1118 = vrot.slane %v1116, 1
        %v1119 = vsel %vm1083, %v1114, %v1118
        %v1121 = vshrl.u32 %v1022, 16
        %v1123 = vshll.u32 %v1022, 16
        %v1125 = vrot.slane %v1123, 1
        %v1126 = vor.u32 %v1121, %v1125
        %v1128 = vshll.u32 %v1070, 16
        %v1130 = vrot.slane %v1128, 1
        %v1131 = vsel %vm1083, %v1126, %v1130
        %v1133 = vshrl.u32 %v1023, 16
        %v1135 = vshll.u32 %v1023, 16
        %v1137 = vrot.slane %v1135, 1
        %v1138 = vor.u32 %v1133, %v1137
        %v1140 = vshll.u32 %v1071, 16
        %v1142 = vrot.slane %v1140, 1
        %v1143 = vsel %vm1083, %v1138, %v1142
        %v1145 = vshrl.u32 %v1024, 16
        %v1147 = vshll.u32 %v1024, 16
        %v1149 = vrot.slane %v1147, 1
        %v1150 = vor.u32 %v1145, %v1149
        %v1152 = vshll.u32 %v1072, 16
        %v1154 = vrot.slane %v1152, 1
        %v1155 = vsel %vm1083, %v1150, %v1154
        %v1157 = vshrl.u32 %v1025, 16
        %v1159 = vshll.u32 %v1025, 16
        %v1161 = vrot.slane %v1159, 1
        %v1162 = vor.u32 %v1157, %v1161
        %v1164 = vshll.u32 %v1073, 16
        %v1166 = vrot.slane %v1164, 1
        %v1167 = vsel %vm1083, %v1162, %v1166
        %v1169 = vshrl.u32 %v1026, 16
        %v1171 = vshll.u32 %v1026, 16
        %v1173 = vrot.slane %v1171, 1
        %v1174 = vor.u32 %v1169, %v1173
        %v1176 = vshll.u32 %v1074, 16
        %v1178 = vrot.slane %v1176, 1
        %v1179 = vsel %vm1083, %v1174, %v1178
        %v1181 = vshrl.u32 %v1027, 16
        %v1183 = vshll.u32 %v1027, 16
        %v1185 = vrot.slane %v1183, 1
        %v1186 = vor.u32 %v1181, %v1185
        %v1188 = vshll.u32 %v1075, 16
        %v1190 = vrot.slane %v1188, 1
        %v1191 = vsel %vm1083, %v1186, %v1190
        %v1193 = vshrl.u32 %v1028, 16
        %v1195 = vshll.u32 %v1028, 16
        %v1197 = vrot.slane %v1195, 1
        %v1198 = vor.u32 %v1193, %v1197
        %v1200 = vshll.u32 %v1076, 16
        %v1202 = vrot.slane %v1200, 1
        %v1203 = vsel %vm1083, %v1198, %v1202
        %v1205 = vshrl.u32 %v1029, 16
        %v1207 = vshll.u32 %v1029, 16
        %v1209 = vrot.slane %v1207, 1
        %v1210 = vor.u32 %v1205, %v1209
        %v1212 = vshll.u32 %v1077, 16
        %v1214 = vrot.slane %v1212, 1
        %v1215 = vsel %vm1083, %v1210, %v1214
        %v1217 = vshrl.u32 %v1030, 16
        %v1219 = vshll.u32 %v1030, 16
        %v1221 = vrot.slane %v1219, 1
        %v1222 = vor.u32 %v1217, %v1221
        %v1224 = vshll.u32 %v1078, 16
        %v1226 = vrot.slane %v1224, 1
        %v1227 = vsel %vm1083, %v1222, %v1226
        %v1229 = vshrl.u32 %v1031, 16
        %v1231 = vshll.u32 %v1031, 16
        %v1233 = vrot.slane %v1231, 1
        %v1234 = vor.u32 %v1229, %v1233
        %v1236 = vshll.u32 %v1079, 16
        %v1238 = vrot.slane %v1236, 1
        %v1239 = vsel %vm1083, %v1234, %v1238
        %v1241 = vshrl.u32 %v1032, 16
        %v1243 = vshll.u32 %v1032, 16
        %v1245 = vrot.slane %v1243, 1
        %v1246 = vor.u32 %v1241, %v1245
        %v1248 = vshll.u32 %v1080, 16
        %v1250 = vrot.slane %v1248, 1
        %v1251 = vsel %vm1083, %v1246, %v1250
        %v1253 = vshrl.u32 %v1033, 16
        %v1255 = vshll.u32 %v1033, 16
        %v1257 = vrot.slane %v1255, 1
        %v1258 = vor.u32 %v1253, %v1257
        %v1260 = vshll.u32 %v1081, 16
        %v1262 = vrot.slane %v1260, 1
        %v1263 = vsel %vm1083, %v1258, %v1262
        %v1265 = vshrl.u32 %v1034, 16
        %v1267 = vshll.u32 %v1034, 16
        %v1269 = vrot.slane %v1267, 1
        %v1270 = vor.u32 %v1265, %v1269
        %v1272 = vshll.u32 %v1082, 16
        %v1274 = vrot.slane %v1272, 1
        %v1275 = vsel %vm1083, %v1270, %v1274
        %1276 = vrot.lane.b32.xlu0 %v1095, 4
        %v1277 = vpop.permute.xlu0 %1276
        %1278 = vrot.lane.b32.xlu0 %v1107, 4
        %v1279 = vpop.permute.xlu0 %1278
        %1280 = vrot.lane.b32.xlu0 %v1119, 4
        %v1281 = vpop.permute.xlu0 %1280
        %1282 = vrot.lane.b32.xlu0 %v1131, 4
        %v1283 = vpop.permute.xlu0 %1282
        %1284 = vrot.lane.b32.xlu0 %v1143, 4
        %v1285 = vpop.permute.xlu0 %1284
        %1286 = vrot.lane.b32.xlu0 %v1155, 4
        %v1287 = vpop.permute.xlu0 %1286
        %1288 = vrot.lane.b32.xlu0 %v1167, 4
        %v1289 = vpop.permute.xlu0 %1288
        %1290 = vrot.lane.b32.xlu0 %v1179, 4
        %v1291 = vpop.permute.xlu0 %1290
        %1292 = vrot.lane.b32.xlu0 %v1191, 4
        %v1293 = vpop.permute.xlu0 %1292
        %1294 = vrot.lane.b32.xlu0 %v1203, 4
        %v1295 = vpop.permute.xlu0 %1294
        %1296 = vrot.lane.b32.xlu0 %v1215, 4
        %v1297 = vpop.permute.xlu0 %1296
        %1298 = vrot.lane.b32.xlu0 %v1227, 4
        %v1299 = vpop.permute.xlu0 %1298
        %1300 = vrot.lane.b32.xlu0 %v1239, 4
        %v1301 = vpop.permute.xlu0 %1300
        %1302 = vrot.lane.b32.xlu0 %v1251, 4
        %v1303 = vpop.permute.xlu0 %1302
        %1304 = vrot.lane.b32.xlu0 %v1263, 4
        %v1305 = vpop.permute.xlu0 %1304
        %1306 = vrot.lane.b32.xlu0 %v1275, 4
        %v1307 = vpop.permute.xlu0 %1306
        %v1324 = vunpack.c.l.b16 %v939
        %v1325 = vunpack.c.l.b16 %v940
        %v1326 = vunpack.c.l.b16 %v941
        %v1327 = vunpack.c.l.b16 %v942
        %v1328 = vunpack.c.l.b16 %v943
        %v1329 = vunpack.c.l.b16 %v944
        %v1330 = vunpack.c.l.b16 %v945
        %v1331 = vunpack.c.l.b16 %v946
        %v1332 = vunpack.c.l.b16 %v947
        %v1333 = vunpack.c.l.b16 %v948
        %v1334 = vunpack.c.l.b16 %v949
        %v1335 = vunpack.c.l.b16 %v950
        %v1336 = vunpack.c.l.b16 %v951
        %v1337 = vunpack.c.l.b16 %v952
        %v1338 = vunpack.c.l.b16 %v953
        %v1339 = vunpack.c.l.b16 %v954
        %v1340 = vpack.c.b16 %v988, %v1324
        %v1341 = vpack.c.b16 %v990, %v1325
        %v1342 = vpack.c.b16 %v992, %v1326
        %v1343 = vpack.c.b16 %v994, %v1327
        %v1344 = vpack.c.b16 %v996, %v1328
        %v1345 = vpack.c.b16 %v998, %v1329
        %v1346 = vpack.c.b16 %v1000, %v1330
        %v1347 = vpack.c.b16 %v1002, %v1331
        %v1348 = vpack.c.b16 %v1004, %v1332
        %v1349 = vpack.c.b16 %v1006, %v1333
        %v1350 = vpack.c.b16 %v1008, %v1334
        %v1351 = vpack.c.b16 %v1010, %v1335
        %v1352 = vpack.c.b16 %v1012, %v1336
        %v1353 = vpack.c.b16 %v1014, %v1337
        %v1354 = vpack.c.b16 %v1016, %v1338
        %v1355 = vpack.c.b16 %v1018, %v1339
        %vm1356 = vcmask 1046528
        %v1357 = vrot.slane %v1340, 1
        %v1358 = vrot.slane %v1067, 1
        %v1359 = vsel %vm1356, %v1357, %v1358
        %v1360 = vrot.slane %v1341, 1
        %v1361 = vrot.slane %v1068, 1
        %v1362 = vsel %vm1356, %v1360, %v1361
        %v1363 = vrot.slane %v1342, 1
        %v1364 = vrot.slane %v1069, 1
        %v1365 = vsel %vm1356, %v1363, %v1364
        %v1366 = vrot.slane %v1343, 1
        %v1367 = vrot.slane %v1070, 1
        %v1368 = vsel %vm1356, %v1366, %v1367
        %v1369 = vrot.slane %v1344, 1
        %v1370 = vrot.slane %v1071, 1
        %v1371 = vsel %vm1356, %v1369, %v1370
        %v1372 = vrot.slane %v1345, 1
        %v1373 = vrot.slane %v1072, 1
        %v1374 = vsel %vm1356, %v1372, %v1373
        %v1375 = vrot.slane %v1346, 1
        %v1376 = vrot.slane %v1073, 1
        %v1377 = vsel %vm1356, %v1375, %v1376
        %v1378 = vrot.slane %v1347, 1
        %v1379 = vrot.slane %v1074, 1
        %v1380 = vsel %vm1356, %v1378, %v1379
        %v1381 = vrot.slane %v1348, 1
        %v1382 = vrot.slane %v1075, 1
        %v1383 = vsel %vm1356, %v1381, %v1382
        %v1384 = vrot.slane %v1349, 1
        %v1385 = vrot.slane %v1076, 1
        %v1386 = vsel %vm1356, %v1384, %v1385
        %v1387 = vrot.slane %v1350, 1
        %v1388 = vrot.slane %v1077, 1
        %v1389 = vsel %vm1356, %v1387, %v1388
        %v1390 = vrot.slane %v1351, 1
        %v1391 = vrot.slane %v1078, 1
        %v1392 = vsel %vm1356, %v1390, %v1391
        %v1393 = vrot.slane %v1352, 1
        %v1394 = vrot.slane %v1079, 1
        %v1395 = vsel %vm1356, %v1393, %v1394
        %v1396 = vrot.slane %v1353, 1
        %v1397 = vrot.slane %v1080, 1
        %v1398 = vsel %vm1356, %v1396, %v1397
        %v1399 = vrot.slane %v1354, 1
        %v1400 = vrot.slane %v1081, 1
        %v1401 = vsel %vm1356, %v1399, %v1400
        %v1402 = vrot.slane %v1355, 1
        %v1403 = vrot.slane %v1082, 1
        %v1404 = vsel %vm1356, %v1402, %v1403
        %1405 = vrot.lane.b32.xlu0 %v1359, 8
        %v1406 = vpop.permute.xlu0 %1405
        %1407 = vrot.lane.b32.xlu0 %v1362, 8
        %v1408 = vpop.permute.xlu0 %1407
        %1409 = vrot.lane.b32.xlu0 %v1365, 8
        %v1410 = vpop.permute.xlu0 %1409
        %1411 = vrot.lane.b32.xlu0 %v1368, 8
        %v1412 = vpop.permute.xlu0 %1411
        %1413 = vrot.lane.b32.xlu0 %v1371, 8
        %v1414 = vpop.permute.xlu0 %1413
        %1415 = vrot.lane.b32.xlu0 %v1374, 8
        %v1416 = vpop.permute.xlu0 %1415
        %1417 = vrot.lane.b32.xlu0 %v1377, 8
        %v1418 = vpop.permute.xlu0 %1417
        %1419 = vrot.lane.b32.xlu0 %v1380, 8
        %v1420 = vpop.permute.xlu0 %1419
        %1421 = vrot.lane.b32.xlu0 %v1383, 8
        %v1422 = vpop.permute.xlu0 %1421
        %1423 = vrot.lane.b32.xlu0 %v1386, 8
        %v1424 = vpop.permute.xlu0 %1423
        %1425 = vrot.lane.b32.xlu0 %v1389, 8
        %v1426 = vpop.permute.xlu0 %1425
        %1427 = vrot.lane.b32.xlu0 %v1392, 8
        %v1428 = vpop.permute.xlu0 %1427
        %1429 = vrot.lane.b32.xlu0 %v1395, 8
        %v1430 = vpop.permute.xlu0 %1429
        %1431 = vrot.lane.b32.xlu0 %v1398, 8
        %v1432 = vpop.permute.xlu0 %1431
        %1433 = vrot.lane.b32.xlu0 %v1401, 8
        %v1434 = vpop.permute.xlu0 %1433
        %1435 = vrot.lane.b32.xlu0 %v1404, 8
        %v1436 = vpop.permute.xlu0 %1435
        %vm1437 = vcmask 31744
        %v1439 = vsel %vm1437, %v1019, %v1277
        %v1441 = vsel %vm1437, %v1020, %v1279
        %v1443 = vsel %vm1437, %v1021, %v1281
        %v1445 = vsel %vm1437, %v1022, %v1283
        %v1447 = vsel %vm1437, %v1023, %v1285
        %v1449 = vsel %vm1437, %v1024, %v1287
        %v1451 = vsel %vm1437, %v1025, %v1289
        %v1453 = vsel %vm1437, %v1026, %v1291
        %v1455 = vsel %vm1437, %v1027, %v1293
        %v1457 = vsel %vm1437, %v1028, %v1295
        %v1459 = vsel %vm1437, %v1029, %v1297
        %v1461 = vsel %vm1437, %v1030, %v1299
        %v1463 = vsel %vm1437, %v1031, %v1301
        %v1465 = vsel %vm1437, %v1032, %v1303
        %v1467 = vsel %vm1437, %v1033, %v1305
        %v1469 = vsel %vm1437, %v1034, %v1307
        %vm1470 = vcmask 64512
        %v1472 = vsel %vm1470, %v1439, %v1406
        %v1474 = vsel %vm1470, %v1441, %v1408
        %v1476 = vsel %vm1470, %v1443, %v1410
        %v1478 = vsel %vm1470, %v1445, %v1412
        %v1480 = vsel %vm1470, %v1447, %v1414
        %v1482 = vsel %vm1470, %v1449, %v1416
        %v1484 = vsel %vm1470, %v1451, %v1418
        %v1486 = vsel %vm1470, %v1453, %v1420
        %v1488 = vsel %vm1470, %v1455, %v1422
        %v1490 = vsel %vm1470, %v1457, %v1424
        %v1492 = vsel %vm1470, %v1459, %v1426
        %v1494 = vsel %vm1470, %v1461, %v1428
        %v1496 = vsel %vm1470, %v1463, %v1430
        %v1498 = vsel %vm1470, %v1465, %v1432
        %v1500 = vsel %vm1470, %v1467, %v1434
        %v1502 = vsel %vm1470, %v1469, %v1436
        %v1503 = vld [vmem:[#allocation6] sm:$0xf]
        %v1504 = vld [vmem:[#allocation6 + $0x4] sm:$0x3]
        %v1505 = vld [vmem:[%s257] sm:$0xf]
        %v1506 = vld [vmem:[%s257 + $0x4] sm:$0xf]
        %v1507 = vld [vmem:[%s257 + $0xc] sm:$0xf]
        %v1508 = vld [vmem:[%s257 + $0x10] sm:$0xf]
        %v1509 = vld [vmem:[%s257 + $0x18] sm:$0xf]
        %v1510 = vld [vmem:[%s257 + $0x1c] sm:$0xf]
        %v1511 = vld [vmem:[%s257 + $0x24] sm:$0xf]
        %v1512 = vld [vmem:[%s257 + $0x28] sm:$0xf]
        %v1513 = vld [vmem:[%s257 + $0x30] sm:$0xf]
        %v1514 = vld [vmem:[%s257 + $0x34] sm:$0xf]
        %v1515 = vld [vmem:[%s257 + $0x3c] sm:$0xf]
        %v1516 = vld [vmem:[%s257 + $0x40] sm:$0xf]
        %v1517 = vld [vmem:[%s257 + $0x48] sm:$0xf]
        %v1518 = vld [vmem:[%s257 + $0x4c] sm:$0xf]
        %v1519 = vld [vmem:[%s257 + $0x54] sm:$0xf]
        %v1520 = vld [vmem:[%s257 + $0x58] sm:$0xf]
        %v1521 = vld [vmem:[%s257 + $0x60] sm:$0xf]
        %v1522 = vld [vmem:[%s257 + $0x64] sm:$0xf]
        %v1523 = vld [vmem:[%s257 + $0x6c] sm:$0xf]
        %v1524 = vld [vmem:[%s257 + $0x70] sm:$0xf]
        %v1525 = vld [vmem:[%s257 + $0x78] sm:$0xf]
        %v1526 = vld [vmem:[%s257 + $0x7c] sm:$0xf]
        %v1527 = vld [vmem:[%s257 + $0x84] sm:$0xf]
        %v1528 = vld [vmem:[%s257 + $0x88] sm:$0xf]
        %v1529 = vld [vmem:[%s257 + $0x90] sm:$0xf]
        %v1530 = vld [vmem:[%s257 + $0x94] sm:$0xf]
        %v1531 = vld [vmem:[%s257 + $0x9c] sm:$0xf]
        %v1532 = vld [vmem:[%s257 + $0xa0] sm:$0xf]
        %v1533 = vld [vmem:[%s257 + $0xa8] sm:$0xf]
        %v1534 = vld [vmem:[%s257 + $0xac] sm:$0xf]
        %v1535 = vld [vmem:[%s257 + $0xb4] sm:$0xf]
        %v1536 = vld [vmem:[%s257 + $0xb8] sm:$0xf]
        %v1537 = vld [vmem:[%s257 + $0x8] sm:$0x1]
        %v1538 = vld [vmem:[%s257 + $0x14] sm:$0x1]
        %v1539 = vld [vmem:[%s257 + $0x20] sm:$0x1]
        %v1540 = vld [vmem:[%s257 + $0x2c] sm:$0x1]
        %v1541 = vld [vmem:[%s257 + $0x38] sm:$0x1]
        %v1542 = vld [vmem:[%s257 + $0x44] sm:$0x1]
        %v1543 = vld [vmem:[%s257 + $0x50] sm:$0x1]
        %v1544 = vld [vmem:[%s257 + $0x5c] sm:$0x1]
        %v1545 = vld [vmem:[%s257 + $0x68] sm:$0x1]
        %v1546 = vld [vmem:[%s257 + $0x74] sm:$0x1]
        %v1547 = vld [vmem:[%s257 + $0x80] sm:$0x1]
        %v1548 = vld [vmem:[%s257 + $0x8c] sm:$0x1]
        %v1549 = vld [vmem:[%s257 + $0x98] sm:$0x1]
        %v1550 = vld [vmem:[%s257 + $0xa4] sm:$0x1]
        %v1551 = vld [vmem:[%s257 + $0xb0] sm:$0x1]
        %v1552 = vld [vmem:[%s257 + $0xbc] sm:$0x1]
        %v1553 = vld [vmem:[%s257] sm:$0xe]
        %v1554 = vld [vmem:[%s257 + $0xc] sm:$0xe]
        %v1555 = vld [vmem:[%s257 + $0x18] sm:$0xe]
        %v1556 = vld [vmem:[%s257 + $0x24] sm:$0xe]
        %v1557 = vld [vmem:[%s257 + $0x30] sm:$0xe]
        %v1558 = vld [vmem:[%s257 + $0x3c] sm:$0xe]
        %v1559 = vld [vmem:[%s257 + $0x48] sm:$0xe]
        %v1560 = vld [vmem:[%s257 + $0x54] sm:$0xe]
        %v1561 = vld [vmem:[%s257 + $0x60] sm:$0xe]
        %v1562 = vld [vmem:[%s257 + $0x6c] sm:$0xe]
        %v1563 = vld [vmem:[%s257 + $0x78] sm:$0xe]
        %v1564 = vld [vmem:[%s257 + $0x84] sm:$0xe]
        %v1565 = vld [vmem:[%s257 + $0x90] sm:$0xe]
        %v1566 = vld [vmem:[%s257 + $0x9c] sm:$0xe]
        %v1567 = vld [vmem:[%s257 + $0xa8] sm:$0xe]
        %v1568 = vld [vmem:[%s257 + $0xb4] sm:$0xe]
        %v1601 = vunpack.c.l.b16 %v1505
        %v1602 = vunpack.c.l.b16 %v1506
        %v1603 = vunpack.c.l.b16 %v1507
        %v1604 = vunpack.c.l.b16 %v1508
        %v1605 = vunpack.c.l.b16 %v1509
        %v1606 = vunpack.c.l.b16 %v1510
        %v1607 = vunpack.c.l.b16 %v1511
        %v1608 = vunpack.c.l.b16 %v1512
        %v1609 = vunpack.c.l.b16 %v1513
        %v1610 = vunpack.c.l.b16 %v1514
        %v1611 = vunpack.c.l.b16 %v1515
        %v1612 = vunpack.c.l.b16 %v1516
        %v1613 = vunpack.c.l.b16 %v1517
        %v1614 = vunpack.c.l.b16 %v1518
        %v1615 = vunpack.c.l.b16 %v1519
        %v1616 = vunpack.c.l.b16 %v1520
        %v1617 = vunpack.c.l.b16 %v1521
        %v1618 = vunpack.c.l.b16 %v1522
        %v1619 = vunpack.c.l.b16 %v1523
        %v1620 = vunpack.c.l.b16 %v1524
        %v1621 = vunpack.c.l.b16 %v1525
        %v1622 = vunpack.c.l.b16 %v1526
        %v1623 = vunpack.c.l.b16 %v1527
        %v1624 = vunpack.c.l.b16 %v1528
        %v1625 = vunpack.c.l.b16 %v1529
        %v1626 = vunpack.c.l.b16 %v1530
        %v1627 = vunpack.c.l.b16 %v1531
        %v1628 = vunpack.c.l.b16 %v1532
        %v1629 = vunpack.c.l.b16 %v1533
        %v1630 = vunpack.c.l.b16 %v1534
        %v1631 = vunpack.c.l.b16 %v1535
        %v1632 = vunpack.c.l.b16 %v1536
        %v1633 = vpack.c.b16 %v1602, %v1601
        %v1634 = vpack.c.b16 %v1604, %v1603
        %v1635 = vpack.c.b16 %v1606, %v1605
        %v1636 = vpack.c.b16 %v1608, %v1607
        %v1637 = vpack.c.b16 %v1610, %v1609
        %v1638 = vpack.c.b16 %v1612, %v1611
        %v1639 = vpack.c.b16 %v1614, %v1613
        %v1640 = vpack.c.b16 %v1616, %v1615
        %v1641 = vpack.c.b16 %v1618, %v1617
        %v1642 = vpack.c.b16 %v1620, %v1619
        %v1643 = vpack.c.b16 %v1622, %v1621
        %v1644 = vpack.c.b16 %v1624, %v1623
        %v1645 = vpack.c.b16 %v1626, %v1625
        %v1646 = vpack.c.b16 %v1628, %v1627
        %v1647 = vpack.c.b16 %v1630, %v1629
        %v1648 = vpack.c.b16 %v1632, %v1631
        %v1665 = vunpack.c.l.b16 %v1537
        %v1666 = vunpack.c.l.b16 %v1538
        %v1667 = vunpack.c.l.b16 %v1539
        %v1668 = vunpack.c.l.b16 %v1540
        %v1669 = vunpack.c.l.b16 %v1541
        %v1670 = vunpack.c.l.b16 %v1542
        %v1671 = vunpack.c.l.b16 %v1543
        %v1672 = vunpack.c.l.b16 %v1544
        %v1673 = vunpack.c.l.b16 %v1545
        %v1674 = vunpack.c.l.b16 %v1546
        %v1675 = vunpack.c.l.b16 %v1547
        %v1676 = vunpack.c.l.b16 %v1548
        %v1677 = vunpack.c.l.b16 %v1549
        %v1678 = vunpack.c.l.b16 %v1550
        %v1679 = vunpack.c.l.b16 %v1551
        %v1680 = vunpack.c.l.b16 %v1552
        %v1681 = vpack.c.b16 %v1665, %v1665
        %v1682 = vpack.c.b16 %v1666, %v1666
        %v1683 = vpack.c.b16 %v1667, %v1667
        %v1684 = vpack.c.b16 %v1668, %v1668
        %v1685 = vpack.c.b16 %v1669, %v1669
        %v1686 = vpack.c.b16 %v1670, %v1670
        %v1687 = vpack.c.b16 %v1671, %v1671
        %v1688 = vpack.c.b16 %v1672, %v1672
        %v1689 = vpack.c.b16 %v1673, %v1673
        %v1690 = vpack.c.b16 %v1674, %v1674
        %v1691 = vpack.c.b16 %v1675, %v1675
        %v1692 = vpack.c.b16 %v1676, %v1676
        %v1693 = vpack.c.b16 %v1677, %v1677
        %v1694 = vpack.c.b16 %v1678, %v1678
        %v1695 = vpack.c.b16 %v1679, %v1679
        %v1696 = vpack.c.b16 %v1680, %v1680
        %v1698 = vshrl.u32 %v1633, 16
        %v1700 = vshll.u32 %v1633, 16
        %v1702 = vrot.slane %v1700, 1
        %v1703 = vor.u32 %v1698, %v1702
        %v1705 = vshll.u32 %v1681, 16
        %v1707 = vrot.slane %v1705, 1
        %v1708 = vsel %vm1083, %v1703, %v1707
        %v1710 = vshrl.u32 %v1634, 16
        %v1712 = vshll.u32 %v1634, 16
        %v1714 = vrot.slane %v1712, 1
        %v1715 = vor.u32 %v1710, %v1714
        %v1717 = vshll.u32 %v1682, 16
        %v1719 = vrot.slane %v1717, 1
        %v1720 = vsel %vm1083, %v1715, %v1719
        %v1722 = vshrl.u32 %v1635, 16
        %v1724 = vshll.u32 %v1635, 16
        %v1726 = vrot.slane %v1724, 1
        %v1727 = vor.u32 %v1722, %v1726
        %v1729 = vshll.u32 %v1683, 16
        %v1731 = vrot.slane %v1729, 1
        %v1732 = vsel %vm1083, %v1727, %v1731
        %v1734 = vshrl.u32 %v1636, 16
        %v1736 = vshll.u32 %v1636, 16
        %v1738 = vrot.slane %v1736, 1
        %v1739 = vor.u32 %v1734, %v1738
        %v1741 = vshll.u32 %v1684, 16
        %v1743 = vrot.slane %v1741, 1
        %v1744 = vsel %vm1083, %v1739, %v1743
        %v1746 = vshrl.u32 %v1637, 16
        %v1748 = vshll.u32 %v1637, 16
        %v1750 = vrot.slane %v1748, 1
        %v1751 = vor.u32 %v1746, %v1750
        %v1753 = vshll.u32 %v1685, 16
        %v1755 = vrot.slane %v1753, 1
        %v1756 = vsel %vm1083, %v1751, %v1755
        %v1758 = vshrl.u32 %v1638, 16
        %v1760 = vshll.u32 %v1638, 16
        %v1762 = vrot.slane %v1760, 1
        %v1763 = vor.u32 %v1758, %v1762
        %v1765 = vshll.u32 %v1686, 16
        %v1767 = vrot.slane %v1765, 1
        %v1768 = vsel %vm1083, %v1763, %v1767
        %v1770 = vshrl.u32 %v1639, 16
        %v1772 = vshll.u32 %v1639, 16
        %v1774 = vrot.slane %v1772, 1
        %v1775 = vor.u32 %v1770, %v1774
        %v1777 = vshll.u32 %v1687, 16
        %v1779 = vrot.slane %v1777, 1
        %v1780 = vsel %vm1083, %v1775, %v1779
        %v1782 = vshrl.u32 %v1640, 16
        %v1784 = vshll.u32 %v1640, 16
        %v1786 = vrot.slane %v1784, 1
        %v1787 = vor.u32 %v1782, %v1786
        %v1789 = vshll.u32 %v1688, 16
        %v1791 = vrot.slane %v1789, 1
        %v1792 = vsel %vm1083, %v1787, %v1791
        %v1794 = vshrl.u32 %v1641, 16
        %v1796 = vshll.u32 %v1641, 16
        %v1798 = vrot.slane %v1796, 1
        %v1799 = vor.u32 %v1794, %v1798
        %v1801 = vshll.u32 %v1689, 16
        %v1803 = vrot.slane %v1801, 1
        %v1804 = vsel %vm1083, %v1799, %v1803
        %v1806 = vshrl.u32 %v1642, 16
        %v1808 = vshll.u32 %v1642, 16
        %v1810 = vrot.slane %v1808, 1
        %v1811 = vor.u32 %v1806, %v1810
        %v1813 = vshll.u32 %v1690, 16
        %v1815 = vrot.slane %v1813, 1
        %v1816 = vsel %vm1083, %v1811, %v1815
        %v1818 = vshrl.u32 %v1643, 16
        %v1820 = vshll.u32 %v1643, 16
        %v1822 = vrot.slane %v1820, 1
        %v1823 = vor.u32 %v1818, %v1822
        %v1825 = vshll.u32 %v1691, 16
        %v1827 = vrot.slane %v1825, 1
        %v1828 = vsel %vm1083, %v1823, %v1827
        %v1830 = vshrl.u32 %v1644, 16
        %v1832 = vshll.u32 %v1644, 16
        %v1834 = vrot.slane %v1832, 1
        %v1835 = vor.u32 %v1830, %v1834
        %v1837 = vshll.u32 %v1692, 16
        %v1839 = vrot.slane %v1837, 1
        %v1840 = vsel %vm1083, %v1835, %v1839
        %v1842 = vshrl.u32 %v1645, 16
        %v1844 = vshll.u32 %v1645, 16
        %v1846 = vrot.slane %v1844, 1
        %v1847 = vor.u32 %v1842, %v1846
        %v1849 = vshll.u32 %v1693, 16
        %v1851 = vrot.slane %v1849, 1
        %v1852 = vsel %vm1083, %v1847, %v1851
        %v1854 = vshrl.u32 %v1646, 16
        %v1856 = vshll.u32 %v1646, 16
        %v1858 = vrot.slane %v1856, 1
        %v1859 = vor.u32 %v1854, %v1858
        %v1861 = vshll.u32 %v1694, 16
        %v1863 = vrot.slane %v1861, 1
        %v1864 = vsel %vm1083, %v1859, %v1863
        %v1866 = vshrl.u32 %v1647, 16
        %v1868 = vshll.u32 %v1647, 16
        %v1870 = vrot.slane %v1868, 1
        %v1871 = vor.u32 %v1866, %v1870
        %v1873 = vshll.u32 %v1695, 16
        %v1875 = vrot.slane %v1873, 1
        %v1876 = vsel %vm1083, %v1871, %v1875
        %v1878 = vshrl.u32 %v1648, 16
        %v1880 = vshll.u32 %v1648, 16
        %v1882 = vrot.slane %v1880, 1
        %v1883 = vor.u32 %v1878, %v1882
        %v1885 = vshll.u32 %v1696, 16
        %v1887 = vrot.slane %v1885, 1
        %v1888 = vsel %vm1083, %v1883, %v1887
        %1889 = vrot.lane.b32.xlu0 %v1708, 4
        %v1890 = vpop.permute.xlu0 %1889
        %1891 = vrot.lane.b32.xlu0 %v1720, 4
        %v1892 = vpop.permute.xlu0 %1891
        %1893 = vrot.lane.b32.xlu0 %v1732, 4
        %v1894 = vpop.permute.xlu0 %1893
        %1895 = vrot.lane.b32.xlu0 %v1744, 4
        %v1896 = vpop.permute.xlu0 %1895
        %1897 = vrot.lane.b32.xlu0 %v1756, 4
        %v1898 = vpop.permute.xlu0 %1897
        %1899 = vrot.lane.b32.xlu0 %v1768, 4
        %v1900 = vpop.permute.xlu0 %1899
        %1901 = vrot.lane.b32.xlu0 %v1780, 4
        %v1902 = vpop.permute.xlu0 %1901
        %1903 = vrot.lane.b32.xlu0 %v1792, 4
        %v1904 = vpop.permute.xlu0 %1903
        %1905 = vrot.lane.b32.xlu0 %v1804, 4
        %v1906 = vpop.permute.xlu0 %1905
        %1907 = vrot.lane.b32.xlu0 %v1816, 4
        %v1908 = vpop.permute.xlu0 %1907
        %1909 = vrot.lane.b32.xlu0 %v1828, 4
        %v1910 = vpop.permute.xlu0 %1909
        %1911 = vrot.lane.b32.xlu0 %v1840, 4
        %v1912 = vpop.permute.xlu0 %1911
        %1913 = vrot.lane.b32.xlu0 %v1852, 4
        %v1914 = vpop.permute.xlu0 %1913
        %1915 = vrot.lane.b32.xlu0 %v1864, 4
        %v1916 = vpop.permute.xlu0 %1915
        %1917 = vrot.lane.b32.xlu0 %v1876, 4
        %v1918 = vpop.permute.xlu0 %1917
        %1919 = vrot.lane.b32.xlu0 %v1888, 4
        %v1920 = vpop.permute.xlu0 %1919
        %v1937 = vunpack.c.l.b16 %v1553
        %v1938 = vunpack.c.l.b16 %v1554
        %v1939 = vunpack.c.l.b16 %v1555
        %v1940 = vunpack.c.l.b16 %v1556
        %v1941 = vunpack.c.l.b16 %v1557
        %v1942 = vunpack.c.l.b16 %v1558
        %v1943 = vunpack.c.l.b16 %v1559
        %v1944 = vunpack.c.l.b16 %v1560
        %v1945 = vunpack.c.l.b16 %v1561
        %v1946 = vunpack.c.l.b16 %v1562
        %v1947 = vunpack.c.l.b16 %v1563
        %v1948 = vunpack.c.l.b16 %v1564
        %v1949 = vunpack.c.l.b16 %v1565
        %v1950 = vunpack.c.l.b16 %v1566
        %v1951 = vunpack.c.l.b16 %v1567
        %v1952 = vunpack.c.l.b16 %v1568
        %v1953 = vpack.c.b16 %v1602, %v1937
        %v1954 = vpack.c.b16 %v1604, %v1938
        %v1955 = vpack.c.b16 %v1606, %v1939
        %v1956 = vpack.c.b16 %v1608, %v1940
        %v1957 = vpack.c.b16 %v1610, %v1941
        %v1958 = vpack.c.b16 %v1612, %v1942
        %v1959 = vpack.c.b16 %v1614, %v1943
        %v1960 = vpack.c.b16 %v1616, %v1944
        %v1961 = vpack.c.b16 %v1618, %v1945
        %v1962 = vpack.c.b16 %v1620, %v1946
        %v1963 = vpack.c.b16 %v1622, %v1947
        %v1964 = vpack.c.b16 %v1624, %v1948
        %v1965 = vpack.c.b16 %v1626, %v1949
        %v1966 = vpack.c.b16 %v1628, %v1950
        %v1967 = vpack.c.b16 %v1630, %v1951
        %v1968 = vpack.c.b16 %v1632, %v1952
        %v1969 = vrot.slane %v1953, 1
        %v1970 = vrot.slane %v1681, 1
        %v1971 = vsel %vm1356, %v1969, %v1970
        %v1972 = vrot.slane %v1954, 1
        %v1973 = vrot.slane %v1682, 1
        %v1974 = vsel %vm1356, %v1972, %v1973
        %v1975 = vrot.slane %v1955, 1
        %v1976 = vrot.slane %v1683, 1
        %v1977 = vsel %vm1356, %v1975, %v1976
        %v1978 = vrot.slane %v1956, 1
        %v1979 = vrot.slane %v1684, 1
        %v1980 = vsel %vm1356, %v1978, %v1979
        %v1981 = vrot.slane %v1957, 1
        %v1982 = vrot.slane %v1685, 1
        %v1983 = vsel %vm1356, %v1981, %v1982
        %v1984 = vrot.slane %v1958, 1
        %v1985 = vrot.slane %v1686, 1
        %v1986 = vsel %vm1356, %v1984, %v1985
        %v1987 = vrot.slane %v1959, 1
        %v1988 = vrot.slane %v1687, 1
        %v1989 = vsel %vm1356, %v1987, %v1988
        %v1990 = vrot.slane %v1960, 1
        %v1991 = vrot.slane %v1688, 1
        %v1992 = vsel %vm1356, %v1990, %v1991
        %v1993 = vrot.slane %v1961, 1
        %v1994 = vrot.slane %v1689, 1
        %v1995 = vsel %vm1356, %v1993, %v1994
        %v1996 = vrot.slane %v1962, 1
        %v1997 = vrot.slane %v1690, 1
        %v1998 = vsel %vm1356, %v1996, %v1997
        %v1999 = vrot.slane %v1963, 1
        %v2000 = vrot.slane %v1691, 1
        %v2001 = vsel %vm1356, %v1999, %v2000
        %v2002 = vrot.slane %v1964, 1
        %v2003 = vrot.slane %v1692, 1
        %v2004 = vsel %vm1356, %v2002, %v2003
        %v2005 = vrot.slane %v1965, 1
        %v2006 = vrot.slane %v1693, 1
        %v2007 = vsel %vm1356, %v2005, %v2006
        %v2008 = vrot.slane %v1966, 1
        %v2009 = vrot.slane %v1694, 1
        %v2010 = vsel %vm1356, %v2008, %v2009
        %v2011 = vrot.slane %v1967, 1
        %v2012 = vrot.slane %v1695, 1
        %v2013 = vsel %vm1356, %v2011, %v2012
        %v2014 = vrot.slane %v1968, 1
        %v2015 = vrot.slane %v1696, 1
        %v2016 = vsel %vm1356, %v2014, %v2015
        %2017 = vrot.lane.b32.xlu0 %v1971, 8
        %v2018 = vpop.permute.xlu0 %2017
        %2019 = vrot.lane.b32.xlu0 %v1974, 8
        %v2020 = vpop.permute.xlu0 %2019
        %2021 = vrot.lane.b32.xlu0 %v1977, 8
        %v2022 = vpop.permute.xlu0 %2021
        %2023 = vrot.lane.b32.xlu0 %v1980, 8
        %v2024 = vpop.permute.xlu0 %2023
        %2025 = vrot.lane.b32.xlu0 %v1983, 8
        %v2026 = vpop.permute.xlu0 %2025
        %2027 = vrot.lane.b32.xlu0 %v1986, 8
        %v2028 = vpop.permute.xlu0 %2027
        %2029 = vrot.lane.b32.xlu0 %v1989, 8
        %v2030 = vpop.permute.xlu0 %2029
        %2031 = vrot.lane.b32.xlu0 %v1992, 8
        %v2032 = vpop.permute.xlu0 %2031
        %2033 = vrot.lane.b32.xlu0 %v1995, 8
        %v2034 = vpop.permute.xlu0 %2033
        %2035 = vrot.lane.b32.xlu0 %v1998, 8
        %v2036 = vpop.permute.xlu0 %2035
        %2037 = vrot.lane.b32.xlu0 %v2001, 8
        %v2038 = vpop.permute.xlu0 %2037
        %2039 = vrot.lane.b32.xlu0 %v2004, 8
        %v2040 = vpop.permute.xlu0 %2039
        %2041 = vrot.lane.b32.xlu0 %v2007, 8
        %v2042 = vpop.permute.xlu0 %2041
        %2043 = vrot.lane.b32.xlu0 %v2010, 8
        %v2044 = vpop.permute.xlu0 %2043
        %2045 = vrot.lane.b32.xlu0 %v2013, 8
        %v2046 = vpop.permute.xlu0 %2045
        %2047 = vrot.lane.b32.xlu0 %v2016, 8
        %v2048 = vpop.permute.xlu0 %2047
        %v2050 = vsel %vm1437, %v1633, %v1890
        %v2052 = vsel %vm1437, %v1634, %v1892
        %v2054 = vsel %vm1437, %v1635, %v1894
        %v2056 = vsel %vm1437, %v1636, %v1896
        %v2058 = vsel %vm1437, %v1637, %v1898
        %v2060 = vsel %vm1437, %v1638, %v1900
        %v2062 = vsel %vm1437, %v1639, %v1902
        %v2064 = vsel %vm1437, %v1640, %v1904
        %v2066 = vsel %vm1437, %v1641, %v1906
        %v2068 = vsel %vm1437, %v1642, %v1908
        %v2070 = vsel %vm1437, %v1643, %v1910
        %v2072 = vsel %vm1437, %v1644, %v1912
        %v2074 = vsel %vm1437, %v1645, %v1914
        %v2076 = vsel %vm1437, %v1646, %v1916
        %v2078 = vsel %vm1437, %v1647, %v1918
        %v2080 = vsel %vm1437, %v1648, %v1920
        %v2082 = vsel %vm1470, %v2050, %v2018
        %v2084 = vsel %vm1470, %v2052, %v2020
        %v2086 = vsel %vm1470, %v2054, %v2022
        %v2088 = vsel %vm1470, %v2056, %v2024
        %v2090 = vsel %vm1470, %v2058, %v2026
        %v2092 = vsel %vm1470, %v2060, %v2028
        %v2094 = vsel %vm1470, %v2062, %v2030
        %v2096 = vsel %vm1470, %v2064, %v2032
        %v2098 = vsel %vm1470, %v2066, %v2034
        %v2100 = vsel %vm1470, %v2068, %v2036
        %v2102 = vsel %vm1470, %v2070, %v2038
        %v2104 = vsel %vm1470, %v2072, %v2040
        %v2106 = vsel %vm1470, %v2074, %v2042
        %v2108 = vsel %vm1470, %v2076, %v2044
        %v2110 = vsel %vm1470, %v2078, %v2046
        %v2112 = vsel %vm1470, %v2080, %v2048
        %s2113 = scalar_lea.vmem [#allocation6], 8
        %v2114 = vld [vmem:[%s2113] sm:$0xf]
        %v2115 = vld [vmem:[%s2113 + $0x4] sm:$0x3]
        %v2118 = vunpack.c.l.b16 %v2114
        %v2119 = vunpack.c.l.b16 %v2115
        %v2120 = vpack.c.b16 %v2119, %v2118
        %vm2121 = vcmask 97280
        %v2122 = vsel %vm2121, %v2082, 0
        %v2124 = vsel %vm2121, %v2084, 0
        %v2126 = vsel %vm2121, %v2086, 0
        %v2128 = vsel %vm2121, %v2088, 0
        %v2130 = vsel %vm2121, %v2090, 0
        %v2132 = vsel %vm2121, %v2092, 0
        %v2134 = vsel %vm2121, %v2094, 0
        %v2136 = vsel %vm2121, %v2096, 0
        %v2138 = vsel %vm2121, %v2098, 0
        %v2140 = vsel %vm2121, %v2100, 0
        %v2142 = vsel %vm2121, %v2102, 0
        %v2144 = vsel %vm2121, %v2104, 0
        %v2146 = vsel %vm2121, %v2106, 0
        %v2148 = vsel %vm2121, %v2108, 0
        %v2150 = vsel %vm2121, %v2110, 0
        %v2152 = vsel %vm2121, %v2112, 0
        %vm2154 = vcmask 1045504
        %v2156 = vsel %vm2154, %v2120, 0
        %2158 = vmatprep.subr.bf16.mxu0 0
        %2159 = vmatpush1.bf16.msra.mxu0 %v2156
        %2160 = vmatprep.subr.bf16.mxu0 0
        %2161 = vmatpush1.bf16.msra.mxu0 0
        %2162 = vmatprep.subr.bf16.mxu0 0
        %2163 = vmatpush1.bf16.msra.mxu0 0
        %2164 = vmatprep.subr.bf16.mxu0 0
        %2165 = vmatpush1.bf16.msra.mxu0 0
        %2166 = vmatprep.subr.bf16.mxu0 0
        %2167 = vmatpush1.bf16.msra.mxu0 0
        %2168 = vmatprep.subr.bf16.mxu0 0
        %2169 = vmatpush1.bf16.msra.mxu0 0
        %2170 = vmatprep.subr.bf16.mxu0 0
        %2171 = vmatpush1.bf16.msra.mxu0 0
        %2172 = vmatprep.subr.bf16.mxu0 0
        %2173 = vmatpush1.bf16.msra.mxu0 0
        %2174 = vmatprep.subr.bf16.mxu0 0
        %2175 = vmatpush1.bf16.msra.mxu0 0
        %2176 = vmatprep.subr.bf16.mxu0 0
        %2177 = vmatpush1.bf16.msra.mxu0 0
        %2178 = vmatprep.subr.bf16.mxu0 0
        %2179 = vmatpush1.bf16.msra.mxu0 0
        %2180 = vmatprep.subr.bf16.mxu0 0
        %2181 = vmatpush1.bf16.msra.mxu0 0
        %2182 = vmatprep.subr.bf16.mxu0 0
        %2183 = vmatpush1.bf16.msra.mxu0 0
        %2184 = vmatprep.subr.bf16.mxu0 0
        %2185 = vmatpush1.bf16.msra.mxu0 0
        %2186 = vmatprep.subr.bf16.mxu0 0
        %2187 = vmatpush1.bf16.msra.mxu0 0
        %2188 = vmatprep.subr.bf16.mxu0 0
        %2189 = vmatpush1.bf16.msra.mxu0 0
        %2190 = vmatprep.mubr.bf16.mxu0 0
        %2191 = vmatmul.mubr.bf16.gmra.mrb[0].mxu0 %v2122
        %v2192 = vpop.f32.mrb[0].mxu0
        %v2193 = vadd.f32 0.0, %v2192
        %v2194 = vpop.f32.mrb[0].mxu0
        %v2195 = vpop.f32.mrb[0].mxu0
        %v2196 = vadd.f32 0.0, %v2195
        %v2197 = vpop.f32.mrb[0].mxu0
        %2198 = vmatprep.mubr.bf16.mxu0 0
        %2199 = vmatmul.mubr.bf16.gmra.mrb[0].mxu0 %v2124
        %v2200 = vpop.f32.mrb[0].mxu0
        %v2201 = vadd.f32 0.0, %v2200
        %v2202 = vpop.f32.mrb[0].mxu0
        %v2203 = vpop.f32.mrb[0].mxu0
        %v2204 = vadd.f32 0.0, %v2203
        %v2205 = vpop.f32.mrb[0].mxu0
        %2206 = vmatprep.mubr.bf16.mxu0 0
        %2207 = vmatmul.mubr.bf16.gmra.mrb[0].mxu0 %v2126
        %v2208 = vpop.f32.mrb[0].mxu0
        %v2209 = vadd.f32 0.0, %v2208
        %v2210 = vpop.f32.mrb[0].mxu0
        %v2211 = vpop.f32.mrb[0].mxu0
        %v2212 = vadd.f32 0.0, %v2211
        %v2213 = vpop.f32.mrb[0].mxu0
        %2214 = vmatprep.mubr.bf16.mxu0 0
        %2215 = vmatmul.mubr.bf16.gmra.mrb[0].mxu0 %v2128
        %v2216 = vpop.f32.mrb[0].mxu0
        %v2217 = vadd.f32 0.0, %v2216
        %v2218 = vpop.f32.mrb[0].mxu0
        %v2219 = vpop.f32.mrb[0].mxu0
        %v2220 = vadd.f32 0.0, %v2219
        %v2221 = vpop.f32.mrb[0].mxu0
        %2222 = vmatprep.mubr.bf16.mxu0 0
        %2223 = vmatmul.mubr.bf16.gmra.mrb[0].mxu0 %v2130
        %v2224 = vpop.f32.mrb[0].mxu0
        %v2225 = vadd.f32 0.0, %v2224
        %v2226 = vpop.f32.mrb[0].mxu0
        %v2227 = vpop.f32.mrb[0].mxu0
        %v2228 = vadd.f32 0.0, %v2227
        %v2229 = vpop.f32.mrb[0].mxu0
        %2230 = vmatprep.mubr.bf16.mxu0 0
        %2231 = vmatmul.mubr.bf16.gmra.mrb[0].mxu0 %v2132
        %v2232 = vpop.f32.mrb[0].mxu0
        %v2233 = vadd.f32 0.0, %v2232
        %v2234 = vpop.f32.mrb[0].mxu0
        %v2235 = vpop.f32.mrb[0].mxu0
        %v2236 = vadd.f32 0.0, %v2235
        %v2237 = vpop.f32.mrb[0].mxu0
        %2238 = vmatprep.mubr.bf16.mxu0 0
        %2239 = vmatmul.mubr.bf16.gmra.mrb[0].mxu0 %v2134
        %v2240 = vpop.f32.mrb[0].mxu0
        %v2241 = vadd.f32 0.0, %v2240
        %v2242 = vpop.f32.mrb[0].mxu0
        %v2243 = vpop.f32.mrb[0].mxu0
        %v2244 = vadd.f32 0.0, %v2243
        %v2245 = vpop.f32.mrb[0].mxu0
        %2246 = vmatprep.mubr.bf16.mxu0 0
        %2247 = vmatmul.mubr.bf16.gmra.mrb[0].mxu0 %v2136
        %v2248 = vpop.f32.mrb[0].mxu0
        %v2249 = vadd.f32 0.0, %v2248
        %v2250 = vpop.f32.mrb[0].mxu0
        %v2251 = vpop.f32.mrb[0].mxu0
        %v2252 = vadd.f32 0.0, %v2251
        %v2253 = vpop.f32.mrb[0].mxu0
        %2254 = vmatprep.mubr.bf16.mxu0 0
        %2255 = vmatmul.mubr.bf16.gmra.mrb[0].mxu0 %v2138
        %v2256 = vpop.f32.mrb[0].mxu0
        %v2257 = vadd.f32 0.0, %v2256
        %v2258 = vpop.f32.mrb[0].mxu0
        %v2259 = vpop.f32.mrb[0].mxu0
        %v2260 = vadd.f32 0.0, %v2259
        %v2261 = vpop.f32.mrb[0].mxu0
        %2262 = vmatprep.mubr.bf16.mxu0 0
        %2263 = vmatmul.mubr.bf16.gmra.mrb[0].mxu0 %v2140
        %v2264 = vpop.f32.mrb[0].mxu0
        %v2265 = vadd.f32 0.0, %v2264
        %v2266 = vpop.f32.mrb[0].mxu0
        %v2267 = vpop.f32.mrb[0].mxu0
        %v2268 = vadd.f32 0.0, %v2267
        %v2269 = vpop.f32.mrb[0].mxu0
        %2270 = vmatprep.mubr.bf16.mxu0 0
        %2271 = vmatmul.mubr.bf16.gmra.mrb[0].mxu0 %v2142
        %v2272 = vpop.f32.mrb[0].mxu0
        %v2273 = vadd.f32 0.0, %v2272
        %v2274 = vpop.f32.mrb[0].mxu0
        %v2275 = vpop.f32.mrb[0].mxu0
        %v2276 = vadd.f32 0.0, %v2275
        %v2277 = vpop.f32.mrb[0].mxu0
        %2278 = vmatprep.mubr.bf16.mxu0 0
        %2279 = vmatmul.mubr.bf16.gmra.mrb[0].mxu0 %v2144
        %v2280 = vpop.f32.mrb[0].mxu0
        %v2281 = vadd.f32 0.0, %v2280
        %v2282 = vpop.f32.mrb[0].mxu0
        %v2283 = vpop.f32.mrb[0].mxu0
        %v2284 = vadd.f32 0.0, %v2283
        %v2285 = vpop.f32.mrb[0].mxu0
        %2286 = vmatprep.mubr.bf16.mxu0 0
        %2287 = vmatmul.mubr.bf16.gmra.mrb[0].mxu0 %v2146
        %v2288 = vpop.f32.mrb[0].mxu0
        %v2289 = vadd.f32 0.0, %v2288
        %v2290 = vpop.f32.mrb[0].mxu0
        %v2291 = vpop.f32.mrb[0].mxu0
        %v2292 = vadd.f32 0.0, %v2291
        %v2293 = vpop.f32.mrb[0].mxu0
        %2294 = vmatprep.mubr.bf16.mxu0 0
        %2295 = vmatmul.mubr.bf16.gmra.mrb[0].mxu0 %v2148
        %v2296 = vpop.f32.mrb[0].mxu0
        %v2297 = vadd.f32 0.0, %v2296
        %v2298 = vpop.f32.mrb[0].mxu0
        %v2299 = vpop.f32.mrb[0].mxu0
        %v2300 = vadd.f32 0.0, %v2299
        %v2301 = vpop.f32.mrb[0].mxu0
        %2302 = vmatprep.mubr.bf16.mxu0 0
        %2303 = vmatmul.mubr.bf16.gmra.mrb[0].mxu0 %v2150
        %v2304 = vpop.f32.mrb[0].mxu0
        %v2305 = vadd.f32 0.0, %v2304
        %v2306 = vpop.f32.mrb[0].mxu0
        %v2307 = vpop.f32.mrb[0].mxu0
        %v2308 = vadd.f32 0.0, %v2307
        %v2309 = vpop.f32.mrb[0].mxu0
        %2310 = vmatprep.mubr.bf16.mxu0 0
        %2311 = vmatmul.mubr.bf16.gmra.mrb[0].mxu0 %v2152
        %v2312 = vpop.f32.mrb[0].mxu0
        %v2313 = vadd.f32 0.0, %v2312
        %v2314 = vpop.f32.mrb[0].mxu0
        %v2315 = vpop.f32.mrb[0].mxu0
        %v2316 = vadd.f32 0.0, %v2315
        %v2317 = vpop.f32.mrb[0].mxu0
        %2318 = vdwg.mxu0
        %v2321 = vunpack.c.l.b16 %v1503
        %v2322 = vunpack.c.l.b16 %v1504
        %v2323 = vpack.c.b16 %v2322, %v2321
        %v2324 = vsel %vm2121, %v1472, 0
        %v2326 = vsel %vm2121, %v1474, 0
        %v2328 = vsel %vm2121, %v1476, 0
        %v2330 = vsel %vm2121, %v1478, 0
        %v2332 = vsel %vm2121, %v1480, 0
        %v2334 = vsel %vm2121, %v1482, 0
        %v2336 = vsel %vm2121, %v1484, 0
        %v2338 = vsel %vm2121, %v1486, 0
        %v2340 = vsel %vm2121, %v1488, 0
        %v2342 = vsel %vm2121, %v1490, 0
        %v2344 = vsel %vm2121, %v1492, 0
        %v2346 = vsel %vm2121, %v1494, 0
        %v2348 = vsel %vm2121, %v1496, 0
        %v2350 = vsel %vm2121, %v1498, 0
        %v2352 = vsel %vm2121, %v1500, 0
        %v2354 = vsel %vm2121, %v1502, 0
        %v2357 = vsel %vm2154, %v2323, 0
        %2359 = vmatprep.subr.bf16.mxu0 0
        %2360 = vmatpush1.bf16.msra.mxu0 %v2357
        %2361 = vmatprep.subr.bf16.mxu0 0
        %2362 = vmatpush1.bf16.msra.mxu0 0
        %2363 = vmatprep.subr.bf16.mxu0 0
        %2364 = vmatpush1.bf16.msra.mxu0 0
        %2365 = vmatprep.subr.bf16.mxu0 0
        %2366 = vmatpush1.bf16.msra.mxu0 0
        %2367 = vmatprep.subr.bf16.mxu0 0
        %2368 = vmatpush1.bf16.msra.mxu0 0
        %2369 = vmatprep.subr.bf16.mxu0 0
        %2370 = vmatpush1.bf16.msra.mxu0 0
        %2371 = vmatprep.subr.bf16.mxu0 0
        %2372 = vmatpush1.bf16.msra.mxu0 0
        %2373 = vmatprep.subr.bf16.mxu0 0
        %2374 = vmatpush1.bf16.msra.mxu0 0
        %2375 = vmatprep.subr.bf16.mxu0 0
        %2376 = vmatpush1.bf16.msra.mxu0 0
        %2377 = vmatprep.subr.bf16.mxu0 0
        %2378 = vmatpush1.bf16.msra.mxu0 0
        %2379 = vmatprep.subr.bf16.mxu0 0
        %2380 = vmatpush1.bf16.msra.mxu0 0
        %2381 = vmatprep.subr.bf16.mxu0 0
        %2382 = vmatpush1.bf16.msra.mxu0 0
        %2383 = vmatprep.subr.bf16.mxu0 0
        %2384 = vmatpush1.bf16.msra.mxu0 0
        %2385 = vmatprep.subr.bf16.mxu0 0
        %2386 = vmatpush1.bf16.msra.mxu0 0
        %2387 = vmatprep.subr.bf16.mxu0 0
        %2388 = vmatpush1.bf16.msra.mxu0 0
        %2389 = vmatprep.subr.bf16.mxu0 0
        %2390 = vmatpush1.bf16.msra.mxu0 0
        %2391 = vmatprep.mubr.bf16.mxu0 0
        %2392 = vmatmul.mubr.bf16.gmra.mrb[0].mxu0 %v2324
        %v2393 = vpop.f32.mrb[0].mxu0
        %v2394 = vadd.f32 %v2193, %v2393
        %v2395 = vpop.f32.mrb[0].mxu0
        %v2396 = vpop.f32.mrb[0].mxu0
        %v2397 = vadd.f32 %v2196, %v2396
        %v2398 = vpop.f32.mrb[0].mxu0
        %2399 = vmatprep.mubr.bf16.mxu0 0
        %2400 = vmatmul.mubr.bf16.gmra.mrb[0].mxu0 %v2326
        %v2401 = vpop.f32.mrb[0].mxu0
        %v2402 = vadd.f32 %v2201, %v2401
        %v2403 = vpop.f32.mrb[0].mxu0
        %v2404 = vpop.f32.mrb[0].mxu0
        %v2405 = vadd.f32 %v2204, %v2404
        %v2406 = vpop.f32.mrb[0].mxu0
        %2407 = vmatprep.mubr.bf16.mxu0 0
        %2408 = vmatmul.mubr.bf16.gmra.mrb[0].mxu0 %v2328
        %v2409 = vpop.f32.mrb[0].mxu0
        %v2410 = vadd.f32 %v2209, %v2409
        %v2411 = vpop.f32.mrb[0].mxu0
        %v2412 = vpop.f32.mrb[0].mxu0
        %v2413 = vadd.f32 %v2212, %v2412
        %v2414 = vpop.f32.mrb[0].mxu0
        %2415 = vmatprep.mubr.bf16.mxu0 0
        %2416 = vmatmul.mubr.bf16.gmra.mrb[0].mxu0 %v2330
        %v2417 = vpop.f32.mrb[0].mxu0
        %v2418 = vadd.f32 %v2217, %v2417
        %v2419 = vpop.f32.mrb[0].mxu0
        %v2420 = vpop.f32.mrb[0].mxu0
        %v2421 = vadd.f32 %v2220, %v2420
        %v2422 = vpop.f32.mrb[0].mxu0
        %2423 = vmatprep.mubr.bf16.mxu0 0
        %2424 = vmatmul.mubr.bf16.gmra.mrb[0].mxu0 %v2332
        %v2425 = vpop.f32.mrb[0].mxu0
        %v2426 = vadd.f32 %v2225, %v2425
        %v2427 = vpop.f32.mrb[0].mxu0
        %v2428 = vpop.f32.mrb[0].mxu0
        %v2429 = vadd.f32 %v2228, %v2428
        %v2430 = vpop.f32.mrb[0].mxu0
        %2431 = vmatprep.mubr.bf16.mxu0 0
        %2432 = vmatmul.mubr.bf16.gmra.mrb[0].mxu0 %v2334
        %v2433 = vpop.f32.mrb[0].mxu0
        %v2434 = vadd.f32 %v2233, %v2433
        %v2435 = vpop.f32.mrb[0].mxu0
        %v2436 = vpop.f32.mrb[0].mxu0
        %v2437 = vadd.f32 %v2236, %v2436
        %v2438 = vpop.f32.mrb[0].mxu0
        %2439 = vmatprep.mubr.bf16.mxu0 0
        %2440 = vmatmul.mubr.bf16.gmra.mrb[0].mxu0 %v2336
        %v2441 = vpop.f32.mrb[0].mxu0
        %v2442 = vadd.f32 %v2241, %v2441
        %v2443 = vpop.f32.mrb[0].mxu0
        %v2444 = vpop.f32.mrb[0].mxu0
        %v2445 = vadd.f32 %v2244, %v2444
        %v2446 = vpop.f32.mrb[0].mxu0
        %2447 = vmatprep.mubr.bf16.mxu0 0
        %2448 = vmatmul.mubr.bf16.gmra.mrb[0].mxu0 %v2338
        %v2449 = vpop.f32.mrb[0].mxu0
        %v2450 = vadd.f32 %v2249, %v2449
        %v2451 = vpop.f32.mrb[0].mxu0
        %v2452 = vpop.f32.mrb[0].mxu0
        %v2453 = vadd.f32 %v2252, %v2452
        %v2454 = vpop.f32.mrb[0].mxu0
        %2455 = vmatprep.mubr.bf16.mxu0 0
        %2456 = vmatmul.mubr.bf16.gmra.mrb[0].mxu0 %v2340
        %v2457 = vpop.f32.mrb[0].mxu0
        %v2458 = vadd.f32 %v2257, %v2457
        %v2459 = vpop.f32.mrb[0].mxu0
        %v2460 = vpop.f32.mrb[0].mxu0
        %v2461 = vadd.f32 %v2260, %v2460
        %v2462 = vpop.f32.mrb[0].mxu0
        %2463 = vmatprep.mubr.bf16.mxu0 0
        %2464 = vmatmul.mubr.bf16.gmra.mrb[0].mxu0 %v2342
        %v2465 = vpop.f32.mrb[0].mxu0
        %v2466 = vadd.f32 %v2265, %v2465
        %v2467 = vpop.f32.mrb[0].mxu0
        %v2468 = vpop.f32.mrb[0].mxu0
        %v2469 = vadd.f32 %v2268, %v2468
        %v2470 = vpop.f32.mrb[0].mxu0
        %2471 = vmatprep.mubr.bf16.mxu0 0
        %2472 = vmatmul.mubr.bf16.gmra.mrb[0].mxu0 %v2344
        %v2473 = vpop.f32.mrb[0].mxu0
        %v2474 = vadd.f32 %v2273, %v2473
        %v2475 = vpop.f32.mrb[0].mxu0
        %v2476 = vpop.f32.mrb[0].mxu0
        %v2477 = vadd.f32 %v2276, %v2476
        %v2478 = vpop.f32.mrb[0].mxu0
        %2479 = vmatprep.mubr.bf16.mxu0 0
        %2480 = vmatmul.mubr.bf16.gmra.mrb[0].mxu0 %v2346
        %v2481 = vpop.f32.mrb[0].mxu0
        %v2482 = vadd.f32 %v2281, %v2481
        %v2483 = vpop.f32.mrb[0].mxu0
        %v2484 = vpop.f32.mrb[0].mxu0
        %v2485 = vadd.f32 %v2284, %v2484
        %v2486 = vpop.f32.mrb[0].mxu0
        %2487 = vmatprep.mubr.bf16.mxu0 0
        %2488 = vmatmul.mubr.bf16.gmra.mrb[0].mxu0 %v2348
        %v2489 = vpop.f32.mrb[0].mxu0
        %v2490 = vadd.f32 %v2289, %v2489
        %v2491 = vpop.f32.mrb[0].mxu0
        %v2492 = vpop.f32.mrb[0].mxu0
        %v2493 = vadd.f32 %v2292, %v2492
        %v2494 = vpop.f32.mrb[0].mxu0
        %2495 = vmatprep.mubr.bf16.mxu0 0
        %2496 = vmatmul.mubr.bf16.gmra.mrb[0].mxu0 %v2350
        %v2497 = vpop.f32.mrb[0].mxu0
        %v2498 = vadd.f32 %v2297, %v2497
        %v2499 = vpop.f32.mrb[0].mxu0
        %v2500 = vpop.f32.mrb[0].mxu0
        %v2501 = vadd.f32 %v2300, %v2500
        %v2502 = vpop.f32.mrb[0].mxu0
        %2503 = vmatprep.mubr.bf16.mxu0 0
        %2504 = vmatmul.mubr.bf16.gmra.mrb[0].mxu0 %v2352
        %v2505 = vpop.f32.mrb[0].mxu0
        %v2506 = vadd.f32 %v2305, %v2505
        %v2507 = vpop.f32.mrb[0].mxu0
        %v2508 = vpop.f32.mrb[0].mxu0
        %v2509 = vadd.f32 %v2308, %v2508
        %v2510 = vpop.f32.mrb[0].mxu0
        %2511 = vmatprep.mubr.bf16.mxu0 0
        %2512 = vmatmul.mubr.bf16.gmra.mrb[0].mxu0 %v2354
        %v2513 = vpop.f32.mrb[0].mxu0
        %v2514 = vadd.f32 %v2313, %v2513
        %v2515 = vpop.f32.mrb[0].mxu0
        %v2516 = vpop.f32.mrb[0].mxu0
        %v2517 = vadd.f32 %v2316, %v2516
        %v2518 = vpop.f32.mrb[0].mxu0
        %2519 = vdwg.mxu0
        %s2520 = scalar_lea.vmem [#allocation2], 24
        %v2521 = vld [vmem:[%s2520] sm:$0xf]
        %v2522 = vld [vmem:[%s2520 + $0x4] sm:$0xf]
        %v2523 = vld [vmem:[%s2520 + $0xc] sm:$0xf]
        %v2524 = vld [vmem:[%s2520 + $0x10] sm:$0xf]
        %v2525 = vld [vmem:[%s2520 + $0x18] sm:$0xf]
        %v2526 = vld [vmem:[%s2520 + $0x1c] sm:$0xf]
        %v2527 = vld [vmem:[%s2520 + $0x24] sm:$0xf]
        %v2528 = vld [vmem:[%s2520 + $0x28] sm:$0xf]
        %v2529 = vld [vmem:[%s2520 + $0x30] sm:$0xf]
        %v2530 = vld [vmem:[%s2520 + $0x34] sm:$0xf]
        %v2531 = vld [vmem:[%s2520 + $0x3c] sm:$0xf]
        %v2532 = vld [vmem:[%s2520 + $0x40] sm:$0xf]
        %v2533 = vld [vmem:[%s2520 + $0x48] sm:$0xf]
        %v2534 = vld [vmem:[%s2520 + $0x4c] sm:$0xf]
        %v2535 = vld [vmem:[%s2520 + $0x54] sm:$0xf]
        %v2536 = vld [vmem:[%s2520 + $0x58] sm:$0xf]
        %v2537 = vld [vmem:[%s2520 + $0x60] sm:$0xf]
        %v2538 = vld [vmem:[%s2520 + $0x64] sm:$0xf]
        %v2539 = vld [vmem:[%s2520 + $0x6c] sm:$0xf]
        %v2540 = vld [vmem:[%s2520 + $0x70] sm:$0xf]
        %v2541 = vld [vmem:[%s2520 + $0x78] sm:$0xf]
        %v2542 = vld [vmem:[%s2520 + $0x7c] sm:$0xf]
        %v2543 = vld [vmem:[%s2520 + $0x84] sm:$0xf]
        %v2544 = vld [vmem:[%s2520 + $0x88] sm:$0xf]
        %v2545 = vld [vmem:[%s2520 + $0x90] sm:$0xf]
        %v2546 = vld [vmem:[%s2520 + $0x94] sm:$0xf]
        %v2547 = vld [vmem:[%s2520 + $0x9c] sm:$0xf]
        %v2548 = vld [vmem:[%s2520 + $0xa0] sm:$0xf]
        %v2549 = vld [vmem:[%s2520 + $0xa8] sm:$0xf]
        %v2550 = vld [vmem:[%s2520 + $0xac] sm:$0xf]
        %v2551 = vld [vmem:[%s2520 + $0xb4] sm:$0xf]
        %v2552 = vld [vmem:[%s2520 + $0xb8] sm:$0xf]
        %v2553 = vld [vmem:[%s2520 + $0x8] sm:$0x1]
        %v2554 = vld [vmem:[%s2520 + $0x14] sm:$0x1]
        %v2555 = vld [vmem:[%s2520 + $0x20] sm:$0x1]
        %v2556 = vld [vmem:[%s2520 + $0x2c] sm:$0x1]
        %v2557 = vld [vmem:[%s2520 + $0x38] sm:$0x1]
        %v2558 = vld [vmem:[%s2520 + $0x44] sm:$0x1]
        %v2559 = vld [vmem:[%s2520 + $0x50] sm:$0x1]
        %v2560 = vld [vmem:[%s2520 + $0x5c] sm:$0x1]
        %v2561 = vld [vmem:[%s2520 + $0x68] sm:$0x1]
        %v2562 = vld [vmem:[%s2520 + $0x74] sm:$0x1]
        %v2563 = vld [vmem:[%s2520 + $0x80] sm:$0x1]
        %v2564 = vld [vmem:[%s2520 + $0x8c] sm:$0x1]
        %v2565 = vld [vmem:[%s2520 + $0x98] sm:$0x1]
        %v2566 = vld [vmem:[%s2520 + $0xa4] sm:$0x1]
        %v2567 = vld [vmem:[%s2520 + $0xb0] sm:$0x1]
        %v2568 = vld [vmem:[%s2520 + $0xbc] sm:$0x1]
        %v2569 = vld [vmem:[%s2520] sm:$0xe]
        %v2570 = vld [vmem:[%s2520 + $0xc] sm:$0xe]
        %v2571 = vld [vmem:[%s2520 + $0x18] sm:$0xe]
        %v2572 = vld [vmem:[%s2520 + $0x24] sm:$0xe]
        %v2573 = vld [vmem:[%s2520 + $0x30] sm:$0xe]
        %v2574 = vld [vmem:[%s2520 + $0x3c] sm:$0xe]
        %v2575 = vld [vmem:[%s2520 + $0x48] sm:$0xe]
        %v2576 = vld [vmem:[%s2520 + $0x54] sm:$0xe]
        %v2577 = vld [vmem:[%s2520 + $0x60] sm:$0xe]
        %v2578 = vld [vmem:[%s2520 + $0x6c] sm:$0xe]
        %v2579 = vld [vmem:[%s2520 + $0x78] sm:$0xe]
        %v2580 = vld [vmem:[%s2520 + $0x84] sm:$0xe]
        %v2581 = vld [vmem:[%s2520 + $0x90] sm:$0xe]
        %v2582 = vld [vmem:[%s2520 + $0x9c] sm:$0xe]
        %v2583 = vld [vmem:[%s2520 + $0xa8] sm:$0xe]
        %v2584 = vld [vmem:[%s2520 + $0xb4] sm:$0xe]
        %v2617 = vunpack.c.l.b16 %v2521
        %v2618 = vunpack.c.l.b16 %v2522
        %v2619 = vunpack.c.l.b16 %v2523
        %v2620 = vunpack.c.l.b16 %v2524
        %v2621 = vunpack.c.l.b16 %v2525
        %v2622 = vunpack.c.l.b16 %v2526
        %v2623 = vunpack.c.l.b16 %v2527
        %v2624 = vunpack.c.l.b16 %v2528
        %v2625 = vunpack.c.l.b16 %v2529
        %v2626 = vunpack.c.l.b16 %v2530
        %v2627 = vunpack.c.l.b16 %v2531
        %v2628 = vunpack.c.l.b16 %v2532
        %v2629 = vunpack.c.l.b16 %v2533
        %v2630 = vunpack.c.l.b16 %v2534
        %v2631 = vunpack.c.l.b16 %v2535
        %v2632 = vunpack.c.l.b16 %v2536
        %v2633 = vunpack.c.l.b16 %v2537
        %v2634 = vunpack.c.l.b16 %v2538
        %v2635 = vunpack.c.l.b16 %v2539
        %v2636 = vunpack.c.l.b16 %v2540
        %v2637 = vunpack.c.l.b16 %v2541
        %v2638 = vunpack.c.l.b16 %v2542
        %v2639 = vunpack.c.l.b16 %v2543
        %v2640 = vunpack.c.l.b16 %v2544
        %v2641 = vunpack.c.l.b16 %v2545
        %v2642 = vunpack.c.l.b16 %v2546
        %v2643 = vunpack.c.l.b16 %v2547
        %v2644 = vunpack.c.l.b16 %v2548
        %v2645 = vunpack.c.l.b16 %v2549
        %v2646 = vunpack.c.l.b16 %v2550
        %v2647 = vunpack.c.l.b16 %v2551
        %v2648 = vunpack.c.l.b16 %v2552
        %v2649 = vpack.c.b16 %v2618, %v2617
        %v2650 = vpack.c.b16 %v2620, %v2619
        %v2651 = vpack.c.b16 %v2622, %v2621
        %v2652 = vpack.c.b16 %v2624, %v2623
        %v2653 = vpack.c.b16 %v2626, %v2625
        %v2654 = vpack.c.b16 %v2628, %v2627
        %v2655 = vpack.c.b16 %v2630, %v2629
        %v2656 = vpack.c.b16 %v2632, %v2631
        %v2657 = vpack.c.b16 %v2634, %v2633
        %v2658 = vpack.c.b16 %v2636, %v2635
        %v2659 = vpack.c.b16 %v2638, %v2637
        %v2660 = vpack.c.b16 %v2640, %v2639
        %v2661 = vpack.c.b16 %v2642, %v2641
        %v2662 = vpack.c.b16 %v2644, %v2643
        %v2663 = vpack.c.b16 %v2646, %v2645
        %v2664 = vpack.c.b16 %v2648, %v2647
        %v2681 = vunpack.c.l.b16 %v2553
        %v2682 = vunpack.c.l.b16 %v2554
        %v2683 = vunpack.c.l.b16 %v2555
        %v2684 = vunpack.c.l.b16 %v2556
        %v2685 = vunpack.c.l.b16 %v2557
        %v2686 = vunpack.c.l.b16 %v2558
        %v2687 = vunpack.c.l.b16 %v2559
        %v2688 = vunpack.c.l.b16 %v2560
        %v2689 = vunpack.c.l.b16 %v2561
        %v2690 = vunpack.c.l.b16 %v2562
        %v2691 = vunpack.c.l.b16 %v2563
        %v2692 = vunpack.c.l.b16 %v2564
        %v2693 = vunpack.c.l.b16 %v2565
        %v2694 = vunpack.c.l.b16 %v2566
        %v2695 = vunpack.c.l.b16 %v2567
        %v2696 = vunpack.c.l.b16 %v2568
        %v2697 = vpack.c.b16 %v2681, %v2681
        %v2698 = vpack.c.b16 %v2682, %v2682
        %v2699 = vpack.c.b16 %v2683, %v2683
        %v2700 = vpack.c.b16 %v2684, %v2684
        %v2701 = vpack.c.b16 %v2685, %v2685
        %v2702 = vpack.c.b16 %v2686, %v2686
        %v2703 = vpack.c.b16 %v2687, %v2687
        %v2704 = vpack.c.b16 %v2688, %v2688
        %v2705 = vpack.c.b16 %v2689, %v2689
        %v2706 = vpack.c.b16 %v2690, %v2690
        %v2707 = vpack.c.b16 %v2691, %v2691
        %v2708 = vpack.c.b16 %v2692, %v2692
        %v2709 = vpack.c.b16 %v2693, %v2693
        %v2710 = vpack.c.b16 %v2694, %v2694
        %v2711 = vpack.c.b16 %v2695, %v2695
        %v2712 = vpack.c.b16 %v2696, %v2696
        %v2714 = vshrl.u32 %v2649, 16
        %v2716 = vshll.u32 %v2649, 16
        %v2718 = vrot.slane %v2716, 1
        %v2719 = vor.u32 %v2714, %v2718
        %v2721 = vshll.u32 %v2697, 16
        %v2723 = vrot.slane %v2721, 1
        %v2724 = vsel %vm1083, %v2719, %v2723
        %v2726 = vshrl.u32 %v2650, 16
        %v2728 = vshll.u32 %v2650, 16
        %v2730 = vrot.slane %v2728, 1
        %v2731 = vor.u32 %v2726, %v2730
        %v2733 = vshll.u32 %v2698, 16
        %v2735 = vrot.slane %v2733, 1
        %v2736 = vsel %vm1083, %v2731, %v2735
        %v2738 = vshrl.u32 %v2651, 16
        %v2740 = vshll.u32 %v2651, 16
        %v2742 = vrot.slane %v2740, 1
        %v2743 = vor.u32 %v2738, %v2742
        %v2745 = vshll.u32 %v2699, 16
        %v2747 = vrot.slane %v2745, 1
        %v2748 = vsel %vm1083, %v2743, %v2747
        %v2750 = vshrl.u32 %v2652, 16
        %v2752 = vshll.u32 %v2652, 16
        %v2754 = vrot.slane %v2752, 1
        %v2755 = vor.u32 %v2750, %v2754
        %v2757 = vshll.u32 %v2700, 16
        %v2759 = vrot.slane %v2757, 1
        %v2760 = vsel %vm1083, %v2755, %v2759
        %v2762 = vshrl.u32 %v2653, 16
        %v2764 = vshll.u32 %v2653, 16
        %v2766 = vrot.slane %v2764, 1
        %v2767 = vor.u32 %v2762, %v2766
        %v2769 = vshll.u32 %v2701, 16
        %v2771 = vrot.slane %v2769, 1
        %v2772 = vsel %vm1083, %v2767, %v2771
        %v2774 = vshrl.u32 %v2654, 16
        %v2776 = vshll.u32 %v2654, 16
        %v2778 = vrot.slane %v2776, 1
        %v2779 = vor.u32 %v2774, %v2778
        %v2781 = vshll.u32 %v2702, 16
        %v2783 = vrot.slane %v2781, 1
        %v2784 = vsel %vm1083, %v2779, %v2783
        %v2786 = vshrl.u32 %v2655, 16
        %v2788 = vshll.u32 %v2655, 16
        %v2790 = vrot.slane %v2788, 1
        %v2791 = vor.u32 %v2786, %v2790
        %v2793 = vshll.u32 %v2703, 16
        %v2795 = vrot.slane %v2793, 1
        %v2796 = vsel %vm1083, %v2791, %v2795
        %v2798 = vshrl.u32 %v2656, 16
        %v2800 = vshll.u32 %v2656, 16
        %v2802 = vrot.slane %v2800, 1
        %v2803 = vor.u32 %v2798, %v2802
        %v2805 = vshll.u32 %v2704, 16
        %v2807 = vrot.slane %v2805, 1
        %v2808 = vsel %vm1083, %v2803, %v2807
        %v2810 = vshrl.u32 %v2657, 16
        %v2812 = vshll.u32 %v2657, 16
        %v2814 = vrot.slane %v2812, 1
        %v2815 = vor.u32 %v2810, %v2814
        %v2817 = vshll.u32 %v2705, 16
        %v2819 = vrot.slane %v2817, 1
        %v2820 = vsel %vm1083, %v2815, %v2819
        %v2822 = vshrl.u32 %v2658, 16
        %v2824 = vshll.u32 %v2658, 16
        %v2826 = vrot.slane %v2824, 1
        %v2827 = vor.u32 %v2822, %v2826
        %v2829 = vshll.u32 %v2706, 16
        %v2831 = vrot.slane %v2829, 1
        %v2832 = vsel %vm1083, %v2827, %v2831
        %v2834 = vshrl.u32 %v2659, 16
        %v2836 = vshll.u32 %v2659, 16
        %v2838 = vrot.slane %v2836, 1
        %v2839 = vor.u32 %v2834, %v2838
        %v2841 = vshll.u32 %v2707, 16
        %v2843 = vrot.slane %v2841, 1
        %v2844 = vsel %vm1083, %v2839, %v2843
        %v2846 = vshrl.u32 %v2660, 16
        %v2848 = vshll.u32 %v2660, 16
        %v2850 = vrot.slane %v2848, 1
        %v2851 = vor.u32 %v2846, %v2850
        %v2853 = vshll.u32 %v2708, 16
        %v2855 = vrot.slane %v2853, 1
        %v2856 = vsel %vm1083, %v2851, %v2855
        %v2858 = vshrl.u32 %v2661, 16
        %v2860 = vshll.u32 %v2661, 16
        %v2862 = vrot.slane %v2860, 1
        %v2863 = vor.u32 %v2858, %v2862
        %v2865 = vshll.u32 %v2709, 16
        %v2867 = vrot.slane %v2865, 1
        %v2868 = vsel %vm1083, %v2863, %v2867
        %v2870 = vshrl.u32 %v2662, 16
        %v2872 = vshll.u32 %v2662, 16
        %v2874 = vrot.slane %v2872, 1
        %v2875 = vor.u32 %v2870, %v2874
        %v2877 = vshll.u32 %v2710, 16
        %v2879 = vrot.slane %v2877, 1
        %v2880 = vsel %vm1083, %v2875, %v2879
        %v2882 = vshrl.u32 %v2663, 16
        %v2884 = vshll.u32 %v2663, 16
        %v2886 = vrot.slane %v2884, 1
        %v2887 = vor.u32 %v2882, %v2886
        %v2889 = vshll.u32 %v2711, 16
        %v2891 = vrot.slane %v2889, 1
        %v2892 = vsel %vm1083, %v2887, %v2891
        %v2894 = vshrl.u32 %v2664, 16
        %v2896 = vshll.u32 %v2664, 16
        %v2898 = vrot.slane %v2896, 1
        %v2899 = vor.u32 %v2894, %v2898
        %v2901 = vshll.u32 %v2712, 16
        %v2903 = vrot.slane %v2901, 1
        %v2904 = vsel %vm1083, %v2899, %v2903
        %2905 = vrot.lane.b32.xlu0 %v2724, 4
        %v2906 = vpop.permute.xlu0 %2905
        %2907 = vrot.lane.b32.xlu0 %v2736, 4
        %v2908 = vpop.permute.xlu0 %2907
        %2909 = vrot.lane.b32.xlu0 %v2748, 4
        %v2910 = vpop.permute.xlu0 %2909
        %2911 = vrot.lane.b32.xlu0 %v2760, 4
        %v2912 = vpop.permute.xlu0 %2911
        %2913 = vrot.lane.b32.xlu0 %v2772, 4
        %v2914 = vpop.permute.xlu0 %2913
        %2915 = vrot.lane.b32.xlu0 %v2784, 4
        %v2916 = vpop.permute.xlu0 %2915
        %2917 = vrot.lane.b32.xlu0 %v2796, 4
        %v2918 = vpop.permute.xlu0 %2917
        %2919 = vrot.lane.b32.xlu0 %v2808, 4
        %v2920 = vpop.permute.xlu0 %2919
        %2921 = vrot.lane.b32.xlu0 %v2820, 4
        %v2922 = vpop.permute.xlu0 %2921
        %2923 = vrot.lane.b32.xlu0 %v2832, 4
        %v2924 = vpop.permute.xlu0 %2923
        %2925 = vrot.lane.b32.xlu0 %v2844, 4
        %v2926 = vpop.permute.xlu0 %2925
        %2927 = vrot.lane.b32.xlu0 %v2856, 4
        %v2928 = vpop.permute.xlu0 %2927
        %2929 = vrot.lane.b32.xlu0 %v2868, 4
        %v2930 = vpop.permute.xlu0 %2929
        %2931 = vrot.lane.b32.xlu0 %v2880, 4
        %v2932 = vpop.permute.xlu0 %2931
        %2933 = vrot.lane.b32.xlu0 %v2892, 4
        %v2934 = vpop.permute.xlu0 %2933
        %2935 = vrot.lane.b32.xlu0 %v2904, 4
        %v2936 = vpop.permute.xlu0 %2935
        %v2953 = vunpack.c.l.b16 %v2569
        %v2954 = vunpack.c.l.b16 %v2570
        %v2955 = vunpack.c.l.b16 %v2571
        %v2956 = vunpack.c.l.b16 %v2572
        %v2957 = vunpack.c.l.b16 %v2573
        %v2958 = vunpack.c.l.b16 %v2574
        %v2959 = vunpack.c.l.b16 %v2575
        %v2960 = vunpack.c.l.b16 %v2576
        %v2961 = vunpack.c.l.b16 %v2577
        %v2962 = vunpack.c.l.b16 %v2578
        %v2963 = vunpack.c.l.b16 %v2579
        %v2964 = vunpack.c.l.b16 %v2580
        %v2965 = vunpack.c.l.b16 %v2581
        %v2966 = vunpack.c.l.b16 %v2582
        %v2967 = vunpack.c.l.b16 %v2583
        %v2968 = vunpack.c.l.b16 %v2584
        %v2969 = vpack.c.b16 %v2618, %v2953
        %v2970 = vpack.c.b16 %v2620, %v2954
        %v2971 = vpack.c.b16 %v2622, %v2955
        %v2972 = vpack.c.b16 %v2624, %v2956
        %v2973 = vpack.c.b16 %v2626, %v2957
        %v2974 = vpack.c.b16 %v2628, %v2958
        %v2975 = vpack.c.b16 %v2630, %v2959
        %v2976 = vpack.c.b16 %v2632, %v2960
        %v2977 = vpack.c.b16 %v2634, %v2961
        %v2978 = vpack.c.b16 %v2636, %v2962
        %v2979 = vpack.c.b16 %v2638, %v2963
        %v2980 = vpack.c.b16 %v2640, %v2964
        %v2981 = vpack.c.b16 %v2642, %v2965
        %v2982 = vpack.c.b16 %v2644, %v2966
        %v2983 = vpack.c.b16 %v2646, %v2967
        %v2984 = vpack.c.b16 %v2648, %v2968
        %v2985 = vrot.slane %v2969, 1
        %v2986 = vrot.slane %v2697, 1
        %v2987 = vsel %vm1356, %v2985, %v2986
        %v2988 = vrot.slane %v2970, 1
        %v2989 = vrot.slane %v2698, 1
        %v2990 = vsel %vm1356, %v2988, %v2989
        %v2991 = vrot.slane %v2971, 1
        %v2992 = vrot.slane %v2699, 1
        %v2993 = vsel %vm1356, %v2991, %v2992
        %v2994 = vrot.slane %v2972, 1
        %v2995 = vrot.slane %v2700, 1
        %v2996 = vsel %vm1356, %v2994, %v2995
        %v2997 = vrot.slane %v2973, 1
        %v2998 = vrot.slane %v2701, 1
        %v2999 = vsel %vm1356, %v2997, %v2998
        %v3000 = vrot.slane %v2974, 1
        %v3001 = vrot.slane %v2702, 1
        %v3002 = vsel %vm1356, %v3000, %v3001
        %v3003 = vrot.slane %v2975, 1
        %v3004 = vrot.slane %v2703, 1
        %v3005 = vsel %vm1356, %v3003, %v3004
        %v3006 = vrot.slane %v2976, 1
        %v3007 = vrot.slane %v2704, 1
        %v3008 = vsel %vm1356, %v3006, %v3007
        %v3009 = vrot.slane %v2977, 1
        %v3010 = vrot.slane %v2705, 1
        %v3011 = vsel %vm1356, %v3009, %v3010
        %v3012 = vrot.slane %v2978, 1
        %v3013 = vrot.slane %v2706, 1
        %v3014 = vsel %vm1356, %v3012, %v3013
        %v3015 = vrot.slane %v2979, 1
        %v3016 = vrot.slane %v2707, 1
        %v3017 = vsel %vm1356, %v3015, %v3016
        %v3018 = vrot.slane %v2980, 1
        %v3019 = vrot.slane %v2708, 1
        %v3020 = vsel %vm1356, %v3018, %v3019
        %v3021 = vrot.slane %v2981, 1
        %v3022 = vrot.slane %v2709, 1
        %v3023 = vsel %vm1356, %v3021, %v3022
        %v3024 = vrot.slane %v2982, 1
        %v3025 = vrot.slane %v2710, 1
        %v3026 = vsel %vm1356, %v3024, %v3025
        %v3027 = vrot.slane %v2983, 1
        %v3028 = vrot.slane %v2711, 1
        %v3029 = vsel %vm1356, %v3027, %v3028
        %v3030 = vrot.slane %v2984, 1
        %v3031 = vrot.slane %v2712, 1
        %v3032 = vsel %vm1356, %v3030, %v3031
        %3033 = vrot.lane.b32.xlu0 %v2987, 8
        %v3034 = vpop.permute.xlu0 %3033
        %3035 = vrot.lane.b32.xlu0 %v2990, 8
        %v3036 = vpop.permute.xlu0 %3035
        %3037 = vrot.lane.b32.xlu0 %v2993, 8
        %v3038 = vpop.permute.xlu0 %3037
        %3039 = vrot.lane.b32.xlu0 %v2996, 8
        %v3040 = vpop.permute.xlu0 %3039
        %3041 = vrot.lane.b32.xlu0 %v2999, 8
        %v3042 = vpop.permute.xlu0 %3041
        %3043 = vrot.lane.b32.xlu0 %v3002, 8
        %v3044 = vpop.permute.xlu0 %3043
        %3045 = vrot.lane.b32.xlu0 %v3005, 8
        %v3046 = vpop.permute.xlu0 %3045
        %3047 = vrot.lane.b32.xlu0 %v3008, 8
        %v3048 = vpop.permute.xlu0 %3047
        %3049 = vrot.lane.b32.xlu0 %v3011, 8
        %v3050 = vpop.permute.xlu0 %3049
        %3051 = vrot.lane.b32.xlu0 %v3014, 8
        %v3052 = vpop.permute.xlu0 %3051
        %3053 = vrot.lane.b32.xlu0 %v3017, 8
        %v3054 = vpop.permute.xlu0 %3053
        %3055 = vrot.lane.b32.xlu0 %v3020, 8
        %v3056 = vpop.permute.xlu0 %3055
        %3057 = vrot.lane.b32.xlu0 %v3023, 8
        %v3058 = vpop.permute.xlu0 %3057
        %3059 = vrot.lane.b32.xlu0 %v3026, 8
        %v3060 = vpop.permute.xlu0 %3059
        %3061 = vrot.lane.b32.xlu0 %v3029, 8
        %v3062 = vpop.permute.xlu0 %3061
        %3063 = vrot.lane.b32.xlu0 %v3032, 8
        %v3064 = vpop.permute.xlu0 %3063
        %v3066 = vsel %vm1437, %v2649, %v2906
        %v3068 = vsel %vm1437, %v2650, %v2908
        %v3070 = vsel %vm1437, %v2651, %v2910
        %v3072 = vsel %vm1437, %v2652, %v2912
        %v3074 = vsel %vm1437, %v2653, %v2914
        %v3076 = vsel %vm1437, %v2654, %v2916
        %v3078 = vsel %vm1437, %v2655, %v2918
        %v3080 = vsel %vm1437, %v2656, %v2920
        %v3082 = vsel %vm1437, %v2657, %v2922
        %v3084 = vsel %vm1437, %v2658, %v2924
        %v3086 = vsel %vm1437, %v2659, %v2926
        %v3088 = vsel %vm1437, %v2660, %v2928
        %v3090 = vsel %vm1437, %v2661, %v2930
        %v3092 = vsel %vm1437, %v2662, %v2932
        %v3094 = vsel %vm1437, %v2663, %v2934
        %v3096 = vsel %vm1437, %v2664, %v2936
        %v3098 = vsel %vm1470, %v3066, %v3034
        %v3100 = vsel %vm1470, %v3068, %v3036
        %v3102 = vsel %vm1470, %v3070, %v3038
        %v3104 = vsel %vm1470, %v3072, %v3040
        %v3106 = vsel %vm1470, %v3074, %v3042
        %v3108 = vsel %vm1470, %v3076, %v3044
        %v3110 = vsel %vm1470, %v3078, %v3046
        %v3112 = vsel %vm1470, %v3080, %v3048
        %v3114 = vsel %vm1470, %v3082, %v3050
        %v3116 = vsel %vm1470, %v3084, %v3052
        %v3118 = vsel %vm1470, %v3086, %v3054
        %v3120 = vsel %vm1470, %v3088, %v3056
        %v3122 = vsel %vm1470, %v3090, %v3058
        %v3124 = vsel %vm1470, %v3092, %v3060
        %v3126 = vsel %vm1470, %v3094, %v3062
        %v3128 = vsel %vm1470, %v3096, %v3064
        %s3129 = scalar_lea.vmem [#allocation6], 16
        %v3130 = vld [vmem:[%s3129] sm:$0xf]
        %v3131 = vld [vmem:[%s3129 + $0x4] sm:$0x3]
        %v3134 = vunpack.c.l.b16 %v3130
        %v3135 = vunpack.c.l.b16 %v3131
        %v3136 = vpack.c.b16 %v3135, %v3134
        %v3137 = vsel %vm2121, %v3098, 0
        %v3139 = vsel %vm2121, %v3100, 0
        %v3141 = vsel %vm2121, %v3102, 0
        %v3143 = vsel %vm2121, %v3104, 0
        %v3145 = vsel %vm2121, %v3106, 0
        %v3147 = vsel %vm2121, %v3108, 0
        %v3149 = vsel %vm2121, %v3110, 0
        %v3151 = vsel %vm2121, %v3112, 0
        %v3153 = vsel %vm2121, %v3114, 0
        %v3155 = vsel %vm2121, %v3116, 0
        %v3157 = vsel %vm2121, %v3118, 0
        %v3159 = vsel %vm2121, %v3120, 0
        %v3161 = vsel %vm2121, %v3122, 0
        %v3163 = vsel %vm2121, %v3124, 0
        %v3165 = vsel %vm2121, %v3126, 0
        %v3167 = vsel %vm2121, %v3128, 0
        %v3170 = vsel %vm2154, %v3136, 0
        %3172 = vmatprep.subr.bf16.mxu0 0
        %3173 = vmatpush1.bf16.msra.mxu0 %v3170
        %3174 = vmatprep.subr.bf16.mxu0 0
        %3175 = vmatpush1.bf16.msra.mxu0 0
        %3176 = vmatprep.subr.bf16.mxu0 0
        %3177 = vmatpush1.bf16.msra.mxu0 0
        %3178 = vmatprep.subr.bf16.mxu0 0
        %3179 = vmatpush1.bf16.msra.mxu0 0
        %3180 = vmatprep.subr.bf16.mxu0 0
        %3181 = vmatpush1.bf16.msra.mxu0 0
        %3182 = vmatprep.subr.bf16.mxu0 0
        %3183 = vmatpush1.bf16.msra.mxu0 0
        %3184 = vmatprep.subr.bf16.mxu0 0
        %3185 = vmatpush1.bf16.msra.mxu0 0
        %3186 = vmatprep.subr.bf16.mxu0 0
        %3187 = vmatpush1.bf16.msra.mxu0 0
        %3188 = vmatprep.subr.bf16.mxu0 0
        %3189 = vmatpush1.bf16.msra.mxu0 0
        %3190 = vmatprep.subr.bf16.mxu0 0
        %3191 = vmatpush1.bf16.msra.mxu0 0
        %3192 = vmatprep.subr.bf16.mxu0 0
        %3193 = vmatpush1.bf16.msra.mxu0 0
        %3194 = vmatprep.subr.bf16.mxu0 0
        %3195 = vmatpush1.bf16.msra.mxu0 0
        %3196 = vmatprep.subr.bf16.mxu0 0
        %3197 = vmatpush1.bf16.msra.mxu0 0
        %3198 = vmatprep.subr.bf16.mxu0 0
        %3199 = vmatpush1.bf16.msra.mxu0 0
        %3200 = vmatprep.subr.bf16.mxu0 0
        %3201 = vmatpush1.bf16.msra.mxu0 0
        %3202 = vmatprep.subr.bf16.mxu0 0
        %3203 = vmatpush1.bf16.msra.mxu0 0
        %3204 = vmatprep.mubr.bf16.mxu0 0
        %3205 = vmatmul.mubr.bf16.gmra.mrb[0].mxu0 %v3137
        %v3206 = vpop.f32.mrb[0].mxu0
        %v3207 = vadd.f32 0.0, %v3206
        %v3208 = vpop.f32.mrb[0].mxu0
        %v3209 = vpop.f32.mrb[0].mxu0
        %v3210 = vadd.f32 0.0, %v3209
        %v3211 = vpop.f32.mrb[0].mxu0
        %3212 = vmatprep.mubr.bf16.mxu0 0
        %3213 = vmatmul.mubr.bf16.gmra.mrb[0].mxu0 %v3139
        %v3214 = vpop.f32.mrb[0].mxu0
        %v3215 = vadd.f32 0.0, %v3214
        %v3216 = vpop.f32.mrb[0].mxu0
        %v3217 = vpop.f32.mrb[0].mxu0
        %v3218 = vadd.f32 0.0, %v3217
        %v3219 = vpop.f32.mrb[0].mxu0
        %3220 = vmatprep.mubr.bf16.mxu0 0
        %3221 = vmatmul.mubr.bf16.gmra.mrb[0].mxu0 %v3141
        %v3222 = vpop.f32.mrb[0].mxu0
        %v3223 = vadd.f32 0.0, %v3222
        %v3224 = vpop.f32.mrb[0].mxu0
        %v3225 = vpop.f32.mrb[0].mxu0
        %v3226 = vadd.f32 0.0, %v3225
        %v3227 = vpop.f32.mrb[0].mxu0
        %3228 = vmatprep.mubr.bf16.mxu0 0
        %3229 = vmatmul.mubr.bf16.gmra.mrb[0].mxu0 %v3143
        %v3230 = vpop.f32.mrb[0].mxu0
        %v3231 = vadd.f32 0.0, %v3230
        %v3232 = vpop.f32.mrb[0].mxu0
        %v3233 = vpop.f32.mrb[0].mxu0
        %v3234 = vadd.f32 0.0, %v3233
        %v3235 = vpop.f32.mrb[0].mxu0
        %3236 = vmatprep.mubr.bf16.mxu0 0
        %3237 = vmatmul.mubr.bf16.gmra.mrb[0].mxu0 %v3145
        %v3238 = vpop.f32.mrb[0].mxu0
        %v3239 = vadd.f32 0.0, %v3238
        %v3240 = vpop.f32.mrb[0].mxu0
        %v3241 = vpop.f32.mrb[0].mxu0
        %v3242 = vadd.f32 0.0, %v3241
        %v3243 = vpop.f32.mrb[0].mxu0
        %3244 = vmatprep.mubr.bf16.mxu0 0
        %3245 = vmatmul.mubr.bf16.gmra.mrb[0].mxu0 %v3147
        %v3246 = vpop.f32.mrb[0].mxu0
        %v3247 = vadd.f32 0.0, %v3246
        %v3248 = vpop.f32.mrb[0].mxu0
        %v3249 = vpop.f32.mrb[0].mxu0
        %v3250 = vadd.f32 0.0, %v3249
        %v3251 = vpop.f32.mrb[0].mxu0
        %3252 = vmatprep.mubr.bf16.mxu0 0
        %3253 = vmatmul.mubr.bf16.gmra.mrb[0].mxu0 %v3149
        %v3254 = vpop.f32.mrb[0].mxu0
        %v3255 = vadd.f32 0.0, %v3254
        %v3256 = vpop.f32.mrb[0].mxu0
        %v3257 = vpop.f32.mrb[0].mxu0
        %v3258 = vadd.f32 0.0, %v3257
        %v3259 = vpop.f32.mrb[0].mxu0
        %3260 = vmatprep.mubr.bf16.mxu0 0
        %3261 = vmatmul.mubr.bf16.gmra.mrb[0].mxu0 %v3151
        %v3262 = vpop.f32.mrb[0].mxu0
        %v3263 = vadd.f32 0.0, %v3262
        %v3264 = vpop.f32.mrb[0].mxu0
        %v3265 = vpop.f32.mrb[0].mxu0
        %v3266 = vadd.f32 0.0, %v3265
        %v3267 = vpop.f32.mrb[0].mxu0
        %3268 = vmatprep.mubr.bf16.mxu0 0
        %3269 = vmatmul.mubr.bf16.gmra.mrb[0].mxu0 %v3153
        %v3270 = vpop.f32.mrb[0].mxu0
        %v3271 = vadd.f32 0.0, %v3270
        %v3272 = vpop.f32.mrb[0].mxu0
        %v3273 = vpop.f32.mrb[0].mxu0
        %v3274 = vadd.f32 0.0, %v3273
        %v3275 = vpop.f32.mrb[0].mxu0
        %3276 = vmatprep.mubr.bf16.mxu0 0
        %3277 = vmatmul.mubr.bf16.gmra.mrb[0].mxu0 %v3155
        %v3278 = vpop.f32.mrb[0].mxu0
        %v3279 = vadd.f32 0.0, %v3278
        %v3280 = vpop.f32.mrb[0].mxu0
        %v3281 = vpop.f32.mrb[0].mxu0
        %v3282 = vadd.f32 0.0, %v3281
        %v3283 = vpop.f32.mrb[0].mxu0
        %3284 = vmatprep.mubr.bf16.mxu0 0
        %3285 = vmatmul.mubr.bf16.gmra.mrb[0].mxu0 %v3157
        %v3286 = vpop.f32.mrb[0].mxu0
        %v3287 = vadd.f32 0.0, %v3286
        %v3288 = vpop.f32.mrb[0].mxu0
        %v3289 = vpop.f32.mrb[0].mxu0
        %v3290 = vadd.f32 0.0, %v3289
        %v3291 = vpop.f32.mrb[0].mxu0
        %3292 = vmatprep.mubr.bf16.mxu0 0
        %3293 = vmatmul.mubr.bf16.gmra.mrb[0].mxu0 %v3159
        %v3294 = vpop.f32.mrb[0].mxu0
        %v3295 = vadd.f32 0.0, %v3294
        %v3296 = vpop.f32.mrb[0].mxu0
        %v3297 = vpop.f32.mrb[0].mxu0
        %v3298 = vadd.f32 0.0, %v3297
        %v3299 = vpop.f32.mrb[0].mxu0
        %3300 = vmatprep.mubr.bf16.mxu0 0
        %3301 = vmatmul.mubr.bf16.gmra.mrb[0].mxu0 %v3161
        %v3302 = vpop.f32.mrb[0].mxu0
        %v3303 = vadd.f32 0.0, %v3302
        %v3304 = vpop.f32.mrb[0].mxu0
        %v3305 = vpop.f32.mrb[0].mxu0
        %v3306 = vadd.f32 0.0, %v3305
        %v3307 = vpop.f32.mrb[0].mxu0
        %3308 = vmatprep.mubr.bf16.mxu0 0
        %3309 = vmatmul.mubr.bf16.gmra.mrb[0].mxu0 %v3163
        %v3310 = vpop.f32.mrb[0].mxu0
        %v3311 = vadd.f32 0.0, %v3310
        %v3312 = vpop.f32.mrb[0].mxu0
        %v3313 = vpop.f32.mrb[0].mxu0
        %v3314 = vadd.f32 0.0, %v3313
        %v3315 = vpop.f32.mrb[0].mxu0
        %3316 = vmatprep.mubr.bf16.mxu0 0
        %3317 = vmatmul.mubr.bf16.gmra.mrb[0].mxu0 %v3165
        %v3318 = vpop.f32.mrb[0].mxu0
        %v3319 = vadd.f32 0.0, %v3318
        %v3320 = vpop.f32.mrb[0].mxu0
        %v3321 = vpop.f32.mrb[0].mxu0
        %v3322 = vadd.f32 0.0, %v3321
        %v3323 = vpop.f32.mrb[0].mxu0
        %3324 = vmatprep.mubr.bf16.mxu0 0
        %3325 = vmatmul.mubr.bf16.gmra.mrb[0].mxu0 %v3167
        %v3326 = vpop.f32.mrb[0].mxu0
        %v3327 = vadd.f32 0.0, %v3326
        %v3328 = vpop.f32.mrb[0].mxu0
        %v3329 = vpop.f32.mrb[0].mxu0
        %v3330 = vadd.f32 0.0, %v3329
        %v3331 = vpop.f32.mrb[0].mxu0
        %3332 = vdwg.mxu0
        %v3333 = vadd.f32 %v2394, %v3207
        %v3334 = vadd.f32 %v2397, %v3210
        %v3335 = vadd.f32 %v2402, %v3215
        %v3336 = vadd.f32 %v2405, %v3218
        %v3337 = vadd.f32 %v2410, %v3223
        %v3338 = vadd.f32 %v2413, %v3226
        %v3339 = vadd.f32 %v2418, %v3231
        %v3340 = vadd.f32 %v2421, %v3234
        %v3341 = vadd.f32 %v2426, %v3239
        %v3342 = vadd.f32 %v2429, %v3242
        %v3343 = vadd.f32 %v2434, %v3247
        %v3344 = vadd.f32 %v2437, %v3250
        %v3345 = vadd.f32 %v2442, %v3255
        %v3346 = vadd.f32 %v2445, %v3258
        %v3347 = vadd.f32 %v2450, %v3263
        %v3348 = vadd.f32 %v2453, %v3266
        %v3349 = vadd.f32 %v2458, %v3271
        %v3350 = vadd.f32 %v2461, %v3274
        %v3351 = vadd.f32 %v2466, %v3279
        %v3352 = vadd.f32 %v2469, %v3282
        %v3353 = vadd.f32 %v2474, %v3287
        %v3354 = vadd.f32 %v2477, %v3290
        %v3355 = vadd.f32 %v2482, %v3295
        %v3356 = vadd.f32 %v2485, %v3298
        %v3357 = vadd.f32 %v2490, %v3303
        %v3358 = vadd.f32 %v2493, %v3306
        %v3359 = vadd.f32 %v2498, %v3311
        %v3360 = vadd.f32 %v2501, %v3314
        %v3361 = vadd.f32 %v2506, %v3319
        %v3362 = vadd.f32 %v2509, %v3322
        %v3363 = vadd.f32 %v2514, %v3327
        %v3364 = vadd.f32 %v2517, %v3330
        %v3365 = vsel %vm1437, %v3333, 0.0
        %v3366 = vsel %vm1437, %v3334, 0.0
        %v3367 = vadd.f32 %v3365, %v3366
        %v3368 = vsel %vm1437, %v3335, 0.0
        %v3369 = vadd.f32 %v3367, %v3368
        %v3370 = vsel %vm1437, %v3336, 0.0
        %v3371 = vadd.f32 %v3369, %v3370
        %v3372 = vsel %vm1437, %v3337, 0.0
        %v3373 = vadd.f32 %v3371, %v3372
        %v3374 = vsel %vm1437, %v3338, 0.0
        %v3375 = vadd.f32 %v3373, %v3374
        %v3376 = vsel %vm1437, %v3339, 0.0
        %v3377 = vadd.f32 %v3375, %v3376
        %v3378 = vsel %vm1437, %v3340, 0.0
        %v3379 = vadd.f32 %v3377, %v3378
        %v3380 = vsel %vm1437, %v3341, 0.0
        %v3381 = vadd.f32 %v3379, %v3380
        %v3382 = vsel %vm1437, %v3342, 0.0
        %v3383 = vadd.f32 %v3381, %v3382
        %v3384 = vsel %vm1437, %v3343, 0.0
        %v3385 = vadd.f32 %v3383, %v3384
        %v3386 = vsel %vm1437, %v3344, 0.0
        %v3387 = vadd.f32 %v3385, %v3386
        %v3388 = vsel %vm1437, %v3345, 0.0
        %v3389 = vadd.f32 %v3387, %v3388
        %v3390 = vsel %vm1437, %v3346, 0.0
        %v3391 = vadd.f32 %v3389, %v3390
        %v3392 = vsel %vm1437, %v3347, 0.0
        %v3393 = vadd.f32 %v3391, %v3392
        %v3394 = vsel %vm1437, %v3348, 0.0
        %v3395 = vadd.f32 %v3393, %v3394
        %v3396 = vsel %vm1437, %v3349, 0.0
        %v3397 = vadd.f32 %v3395, %v3396
        %v3398 = vsel %vm1437, %v3350, 0.0
        %v3399 = vadd.f32 %v3397, %v3398
        %v3400 = vsel %vm1437, %v3351, 0.0
        %v3401 = vadd.f32 %v3399, %v3400
        %v3402 = vsel %vm1437, %v3352, 0.0
        %v3403 = vadd.f32 %v3401, %v3402
        %v3404 = vsel %vm1437, %v3353, 0.0
        %v3405 = vadd.f32 %v3403, %v3404
        %v3406 = vsel %vm1437, %v3354, 0.0
        %v3407 = vadd.f32 %v3405, %v3406
        %v3408 = vsel %vm1437, %v3355, 0.0
        %v3409 = vadd.f32 %v3407, %v3408
        %v3410 = vsel %vm1437, %v3356, 0.0
        %v3411 = vadd.f32 %v3409, %v3410
        %v3412 = vsel %vm1437, %v3357, 0.0
        %v3413 = vadd.f32 %v3411, %v3412
        %v3414 = vsel %vm1437, %v3358, 0.0
        %v3415 = vadd.f32 %v3413, %v3414
        %v3416 = vsel %vm1437, %v3359, 0.0
        %v3417 = vadd.f32 %v3415, %v3416
        %v3418 = vsel %vm1437, %v3360, 0.0
        %v3419 = vadd.f32 %v3417, %v3418
        %v3420 = vsel %vm1437, %v3361, 0.0
        %v3421 = vadd.f32 %v3419, %v3420
        %v3422 = vsel %vm1437, %v3362, 0.0
        %v3423 = vadd.f32 %v3421, %v3422
        %v3424 = vsel %vm1437, %v3363, 0.0
        %v3425 = vadd.f32 %v3423, %v3424
        %v3426 = vsel %vm1437, %v3364, 0.0
        %v3427 = vadd.f32 %v3425, %v3426
        %v3428 = vrot.slane %v3427, 4
        %v3429 = vadd.f32 %v3427, %v3428
        %v3430 = vrot.slane %v3429, 2
        %v3431 = vadd.f32 %v3429, %v3430
        %v3432 = vrot.slane %v3431, 1
        %v3433 = vadd.f32 %v3431, %v3432
        %v3434 = vmul.f32 %v3433, 0.00390625
        %v3435 = vsub.f32 %v3333, %v3434
        %v3436 = vsub.f32 %v3334, %v3434
        %v3437 = vsub.f32 %v3335, %v3434
        %v3438 = vsub.f32 %v3336, %v3434
        %v3439 = vsub.f32 %v3337, %v3434
        %v3440 = vsub.f32 %v3338, %v3434
        %v3441 = vsub.f32 %v3339, %v3434
        %v3442 = vsub.f32 %v3340, %v3434
        %v3443 = vsub.f32 %v3341, %v3434
        %v3444 = vsub.f32 %v3342, %v3434
        %v3445 = vsub.f32 %v3343, %v3434
        %v3446 = vsub.f32 %v3344, %v3434
        %v3447 = vsub.f32 %v3345, %v3434
        %v3448 = vsub.f32 %v3346, %v3434
        %v3449 = vsub.f32 %v3347, %v3434
        %v3450 = vsub.f32 %v3348, %v3434
        %v3451 = vsub.f32 %v3349, %v3434
        %v3452 = vsub.f32 %v3350, %v3434
        %v3453 = vsub.f32 %v3351, %v3434
        %v3454 = vsub.f32 %v3352, %v3434
        %v3455 = vsub.f32 %v3353, %v3434
        %v3456 = vsub.f32 %v3354, %v3434
        %v3457 = vsub.f32 %v3355, %v3434
        %v3458 = vsub.f32 %v3356, %v3434
        %v3459 = vsub.f32 %v3357, %v3434
        %v3460 = vsub.f32 %v3358, %v3434
        %v3461 = vsub.f32 %v3359, %v3434
        %v3462 = vsub.f32 %v3360, %v3434
        %v3463 = vsub.f32 %v3361, %v3434
        %v3464 = vsub.f32 %v3362, %v3434
        %v3465 = vsub.f32 %v3363, %v3434
        %v3466 = vsub.f32 %v3364, %v3434
        %v3467 = vmul.f32 %v3435, %v3435
        %v3468 = vmul.f32 %v3436, %v3436
        %v3469 = vmul.f32 %v3437, %v3437
        %v3470 = vmul.f32 %v3438, %v3438
        %v3471 = vmul.f32 %v3439, %v3439
        %v3472 = vmul.f32 %v3440, %v3440
        %v3473 = vmul.f32 %v3441, %v3441
        %v3474 = vmul.f32 %v3442, %v3442
        %v3475 = vmul.f32 %v3443, %v3443
        %v3476 = vmul.f32 %v3444, %v3444
        %v3477 = vmul.f32 %v3445, %v3445
        %v3478 = vmul.f32 %v3446, %v3446
        %v3479 = vmul.f32 %v3447, %v3447
        %v3480 = vmul.f32 %v3448, %v3448
        %v3481 = vmul.f32 %v3449, %v3449
        %v3482 = vmul.f32 %v3450, %v3450
        %v3483 = vmul.f32 %v3451, %v3451
        %v3484 = vmul.f32 %v3452, %v3452
        %v3485 = vmul.f32 %v3453, %v3453
        %v3486 = vmul.f32 %v3454, %v3454
        %v3487 = vmul.f32 %v3455, %v3455
        %v3488 = vmul.f32 %v3456, %v3456
        %v3489 = vmul.f32 %v3457, %v3457
        %v3490 = vmul.f32 %v3458, %v3458
        %v3491 = vmul.f32 %v3459, %v3459
        %v3492 = vmul.f32 %v3460, %v3460
        %v3493 = vmul.f32 %v3461, %v3461
        %v3494 = vmul.f32 %v3462, %v3462
        %v3495 = vmul.f32 %v3463, %v3463
        %v3496 = vmul.f32 %v3464, %v3464
        %v3497 = vmul.f32 %v3465, %v3465
        %v3498 = vmul.f32 %v3466, %v3466
        %v3499 = vsel %vm1437, %v3467, 0.0
        %v3500 = vsel %vm1437, %v3468, 0.0
        %v3501 = vadd.f32 %v3499, %v3500
        %v3502 = vsel %vm1437, %v3469, 0.0
        %v3503 = vadd.f32 %v3501, %v3502
        %v3504 = vsel %vm1437, %v3470, 0.0
        %v3505 = vadd.f32 %v3503, %v3504
        %v3506 = vsel %vm1437, %v3471, 0.0
        %v3507 = vadd.f32 %v3505, %v3506
        %v3508 = vsel %vm1437, %v3472, 0.0
        %v3509 = vadd.f32 %v3507, %v3508
        %v3510 = vsel %vm1437, %v3473, 0.0
        %v3511 = vadd.f32 %v3509, %v3510
        %v3512 = vsel %vm1437, %v3474, 0.0
        %v3513 = vadd.f32 %v3511, %v3512
        %v3514 = vsel %vm1437, %v3475, 0.0
        %v3515 = vadd.f32 %v3513, %v3514
        %v3516 = vsel %vm1437, %v3476, 0.0
        %v3517 = vadd.f32 %v3515, %v3516
        %v3518 = vsel %vm1437, %v3477, 0.0
        %v3519 = vadd.f32 %v3517, %v3518
        %v3520 = vsel %vm1437, %v3478, 0.0
        %v3521 = vadd.f32 %v3519, %v3520
        %v3522 = vsel %vm1437, %v3479, 0.0
        %v3523 = vadd.f32 %v3521, %v3522
        %v3524 = vsel %vm1437, %v3480, 0.0
        %v3525 = vadd.f32 %v3523, %v3524
        %v3526 = vsel %vm1437, %v3481, 0.0
        %v3527 = vadd.f32 %v3525, %v3526
        %v3528 = vsel %vm1437, %v3482, 0.0
        %v3529 = vadd.f32 %v3527, %v3528
        %v3530 = vsel %vm1437, %v3483, 0.0
        %v3531 = vadd.f32 %v3529, %v3530
        %v3532 = vsel %vm1437, %v3484, 0.0
        %v3533 = vadd.f32 %v3531, %v3532
        %v3534 = vsel %vm1437, %v3485, 0.0
        %v3535 = vadd.f32 %v3533, %v3534
        %v3536 = vsel %vm1437, %v3486, 0.0
        %v3537 = vadd.f32 %v3535, %v3536
        %v3538 = vsel %vm1437, %v3487, 0.0
        %v3539 = vadd.f32 %v3537, %v3538
        %v3540 = vsel %vm1437, %v3488, 0.0
        %v3541 = vadd.f32 %v3539, %v3540
        %v3542 = vsel %vm1437, %v3489, 0.0
        %v3543 = vadd.f32 %v3541, %v3542
        %v3544 = vsel %vm1437, %v3490, 0.0
        %v3545 = vadd.f32 %v3543, %v3544
        %v3546 = vsel %vm1437, %v3491, 0.0
        %v3547 = vadd.f32 %v3545, %v3546
        %v3548 = vsel %vm1437, %v3492, 0.0
        %v3549 = vadd.f32 %v3547, %v3548
        %v3550 = vsel %vm1437, %v3493, 0.0
        %v3551 = vadd.f32 %v3549, %v3550
        %v3552 = vsel %vm1437, %v3494, 0.0
        %v3553 = vadd.f32 %v3551, %v3552
        %v3554 = vsel %vm1437, %v3495, 0.0
        %v3555 = vadd.f32 %v3553, %v3554
        %v3556 = vsel %vm1437, %v3496, 0.0
        %v3557 = vadd.f32 %v3555, %v3556
        %v3558 = vsel %vm1437, %v3497, 0.0
        %v3559 = vadd.f32 %v3557, %v3558
        %v3560 = vsel %vm1437, %v3498, 0.0
        %v3561 = vadd.f32 %v3559, %v3560
        %v3562 = vrot.slane %v3561, 4
        %v3563 = vadd.f32 %v3561, %v3562
        %v3564 = vrot.slane %v3563, 2
        %v3565 = vadd.f32 %v3563, %v3564
        %v3566 = vrot.slane %v3565, 1
        %v3567 = vadd.f32 %v3565, %v3566
        %vm3568 = vcmask 1040384
        %v3569 = vsel %vm3568, %v3433, %v3567
        %vm3570 = vcmask 25600
        %3571 = vst.msk [vmem:[%s214] sm:$0x3] %vm3570, %v3569
        %v3572 = vpack.c.bf16 %v3334, %v3333
        %v3573 = vpack.c.bf16 %v3336, %v3335
        %v3574 = vpack.c.bf16 %v3338, %v3337
        %v3575 = vpack.c.bf16 %v3340, %v3339
        %v3576 = vpack.c.bf16 %v3342, %v3341
        %v3577 = vpack.c.bf16 %v3344, %v3343
        %v3578 = vpack.c.bf16 %v3346, %v3345
        %v3579 = vpack.c.bf16 %v3348, %v3347
        %v3580 = vpack.c.bf16 %v3350, %v3349
        %v3581 = vpack.c.bf16 %v3352, %v3351
        %v3582 = vpack.c.bf16 %v3354, %v3353
        %v3583 = vpack.c.bf16 %v3356, %v3355
        %v3584 = vpack.c.bf16 %v3358, %v3357
        %v3585 = vpack.c.bf16 %v3360, %v3359
        %v3586 = vpack.c.bf16 %v3362, %v3361
        %v3587 = vpack.c.bf16 %v3364, %v3363
        %v3604 = vunpack.c.l.b16 %v3572
        %v3605 = vunpack.c.h.b16 %v3572
        %v3606 = vunpack.c.l.b16 %v3573
        %v3607 = vunpack.c.h.b16 %v3573
        %v3608 = vunpack.c.l.b16 %v3574
        %v3609 = vunpack.c.h.b16 %v3574
        %v3610 = vunpack.c.l.b16 %v3575
        %v3611 = vunpack.c.h.b16 %v3575
        %v3612 = vunpack.c.l.b16 %v3576
        %v3613 = vunpack.c.h.b16 %v3576
        %v3614 = vunpack.c.l.b16 %v3577
        %v3615 = vunpack.c.h.b16 %v3577
        %v3616 = vunpack.c.l.b16 %v3578
        %v3617 = vunpack.c.h.b16 %v3578
        %v3618 = vunpack.c.l.b16 %v3579
        %v3619 = vunpack.c.h.b16 %v3579
        %v3620 = vunpack.c.l.b16 %v3580
        %v3621 = vunpack.c.h.b16 %v3580
        %v3622 = vunpack.c.l.b16 %v3581
        %v3623 = vunpack.c.h.b16 %v3581
        %v3624 = vunpack.c.l.b16 %v3582
        %v3625 = vunpack.c.h.b16 %v3582
        %v3626 = vunpack.c.l.b16 %v3583
        %v3627 = vunpack.c.h.b16 %v3583
        %v3628 = vunpack.c.l.b16 %v3584
        %v3629 = vunpack.c.h.b16 %v3584
        %v3630 = vunpack.c.l.b16 %v3585
        %v3631 = vunpack.c.h.b16 %v3585
        %v3632 = vunpack.c.l.b16 %v3586
        %v3633 = vunpack.c.h.b16 %v3586
        %v3634 = vunpack.c.l.b16 %v3587
        %v3635 = vunpack.c.h.b16 %v3587
        %v3636 = vpack.c.b16 %v3604, %v3604
        %v3637 = vpack.c.b16 %v3605, %v3605
        %v3638 = vpack.c.b16 %v3606, %v3606
        %v3639 = vpack.c.b16 %v3607, %v3607
        %v3640 = vpack.c.b16 %v3608, %v3608
        %v3641 = vpack.c.b16 %v3609, %v3609
        %v3642 = vpack.c.b16 %v3610, %v3610
        %v3643 = vpack.c.b16 %v3611, %v3611
        %v3644 = vpack.c.b16 %v3612, %v3612
        %v3645 = vpack.c.b16 %v3613, %v3613
        %v3646 = vpack.c.b16 %v3614, %v3614
        %v3647 = vpack.c.b16 %v3615, %v3615
        %v3648 = vpack.c.b16 %v3616, %v3616
        %v3649 = vpack.c.b16 %v3617, %v3617
        %v3650 = vpack.c.b16 %v3618, %v3618
        %v3651 = vpack.c.b16 %v3619, %v3619
        %v3652 = vpack.c.b16 %v3620, %v3620
        %v3653 = vpack.c.b16 %v3621, %v3621
        %v3654 = vpack.c.b16 %v3622, %v3622
        %v3655 = vpack.c.b16 %v3623, %v3623
        %v3656 = vpack.c.b16 %v3624, %v3624
        %v3657 = vpack.c.b16 %v3625, %v3625
        %v3658 = vpack.c.b16 %v3626, %v3626
        %v3659 = vpack.c.b16 %v3627, %v3627
        %v3660 = vpack.c.b16 %v3628, %v3628
        %v3661 = vpack.c.b16 %v3629, %v3629
        %v3662 = vpack.c.b16 %v3630, %v3630
        %v3663 = vpack.c.b16 %v3631, %v3631
        %v3664 = vpack.c.b16 %v3632, %v3632
        %v3665 = vpack.c.b16 %v3633, %v3633
        %v3666 = vpack.c.b16 %v3634, %v3634
        %v3667 = vpack.c.b16 %v3635, %v3635
        %3700 = vst.msk [vmem:[%s207] sm:$0xf] %vm248, %v3636
        %3701 = vst.msk [vmem:[%s207 + $0x4] sm:$0xf] %vm248, %v3637
        %3702 = vst.msk [vmem:[%s207 + $0x8] sm:$0xf] %vm248, %v3638
        %3703 = vst.msk [vmem:[%s207 + $0xc] sm:$0xf] %vm248, %v3639
        %3704 = vst.msk [vmem:[%s207 + $0x10] sm:$0xf] %vm248, %v3640
        %3705 = vst.msk [vmem:[%s207 + $0x14] sm:$0xf] %vm248, %v3641
        %3706 = vst.msk [vmem:[%s207 + $0x18] sm:$0xf] %vm248, %v3642
        %3707 = vst.msk [vmem:[%s207 + $0x1c] sm:$0xf] %vm248, %v3643
        %3708 = vst.msk [vmem:[%s207 + $0x20] sm:$0xf] %vm248, %v3644
        %3709 = vst.msk [vmem:[%s207 + $0x24] sm:$0xf] %vm248, %v3645
        %3710 = vst.msk [vmem:[%s207 + $0x28] sm:$0xf] %vm248, %v3646
        %3711 = vst.msk [vmem:[%s207 + $0x2c] sm:$0xf] %vm248, %v3647
        %3712 = vst.msk [vmem:[%s207 + $0x30] sm:$0xf] %vm248, %v3648
        %3713 = vst.msk [vmem:[%s207 + $0x34] sm:$0xf] %vm248, %v3649
        %3714 = vst.msk [vmem:[%s207 + $0x38] sm:$0xf] %vm248, %v3650
        %3715 = vst.msk [vmem:[%s207 + $0x3c] sm:$0xf] %vm248, %v3651
        %3716 = vst.msk [vmem:[%s207 + $0x40] sm:$0xf] %vm248, %v3652
        %3717 = vst.msk [vmem:[%s207 + $0x44] sm:$0xf] %vm248, %v3653
        %3718 = vst.msk [vmem:[%s207 + $0x48] sm:$0xf] %vm248, %v3654
        %3719 = vst.msk [vmem:[%s207 + $0x4c] sm:$0xf] %vm248, %v3655
        %3720 = vst.msk [vmem:[%s207 + $0x50] sm:$0xf] %vm248, %v3656
        %3721 = vst.msk [vmem:[%s207 + $0x54] sm:$0xf] %vm248, %v3657
        %3722 = vst.msk [vmem:[%s207 + $0x58] sm:$0xf] %vm248, %v3658
        %3723 = vst.msk [vmem:[%s207 + $0x5c] sm:$0xf] %vm248, %v3659
        %3724 = vst.msk [vmem:[%s207 + $0x60] sm:$0xf] %vm248, %v3660
        %3725 = vst.msk [vmem:[%s207 + $0x64] sm:$0xf] %vm248, %v3661
        %3726 = vst.msk [vmem:[%s207 + $0x68] sm:$0xf] %vm248, %v3662
        %3727 = vst.msk [vmem:[%s207 + $0x6c] sm:$0xf] %vm248, %v3663
        %3728 = vst.msk [vmem:[%s207 + $0x70] sm:$0xf] %vm248, %v3664
        %3729 = vst.msk [vmem:[%s207 + $0x74] sm:$0xf] %vm248, %v3665
        %3730 = vst.msk [vmem:[%s207 + $0x78] sm:$0xf] %vm248, %v3666
        %3731 = vst.msk [vmem:[%s207 + $0x7c] sm:$0xf] %vm248, %v3667
        %s3732 = sand.u32 %s80, 1
        %s3733 = scalar_lea.sflag [#allocation5], %s3732
        %s3734 = sand.u32 %s80, 1
        %s3735 = smul.addr %s3734, 128
        %s3736 = scalar_lea.vmem [#allocation8], %s3735
        %s3737 = sand.u32 %s106, 1
        %s3738 = scalar_lea.sflag [#allocation10], %s3737
        %s3739 = sand.u32 %s106, 1
        %s3740 = smul.addr %s3739, 2
        %s3741 = scalar_lea.vmem [#allocation9], %s3740
        // Predicated region
        $region37: #{block_forward.3} parent=27 // pred_check
          %p3742 = pneg %p90
        $region38: #{block_forward.3} parent=27 // pred_check_branch
          %3744 = sbr.rel (%p3742) target = $region40
        $region39: #{block_forward.3} parent=27 // pred_region
          %s3746 = ssub.s32 2048, 2048
          %3747 = vsyncadd %s3733, %s3746
          %s3748 = smul.addr %s25, 32
          %s3749 = smul.addr %s3748, 64
          %s3750 = scalar_lea.hbm %s2, %s3749
          %s3751 = sshll.u32 %s3736, 4
          %s3752 = int_to_ptr.vmem [resolvable:$true] %s3751
          %3757 = dma.vmem_to_hbm [thread:$0]  %s3752, 2048, %s3750, %s3733, 64, 64, 4
        $region40: #{block_forward.3} parent=27 // pred_fallthru
          _
        // Predicated region
        $region41: #{block_forward.3} parent=27 // pred_check
          %p3758 = pneg %p116
        $region42: #{block_forward.3} parent=27 // pred_check_branch
          %3760 = sbr.rel (%p3758) target = $region44
        $region43: #{block_forward.3} parent=27 // pred_region
          %s3762 = ssub.s32 32, 32
          %3763 = vsyncadd %s3738, %s3762
          %s3764 = smul.addr %s25, 32
          %s3765 = scalar_lea.hbm %s3, %s3764
          %s3767 = sshll.u32 %s3741, 4
          %s3768 = int_to_ptr.vmem [resolvable:$true] %s3767
          %3770 = dma.vmem_to_hbm [thread:$0]  %s3768, 32, %s3765, %s3738
        $region44: #{block_forward.3} parent=27 // pred_fallthru
          _
      $region28: #{block_forward.3} parent=5 // pred_fallthru
        _
      %p3771 = scmp.le.s32.totalorder 2, %s20
      // Predicated region
      $region45: #{block_forward.3} parent=5 // pred_check
        %p3772 = pneg %p3771
      $region46: #{block_forward.3} parent=5 // pred_check_branch
        %3774 = sbr.rel (%p3772) target = $region48
      $region47: #{block_forward.3} parent=5 // pred_region
        %s3775 = ssub.s32 %s20, 2
        // Predicated region
        $region49: #{block_forward.3} parent=47 // pred_check
          %p3776 = pneg %p96
        $region50: #{block_forward.3} parent=47 // pred_check_branch
          %3778 = sbr.rel (%p3776) target = $region52
        $region51: #{block_forward.3} parent=47 // pred_region
          %s3779 = sand.u32 %s81, 1
          %s3780 = scalar_lea.sflag [#allocation5], %s3779
          %s3781 = sand.u32 %s81, 1
          %s3782 = smul.addr %s3781, 128
          %s3783 = scalar_lea.vmem [#allocation8], %s3782
          %3784 = dma.done %s3780, 2048
        $region52: #{block_forward.3} parent=47 // pred_fallthru
          _
        // Predicated region
        $region53: #{block_forward.3} parent=47 // pred_check
          %p3785 = pneg %p122
        $region54: #{block_forward.3} parent=47 // pred_check_branch
          %3787 = sbr.rel (%p3785) target = $region56
        $region55: #{block_forward.3} parent=47 // pred_region
          %s3788 = sand.u32 %s107, 1
          %s3789 = scalar_lea.sflag [#allocation10], %s3788
          %s3790 = sand.u32 %s107, 1
          %s3791 = smul.addr %s3790, 2
          %s3792 = scalar_lea.vmem [#allocation9], %s3791
          %3793 = dma.done %s3789, 32
        $region56: #{block_forward.3} parent=47 // pred_fallthru
          _
      $region48: #{block_forward.3} parent=5 // pred_fallthru
        _
    $region6: #{block_forward.3} parent=1 // loop_footer
      %s24 = sadd.s32 1, %s20
    $region7: #{block_forward.3} parent=1 // loop_footer_branch
      %19 = sbr.rel target = $region3
    $region8: #{block_forward.3} parent=1 // loop_exit
      _
    %3794 = vsyncpa [#allocation4], 1
    %s3795 = scalar_lea.sflag [#allocation4], 1
    %3796 = vsyncpa %s3795, 1
    %3797 = vsyncpa [#allocation7], 1
    %3798 = vsyncpa [#allocation5], 1
    %s3799 = scalar_lea.sflag [#allocation5], 1
    %3800 = vsyncpa %s3799, 1
    %3801 = vsyncpa [#allocation10], 1
    %s3802 = scalar_lea.sflag [#allocation10], 1
    %3803 = vsyncpa %s3802, 1

// kernel: block_forward.4
$region0: #{block_forward.4}
  #allocation0 [shape = 'u32[]', space=smem, size = 0x4, offset = 0x4, fixed_abs, tag = 'smem constant byte address 0x4 - core index']
  #allocation1 [shape = 'u32[144,128]{1,0:T(1,128)}', space=vmem, size = 0x12000, scoped, tag = 'internal scratch']
  #allocation2 [shape = 'bf16[18,18,4]{2,1,0:T(8,128)(2,1)}', space=vmem, size = 0x1b000, scoped, tag = 'scratch operand']
  %s0 = inlined_call_operand.hbm [shape: bf16[2,16,16,4], index: 0, kind: input, shape index: {}]
  %s1 = inlined_call_operand.hbm [shape: f32[1,4], index: 1, kind: input, shape index: {}]
  %s2 = inlined_call_operand.hbm [shape: f32[1,4], index: 2, kind: input, shape index: {}]
  %s3 = inlined_call_operand.hbm [shape: bf16[3,12,4], index: 3, kind: input, shape index: {}]
  %s4 = inlined_call_operand.hbm [shape: bf16[2,16,16,4], index: 4, kind: output, shape index: {0}]
  %s5 = inlined_call_operand.hbm [shape: f32[2,2,4], index: 5, kind: output, shape index: {1}]
  %6 = xla_tuple %s4, %s5
  %s7 = sld [smem:[#allocation0]]
  $region73: #{block_forward.4} parent=0
    _
  %s9 = ssub.s32 1, %s7
  %s10 = scalar_select 0, %s9, %s7
  $region1: #{block_forward.4} parent=0
    #allocation3 [shape = 'u8[131072]{0}', space=vmem, size = 0x20000, scoped, tag = 'input window, operand 0']
    #allocation4 [shape = 's32[2]{0}', space=sflag, size = 0x8, scoped, tag = 'scoped memory for block_forward.4']
    #allocation5 [shape = 's32[2]{0}', space=sflag, size = 0x8, scoped, tag = 'scoped memory for block_forward.4']
    #allocation6 [shape = 'u8[512]{0}', space=vmem, size = 0x400, scoped, tag = 'input window, operand 1, single buffered']
    #allocation7 [shape = 's32[1]{0}', space=sflag, size = 0x4, scoped, tag = 'scoped memory for block_forward.4']
    #allocation8 [shape = 'u8[512]{0}', space=vmem, size = 0x400, scoped, tag = 'input window, operand 2, single buffered']
    #allocation9 [shape = 'u8[12288]{0}', space=vmem, size = 0x3000, scoped, tag = 'input window, operand 3, single buffered']
    #allocation10 [shape = 's32[1]{0}', space=sflag, size = 0x4, scoped, tag = 'scoped memory for block_forward.4']
    #allocation11 [shape = 'u8[131072]{0}', space=vmem, size = 0x20000, scoped, tag = 'output window, operand 0']
    #allocation12 [shape = 'u8[2048]{0}', space=vmem, size = 0x800, scoped, tag = 'output window, operand 1']
    #allocation13 [shape = 's32[2]{0}', space=sflag, size = 0x8, scoped, tag = 'scoped memory for block_forward.4']
    %11 = vsyncpa [#allocation4], 0
    %s12 = scalar_lea.sflag [#allocation4], 1
    %13 = vsyncpa %s12, 0
    %14 = vsyncpa [#allocation7], 0
    %15 = vsyncpa [#allocation10], 0
    %16 = vsyncpa [#allocation5], 0
    %s17 = scalar_lea.sflag [#allocation5], 1
    %18 = vsyncpa %s17, 0
    %19 = vsyncpa [#allocation13], 0
    %s20 = scalar_lea.sflag [#allocation13], 1
    %21 = vsyncpa %s20, 0
    loop: start=0, step=1, limit=4
    $region2: #{block_forward.4} parent=1 // loop_pre_header
      _
    $region3: #{block_forward.4} parent=1 // loop_header
      %s23 = sphi 0, %s27
      %p24 = scmp.ge.s32.totalorder %s23, 4
      %s33 = sphi 0, %s35
      %s36 = sphi 0, %s33
      %s37 = sphi 0, %s36
      %s53 = sphi 0, %s37
      %s57 = sphi 0, %s57
      %s59 = sphi 0, %s57
      %s60 = sphi 0, %s59
      %s74 = sphi 0, %s60
      %s78 = sphi 0, %s78
      %s80 = sphi 0, %s78
      %s81 = sphi 0, %s80
      %s95 = sphi 0, %s81
      %s99 = sphi 0, %s99
      %s101 = sphi 0, %s99
      %s102 = sphi 0, %s101
      %s116 = sphi 0, %s102
      %s122 = sphi 0, %s124
      %s125 = sphi 0, %s122
      %s126 = sphi 0, %s125
      %s142 = sphi 0, %s126
      %s148 = sphi 0, %s150
      %s151 = sphi 0, %s148
      %s152 = sphi 0, %s151
      %s168 = sphi 0, %s152
    $region4: #{block_forward.4} parent=1 // loop_header_branch
      %26 = sbr.rel (%p24) target = $region8
    $region5: #{block_forward.4} parent=1 // loop_body
      %s28 = ssub.s32 %s23, 1
      %s29 = ssub.s32 %s23, 2
      %s30 = sadd.s32 %s23, 1
      %s31 = ssub.s32 %s23, %s30
      %p32 = scmp.eq.s32.totalorder %s31, 0
      %s34 = sadd.s32 %s33, 1
      %s35 = scalar_select %p32, %s33, %s34
      %p38 = pneg %p32
      %p39 = scmp.eq.s32.totalorder %s23, 1
      %p40 = por %p38, %p39
      %p41 = scmp.ne.s32.totalorder %s33, %s36
      %p42 = scmp.eq.s32.totalorder %s23, 0
      %p43 = por %p41, %p42
      %p44 = scmp.ne.s32.totalorder %s33, %s36
      %p45 = scmp.eq.s32.totalorder %s28, 1
      %p46 = por %p44, %p45
      %p47 = scmp.ne.s32.totalorder %s36, %s37
      %p48 = scmp.eq.s32.totalorder %s28, 0
      %p49 = por %p47, %p48
      %p50 = scmp.ne.s32.totalorder %s36, %s37
      %p51 = scmp.eq.s32.totalorder %s29, 1
      %p52 = por %p50, %p51
      %p54 = scmp.ne.s32.totalorder %s37, %s53
      %p55 = scmp.eq.s32.totalorder %s29, 0
      %p56 = por %p54, %p55
      %s58 = sadd.s32 %s57, 1
      %p61 = scmp.eq.s32.totalorder %s23, 1
      %p62 = scmp.ne.s32.totalorder %s57, %s59
      %p63 = scmp.eq.s32.totalorder %s23, 0
      %p64 = por %p62, %p63
      %p65 = scmp.ne.s32.totalorder %s57, %s59
      %p66 = scmp.eq.s32.totalorder %s28, 1
      %p67 = por %p65, %p66
      %p68 = scmp.ne.s32.totalorder %s59, %s60
      %p69 = scmp.eq.s32.totalorder %s28, 0
      %p70 = por %p68, %p69
      %p71 = scmp.ne.s32.totalorder %s59, %s60
      %p72 = scmp.eq.s32.totalorder %s29, 1
      %p73 = por %p71, %p72
      %p75 = scmp.ne.s32.totalorder %s60, %s74
      %p76 = scmp.eq.s32.totalorder %s29, 0
      %p77 = por %p75, %p76
      %s79 = sadd.s32 %s78, 1
      %p82 = scmp.eq.s32.totalorder %s23, 1
      %p83 = scmp.ne.s32.totalorder %s78, %s80
      %p84 = scmp.eq.s32.totalorder %s23, 0
      %p85 = por %p83, %p84
      %p86 = scmp.ne.s32.totalorder %s78, %s80
      %p87 = scmp.eq.s32.totalorder %s28, 1
      %p88 = por %p86, %p87
      %p89 = scmp.ne.s32.totalorder %s80, %s81
      %p90 = scmp.eq.s32.totalorder %s28, 0
      %p91 = por %p89, %p90
      %p92 = scmp.ne.s32.totalorder %s80, %s81
      %p93 = scmp.eq.s32.totalorder %s29, 1
      %p94 = por %p92, %p93
      %p96 = scmp.ne.s32.totalorder %s81, %s95
      %p97 = scmp.eq.s32.totalorder %s29, 0
      %p98 = por %p96, %p97
      %s100 = sadd.s32 %s99, 1
      %p103 = scmp.eq.s32.totalorder %s23, 1
      %p104 = scmp.ne.s32.totalorder %s99, %s101
      %p105 = scmp.eq.s32.totalorder %s23, 0
      %p106 = por %p104, %p105
      %p107 = scmp.ne.s32.totalorder %s99, %s101
      %p108 = scmp.eq.s32.totalorder %s28, 1
      %p109 = por %p107, %p108
      %p110 = scmp.ne.s32.totalorder %s101, %s102
      %p111 = scmp.eq.s32.totalorder %s28, 0
      %p112 = por %p110, %p111
      %p113 = scmp.ne.s32.totalorder %s101, %s102
      %p114 = scmp.eq.s32.totalorder %s29, 1
      %p115 = por %p113, %p114
      %p117 = scmp.ne.s32.totalorder %s102, %s116
      %p118 = scmp.eq.s32.totalorder %s29, 0
      %p119 = por %p117, %p118
      %s120 = ssub.s32 %s23, %s30
      %p121 = scmp.eq.s32.totalorder %s120, 0
      %s123 = sadd.s32 %s122, 1
      %s124 = scalar_select %p121, %s122, %s123
      %p127 = pneg %p121
      %p128 = scmp.eq.s32.totalorder %s23, 1
      %p129 = por %p127, %p128
      %p130 = scmp.ne.s32.totalorder %s122, %s125
      %p131 = scmp.eq.s32.totalorder %s23, 0
      %p132 = por %p130, %p131
      %p133 = scmp.ne.s32.totalorder %s122, %s125
      %p134 = scmp.eq.s32.totalorder %s28, 1
      %p135 = por %p133, %p134
      %p136 = scmp.ne.s32.totalorder %s125, %s126
      %p137 = scmp.eq.s32.totalorder %s28, 0
      %p138 = por %p136, %p137
      %p139 = scmp.ne.s32.totalorder %s125, %s126
      %p140 = scmp.eq.s32.totalorder %s29, 1
      %p141 = por %p139, %p140
      %p143 = scmp.ne.s32.totalorder %s126, %s142
      %p144 = scmp.eq.s32.totalorder %s29, 0
      %p145 = por %p143, %p144
      %s146 = ssub.s32 %s23, %s30
      %p147 = scmp.eq.s32.totalorder %s146, 0
      %s149 = sadd.s32 %s148, 1
      %s150 = scalar_select %p147, %s148, %s149
      %p153 = pneg %p147
      %p154 = scmp.eq.s32.totalorder %s23, 1
      %p155 = por %p153, %p154
      %p156 = scmp.ne.s32.totalorder %s148, %s151
      %p157 = scmp.eq.s32.totalorder %s23, 0
      %p158 = por %p156, %p157
      %p159 = scmp.ne.s32.totalorder %s148, %s151
      %p160 = scmp.eq.s32.totalorder %s28, 1
      %p161 = por %p159, %p160
      %p162 = scmp.ne.s32.totalorder %s151, %s152
      %p163 = scmp.eq.s32.totalorder %s28, 0
      %p164 = por %p162, %p163
      %p165 = scmp.ne.s32.totalorder %s151, %s152
      %p166 = scmp.eq.s32.totalorder %s29, 1
      %p167 = por %p165, %p166
      %p169 = scmp.ne.s32.totalorder %s152, %s168
      %p170 = scmp.eq.s32.totalorder %s29, 0
      %p171 = por %p169, %p170
      %p172 = scmp.le.s32.totalorder 1, %s23
      %p173 = scmp.lt.s32.totalorder %s23, 3
      %p174 = pnand %p172, %p173
      %p175 = pneg %p174
      // Predicated region
      $region9: #{block_forward.4} parent=5 // pred_check
        _
      $region10: #{block_forward.4} parent=5 // pred_check_branch
        %177 = sbr.rel (%p174) target = $region12
      $region11: #{block_forward.4} parent=5 // pred_region
        %s178 = ssub.s32 %s23, 1
        // Predicated region
        $region13: #{block_forward.4} parent=11 // pred_check
          %p179 = pneg %p70
        $region14: #{block_forward.4} parent=11 // pred_check_branch
          %181 = sbr.rel (%p179) target = $region16
        $region15: #{block_forward.4} parent=11 // pred_region
          %s183 = ssub.s32 16, 16
          %184 = vsyncadd [#allocation7], %s183
          %s186 = sshll.u32 [#allocation6], 4
          %s187 = int_to_ptr.vmem [resolvable:$true] %s186
          %189 = dma.hbm_to_vmem [thread:$0]  %s1, 16, %s187, [#allocation7]
        $region16: #{block_forward.4} parent=11 // pred_fallthru
          _
        // Predicated region
        $region17: #{block_forward.4} parent=11 // pred_check
          %p190 = pneg %p91
        $region18: #{block_forward.4} parent=11 // pred_check_branch
          %192 = sbr.rel (%p190) target = $region20
        $region19: #{block_forward.4} parent=11 // pred_region
          %s194 = ssub.s32 16, 16
          %195 = vsyncadd [#allocation7], %s194
          %s197 = sshll.u32 [#allocation8], 4
          %s198 = int_to_ptr.vmem [resolvable:$true] %s197
          %200 = dma.hbm_to_vmem [thread:$0]  %s2, 16, %s198, [#allocation7]
        $region20: #{block_forward.4} parent=11 // pred_fallthru
          _
        // Predicated region
        $region21: #{block_forward.4} parent=11 // pred_check
          %p201 = pneg %p112
        $region22: #{block_forward.4} parent=11 // pred_check_branch
          %203 = sbr.rel (%p201) target = $region24
        $region23: #{block_forward.4} parent=11 // pred_region
          %s205 = ssub.s32 384, 384
          %206 = vsyncadd [#allocation10], %s205
          %s207 = sshll.u32 [#allocation9], 4
          %s208 = int_to_ptr.vmem [resolvable:$true] %s207
          %213 = dma.hbm_to_vmem [thread:$0]  %s3, 384, %s208, [#allocation10], 64, 64, 4
        $region24: #{block_forward.4} parent=11 // pred_fallthru
          _
      $region12: #{block_forward.4} parent=5 // pred_fallthru
        _
      %p214 = scmp.lt.s32.totalorder %s23, 2
      // Predicated region
      $region25: #{block_forward.4} parent=5 // pred_check
        %p215 = pneg %p214
      $region26: #{block_forward.4} parent=5 // pred_check_branch
        %217 = sbr.rel (%p215) target = $region28
      $region27: #{block_forward.4} parent=5 // pred_region
        // Predicated region
        $region29: #{block_forward.4} parent=27 // pred_check
          %p218 = pneg %p43
        $region30: #{block_forward.4} parent=27 // pred_check_branch
          %220 = sbr.rel (%p218) target = $region32
        $region31: #{block_forward.4} parent=27 // pred_region
          %s221 = sand.u32 %s33, 1
          %s222 = scalar_lea.sflag [#allocation4], %s221
          %s223 = sand.u32 %s33, 1
          %s224 = smul.addr %s223, 128
          %s225 = scalar_lea.vmem [#allocation3], %s224
          %s227 = ssub.s32 2048, 2048
          %228 = vsyncadd %s222, %s227
          %s229 = smul.addr %s23, 32
          %s230 = smul.addr %s229, 64
          %s231 = scalar_lea.hbm %s0, %s230
          %s232 = sshll.u32 %s225, 4
          %s233 = int_to_ptr.vmem [resolvable:$true] %s232
          %238 = dma.hbm_to_vmem [thread:$0]  %s231, 2048, %s233, %s222, 64, 64, 4
        $region32: #{block_forward.4} parent=27 // pred_fallthru
          _
      $region28: #{block_forward.4} parent=5 // pred_fallthru
        _
      %p239 = scmp.le.s32.totalorder 1, %s23
      %p240 = scmp.lt.s32.totalorder %s23, 3
      %p241 = pnand %p239, %p240
      %p242 = pneg %p241
      // Predicated region
      $region33: #{block_forward.4} parent=5 // pred_check
        _
      $region34: #{block_forward.4} parent=5 // pred_check_branch
        %244 = sbr.rel (%p241) target = $region36
      $region35: #{block_forward.4} parent=5 // pred_region
        %s245 = ssub.s32 %s23, 1
        %s246 = sand.u32 %s36, 1
        %s247 = scalar_lea.sflag [#allocation4], %s246
        %s248 = sand.u32 %s36, 1
        %s249 = smul.addr %s248, 128
        %s250 = scalar_lea.vmem [#allocation3], %s249
        // Predicated region
        $region37: #{block_forward.4} parent=35 // pred_check
          %p251 = pneg %p49
        $region38: #{block_forward.4} parent=35 // pred_check_branch
          %253 = sbr.rel (%p251) target = $region40
        $region39: #{block_forward.4} parent=35 // pred_region
          %254 = dma.done %s247, 2048
        $region40: #{block_forward.4} parent=35 // pred_fallthru
          _
        // Predicated region
        $region41: #{block_forward.4} parent=35 // pred_check
          %p255 = pneg %p70
        $region42: #{block_forward.4} parent=35 // pred_check_branch
          %257 = sbr.rel (%p255) target = $region44
        $region43: #{block_forward.4} parent=35 // pred_region
          %258 = dma.done [#allocation7], 16
        $region44: #{block_forward.4} parent=35 // pred_fallthru
          _
        // Predicated region
        $region45: #{block_forward.4} parent=35 // pred_check
          %p259 = pneg %p91
        $region46: #{block_forward.4} parent=35 // pred_check_branch
          %261 = sbr.rel (%p259) target = $region48
        $region47: #{block_forward.4} parent=35 // pred_region
          %262 = dma.done [#allocation7], 16
        $region48: #{block_forward.4} parent=35 // pred_fallthru
          _
        // Predicated region
        $region49: #{block_forward.4} parent=35 // pred_check
          %p263 = pneg %p112
        $region50: #{block_forward.4} parent=35 // pred_check_branch
          %265 = sbr.rel (%p263) target = $region52
        $region51: #{block_forward.4} parent=35 // pred_region
          %266 = dma.done [#allocation10], 384
        $region52: #{block_forward.4} parent=35 // pred_fallthru
          _
        %s267 = sand.u32 %s36, 1
        %s268 = scalar_lea.sflag [#allocation4], %s267
        %s269 = sand.u32 %s36, 1
        %s270 = smul.addr %s269, 128
        %s271 = scalar_lea.vmem [#allocation3], %s270
        %p272 = pneg %p49
        %p273 = pneg %p46
        %p274 = pneg %p70
        %p275 = pneg %p67
        %p276 = pneg %p91
        %p277 = pneg %p88
        %p278 = pneg %p112
        %p279 = pneg %p109
        %p280 = pneg %p138
        %p281 = pneg %p135
        %s282 = sand.u32 %s125, 1
        %s283 = scalar_lea.sflag [#allocation5], %s282
        %s284 = sand.u32 %s125, 1
        %s285 = smul.addr %s284, 128
        %s286 = scalar_lea.vmem [#allocation11], %s285
        %p287 = pneg %p164
        %p288 = pneg %p161
        %s289 = sand.u32 %s151, 1
        %s290 = scalar_lea.sflag [#allocation13], %s289
        %s291 = sand.u32 %s151, 1
        %s292 = smul.addr %s291, 2
        %s293 = scalar_lea.vmem [#allocation12], %s292
        %v295 = vld [vmem:[%s250] sm:$0xf]
        %v296 = vld [vmem:[%s250 + $0x4] sm:$0xf]
        %v297 = vld [vmem:[%s250 + $0x8] sm:$0xf]
        %v298 = vld [vmem:[%s250 + $0xc] sm:$0xf]
        %v299 = vld [vmem:[%s250 + $0x10] sm:$0xf]
        %v300 = vld [vmem:[%s250 + $0x14] sm:$0xf]
        %v301 = vld [vmem:[%s250 + $0x18] sm:$0xf]
        %v302 = vld [vmem:[%s250 + $0x1c] sm:$0xf]
        %v303 = vld [vmem:[%s250 + $0x20] sm:$0xf]
        %v304 = vld [vmem:[%s250 + $0x24] sm:$0xf]
        %v305 = vld [vmem:[%s250 + $0x28] sm:$0xf]
        %v306 = vld [vmem:[%s250 + $0x2c] sm:$0xf]
        %v307 = vld [vmem:[%s250 + $0x30] sm:$0xf]
        %v308 = vld [vmem:[%s250 + $0x34] sm:$0xf]
        %v309 = vld [vmem:[%s250 + $0x38] sm:$0xf]
        %v310 = vld [vmem:[%s250 + $0x3c] sm:$0xf]
        %v311 = vld [vmem:[%s250 + $0x40] sm:$0xf]
        %v312 = vld [vmem:[%s250 + $0x44] sm:$0xf]
        %v313 = vld [vmem:[%s250 + $0x48] sm:$0xf]
        %v314 = vld [vmem:[%s250 + $0x4c] sm:$0xf]
        %v315 = vld [vmem:[%s250 + $0x50] sm:$0xf]
        %v316 = vld [vmem:[%s250 + $0x54] sm:$0xf]
        %v317 = vld [vmem:[%s250 + $0x58] sm:$0xf]
        %v318 = vld [vmem:[%s250 + $0x5c] sm:$0xf]
        %v319 = vld [vmem:[%s250 + $0x60] sm:$0xf]
        %v320 = vld [vmem:[%s250 + $0x64] sm:$0xf]
        %v321 = vld [vmem:[%s250 + $0x68] sm:$0xf]
        %v322 = vld [vmem:[%s250 + $0x6c] sm:$0xf]
        %v323 = vld [vmem:[%s250 + $0x70] sm:$0xf]
        %v324 = vld [vmem:[%s250 + $0x74] sm:$0xf]
        %v325 = vld [vmem:[%s250 + $0x78] sm:$0xf]
        %v326 = vld [vmem:[%s250 + $0x7c] sm:$0xf]
        %v327 = vunpack.c.l.bf16 %v295
        %v328 = vunpack.c.l.bf16 %v296
        %v329 = vunpack.c.l.bf16 %v297
        %v330 = vunpack.c.l.bf16 %v298
        %v331 = vunpack.c.l.bf16 %v299
        %v332 = vunpack.c.l.bf16 %v300
        %v333 = vunpack.c.l.bf16 %v301
        %v334 = vunpack.c.l.bf16 %v302
        %v335 = vunpack.c.l.bf16 %v303
        %v336 = vunpack.c.l.bf16 %v304
        %v337 = vunpack.c.l.bf16 %v305
        %v338 = vunpack.c.l.bf16 %v306
        %v339 = vunpack.c.l.bf16 %v307
        %v340 = vunpack.c.l.bf16 %v308
        %v341 = vunpack.c.l.bf16 %v309
        %v342 = vunpack.c.l.bf16 %v310
        %v343 = vunpack.c.l.bf16 %v311
        %v344 = vunpack.c.l.bf16 %v312
        %v345 = vunpack.c.l.bf16 %v313
        %v346 = vunpack.c.l.bf16 %v314
        %v347 = vunpack.c.l.bf16 %v315
        %v348 = vunpack.c.l.bf16 %v316
        %v349 = vunpack.c.l.bf16 %v317
        %v350 = vunpack.c.l.bf16 %v318
        %v351 = vunpack.c.l.bf16 %v319
        %v352 = vunpack.c.l.bf16 %v320
        %v353 = vunpack.c.l.bf16 %v321
        %v354 = vunpack.c.l.bf16 %v322
        %v355 = vunpack.c.l.bf16 %v323
        %v356 = vunpack.c.l.bf16 %v324
        %v357 = vunpack.c.l.bf16 %v325
        %v358 = vunpack.c.l.bf16 %v326
        %v359 = vld [vmem:[#allocation6] sm:$0x1]
        %v361 = vlaneseq
        %v362 = vshrl.u32 %v361, 7
        %v363 = vsub.s32 0, %v362
        %v364 = vrot.slane %v359, %v363
        %v366 = vmul.f32 %v327, %v364
        %v367 = vmul.f32 %v328, %v364
        %v368 = vmul.f32 %v329, %v364
        %v369 = vmul.f32 %v330, %v364
        %v370 = vmul.f32 %v331, %v364
        %v371 = vmul.f32 %v332, %v364
        %v372 = vmul.f32 %v333, %v364
        %v373 = vmul.f32 %v334, %v364
        %v374 = vmul.f32 %v335, %v364
        %v375 = vmul.f32 %v336, %v364
        %v376 = vmul.f32 %v337, %v364
        %v377 = vmul.f32 %v338, %v364
        %v378 = vmul.f32 %v339, %v364
        %v379 = vmul.f32 %v340, %v364
        %v380 = vmul.f32 %v341, %v364
        %v381 = vmul.f32 %v342, %v364
        %v382 = vmul.f32 %v343, %v364
        %v383 = vmul.f32 %v344, %v364
        %v384 = vmul.f32 %v345, %v364
        %v385 = vmul.f32 %v346, %v364
        %v386 = vmul.f32 %v347, %v364
        %v387 = vmul.f32 %v348, %v364
        %v388 = vmul.f32 %v349, %v364
        %v389 = vmul.f32 %v350, %v364
        %v390 = vmul.f32 %v351, %v364
        %v391 = vmul.f32 %v352, %v364
        %v392 = vmul.f32 %v353, %v364
        %v393 = vmul.f32 %v354, %v364
        %v394 = vmul.f32 %v355, %v364
        %v395 = vmul.f32 %v356, %v364
        %v396 = vmul.f32 %v357, %v364
        %v397 = vmul.f32 %v358, %v364
        %v398 = vld [vmem:[#allocation8] sm:$0x1]
        %v400 = vlaneseq
        %v401 = vshrl.u32 %v400, 7
        %v402 = vsub.s32 0, %v401
        %v403 = vrot.slane %v398, %v402
        %v405 = vadd.f32 %v366, %v403
        %v406 = vadd.f32 %v367, %v403
        %v407 = vadd.f32 %v368, %v403
        %v408 = vadd.f32 %v369, %v403
        %v409 = vadd.f32 %v370, %v403
        %v410 = vadd.f32 %v371, %v403
        %v411 = vadd.f32 %v372, %v403
        %v412 = vadd.f32 %v373, %v403
        %v413 = vadd.f32 %v374, %v403
        %v414 = vadd.f32 %v375, %v403
        %v415 = vadd.f32 %v376, %v403
        %v416 = vadd.f32 %v377, %v403
        %v417 = vadd.f32 %v378, %v403
        %v418 = vadd.f32 %v379, %v403
        %v419 = vadd.f32 %v380, %v403
        %v420 = vadd.f32 %v381, %v403
        %v421 = vadd.f32 %v382, %v403
        %v422 = vadd.f32 %v383, %v403
        %v423 = vadd.f32 %v384, %v403
        %v424 = vadd.f32 %v385, %v403
        %v425 = vadd.f32 %v386, %v403
        %v426 = vadd.f32 %v387, %v403
        %v427 = vadd.f32 %v388, %v403
        %v428 = vadd.f32 %v389, %v403
        %v429 = vadd.f32 %v390, %v403
        %v430 = vadd.f32 %v391, %v403
        %v431 = vadd.f32 %v392, %v403
        %v432 = vadd.f32 %v393, %v403
        %v433 = vadd.f32 %v394, %v403
        %v434 = vadd.f32 %v395, %v403
        %v435 = vadd.f32 %v396, %v403
        %v436 = vadd.f32 %v397, %v403
        %v437 = vmax.f32 %v405, 0.0
        %v438 = vmax.f32 %v406, 0.0
        %v439 = vmax.f32 %v407, 0.0
        %v440 = vmax.f32 %v408, 0.0
        %v441 = vmax.f32 %v409, 0.0
        %v442 = vmax.f32 %v410, 0.0
        %v443 = vmax.f32 %v411, 0.0
        %v444 = vmax.f32 %v412, 0.0
        %v445 = vmax.f32 %v413, 0.0
        %v446 = vmax.f32 %v414, 0.0
        %v447 = vmax.f32 %v415, 0.0
        %v448 = vmax.f32 %v416, 0.0
        %v449 = vmax.f32 %v417, 0.0
        %v450 = vmax.f32 %v418, 0.0
        %v451 = vmax.f32 %v419, 0.0
        %v452 = vmax.f32 %v420, 0.0
        %v453 = vmax.f32 %v421, 0.0
        %v454 = vmax.f32 %v422, 0.0
        %v455 = vmax.f32 %v423, 0.0
        %v456 = vmax.f32 %v424, 0.0
        %v457 = vmax.f32 %v425, 0.0
        %v458 = vmax.f32 %v426, 0.0
        %v459 = vmax.f32 %v427, 0.0
        %v460 = vmax.f32 %v428, 0.0
        %v461 = vmax.f32 %v429, 0.0
        %v462 = vmax.f32 %v430, 0.0
        %v463 = vmax.f32 %v431, 0.0
        %v464 = vmax.f32 %v432, 0.0
        %v465 = vmax.f32 %v433, 0.0
        %v466 = vmax.f32 %v434, 0.0
        %v467 = vmax.f32 %v435, 0.0
        %v468 = vmax.f32 %v436, 0.0
        %vm469 = vcmask 27648
        %470 = vst.msk [vmem:[#allocation2] sm:$0xf] %vm469, 0
        %471 = vst.msk [vmem:[#allocation2 + $0x4] sm:$0xf] %vm469, 0
        %vm472 = vcmask 24576
        %473 = vst.msk [vmem:[#allocation2 + $0x8] sm:$0x1] %vm472, 0
        %s474 = scalar_lea.vmem [#allocation2], 204
        %475 = vst.msk [vmem:[%s474] sm:$0xf] %vm469, 0
        %476 = vst.msk [vmem:[%s474 + $0x4] sm:$0xf] %vm469, 0
        %477 = vst.msk [vmem:[%s474 + $0x8] sm:$0x1] %vm472, 0
        %s478 = scalar_lea.vmem [#allocation2], 12
        %vm479 = vcmask 24576
        %vm480 = vsmask.f32 256
        %vm481 = vmand %vm479, %vm480
        %v482 = vld [vmem:[%s478] sm:$0x1]
        %v483 = vsel %vm481, 0, %v482
        %484 = vst [vmem:[%s478] sm:$0x1] %v483
        %v485 = vld [vmem:[%s478 + $0xc] sm:$0x1]
        %v486 = vsel %vm481, 0, %v485
        %487 = vst [vmem:[%s478 + $0xc] sm:$0x1] %v486
        %v488 = vld [vmem:[%s478 + $0x18] sm:$0x1]
        %v489 = vsel %vm481, 0, %v488
        %490 = vst [vmem:[%s478 + $0x18] sm:$0x1] %v489
        %v491 = vld [vmem:[%s478 + $0x24] sm:$0x1]
        %v492 = vsel %vm481, 0, %v491
        %493 = vst [vmem:[%s478 + $0x24] sm:$0x1] %v492
        %v494 = vld [vmem:[%s478 + $0x30] sm:$0x1]
        %v495 = vsel %vm481, 0, %v494
        %496 = vst [vmem:[%s478 + $0x30] sm:$0x1] %v495
        %v497 = vld [vmem:[%s478 + $0x3c] sm:$0x1]
        %v498 = vsel %vm481, 0, %v497
        %499 = vst [vmem:[%s478 + $0x3c] sm:$0x1] %v498
        %v500 = vld [vmem:[%s478 + $0x48] sm:$0x1]
        %v501 = vsel %vm481, 0, %v500
        %502 = vst [vmem:[%s478 + $0x48] sm:$0x1] %v501
        %v503 = vld [vmem:[%s478 + $0x54] sm:$0x1]
        %v504 = vsel %vm481, 0, %v503
        %505 = vst [vmem:[%s478 + $0x54] sm:$0x1] %v504
        %v506 = vld [vmem:[%s478 + $0x60] sm:$0x1]
        %v507 = vsel %vm481, 0, %v506
        %508 = vst [vmem:[%s478 + $0x60] sm:$0x1] %v507
        %v509 = vld [vmem:[%s478 + $0x6c] sm:$0x1]
        %v510 = vsel %vm481, 0, %v509
        %511 = vst [vmem:[%s478 + $0x6c] sm:$0x1] %v510
        %v512 = vld [vmem:[%s478 + $0x78] sm:$0x1]
        %v513 = vsel %vm481, 0, %v512
        %514 = vst [vmem:[%s478 + $0x78] sm:$0x1] %v513
        %v515 = vld [vmem:[%s478 + $0x84] sm:$0x1]
        %v516 = vsel %vm481, 0, %v515
        %517 = vst [vmem:[%s478 + $0x84] sm:$0x1] %v516
        %v518 = vld [vmem:[%s478 + $0x90] sm:$0x1]
        %v519 = vsel %vm481, 0, %v518
        %520 = vst [vmem:[%s478 + $0x90] sm:$0x1] %v519
        %v521 = vld [vmem:[%s478 + $0x9c] sm:$0x1]
        %v522 = vsel %vm481, 0, %v521
        %523 = vst [vmem:[%s478 + $0x9c] sm:$0x1] %v522
        %v524 = vld [vmem:[%s478 + $0xa8] sm:$0x1]
        %v525 = vsel %vm481, 0, %v524
        %526 = vst [vmem:[%s478 + $0xa8] sm:$0x1] %v525
        %v527 = vld [vmem:[%s478 + $0xb4] sm:$0x1]
        %v528 = vsel %vm481, 0, %v527
        %529 = vst [vmem:[%s478 + $0xb4] sm:$0x1] %v528
        %vm530 = vsmask.f32 7938
        %vm531 = vmand %vm479, %vm530
        %v532 = vld [vmem:[%s478 + $0x8] sm:$0x1]
        %v533 = vsel %vm531, 0, %v532
        %534 = vst [vmem:[%s478 + $0x8] sm:$0x1] %v533
        %v535 = vld [vmem:[%s478 + $0x14] sm:$0x1]
        %v536 = vsel %vm531, 0, %v535
        %537 = vst [vmem:[%s478 + $0x14] sm:$0x1] %v536
        %v538 = vld [vmem:[%s478 + $0x20] sm:$0x1]
        %v539 = vsel %vm531, 0, %v538
        %540 = vst [vmem:[%s478 + $0x20] sm:$0x1] %v539
        %v541 = vld [vmem:[%s478 + $0x2c] sm:$0x1]
        %v542 = vsel %vm531, 0, %v541
        %543 = vst [vmem:[%s478 + $0x2c] sm:$0x1] %v542
        %v544 = vld [vmem:[%s478 + $0x38] sm:$0x1]
        %v545 = vsel %vm531, 0, %v544
        %546 = vst [vmem:[%s478 + $0x38] sm:$0x1] %v545
        %v547 = vld [vmem:[%s478 + $0x44] sm:$0x1]
        %v548 = vsel %vm531, 0, %v547
        %549 = vst [vmem:[%s478 + $0x44] sm:$0x1] %v548
        %v550 = vld [vmem:[%s478 + $0x50] sm:$0x1]
        %v551 = vsel %vm531, 0, %v550
        %552 = vst [vmem:[%s478 + $0x50] sm:$0x1] %v551
        %v553 = vld [vmem:[%s478 + $0x5c] sm:$0x1]
        %v554 = vsel %vm531, 0, %v553
        %555 = vst [vmem:[%s478 + $0x5c] sm:$0x1] %v554
        %v556 = vld [vmem:[%s478 + $0x68] sm:$0x1]
        %v557 = vsel %vm531, 0, %v556
        %558 = vst [vmem:[%s478 + $0x68] sm:$0x1] %v557
        %v559 = vld [vmem:[%s478 + $0x74] sm:$0x1]
        %v560 = vsel %vm531, 0, %v559
        %561 = vst [vmem:[%s478 + $0x74] sm:$0x1] %v560
        %v562 = vld [vmem:[%s478 + $0x80] sm:$0x1]
        %v563 = vsel %vm531, 0, %v562
        %564 = vst [vmem:[%s478 + $0x80] sm:$0x1] %v563
        %v565 = vld [vmem:[%s478 + $0x8c] sm:$0x1]
        %v566 = vsel %vm531, 0, %v565
        %567 = vst [vmem:[%s478 + $0x8c] sm:$0x1] %v566
        %v568 = vld [vmem:[%s478 + $0x98] sm:$0x1]
        %v569 = vsel %vm531, 0, %v568
        %570 = vst [vmem:[%s478 + $0x98] sm:$0x1] %v569
        %v571 = vld [vmem:[%s478 + $0xa4] sm:$0x1]
        %v572 = vsel %vm531, 0, %v571
        %573 = vst [vmem:[%s478 + $0xa4] sm:$0x1] %v572
        %v574 = vld [vmem:[%s478 + $0xb0] sm:$0x1]
        %v575 = vsel %vm531, 0, %v574
        %576 = vst [vmem:[%s478 + $0xb0] sm:$0x1] %v575
        %v577 = vld [vmem:[%s478 + $0xbc] sm:$0x1]
        %v578 = vsel %vm531, 0, %v577
        %579 = vst [vmem:[%s478 + $0xbc] sm:$0x1] %v578
        %v580 = vpack.c.bf16 %v438, %v437
        %v581 = vpack.c.bf16 %v440, %v439
        %v582 = vpack.c.bf16 %v442, %v441
        %v583 = vpack.c.bf16 %v444, %v443
        %v584 = vpack.c.bf16 %v446, %v445
        %v585 = vpack.c.bf16 %v448, %v447
        %v586 = vpack.c.bf16 %v450, %v449
        %v587 = vpack.c.bf16 %v452, %v451
        %v588 = vpack.c.bf16 %v454, %v453
        %v589 = vpack.c.bf16 %v456, %v455
        %v590 = vpack.c.bf16 %v458, %v457
        %v591 = vpack.c.bf16 %v460, %v459
        %v592 = vpack.c.bf16 %v462, %v461
        %v593 = vpack.c.bf16 %v464, %v463
        %v594 = vpack.c.bf16 %v466, %v465
        %v595 = vpack.c.bf16 %v468, %v467
        %v612 = vunpack.c.l.b16 %v580
        %v613 = vunpack.c.h.b16 %v580
        %v614 = vunpack.c.l.b16 %v581
        %v615 = vunpack.c.h.b16 %v581
        %v616 = vunpack.c.l.b16 %v582
        %v617 = vunpack.c.h.b16 %v582
        %v618 = vunpack.c.l.b16 %v583
        %v619 = vunpack.c.h.b16 %v583
        %v620 = vunpack.c.l.b16 %v584
        %v621 = vunpack.c.h.b16 %v584
        %v622 = vunpack.c.l.b16 %v585
        %v623 = vunpack.c.h.b16 %v585
        %v624 = vunpack.c.l.b16 %v586
        %v625 = vunpack.c.h.b16 %v586
        %v626 = vunpack.c.l.b16 %v587
        %v627 = vunpack.c.h.b16 %v587
        %v628 = vunpack.c.l.b16 %v588
        %v629 = vunpack.c.h.b16 %v588
        %v630 = vunpack.c.l.b16 %v589
        %v631 = vunpack.c.h.b16 %v589
        %v632 = vunpack.c.l.b16 %v590
        %v633 = vunpack.c.h.b16 %v590
        %v634 = vunpack.c.l.b16 %v591
        %v635 = vunpack.c.h.b16 %v591
        %v636 = vunpack.c.l.b16 %v592
        %v637 = vunpack.c.h.b16 %v592
        %v638 = vunpack.c.l.b16 %v593
        %v639 = vunpack.c.h.b16 %v593
        %v640 = vunpack.c.l.b16 %v594
        %v641 = vunpack.c.h.b16 %v594
        %v642 = vunpack.c.l.b16 %v595
        %v643 = vunpack.c.h.b16 %v595
        %v644 = vpack.c.b16 %v612, %v612
        %v645 = vpack.c.b16 %v613, %v613
        %v646 = vpack.c.b16 %v614, %v614
        %v647 = vpack.c.b16 %v615, %v615
        %v648 = vpack.c.b16 %v616, %v616
        %v649 = vpack.c.b16 %v617, %v617
        %v650 = vpack.c.b16 %v618, %v618
        %v651 = vpack.c.b16 %v619, %v619
        %v652 = vpack.c.b16 %v620, %v620
        %v653 = vpack.c.b16 %v621, %v621
        %v654 = vpack.c.b16 %v622, %v622
        %v655 = vpack.c.b16 %v623, %v623
        %v656 = vpack.c.b16 %v624, %v624
        %v657 = vpack.c.b16 %v625, %v625
        %v658 = vpack.c.b16 %v626, %v626
        %v659 = vpack.c.b16 %v627, %v627
        %v660 = vpack.c.b16 %v628, %v628
        %v661 = vpack.c.b16 %v629, %v629
        %v662 = vpack.c.b16 %v630, %v630
        %v663 = vpack.c.b16 %v631, %v631
        %v664 = vpack.c.b16 %v632, %v632
        %v665 = vpack.c.b16 %v633, %v633
        %v666 = vpack.c.b16 %v634, %v634
        %v667 = vpack.c.b16 %v635, %v635
        %v668 = vpack.c.b16 %v636, %v636
        %v669 = vpack.c.b16 %v637, %v637
        %v670 = vpack.c.b16 %v638, %v638
        %v671 = vpack.c.b16 %v639, %v639
        %v672 = vpack.c.b16 %v640, %v640
        %v673 = vpack.c.b16 %v641, %v641
        %v674 = vpack.c.b16 %v642, %v642
        %v675 = vpack.c.b16 %v643, %v643
        %vm676 = vsmask.f32 4368
        %vm677 = vmor %vm480, %vm676
        %v679 = vshrl.u32 %v644, 16
        %v681 = vrot.slane %v679, 7
        %v682 = vshll.u32 %v644, 16
        %v684 = vor.u32 %v681, %v682
        %v685 = vrot.slane %v681, 4
        %v687 = vshrl.u32 %v645, 16
        %v689 = vrot.slane %v687, 7
        %v690 = vshll.u32 %v645, 16
        %v692 = vor.u32 %v689, %v690
        %v693 = vsel %vm677, %v685, %v692
        %v694 = vrot.slane %v689, 4
        %v696 = vshrl.u32 %v646, 16
        %v698 = vrot.slane %v696, 7
        %v699 = vshll.u32 %v646, 16
        %v701 = vor.u32 %v698, %v699
        %v702 = vrot.slane %v698, 4
        %v704 = vshrl.u32 %v647, 16
        %v706 = vrot.slane %v704, 7
        %v707 = vshll.u32 %v647, 16
        %v709 = vor.u32 %v706, %v707
        %v710 = vsel %vm677, %v702, %v709
        %v711 = vrot.slane %v706, 4
        %v713 = vshrl.u32 %v648, 16
        %v715 = vrot.slane %v713, 7
        %v716 = vshll.u32 %v648, 16
        %v718 = vor.u32 %v715, %v716
        %v719 = vrot.slane %v715, 4
        %v721 = vshrl.u32 %v649, 16
        %v723 = vrot.slane %v721, 7
        %v724 = vshll.u32 %v649, 16
        %v726 = vor.u32 %v723, %v724
        %v727 = vsel %vm677, %v719, %v726
        %v728 = vrot.slane %v723, 4
        %v730 = vshrl.u32 %v650, 16
        %v732 = vrot.slane %v730, 7
        %v733 = vshll.u32 %v650, 16
        %v735 = vor.u32 %v732, %v733
        %v736 = vrot.slane %v732, 4
        %v738 = vshrl.u32 %v651, 16
        %v740 = vrot.slane %v738, 7
        %v741 = vshll.u32 %v651, 16
        %v743 = vor.u32 %v740, %v741
        %v744 = vsel %vm677, %v736, %v743
        %v745 = vrot.slane %v740, 4
        %v747 = vshrl.u32 %v652, 16
        %v749 = vrot.slane %v747, 7
        %v750 = vshll.u32 %v652, 16
        %v752 = vor.u32 %v749, %v750
        %v753 = vrot.slane %v749, 4
        %v755 = vshrl.u32 %v653, 16
        %v757 = vrot.slane %v755, 7
        %v758 = vshll.u32 %v653, 16
        %v760 = vor.u32 %v757, %v758
        %v761 = vsel %vm677, %v753, %v760
        %v762 = vrot.slane %v757, 4
        %v764 = vshrl.u32 %v654, 16
        %v766 = vrot.slane %v764, 7
        %v767 = vshll.u32 %v654, 16
        %v769 = vor.u32 %v766, %v767
        %v770 = vrot.slane %v766, 4
        %v772 = vshrl.u32 %v655, 16
        %v774 = vrot.slane %v772, 7
        %v775 = vshll.u32 %v655, 16
        %v777 = vor.u32 %v774, %v775
        %v778 = vsel %vm677, %v770, %v777
        %v779 = vrot.slane %v774, 4
        %v781 = vshrl.u32 %v656, 16
        %v783 = vrot.slane %v781, 7
        %v784 = vshll.u32 %v656, 16
        %v786 = vor.u32 %v783, %v784
        %v787 = vrot.slane %v783, 4
        %v789 = vshrl.u32 %v657, 16
        %v791 = vrot.slane %v789, 7
        %v792 = vshll.u32 %v657, 16
        %v794 = vor.u32 %v791, %v792
        %v795 = vsel %vm677, %v787, %v794
        %v796 = vrot.slane %v791, 4
        %v798 = vshrl.u32 %v658, 16
        %v800 = vrot.slane %v798, 7
        %v801 = vshll.u32 %v658, 16
        %v803 = vor.u32 %v800, %v801
        %v804 = vrot.slane %v800, 4
        %v806 = vshrl.u32 %v659, 16
        %v808 = vrot.slane %v806, 7
        %v809 = vshll.u32 %v659, 16
        %v811 = vor.u32 %v808, %v809
        %v812 = vsel %vm677, %v804, %v811
        %v813 = vrot.slane %v808, 4
        %v815 = vshrl.u32 %v660, 16
        %v817 = vrot.slane %v815, 7
        %v818 = vshll.u32 %v660, 16
        %v820 = vor.u32 %v817, %v818
        %v821 = vrot.slane %v817, 4
        %v823 = vshrl.u32 %v661, 16
        %v825 = vrot.slane %v823, 7
        %v826 = vshll.u32 %v661, 16
        %v828 = vor.u32 %v825, %v826
        %v829 = vsel %vm677, %v821, %v828
        %v830 = vrot.slane %v825, 4
        %v832 = vshrl.u32 %v662, 16
        %v834 = vrot.slane %v832, 7
        %v835 = vshll.u32 %v662, 16
        %v837 = vor.u32 %v834, %v835
        %v838 = vrot.slane %v834, 4
        %v840 = vshrl.u32 %v663, 16
        %v842 = vrot.slane %v840, 7
        %v843 = vshll.u32 %v663, 16
        %v845 = vor.u32 %v842, %v843
        %v846 = vsel %vm677, %v838, %v845
        %v847 = vrot.slane %v842, 4
        %v849 = vshrl.u32 %v664, 16
        %v851 = vrot.slane %v849, 7
        %v852 = vshll.u32 %v664, 16
        %v854 = vor.u32 %v851, %v852
        %v855 = vrot.slane %v851, 4
        %v857 = vshrl.u32 %v665, 16
        %v859 = vrot.slane %v857, 7
        %v860 = vshll.u32 %v665, 16
        %v862 = vor.u32 %v859, %v860
        %v863 = vsel %vm677, %v855, %v862
        %v864 = vrot.slane %v859, 4
        %v866 = vshrl.u32 %v666, 16
        %v868 = vrot.slane %v866, 7
        %v869 = vshll.u32 %v666, 16
        %v871 = vor.u32 %v868, %v869
        %v872 = vrot.slane %v868, 4
        %v874 = vshrl.u32 %v667, 16
        %v876 = vrot.slane %v874, 7
        %v877 = vshll.u32 %v667, 16
        %v879 = vor.u32 %v876, %v877
        %v880 = vsel %vm677, %v872, %v879
        %v881 = vrot.slane %v876, 4
        %v883 = vshrl.u32 %v668, 16
        %v885 = vrot.slane %v883, 7
        %v886 = vshll.u32 %v668, 16
        %v888 = vor.u32 %v885, %v886
        %v889 = vrot.slane %v885, 4
        %v891 = vshrl.u32 %v669, 16
        %v893 = vrot.slane %v891, 7
        %v894 = vshll.u32 %v669, 16
        %v896 = vor.u32 %v893, %v894
        %v897 = vsel %vm677, %v889, %v896
        %v898 = vrot.slane %v893, 4
        %v900 = vshrl.u32 %v670, 16
        %v902 = vrot.slane %v900, 7
        %v903 = vshll.u32 %v670, 16
        %v905 = vor.u32 %v902, %v903
        %v906 = vrot.slane %v902, 4
        %v908 = vshrl.u32 %v671, 16
        %v910 = vrot.slane %v908, 7
        %v911 = vshll.u32 %v671, 16
        %v913 = vor.u32 %v910, %v911
        %v914 = vsel %vm677, %v906, %v913
        %v915 = vrot.slane %v910, 4
        %v917 = vshrl.u32 %v672, 16
        %v919 = vrot.slane %v917, 7
        %v920 = vshll.u32 %v672, 16
        %v922 = vor.u32 %v919, %v920
        %v923 = vrot.slane %v919, 4
        %v925 = vshrl.u32 %v673, 16
        %v927 = vrot.slane %v925, 7
        %v928 = vshll.u32 %v673, 16
        %v930 = vor.u32 %v927, %v928
        %v931 = vsel %vm677, %v923, %v930
        %v932 = vrot.slane %v927, 4
        %v934 = vshrl.u32 %v674, 16
        %v936 = vrot.slane %v934, 7
        %v937 = vshll.u32 %v674, 16
        %v939 = vor.u32 %v936, %v937
        %v940 = vrot.slane %v936, 4
        %v942 = vshrl.u32 %v675, 16
        %v944 = vrot.slane %v942, 7
        %v945 = vshll.u32 %v675, 16
        %v947 = vor.u32 %v944, %v945
        %v948 = vsel %vm677, %v940, %v947
        %v949 = vrot.slane %v944, 4
        %vm998 = vcmask 27648
        %vm999 = vmand %vm998, %vm530
        %v1000 = vld [vmem:[%s478] sm:$0xf]
        %v1001 = vsel %vm999, %v684, %v1000
        %1002 = vst [vmem:[%s478] sm:$0xf] %v1001
        %1003 = vst.msk [vmem:[%s478 + $0x4] sm:$0xf] %vm469, %v693
        %v1004 = vld [vmem:[%s478 + $0x8] sm:$0x1]
        %v1005 = vsel %vm481, %v694, %v1004
        %1006 = vst [vmem:[%s478 + $0x8] sm:$0x1] %v1005
        %v1007 = vld [vmem:[%s478 + $0xc] sm:$0xf]
        %v1008 = vsel %vm999, %v701, %v1007
        %1009 = vst [vmem:[%s478 + $0xc] sm:$0xf] %v1008
        %1010 = vst.msk [vmem:[%s478 + $0x10] sm:$0xf] %vm469, %v710
        %v1011 = vld [vmem:[%s478 + $0x14] sm:$0x1]
        %v1012 = vsel %vm481, %v711, %v1011
        %1013 = vst [vmem:[%s478 + $0x14] sm:$0x1] %v1012
        %v1014 = vld [vmem:[%s478 + $0x18] sm:$0xf]
        %v1015 = vsel %vm999, %v718, %v1014
        %1016 = vst [vmem:[%s478 + $0x18] sm:$0xf] %v1015
        %1017 = vst.msk [vmem:[%s478 + $0x1c] sm:$0xf] %vm469, %v727
        %v1018 = vld [vmem:[%s478 + $0x20] sm:$0x1]
        %v1019 = vsel %vm481, %v728, %v1018
        %1020 = vst [vmem:[%s478 + $0x20] sm:$0x1] %v1019
        %v1021 = vld [vmem:[%s478 + $0x24] sm:$0xf]
        %v1022 = vsel %vm999, %v735, %v1021
        %1023 = vst [vmem:[%s478 + $0x24] sm:$0xf] %v1022
        %1024 = vst.msk [vmem:[%s478 + $0x28] sm:$0xf] %vm469, %v744
        %v1025 = vld [vmem:[%s478 + $0x2c] sm:$0x1]
        %v1026 = vsel %vm481, %v745, %v1025
        %1027 = vst [vmem:[%s478 + $0x2c] sm:$0x1] %v1026
        %v1028 = vld [vmem:[%s478 + $0x30] sm:$0xf]
        %v1029 = vsel %vm999, %v752, %v1028
        %1030 = vst [vmem:[%s478 + $0x30] sm:$0xf] %v1029
        %1031 = vst.msk [vmem:[%s478 + $0x34] sm:$0xf] %vm469, %v761
        %v1032 = vld [vmem:[%s478 + $0x38] sm:$0x1]
        %v1033 = vsel %vm481, %v762, %v1032
        %1034 = vst [vmem:[%s478 + $0x38] sm:$0x1] %v1033
        %v1035 = vld [vmem:[%s478 + $0x3c] sm:$0xf]
        %v1036 = vsel %vm999, %v769, %v1035
        %1037 = vst [vmem:[%s478 + $0x3c] sm:$0xf] %v1036
        %1038 = vst.msk [vmem:[%s478 + $0x40] sm:$0xf] %vm469, %v778
        %v1039 = vld [vmem:[%s478 + $0x44] sm:$0x1]
        %v1040 = vsel %vm481, %v779, %v1039
        %1041 = vst [vmem:[%s478 + $0x44] sm:$0x1] %v1040
        %v1042 = vld [vmem:[%s478 + $0x48] sm:$0xf]
        %v1043 = vsel %vm999, %v786, %v1042
        %1044 = vst [vmem:[%s478 + $0x48] sm:$0xf] %v1043
        %1045 = vst.msk [vmem:[%s478 + $0x4c] sm:$0xf] %vm469, %v795
        %v1046 = vld [vmem:[%s478 + $0x50] sm:$0x1]
        %v1047 = vsel %vm481, %v796, %v1046
        %1048 = vst [vmem:[%s478 + $0x50] sm:$0x1] %v1047
        %v1049 = vld [vmem:[%s478 + $0x54] sm:$0xf]
        %v1050 = vsel %vm999, %v803, %v1049
        %1051 = vst [vmem:[%s478 + $0x54] sm:$0xf] %v1050
        %1052 = vst.msk [vmem:[%s478 + $0x58] sm:$0xf] %vm469, %v812
        %v1053 = vld [vmem:[%s478 + $0x5c] sm:$0x1]
        %v1054 = vsel %vm481, %v813, %v1053
        %1055 = vst [vmem:[%s478 + $0x5c] sm:$0x1] %v1054
        %v1056 = vld [vmem:[%s478 + $0x60] sm:$0xf]
        %v1057 = vsel %vm999, %v820, %v1056
        %1058 = vst [vmem:[%s478 + $0x60] sm:$0xf] %v1057
        %1059 = vst.msk [vmem:[%s478 + $0x64] sm:$0xf] %vm469, %v829
        %v1060 = vld [vmem:[%s478 + $0x68] sm:$0x1]
        %v1061 = vsel %vm481, %v830, %v1060
        %1062 = vst [vmem:[%s478 + $0x68] sm:$0x1] %v1061
        %v1063 = vld [vmem:[%s478 + $0x6c] sm:$0xf]
        %v1064 = vsel %vm999, %v837, %v1063
        %1065 = vst [vmem:[%s478 + $0x6c] sm:$0xf] %v1064
        %1066 = vst.msk [vmem:[%s478 + $0x70] sm:$0xf] %vm469, %v846
        %v1067 = vld [vmem:[%s478 + $0x74] sm:$0x1]
        %v1068 = vsel %vm481, %v847, %v1067
        %1069 = vst [vmem:[%s478 + $0x74] sm:$0x1] %v1068
        %v1070 = vld [vmem:[%s478 + $0x78] sm:$0xf]
        %v1071 = vsel %vm999, %v854, %v1070
        %1072 = vst [vmem:[%s478 + $0x78] sm:$0xf] %v1071
        %1073 = vst.msk [vmem:[%s478 + $0x7c] sm:$0xf] %vm469, %v863
        %v1074 = vld [vmem:[%s478 + $0x80] sm:$0x1]
        %v1075 = vsel %vm481, %v864, %v1074
        %1076 = vst [vmem:[%s478 + $0x80] sm:$0x1] %v1075
        %v1077 = vld [vmem:[%s478 + $0x84] sm:$0xf]
        %v1078 = vsel %vm999, %v871, %v1077
        %1079 = vst [vmem:[%s478 + $0x84] sm:$0xf] %v1078
        %1080 = vst.msk [vmem:[%s478 + $0x88] sm:$0xf] %vm469, %v880
        %v1081 = vld [vmem:[%s478 + $0x8c] sm:$0x1]
        %v1082 = vsel %vm481, %v881, %v1081
        %1083 = vst [vmem:[%s478 + $0x8c] sm:$0x1] %v1082
        %v1084 = vld [vmem:[%s478 + $0x90] sm:$0xf]
        %v1085 = vsel %vm999, %v888, %v1084
        %1086 = vst [vmem:[%s478 + $0x90] sm:$0xf] %v1085
        %1087 = vst.msk [vmem:[%s478 + $0x94] sm:$0xf] %vm469, %v897
        %v1088 = vld [vmem:[%s478 + $0x98] sm:$0x1]
        %v1089 = vsel %vm481, %v898, %v1088
        %1090 = vst [vmem:[%s478 + $0x98] sm:$0x1] %v1089
        %v1091 = vld [vmem:[%s478 + $0x9c] sm:$0xf]
        %v1092 = vsel %vm999, %v905, %v1091
        %1093 = vst [vmem:[%s478 + $0x9c] sm:$0xf] %v1092
        %1094 = vst.msk [vmem:[%s478 + $0xa0] sm:$0xf] %vm469, %v914
        %v1095 = vld [vmem:[%s478 + $0xa4] sm:$0x1]
        %v1096 = vsel %vm481, %v915, %v1095
        %1097 = vst [vmem:[%s478 + $0xa4] sm:$0x1] %v1096
        %v1098 = vld [vmem:[%s478 + $0xa8] sm:$0xf]
        %v1099 = vsel %vm999, %v922, %v1098
        %1100 = vst [vmem:[%s478 + $0xa8] sm:$0xf] %v1099
        %1101 = vst.msk [vmem:[%s478 + $0xac] sm:$0xf] %vm469, %v931
        %v1102 = vld [vmem:[%s478 + $0xb0] sm:$0x1]
        %v1103 = vsel %vm481, %v932, %v1102
        %1104 = vst [vmem:[%s478 + $0xb0] sm:$0x1] %v1103
        %v1105 = vld [vmem:[%s478 + $0xb4] sm:$0xf]
        %v1106 = vsel %vm999, %v939, %v1105
        %1107 = vst [vmem:[%s478 + $0xb4] sm:$0xf] %v1106
        %1108 = vst.msk [vmem:[%s478 + $0xb8] sm:$0xf] %vm469, %v948
        %v1109 = vld [vmem:[%s478 + $0xbc] sm:$0x1]
        %v1110 = vsel %vm481, %v949, %v1109
        %1111 = vst [vmem:[%s478 + $0xbc] sm:$0x1] %v1110
        %v1112 = vld [vmem:[#allocation2] sm:$0xf]
        %v1113 = vld [vmem:[#allocation2 + $0x4] sm:$0xf]
        %v1114 = vld [vmem:[#allocation2 + $0xc] sm:$0xf]
        %v1115 = vld [vmem:[#allocation2 + $0x10] sm:$0xf]
        %v1116 = vld [vmem:[#allocation2 + $0x18] sm:$0xf]
        %v1117 = vld [vmem:[#allocation2 + $0x1c] sm:$0xf]
        %v1118 = vld [vmem:[#allocation2 + $0x24] sm:$0xf]
        %v1119 = vld [vmem:[#allocation2 + $0x28] sm:$0xf]
        %v1120 = vld [vmem:[#allocation2 + $0x30] sm:$0xf]
        %v1121 = vld [vmem:[#allocation2 + $0x34] sm:$0xf]
        %v1122 = vld [vmem:[#allocation2 + $0x3c] sm:$0xf]
        %v1123 = vld [vmem:[#allocation2 + $0x40] sm:$0xf]
        %v1124 = vld [vmem:[#allocation2 + $0x48] sm:$0xf]
        %v1125 = vld [vmem:[#allocation2 + $0x4c] sm:$0xf]
        %v1126 = vld [vmem:[#allocation2 + $0x54] sm:$0xf]
        %v1127 = vld [vmem:[#allocation2 + $0x58] sm:$0xf]
        %v1128 = vld [vmem:[#allocation2 + $0x60] sm:$0xf]
        %v1129 = vld [vmem:[#allocation2 + $0x64] sm:$0xf]
        %v1130 = vld [vmem:[#allocation2 + $0x6c] sm:$0xf]
        %v1131 = vld [vmem:[#allocation2 + $0x70] sm:$0xf]
        %v1132 = vld [vmem:[#allocation2 + $0x78] sm:$0xf]
        %v1133 = vld [vmem:[#allocation2 + $0x7c] sm:$0xf]
        %v1134 = vld [vmem:[#allocation2 + $0x84] sm:$0xf]
        %v1135 = vld [vmem:[#allocation2 + $0x88] sm:$0xf]
        %v1136 = vld [vmem:[#allocation2 + $0x90] sm:$0xf]
        %v1137 = vld [vmem:[#allocation2 + $0x94] sm:$0xf]
        %v1138 = vld [vmem:[#allocation2 + $0x9c] sm:$0xf]
        %v1139 = vld [vmem:[#allocation2 + $0xa0] sm:$0xf]
        %v1140 = vld [vmem:[#allocation2 + $0xa8] sm:$0xf]
        %v1141 = vld [vmem:[#allocation2 + $0xac] sm:$0xf]
        %v1142 = vld [vmem:[#allocation2 + $0xb4] sm:$0xf]
        %v1143 = vld [vmem:[#allocation2 + $0xb8] sm:$0xf]
        %v1144 = vld [vmem:[#allocation2 + $0x8] sm:$0x1]
        %v1145 = vld [vmem:[#allocation2 + $0x14] sm:$0x1]
        %v1146 = vld [vmem:[#allocation2 + $0x20] sm:$0x1]
        %v1147 = vld [vmem:[#allocation2 + $0x2c] sm:$0x1]
        %v1148 = vld [vmem:[#allocation2 + $0x38] sm:$0x1]
        %v1149 = vld [vmem:[#allocation2 + $0x44] sm:$0x1]
        %v1150 = vld [vmem:[#allocation2 + $0x50] sm:$0x1]
        %v1151 = vld [vmem:[#allocation2 + $0x5c] sm:$0x1]
        %v1152 = vld [vmem:[#allocation2 + $0x68] sm:$0x1]
        %v1153 = vld [vmem:[#allocation2 + $0x74] sm:$0x1]
        %v1154 = vld [vmem:[#allocation2 + $0x80] sm:$0x1]
        %v1155 = vld [vmem:[#allocation2 + $0x8c] sm:$0x1]
        %v1156 = vld [vmem:[#allocation2 + $0x98] sm:$0x1]
        %v1157 = vld [vmem:[#allocation2 + $0xa4] sm:$0x1]
        %v1158 = vld [vmem:[#allocation2 + $0xb0] sm:$0x1]
        %v1159 = vld [vmem:[#allocation2 + $0xbc] sm:$0x1]
        %v1160 = vld [vmem:[#allocation2] sm:$0xe]
        %v1161 = vld [vmem:[#allocation2 + $0xc] sm:$0xe]
        %v1162 = vld [vmem:[#allocation2 + $0x18] sm:$0xe]
        %v1163 = vld [vmem:[#allocation2 + $0x24] sm:$0xe]
        %v1164 = vld [vmem:[#allocation2 + $0x30] sm:$0xe]
        %v1165 = vld [vmem:[#allocation2 + $0x3c] sm:$0xe]
        %v1166 = vld [vmem:[#allocation2 + $0x48] sm:$0xe]
        %v1167 = vld [vmem:[#allocation2 + $0x54] sm:$0xe]
        %v1168 = vld [vmem:[#allocation2 + $0x60] sm:$0xe]
        %v1169 = vld [vmem:[#allocation2 + $0x6c] sm:$0xe]
        %v1170 = vld [vmem:[#allocation2 + $0x78] sm:$0xe]
        %v1171 = vld [vmem:[#allocation2 + $0x84] sm:$0xe]
        %v1172 = vld [vmem:[#allocation2 + $0x90] sm:$0xe]
        %v1173 = vld [vmem:[#allocation2 + $0x9c] sm:$0xe]
        %v1174 = vld [vmem:[#allocation2 + $0xa8] sm:$0xe]
        %v1175 = vld [vmem:[#allocation2 + $0xb4] sm:$0xe]
        %v1208 = vunpack.c.l.b16 %v1112
        %v1209 = vunpack.c.l.b16 %v1113
        %v1210 = vunpack.c.l.b16 %v1114
        %v1211 = vunpack.c.l.b16 %v1115
        %v1212 = vunpack.c.l.b16 %v1116
        %v1213 = vunpack.c.l.b16 %v1117
        %v1214 = vunpack.c.l.b16 %v1118
        %v1215 = vunpack.c.l.b16 %v1119
        %v1216 = vunpack.c.l.b16 %v1120
        %v1217 = vunpack.c.l.b16 %v1121
        %v1218 = vunpack.c.l.b16 %v1122
        %v1219 = vunpack.c.l.b16 %v1123
        %v1220 = vunpack.c.l.b16 %v1124
        %v1221 = vunpack.c.l.b16 %v1125
        %v1222 = vunpack.c.l.b16 %v1126
        %v1223 = vunpack.c.l.b16 %v1127
        %v1224 = vunpack.c.l.b16 %v1128
        %v1225 = vunpack.c.l.b16 %v1129
        %v1226 = vunpack.c.l.b16 %v1130
        %v1227 = vunpack.c.l.b16 %v1131
        %v1228 = vunpack.c.l.b16 %v1132
        %v1229 = vunpack.c.l.b16 %v1133
        %v1230 = vunpack.c.l.b16 %v1134
        %v1231 = vunpack.c.l.b16 %v1135
        %v1232 = vunpack.c.l.b16 %v1136
        %v1233 = vunpack.c.l.b16 %v1137
        %v1234 = vunpack.c.l.b16 %v1138
        %v1235 = vunpack.c.l.b16 %v1139
        %v1236 = vunpack.c.l.b16 %v1140
        %v1237 = vunpack.c.l.b16 %v1141
        %v1238 = vunpack.c.l.b16 %v1142
        %v1239 = vunpack.c.l.b16 %v1143
        %v1240 = vpack.c.b16 %v1209, %v1208
        %v1241 = vpack.c.b16 %v1211, %v1210
        %v1242 = vpack.c.b16 %v1213, %v1212
        %v1243 = vpack.c.b16 %v1215, %v1214
        %v1244 = vpack.c.b16 %v1217, %v1216
        %v1245 = vpack.c.b16 %v1219, %v1218
        %v1246 = vpack.c.b16 %v1221, %v1220
        %v1247 = vpack.c.b16 %v1223, %v1222
        %v1248 = vpack.c.b16 %v1225, %v1224
        %v1249 = vpack.c.b16 %v1227, %v1226
        %v1250 = vpack.c.b16 %v1229, %v1228
        %v1251 = vpack.c.b16 %v1231, %v1230
        %v1252 = vpack.c.b16 %v1233, %v1232
        %v1253 = vpack.c.b16 %v1235, %v1234
        %v1254 = vpack.c.b16 %v1237, %v1236
        %v1255 = vpack.c.b16 %v1239, %v1238
        %v1272 = vunpack.c.l.b16 %v1144
        %v1273 = vunpack.c.l.b16 %v1145
        %v1274 = vunpack.c.l.b16 %v1146
        %v1275 = vunpack.c.l.b16 %v1147
        %v1276 = vunpack.c.l.b16 %v1148
        %v1277 = vunpack.c.l.b16 %v1149
        %v1278 = vunpack.c.l.b16 %v1150
        %v1279 = vunpack.c.l.b16 %v1151
        %v1280 = vunpack.c.l.b16 %v1152
        %v1281 = vunpack.c.l.b16 %v1153
        %v1282 = vunpack.c.l.b16 %v1154
        %v1283 = vunpack.c.l.b16 %v1155
        %v1284 = vunpack.c.l.b16 %v1156
        %v1285 = vunpack.c.l.b16 %v1157
        %v1286 = vunpack.c.l.b16 %v1158
        %v1287 = vunpack.c.l.b16 %v1159
        %v1288 = vpack.c.b16 %v1272, %v1272
        %v1289 = vpack.c.b16 %v1273, %v1273
        %v1290 = vpack.c.b16 %v1274, %v1274
        %v1291 = vpack.c.b16 %v1275, %v1275
        %v1292 = vpack.c.b16 %v1276, %v1276
        %v1293 = vpack.c.b16 %v1277, %v1277
        %v1294 = vpack.c.b16 %v1278, %v1278
        %v1295 = vpack.c.b16 %v1279, %v1279
        %v1296 = vpack.c.b16 %v1280, %v1280
        %v1297 = vpack.c.b16 %v1281, %v1281
        %v1298 = vpack.c.b16 %v1282, %v1282
        %v1299 = vpack.c.b16 %v1283, %v1283
        %v1300 = vpack.c.b16 %v1284, %v1284
        %v1301 = vpack.c.b16 %v1285, %v1285
        %v1302 = vpack.c.b16 %v1286, %v1286
        %v1303 = vpack.c.b16 %v1287, %v1287
        %vm1304 = vsmask.f32 7424
        %v1306 = vshrl.u32 %v1240, 16
        %v1308 = vshll.u32 %v1240, 16
        %v1310 = vrot.slane %v1308, 1
        %v1311 = vor.u32 %v1306, %v1310
        %v1313 = vshll.u32 %v1288, 16
        %v1315 = vrot.slane %v1313, 1
        %v1316 = vsel %vm1304, %v1311, %v1315
        %v1318 = vshrl.u32 %v1241, 16
        %v1320 = vshll.u32 %v1241, 16
        %v1322 = vrot.slane %v1320, 1
        %v1323 = vor.u32 %v1318, %v1322
        %v1325 = vshll.u32 %v1289, 16
        %v1327 = vrot.slane %v1325, 1
        %v1328 = vsel %vm1304, %v1323, %v1327
        %v1330 = vshrl.u32 %v1242, 16
        %v1332 = vshll.u32 %v1242, 16
        %v1334 = vrot.slane %v1332, 1
        %v1335 = vor.u32 %v1330, %v1334
        %v1337 = vshll.u32 %v1290, 16
        %v1339 = vrot.slane %v1337, 1
        %v1340 = vsel %vm1304, %v1335, %v1339
        %v1342 = vshrl.u32 %v1243, 16
        %v1344 = vshll.u32 %v1243, 16
        %v1346 = vrot.slane %v1344, 1
        %v1347 = vor.u32 %v1342, %v1346
        %v1349 = vshll.u32 %v1291, 16
        %v1351 = vrot.slane %v1349, 1
        %v1352 = vsel %vm1304, %v1347, %v1351
        %v1354 = vshrl.u32 %v1244, 16
        %v1356 = vshll.u32 %v1244, 16
        %v1358 = vrot.slane %v1356, 1
        %v1359 = vor.u32 %v1354, %v1358
        %v1361 = vshll.u32 %v1292, 16
        %v1363 = vrot.slane %v1361, 1
        %v1364 = vsel %vm1304, %v1359, %v1363
        %v1366 = vshrl.u32 %v1245, 16
        %v1368 = vshll.u32 %v1245, 16
        %v1370 = vrot.slane %v1368, 1
        %v1371 = vor.u32 %v1366, %v1370
        %v1373 = vshll.u32 %v1293, 16
        %v1375 = vrot.slane %v1373, 1
        %v1376 = vsel %vm1304, %v1371, %v1375
        %v1378 = vshrl.u32 %v1246, 16
        %v1380 = vshll.u32 %v1246, 16
        %v1382 = vrot.slane %v1380, 1
        %v1383 = vor.u32 %v1378, %v1382
        %v1385 = vshll.u32 %v1294, 16
        %v1387 = vrot.slane %v1385, 1
        %v1388 = vsel %vm1304, %v1383, %v1387
        %v1390 = vshrl.u32 %v1247, 16
        %v1392 = vshll.u32 %v1247, 16
        %v1394 = vrot.slane %v1392, 1
        %v1395 = vor.u32 %v1390, %v1394
        %v1397 = vshll.u32 %v1295, 16
        %v1399 = vrot.slane %v1397, 1
        %v1400 = vsel %vm1304, %v1395, %v1399
        %v1402 = vshrl.u32 %v1248, 16
        %v1404 = vshll.u32 %v1248, 16
        %v1406 = vrot.slane %v1404, 1
        %v1407 = vor.u32 %v1402, %v1406
        %v1409 = vshll.u32 %v1296, 16
        %v1411 = vrot.slane %v1409, 1
        %v1412 = vsel %vm1304, %v1407, %v1411
        %v1414 = vshrl.u32 %v1249, 16
        %v1416 = vshll.u32 %v1249, 16
        %v1418 = vrot.slane %v1416, 1
        %v1419 = vor.u32 %v1414, %v1418
        %v1421 = vshll.u32 %v1297, 16
        %v1423 = vrot.slane %v1421, 1
        %v1424 = vsel %vm1304, %v1419, %v1423
        %v1426 = vshrl.u32 %v1250, 16
        %v1428 = vshll.u32 %v1250, 16
        %v1430 = vrot.slane %v1428, 1
        %v1431 = vor.u32 %v1426, %v1430
        %v1433 = vshll.u32 %v1298, 16
        %v1435 = vrot.slane %v1433, 1
        %v1436 = vsel %vm1304, %v1431, %v1435
        %v1438 = vshrl.u32 %v1251, 16
        %v1440 = vshll.u32 %v1251, 16
        %v1442 = vrot.slane %v1440, 1
        %v1443 = vor.u32 %v1438, %v1442
        %v1445 = vshll.u32 %v1299, 16
        %v1447 = vrot.slane %v1445, 1
        %v1448 = vsel %vm1304, %v1443, %v1447
        %v1450 = vshrl.u32 %v1252, 16
        %v1452 = vshll.u32 %v1252, 16
        %v1454 = vrot.slane %v1452, 1
        %v1455 = vor.u32 %v1450, %v1454
        %v1457 = vshll.u32 %v1300, 16
        %v1459 = vrot.slane %v1457, 1
        %v1460 = vsel %vm1304, %v1455, %v1459
        %v1462 = vshrl.u32 %v1253, 16
        %v1464 = vshll.u32 %v1253, 16
        %v1466 = vrot.slane %v1464, 1
        %v1467 = vor.u32 %v1462, %v1466
        %v1469 = vshll.u32 %v1301, 16
        %v1471 = vrot.slane %v1469, 1
        %v1472 = vsel %vm1304, %v1467, %v1471
        %v1474 = vshrl.u32 %v1254, 16
        %v1476 = vshll.u32 %v1254, 16
        %v1478 = vrot.slane %v1476, 1
        %v1479 = vor.u32 %v1474, %v1478
        %v1481 = vshll.u32 %v1302, 16
        %v1483 = vrot.slane %v1481, 1
        %v1484 = vsel %vm1304, %v1479, %v1483
        %v1486 = vshrl.u32 %v1255, 16
        %v1488 = vshll.u32 %v1255, 16
        %v1490 = vrot.slane %v1488, 1
        %v1491 = vor.u32 %v1486, %v1490
        %v1493 = vshll.u32 %v1303, 16
        %v1495 = vrot.slane %v1493, 1
        %v1496 = vsel %vm1304, %v1491, %v1495
        %1497 = vrot.lane.b32.xlu0 %v1316, 4
        %v1498 = vpop.permute.xlu0 %1497
        %1499 = vrot.lane.b32.xlu0 %v1328, 4
        %v1500 = vpop.permute.xlu0 %1499
        %1501 = vrot.lane.b32.xlu0 %v1340, 4
        %v1502 = vpop.permute.xlu0 %1501
        %1503 = vrot.lane.b32.xlu0 %v1352, 4
        %v1504 = vpop.permute.xlu0 %1503
        %1505 = vrot.lane.b32.xlu0 %v1364, 4
        %v1506 = vpop.permute.xlu0 %1505
        %1507 = vrot.lane.b32.xlu0 %v1376, 4
        %v1508 = vpop.permute.xlu0 %1507
        %1509 = vrot.lane.b32.xlu0 %v1388, 4
        %v1510 = vpop.permute.xlu0 %1509
        %1511 = vrot.lane.b32.xlu0 %v1400, 4
        %v1512 = vpop.permute.xlu0 %1511
        %1513 = vrot.lane.b32.xlu0 %v1412, 4
        %v1514 = vpop.permute.xlu0 %1513
        %1515 = vrot.lane.b32.xlu0 %v1424, 4
        %v1516 = vpop.permute.xlu0 %1515
        %1517 = vrot.lane.b32.xlu0 %v1436, 4
        %v1518 = vpop.permute.xlu0 %1517
        %1519 = vrot.lane.b32.xlu0 %v1448, 4
        %v1520 = vpop.permute.xlu0 %1519
        %1521 = vrot.lane.b32.xlu0 %v1460, 4
        %v1522 = vpop.permute.xlu0 %1521
        %1523 = vrot.lane.b32.xlu0 %v1472, 4
        %v1524 = vpop.permute.xlu0 %1523
        %1525 = vrot.lane.b32.xlu0 %v1484, 4
        %v1526 = vpop.permute.xlu0 %1525
        %1527 = vrot.lane.b32.xlu0 %v1496, 4
        %v1528 = vpop.permute.xlu0 %1527
        %v1545 = vunpack.c.l.b16 %v1160
        %v1546 = vunpack.c.l.b16 %v1161
        %v1547 = vunpack.c.l.b16 %v1162
        %v1548 = vunpack.c.l.b16 %v1163
        %v1549 = vunpack.c.l.b16 %v1164
        %v1550 = vunpack.c.l.b16 %v1165
        %v1551 = vunpack.c.l.b16 %v1166
        %v1552 = vunpack.c.l.b16 %v1167
        %v1553 = vunpack.c.l.b16 %v1168
        %v1554 = vunpack.c.l.b16 %v1169
        %v1555 = vunpack.c.l.b16 %v1170
        %v1556 = vunpack.c.l.b16 %v1171
        %v1557 = vunpack.c.l.b16 %v1172
        %v1558 = vunpack.c.l.b16 %v1173
        %v1559 = vunpack.c.l.b16 %v1174
        %v1560 = vunpack.c.l.b16 %v1175
        %v1561 = vpack.c.b16 %v1209, %v1545
        %v1562 = vpack.c.b16 %v1211, %v1546
        %v1563 = vpack.c.b16 %v1213, %v1547
        %v1564 = vpack.c.b16 %v1215, %v1548
        %v1565 = vpack.c.b16 %v1217, %v1549
        %v1566 = vpack.c.b16 %v1219, %v1550
        %v1567 = vpack.c.b16 %v1221, %v1551
        %v1568 = vpack.c.b16 %v1223, %v1552
        %v1569 = vpack.c.b16 %v1225, %v1553
        %v1570 = vpack.c.b16 %v1227, %v1554
        %v1571 = vpack.c.b16 %v1229, %v1555
        %v1572 = vpack.c.b16 %v1231, %v1556
        %v1573 = vpack.c.b16 %v1233, %v1557
        %v1574 = vpack.c.b16 %v1235, %v1558
        %v1575 = vpack.c.b16 %v1237, %v1559
        %v1576 = vpack.c.b16 %v1239, %v1560
        %vm1577 = vcmask 1046528
        %v1578 = vrot.slane %v1561, 1
        %v1579 = vrot.slane %v1288, 1
        %v1580 = vsel %vm1577, %v1578, %v1579
        %v1581 = vrot.slane %v1562, 1
        %v1582 = vrot.slane %v1289, 1
        %v1583 = vsel %vm1577, %v1581, %v1582
        %v1584 = vrot.slane %v1563, 1
        %v1585 = vrot.slane %v1290, 1
        %v1586 = vsel %vm1577, %v1584, %v1585
        %v1587 = vrot.slane %v1564, 1
        %v1588 = vrot.slane %v1291, 1
        %v1589 = vsel %vm1577, %v1587, %v1588
        %v1590 = vrot.slane %v1565, 1
        %v1591 = vrot.slane %v1292, 1
        %v1592 = vsel %vm1577, %v1590, %v1591
        %v1593 = vrot.slane %v1566, 1
        %v1594 = vrot.slane %v1293, 1
        %v1595 = vsel %vm1577, %v1593, %v1594
        %v1596 = vrot.slane %v1567, 1
        %v1597 = vrot.slane %v1294, 1
        %v1598 = vsel %vm1577, %v1596, %v1597
        %v1599 = vrot.slane %v1568, 1
        %v1600 = vrot.slane %v1295, 1
        %v1601 = vsel %vm1577, %v1599, %v1600
        %v1602 = vrot.slane %v1569, 1
        %v1603 = vrot.slane %v1296, 1
        %v1604 = vsel %vm1577, %v1602, %v1603
        %v1605 = vrot.slane %v1570, 1
        %v1606 = vrot.slane %v1297, 1
        %v1607 = vsel %vm1577, %v1605, %v1606
        %v1608 = vrot.slane %v1571, 1
        %v1609 = vrot.slane %v1298, 1
        %v1610 = vsel %vm1577, %v1608, %v1609
        %v1611 = vrot.slane %v1572, 1
        %v1612 = vrot.slane %v1299, 1
        %v1613 = vsel %vm1577, %v1611, %v1612
        %v1614 = vrot.slane %v1573, 1
        %v1615 = vrot.slane %v1300, 1
        %v1616 = vsel %vm1577, %v1614, %v1615
        %v1617 = vrot.slane %v1574, 1
        %v1618 = vrot.slane %v1301, 1
        %v1619 = vsel %vm1577, %v1617, %v1618
        %v1620 = vrot.slane %v1575, 1
        %v1621 = vrot.slane %v1302, 1
        %v1622 = vsel %vm1577, %v1620, %v1621
        %v1623 = vrot.slane %v1576, 1
        %v1624 = vrot.slane %v1303, 1
        %v1625 = vsel %vm1577, %v1623, %v1624
        %1626 = vrot.lane.b32.xlu0 %v1580, 8
        %v1627 = vpop.permute.xlu0 %1626
        %1628 = vrot.lane.b32.xlu0 %v1583, 8
        %v1629 = vpop.permute.xlu0 %1628
        %1630 = vrot.lane.b32.xlu0 %v1586, 8
        %v1631 = vpop.permute.xlu0 %1630
        %1632 = vrot.lane.b32.xlu0 %v1589, 8
        %v1633 = vpop.permute.xlu0 %1632
        %1634 = vrot.lane.b32.xlu0 %v1592, 8
        %v1635 = vpop.permute.xlu0 %1634
        %1636 = vrot.lane.b32.xlu0 %v1595, 8
        %v1637 = vpop.permute.xlu0 %1636
        %1638 = vrot.lane.b32.xlu0 %v1598, 8
        %v1639 = vpop.permute.xlu0 %1638
        %1640 = vrot.lane.b32.xlu0 %v1601, 8
        %v1641 = vpop.permute.xlu0 %1640
        %1642 = vrot.lane.b32.xlu0 %v1604, 8
        %v1643 = vpop.permute.xlu0 %1642
        %1644 = vrot.lane.b32.xlu0 %v1607, 8
        %v1645 = vpop.permute.xlu0 %1644
        %1646 = vrot.lane.b32.xlu0 %v1610, 8
        %v1647 = vpop.permute.xlu0 %1646
        %1648 = vrot.lane.b32.xlu0 %v1613, 8
        %v1649 = vpop.permute.xlu0 %1648
        %1650 = vrot.lane.b32.xlu0 %v1616, 8
        %v1651 = vpop.permute.xlu0 %1650
        %1652 = vrot.lane.b32.xlu0 %v1619, 8
        %v1653 = vpop.permute.xlu0 %1652
        %1654 = vrot.lane.b32.xlu0 %v1622, 8
        %v1655 = vpop.permute.xlu0 %1654
        %1656 = vrot.lane.b32.xlu0 %v1625, 8
        %v1657 = vpop.permute.xlu0 %1656
        %vm1658 = vcmask 31744
        %v1660 = vsel %vm1658, %v1240, %v1498
        %v1662 = vsel %vm1658, %v1241, %v1500
        %v1664 = vsel %vm1658, %v1242, %v1502
        %v1666 = vsel %vm1658, %v1243, %v1504
        %v1668 = vsel %vm1658, %v1244, %v1506
        %v1670 = vsel %vm1658, %v1245, %v1508
        %v1672 = vsel %vm1658, %v1246, %v1510
        %v1674 = vsel %vm1658, %v1247, %v1512
        %v1676 = vsel %vm1658, %v1248, %v1514
        %v1678 = vsel %vm1658, %v1249, %v1516
        %v1680 = vsel %vm1658, %v1250, %v1518
        %v1682 = vsel %vm1658, %v1251, %v1520
        %v1684 = vsel %vm1658, %v1252, %v1522
        %v1686 = vsel %vm1658, %v1253, %v1524
        %v1688 = vsel %vm1658, %v1254, %v1526
        %v1690 = vsel %vm1658, %v1255, %v1528
        %vm1691 = vcmask 64512
        %v1693 = vsel %vm1691, %v1660, %v1627
        %v1695 = vsel %vm1691, %v1662, %v1629
        %v1697 = vsel %vm1691, %v1664, %v1631
        %v1699 = vsel %vm1691, %v1666, %v1633
        %v1701 = vsel %vm1691, %v1668, %v1635
        %v1703 = vsel %vm1691, %v1670, %v1637
        %v1705 = vsel %vm1691, %v1672, %v1639
        %v1707 = vsel %vm1691, %v1674, %v1641
        %v1709 = vsel %vm1691, %v1676, %v1643
        %v1711 = vsel %vm1691, %v1678, %v1645
        %v1713 = vsel %vm1691, %v1680, %v1647
        %v1715 = vsel %vm1691, %v1682, %v1649
        %v1717 = vsel %vm1691, %v1684, %v1651
        %v1719 = vsel %vm1691, %v1686, %v1653
        %v1721 = vsel %vm1691, %v1688, %v1655
        %v1723 = vsel %vm1691, %v1690, %v1657
        %v1724 = vld [vmem:[#allocation9] sm:$0xf]
        %v1725 = vld [vmem:[#allocation9 + $0x4] sm:$0x3]
        %v1726 = vld [vmem:[%s478] sm:$0xf]
        %v1727 = vld [vmem:[%s478 + $0x4] sm:$0xf]
        %v1728 = vld [vmem:[%s478 + $0xc] sm:$0xf]
        %v1729 = vld [vmem:[%s478 + $0x10] sm:$0xf]
        %v1730 = vld [vmem:[%s478 + $0x18] sm:$0xf]
        %v1731 = vld [vmem:[%s478 + $0x1c] sm:$0xf]
        %v1732 = vld [vmem:[%s478 + $0x24] sm:$0xf]
        %v1733 = vld [vmem:[%s478 + $0x28] sm:$0xf]
        %v1734 = vld [vmem:[%s478 + $0x30] sm:$0xf]
        %v1735 = vld [vmem:[%s478 + $0x34] sm:$0xf]
        %v1736 = vld [vmem:[%s478 + $0x3c] sm:$0xf]
        %v1737 = vld [vmem:[%s478 + $0x40] sm:$0xf]
        %v1738 = vld [vmem:[%s478 + $0x48] sm:$0xf]
        %v1739 = vld [vmem:[%s478 + $0x4c] sm:$0xf]
        %v1740 = vld [vmem:[%s478 + $0x54] sm:$0xf]
        %v1741 = vld [vmem:[%s478 + $0x58] sm:$0xf]
        %v1742 = vld [vmem:[%s478 + $0x60] sm:$0xf]
        %v1743 = vld [vmem:[%s478 + $0x64] sm:$0xf]
        %v1744 = vld [vmem:[%s478 + $0x6c] sm:$0xf]
        %v1745 = vld [vmem:[%s478 + $0x70] sm:$0xf]
        %v1746 = vld [vmem:[%s478 + $0x78] sm:$0xf]
        %v1747 = vld [vmem:[%s478 + $0x7c] sm:$0xf]
        %v1748 = vld [vmem:[%s478 + $0x84] sm:$0xf]
        %v1749 = vld [vmem:[%s478 + $0x88] sm:$0xf]
        %v1750 = vld [vmem:[%s478 + $0x90] sm:$0xf]
        %v1751 = vld [vmem:[%s478 + $0x94] sm:$0xf]
        %v1752 = vld [vmem:[%s478 + $0x9c] sm:$0xf]
        %v1753 = vld [vmem:[%s478 + $0xa0] sm:$0xf]
        %v1754 = vld [vmem:[%s478 + $0xa8] sm:$0xf]
        %v1755 = vld [vmem:[%s478 + $0xac] sm:$0xf]
        %v1756 = vld [vmem:[%s478 + $0xb4] sm:$0xf]
        %v1757 = vld [vmem:[%s478 + $0xb8] sm:$0xf]
        %v1758 = vld [vmem:[%s478 + $0x8] sm:$0x1]
        %v1759 = vld [vmem:[%s478 + $0x14] sm:$0x1]
        %v1760 = vld [vmem:[%s478 + $0x20] sm:$0x1]
        %v1761 = vld [vmem:[%s478 + $0x2c] sm:$0x1]
        %v1762 = vld [vmem:[%s478 + $0x38] sm:$0x1]
        %v1763 = vld [vmem:[%s478 + $0x44] sm:$0x1]
        %v1764 = vld [vmem:[%s478 + $0x50] sm:$0x1]
        %v1765 = vld [vmem:[%s478 + $0x5c] sm:$0x1]
        %v1766 = vld [vmem:[%s478 + $0x68] sm:$0x1]
        %v1767 = vld [vmem:[%s478 + $0x74] sm:$0x1]
        %v1768 = vld [vmem:[%s478 + $0x80] sm:$0x1]
        %v1769 = vld [vmem:[%s478 + $0x8c] sm:$0x1]
        %v1770 = vld [vmem:[%s478 + $0x98] sm:$0x1]
        %v1771 = vld [vmem:[%s478 + $0xa4] sm:$0x1]
        %v1772 = vld [vmem:[%s478 + $0xb0] sm:$0x1]
        %v1773 = vld [vmem:[%s478 + $0xbc] sm:$0x1]
        %v1774 = vld [vmem:[%s478] sm:$0xe]
        %v1775 = vld [vmem:[%s478 + $0xc] sm:$0xe]
        %v1776 = vld [vmem:[%s478 + $0x18] sm:$0xe]
        %v1777 = vld [vmem:[%s478 + $0x24] sm:$0xe]
        %v1778 = vld [vmem:[%s478 + $0x30] sm:$0xe]
        %v1779 = vld [vmem:[%s478 + $0x3c] sm:$0xe]
        %v1780 = vld [vmem:[%s478 + $0x48] sm:$0xe]
        %v1781 = vld [vmem:[%s478 + $0x54] sm:$0xe]
        %v1782 = vld [vmem:[%s478 + $0x60] sm:$0xe]
        %v1783 = vld [vmem:[%s478 + $0x6c] sm:$0xe]
        %v1784 = vld [vmem:[%s478 + $0x78] sm:$0xe]
        %v1785 = vld [vmem:[%s478 + $0x84] sm:$0xe]
        %v1786 = vld [vmem:[%s478 + $0x90] sm:$0xe]
        %v1787 = vld [vmem:[%s478 + $0x9c] sm:$0xe]
        %v1788 = vld [vmem:[%s478 + $0xa8] sm:$0xe]
        %v1789 = vld [vmem:[%s478 + $0xb4] sm:$0xe]
        %v1822 = vunpack.c.l.b16 %v1726
        %v1823 = vunpack.c.l.b16 %v1727
        %v1824 = vunpack.c.l.b16 %v1728
        %v1825 = vunpack.c.l.b16 %v1729
        %v1826 = vunpack.c.l.b16 %v1730
        %v1827 = vunpack.c.l.b16 %v1731
        %v1828 = vunpack.c.l.b16 %v1732
        %v1829 = vunpack.c.l.b16 %v1733
        %v1830 = vunpack.c.l.b16 %v1734
        %v1831 = vunpack.c.l.b16 %v1735
        %v1832 = vunpack.c.l.b16 %v1736
        %v1833 = vunpack.c.l.b16 %v1737
        %v1834 = vunpack.c.l.b16 %v1738
        %v1835 = vunpack.c.l.b16 %v1739
        %v1836 = vunpack.c.l.b16 %v1740
        %v1837 = vunpack.c.l.b16 %v1741
        %v1838 = vunpack.c.l.b16 %v1742
        %v1839 = vunpack.c.l.b16 %v1743
        %v1840 = vunpack.c.l.b16 %v1744
        %v1841 = vunpack.c.l.b16 %v1745
        %v1842 = vunpack.c.l.b16 %v1746
        %v1843 = vunpack.c.l.b16 %v1747
        %v1844 = vunpack.c.l.b16 %v1748
        %v1845 = vunpack.c.l.b16 %v1749
        %v1846 = vunpack.c.l.b16 %v1750
        %v1847 = vunpack.c.l.b16 %v1751
        %v1848 = vunpack.c.l.b16 %v1752
        %v1849 = vunpack.c.l.b16 %v1753
        %v1850 = vunpack.c.l.b16 %v1754
        %v1851 = vunpack.c.l.b16 %v1755
        %v1852 = vunpack.c.l.b16 %v1756
        %v1853 = vunpack.c.l.b16 %v1757
        %v1854 = vpack.c.b16 %v1823, %v1822
        %v1855 = vpack.c.b16 %v1825, %v1824
        %v1856 = vpack.c.b16 %v1827, %v1826
        %v1857 = vpack.c.b16 %v1829, %v1828
        %v1858 = vpack.c.b16 %v1831, %v1830
        %v1859 = vpack.c.b16 %v1833, %v1832
        %v1860 = vpack.c.b16 %v1835, %v1834
        %v1861 = vpack.c.b16 %v1837, %v1836
        %v1862 = vpack.c.b16 %v1839, %v1838
        %v1863 = vpack.c.b16 %v1841, %v1840
        %v1864 = vpack.c.b16 %v1843, %v1842
        %v1865 = vpack.c.b16 %v1845, %v1844
        %v1866 = vpack.c.b16 %v1847, %v1846
        %v1867 = vpack.c.b16 %v1849, %v1848
        %v1868 = vpack.c.b16 %v1851, %v1850
        %v1869 = vpack.c.b16 %v1853, %v1852
        %v1886 = vunpack.c.l.b16 %v1758
        %v1887 = vunpack.c.l.b16 %v1759
        %v1888 = vunpack.c.l.b16 %v1760
        %v1889 = vunpack.c.l.b16 %v1761
        %v1890 = vunpack.c.l.b16 %v1762
        %v1891 = vunpack.c.l.b16 %v1763
        %v1892 = vunpack.c.l.b16 %v1764
        %v1893 = vunpack.c.l.b16 %v1765
        %v1894 = vunpack.c.l.b16 %v1766
        %v1895 = vunpack.c.l.b16 %v1767
        %v1896 = vunpack.c.l.b16 %v1768
        %v1897 = vunpack.c.l.b16 %v1769
        %v1898 = vunpack.c.l.b16 %v1770
        %v1899 = vunpack.c.l.b16 %v1771
        %v1900 = vunpack.c.l.b16 %v1772
        %v1901 = vunpack.c.l.b16 %v1773
        %v1902 = vpack.c.b16 %v1886, %v1886
        %v1903 = vpack.c.b16 %v1887, %v1887
        %v1904 = vpack.c.b16 %v1888, %v1888
        %v1905 = vpack.c.b16 %v1889, %v1889
        %v1906 = vpack.c.b16 %v1890, %v1890
        %v1907 = vpack.c.b16 %v1891, %v1891
        %v1908 = vpack.c.b16 %v1892, %v1892
        %v1909 = vpack.c.b16 %v1893, %v1893
        %v1910 = vpack.c.b16 %v1894, %v1894
        %v1911 = vpack.c.b16 %v1895, %v1895
        %v1912 = vpack.c.b16 %v1896, %v1896
        %v1913 = vpack.c.b16 %v1897, %v1897
        %v1914 = vpack.c.b16 %v1898, %v1898
        %v1915 = vpack.c.b16 %v1899, %v1899
        %v1916 = vpack.c.b16 %v1900, %v1900
        %v1917 = vpack.c.b16 %v1901, %v1901
        %v1919 = vshrl.u32 %v1854, 16
        %v1921 = vshll.u32 %v1854, 16
        %v1923 = vrot.slane %v1921, 1
        %v1924 = vor.u32 %v1919, %v1923
        %v1926 = vshll.u32 %v1902, 16
        %v1928 = vrot.slane %v1926, 1
        %v1929 = vsel %vm1304, %v1924, %v1928
        %v1931 = vshrl.u32 %v1855, 16
        %v1933 = vshll.u32 %v1855, 16
        %v1935 = vrot.slane %v1933, 1
        %v1936 = vor.u32 %v1931, %v1935
        %v1938 = vshll.u32 %v1903, 16
        %v1940 = vrot.slane %v1938, 1
        %v1941 = vsel %vm1304, %v1936, %v1940
        %v1943 = vshrl.u32 %v1856, 16
        %v1945 = vshll.u32 %v1856, 16
        %v1947 = vrot.slane %v1945, 1
        %v1948 = vor.u32 %v1943, %v1947
        %v1950 = vshll.u32 %v1904, 16
        %v1952 = vrot.slane %v1950, 1
        %v1953 = vsel %vm1304, %v1948, %v1952
        %v1955 = vshrl.u32 %v1857, 16
        %v1957 = vshll.u32 %v1857, 16
        %v1959 = vrot.slane %v1957, 1
        %v1960 = vor.u32 %v1955, %v1959
        %v1962 = vshll.u32 %v1905, 16
        %v1964 = vrot.slane %v1962, 1
        %v1965 = vsel %vm1304, %v1960, %v1964
        %v1967 = vshrl.u32 %v1858, 16
        %v1969 = vshll.u32 %v1858, 16
        %v1971 = vrot.slane %v1969, 1
        %v1972 = vor.u32 %v1967, %v1971
        %v1974 = vshll.u32 %v1906, 16
        %v1976 = vrot.slane %v1974, 1
        %v1977 = vsel %vm1304, %v1972, %v1976
        %v1979 = vshrl.u32 %v1859, 16
        %v1981 = vshll.u32 %v1859, 16
        %v1983 = vrot.slane %v1981, 1
        %v1984 = vor.u32 %v1979, %v1983
        %v1986 = vshll.u32 %v1907, 16
        %v1988 = vrot.slane %v1986, 1
        %v1989 = vsel %vm1304, %v1984, %v1988
        %v1991 = vshrl.u32 %v1860, 16
        %v1993 = vshll.u32 %v1860, 16
        %v1995 = vrot.slane %v1993, 1
        %v1996 = vor.u32 %v1991, %v1995
        %v1998 = vshll.u32 %v1908, 16
        %v2000 = vrot.slane %v1998, 1
        %v2001 = vsel %vm1304, %v1996, %v2000
        %v2003 = vshrl.u32 %v1861, 16
        %v2005 = vshll.u32 %v1861, 16
        %v2007 = vrot.slane %v2005, 1
        %v2008 = vor.u32 %v2003, %v2007
        %v2010 = vshll.u32 %v1909, 16
        %v2012 = vrot.slane %v2010, 1
        %v2013 = vsel %vm1304, %v2008, %v2012
        %v2015 = vshrl.u32 %v1862, 16
        %v2017 = vshll.u32 %v1862, 16
        %v2019 = vrot.slane %v2017, 1
        %v2020 = vor.u32 %v2015, %v2019
        %v2022 = vshll.u32 %v1910, 16
        %v2024 = vrot.slane %v2022, 1
        %v2025 = vsel %vm1304, %v2020, %v2024
        %v2027 = vshrl.u32 %v1863, 16
        %v2029 = vshll.u32 %v1863, 16
        %v2031 = vrot.slane %v2029, 1
        %v2032 = vor.u32 %v2027, %v2031
        %v2034 = vshll.u32 %v1911, 16
        %v2036 = vrot.slane %v2034, 1
        %v2037 = vsel %vm1304, %v2032, %v2036
        %v2039 = vshrl.u32 %v1864, 16
        %v2041 = vshll.u32 %v1864, 16
        %v2043 = vrot.slane %v2041, 1
        %v2044 = vor.u32 %v2039, %v2043
        %v2046 = vshll.u32 %v1912, 16
        %v2048 = vrot.slane %v2046, 1
        %v2049 = vsel %vm1304, %v2044, %v2048
        %v2051 = vshrl.u32 %v1865, 16
        %v2053 = vshll.u32 %v1865, 16
        %v2055 = vrot.slane %v2053, 1
        %v2056 = vor.u32 %v2051, %v2055
        %v2058 = vshll.u32 %v1913, 16
        %v2060 = vrot.slane %v2058, 1
        %v2061 = vsel %vm1304, %v2056, %v2060
        %v2063 = vshrl.u32 %v1866, 16
        %v2065 = vshll.u32 %v1866, 16
        %v2067 = vrot.slane %v2065, 1
        %v2068 = vor.u32 %v2063, %v2067
        %v2070 = vshll.u32 %v1914, 16
        %v2072 = vrot.slane %v2070, 1
        %v2073 = vsel %vm1304, %v2068, %v2072
        %v2075 = vshrl.u32 %v1867, 16
        %v2077 = vshll.u32 %v1867, 16
        %v2079 = vrot.slane %v2077, 1
        %v2080 = vor.u32 %v2075, %v2079
        %v2082 = vshll.u32 %v1915, 16
        %v2084 = vrot.slane %v2082, 1
        %v2085 = vsel %vm1304, %v2080, %v2084
        %v2087 = vshrl.u32 %v1868, 16
        %v2089 = vshll.u32 %v1868, 16
        %v2091 = vrot.slane %v2089, 1
        %v2092 = vor.u32 %v2087, %v2091
        %v2094 = vshll.u32 %v1916, 16
        %v2096 = vrot.slane %v2094, 1
        %v2097 = vsel %vm1304, %v2092, %v2096
        %v2099 = vshrl.u32 %v1869, 16
        %v2101 = vshll.u32 %v1869, 16
        %v2103 = vrot.slane %v2101, 1
        %v2104 = vor.u32 %v2099, %v2103
        %v2106 = vshll.u32 %v1917, 16
        %v2108 = vrot.slane %v2106, 1
        %v2109 = vsel %vm1304, %v2104, %v2108
        %2110 = vrot.lane.b32.xlu0 %v1929, 4
        %v2111 = vpop.permute.xlu0 %2110
        %2112 = vrot.lane.b32.xlu0 %v1941, 4
        %v2113 = vpop.permute.xlu0 %2112
        %2114 = vrot.lane.b32.xlu0 %v1953, 4
        %v2115 = vpop.permute.xlu0 %2114
        %2116 = vrot.lane.b32.xlu0 %v1965, 4
        %v2117 = vpop.permute.xlu0 %2116
        %2118 = vrot.lane.b32.xlu0 %v1977, 4
        %v2119 = vpop.permute.xlu0 %2118
        %2120 = vrot.lane.b32.xlu0 %v1989, 4
        %v2121 = vpop.permute.xlu0 %2120
        %2122 = vrot.lane.b32.xlu0 %v2001, 4
        %v2123 = vpop.permute.xlu0 %2122
        %2124 = vrot.lane.b32.xlu0 %v2013, 4
        %v2125 = vpop.permute.xlu0 %2124
        %2126 = vrot.lane.b32.xlu0 %v2025, 4
        %v2127 = vpop.permute.xlu0 %2126
        %2128 = vrot.lane.b32.xlu0 %v2037, 4
        %v2129 = vpop.permute.xlu0 %2128
        %2130 = vrot.lane.b32.xlu0 %v2049, 4
        %v2131 = vpop.permute.xlu0 %2130
        %2132 = vrot.lane.b32.xlu0 %v2061, 4
        %v2133 = vpop.permute.xlu0 %2132
        %2134 = vrot.lane.b32.xlu0 %v2073, 4
        %v2135 = vpop.permute.xlu0 %2134
        %2136 = vrot.lane.b32.xlu0 %v2085, 4
        %v2137 = vpop.permute.xlu0 %2136
        %2138 = vrot.lane.b32.xlu0 %v2097, 4
        %v2139 = vpop.permute.xlu0 %2138
        %2140 = vrot.lane.b32.xlu0 %v2109, 4
        %v2141 = vpop.permute.xlu0 %2140
        %v2158 = vunpack.c.l.b16 %v1774
        %v2159 = vunpack.c.l.b16 %v1775
        %v2160 = vunpack.c.l.b16 %v1776
        %v2161 = vunpack.c.l.b16 %v1777
        %v2162 = vunpack.c.l.b16 %v1778
        %v2163 = vunpack.c.l.b16 %v1779
        %v2164 = vunpack.c.l.b16 %v1780
        %v2165 = vunpack.c.l.b16 %v1781
        %v2166 = vunpack.c.l.b16 %v1782
        %v2167 = vunpack.c.l.b16 %v1783
        %v2168 = vunpack.c.l.b16 %v1784
        %v2169 = vunpack.c.l.b16 %v1785
        %v2170 = vunpack.c.l.b16 %v1786
        %v2171 = vunpack.c.l.b16 %v1787
        %v2172 = vunpack.c.l.b16 %v1788
        %v2173 = vunpack.c.l.b16 %v1789
        %v2174 = vpack.c.b16 %v1823, %v2158
        %v2175 = vpack.c.b16 %v1825, %v2159
        %v2176 = vpack.c.b16 %v1827, %v2160
        %v2177 = vpack.c.b16 %v1829, %v2161
        %v2178 = vpack.c.b16 %v1831, %v2162
        %v2179 = vpack.c.b16 %v1833, %v2163
        %v2180 = vpack.c.b16 %v1835, %v2164
        %v2181 = vpack.c.b16 %v1837, %v2165
        %v2182 = vpack.c.b16 %v1839, %v2166
        %v2183 = vpack.c.b16 %v1841, %v2167
        %v2184 = vpack.c.b16 %v1843, %v2168
        %v2185 = vpack.c.b16 %v1845, %v2169
        %v2186 = vpack.c.b16 %v1847, %v2170
        %v2187 = vpack.c.b16 %v1849, %v2171
        %v2188 = vpack.c.b16 %v1851, %v2172
        %v2189 = vpack.c.b16 %v1853, %v2173
        %v2190 = vrot.slane %v2174, 1
        %v2191 = vrot.slane %v1902, 1
        %v2192 = vsel %vm1577, %v2190, %v2191
        %v2193 = vrot.slane %v2175, 1
        %v2194 = vrot.slane %v1903, 1
        %v2195 = vsel %vm1577, %v2193, %v2194
        %v2196 = vrot.slane %v2176, 1
        %v2197 = vrot.slane %v1904, 1
        %v2198 = vsel %vm1577, %v2196, %v2197
        %v2199 = vrot.slane %v2177, 1
        %v2200 = vrot.slane %v1905, 1
        %v2201 = vsel %vm1577, %v2199, %v2200
        %v2202 = vrot.slane %v2178, 1
        %v2203 = vrot.slane %v1906, 1
        %v2204 = vsel %vm1577, %v2202, %v2203
        %v2205 = vrot.slane %v2179, 1
        %v2206 = vrot.slane %v1907, 1
        %v2207 = vsel %vm1577, %v2205, %v2206
        %v2208 = vrot.slane %v2180, 1
        %v2209 = vrot.slane %v1908, 1
        %v2210 = vsel %vm1577, %v2208, %v2209
        %v2211 = vrot.slane %v2181, 1
        %v2212 = vrot.slane %v1909, 1
        %v2213 = vsel %vm1577, %v2211, %v2212
        %v2214 = vrot.slane %v2182, 1
        %v2215 = vrot.slane %v1910, 1
        %v2216 = vsel %vm1577, %v2214, %v2215
        %v2217 = vrot.slane %v2183, 1
        %v2218 = vrot.slane %v1911, 1
        %v2219 = vsel %vm1577, %v2217, %v2218
        %v2220 = vrot.slane %v2184, 1
        %v2221 = vrot.slane %v1912, 1
        %v2222 = vsel %vm1577, %v2220, %v2221
        %v2223 = vrot.slane %v2185, 1
        %v2224 = vrot.slane %v1913, 1
        %v2225 = vsel %vm1577, %v2223, %v2224
        %v2226 = vrot.slane %v2186, 1
        %v2227 = vrot.slane %v1914, 1
        %v2228 = vsel %vm1577, %v2226, %v2227
        %v2229 = vrot.slane %v2187, 1
        %v2230 = vrot.slane %v1915, 1
        %v2231 = vsel %vm1577, %v2229, %v2230
        %v2232 = vrot.slane %v2188, 1
        %v2233 = vrot.slane %v1916, 1
        %v2234 = vsel %vm1577, %v2232, %v2233
        %v2235 = vrot.slane %v2189, 1
        %v2236 = vrot.slane %v1917, 1
        %v2237 = vsel %vm1577, %v2235, %v2236
        %2238 = vrot.lane.b32.xlu0 %v2192, 8
        %v2239 = vpop.permute.xlu0 %2238
        %2240 = vrot.lane.b32.xlu0 %v2195, 8
        %v2241 = vpop.permute.xlu0 %2240
        %2242 = vrot.lane.b32.xlu0 %v2198, 8
        %v2243 = vpop.permute.xlu0 %2242
        %2244 = vrot.lane.b32.xlu0 %v2201, 8
        %v2245 = vpop.permute.xlu0 %2244
        %2246 = vrot.lane.b32.xlu0 %v2204, 8
        %v2247 = vpop.permute.xlu0 %2246
        %2248 = vrot.lane.b32.xlu0 %v2207, 8
        %v2249 = vpop.permute.xlu0 %2248
        %2250 = vrot.lane.b32.xlu0 %v2210, 8
        %v2251 = vpop.permute.xlu0 %2250
        %2252 = vrot.lane.b32.xlu0 %v2213, 8
        %v2253 = vpop.permute.xlu0 %2252
        %2254 = vrot.lane.b32.xlu0 %v2216, 8
        %v2255 = vpop.permute.xlu0 %2254
        %2256 = vrot.lane.b32.xlu0 %v2219, 8
        %v2257 = vpop.permute.xlu0 %2256
        %2258 = vrot.lane.b32.xlu0 %v2222, 8
        %v2259 = vpop.permute.xlu0 %2258
        %2260 = vrot.lane.b32.xlu0 %v2225, 8
        %v2261 = vpop.permute.xlu0 %2260
        %2262 = vrot.lane.b32.xlu0 %v2228, 8
        %v2263 = vpop.permute.xlu0 %2262
        %2264 = vrot.lane.b32.xlu0 %v2231, 8
        %v2265 = vpop.permute.xlu0 %2264
        %2266 = vrot.lane.b32.xlu0 %v2234, 8
        %v2267 = vpop.permute.xlu0 %2266
        %2268 = vrot.lane.b32.xlu0 %v2237, 8
        %v2269 = vpop.permute.xlu0 %2268
        %v2271 = vsel %vm1658, %v1854, %v2111
        %v2273 = vsel %vm1658, %v1855, %v2113
        %v2275 = vsel %vm1658, %v1856, %v2115
        %v2277 = vsel %vm1658, %v1857, %v2117
        %v2279 = vsel %vm1658, %v1858, %v2119
        %v2281 = vsel %vm1658, %v1859, %v2121
        %v2283 = vsel %vm1658, %v1860, %v2123
        %v2285 = vsel %vm1658, %v1861, %v2125
        %v2287 = vsel %vm1658, %v1862, %v2127
        %v2289 = vsel %vm1658, %v1863, %v2129
        %v2291 = vsel %vm1658, %v1864, %v2131
        %v2293 = vsel %vm1658, %v1865, %v2133
        %v2295 = vsel %vm1658, %v1866, %v2135
        %v2297 = vsel %vm1658, %v1867, %v2137
        %v2299 = vsel %vm1658, %v1868, %v2139
        %v2301 = vsel %vm1658, %v1869, %v2141
        %v2303 = vsel %vm1691, %v2271, %v2239
        %v2305 = vsel %vm1691, %v2273, %v2241
        %v2307 = vsel %vm1691, %v2275, %v2243
        %v2309 = vsel %vm1691, %v2277, %v2245
        %v2311 = vsel %vm1691, %v2279, %v2247
        %v2313 = vsel %vm1691, %v2281, %v2249
        %v2315 = vsel %vm1691, %v2283, %v2251
        %v2317 = vsel %vm1691, %v2285, %v2253
        %v2319 = vsel %vm1691, %v2287, %v2255
        %v2321 = vsel %vm1691, %v2289, %v2257
        %v2323 = vsel %vm1691, %v2291, %v2259
        %v2325 = vsel %vm1691, %v2293, %v2261
        %v2327 = vsel %vm1691, %v2295, %v2263
        %v2329 = vsel %vm1691, %v2297, %v2265
        %v2331 = vsel %vm1691, %v2299, %v2267
        %v2333 = vsel %vm1691, %v2301, %v2269
        %s2334 = scalar_lea.vmem [#allocation9], 8
        %v2335 = vld [vmem:[%s2334] sm:$0xf]
        %v2336 = vld [vmem:[%s2334 + $0x4] sm:$0x3]
        %v2339 = vunpack.c.l.b16 %v2335
        %v2340 = vunpack.c.l.b16 %v2336
        %v2341 = vpack.c.b16 %v2340, %v2339
        %vm2342 = vcmask 97280
        %v2343 = vsel %vm2342, %v2303, 0
        %v2345 = vsel %vm2342, %v2305, 0
        %v2347 = vsel %vm2342, %v2307, 0
        %v2349 = vsel %vm2342, %v2309, 0
        %v2351 = vsel %vm2342, %v2311, 0
        %v2353 = vsel %vm2342, %v2313, 0
        %v2355 = vsel %vm2342, %v2315, 0
        %v2357 = vsel %vm2342, %v2317, 0
        %v2359 = vsel %vm2342, %v2319, 0
        %v2361 = vsel %vm2342, %v2321, 0
        %v2363 = vsel %vm2342, %v2323, 0
        %v2365 = vsel %vm2342, %v2325, 0
        %v2367 = vsel %vm2342, %v2327, 0
        %v2369 = vsel %vm2342, %v2329, 0
        %v2371 = vsel %vm2342, %v2331, 0
        %v2373 = vsel %vm2342, %v2333, 0
        %vm2375 = vcmask 1045504
        %v2377 = vsel %vm2375, %v2341, 0
        %2379 = vmatprep.subr.bf16.mxu0 0
        %2380 = vmatpush1.bf16.msra.mxu0 %v2377
        %2381 = vmatprep.subr.bf16.mxu0 0
        %2382 = vmatpush1.bf16.msra.mxu0 0
        %2383 = vmatprep.subr.bf16.mxu0 0
        %2384 = vmatpush1.bf16.msra.mxu0 0
        %2385 = vmatprep.subr.bf16.mxu0 0
        %2386 = vmatpush1.bf16.msra.mxu0 0
        %2387 = vmatprep.subr.bf16.mxu0 0
        %2388 = vmatpush1.bf16.msra.mxu0 0
        %2389 = vmatprep.subr.bf16.mxu0 0
        %2390 = vmatpush1.bf16.msra.mxu0 0
        %2391 = vmatprep.subr.bf16.mxu0 0
        %2392 = vmatpush1.bf16.msra.mxu0 0
        %2393 = vmatprep.subr.bf16.mxu0 0
        %2394 = vmatpush1.bf16.msra.mxu0 0
        %2395 = vmatprep.subr.bf16.mxu0 0
        %2396 = vmatpush1.bf16.msra.mxu0 0
        %2397 = vmatprep.subr.bf16.mxu0 0
        %2398 = vmatpush1.bf16.msra.mxu0 0
        %2399 = vmatprep.subr.bf16.mxu0 0
        %2400 = vmatpush1.bf16.msra.mxu0 0
        %2401 = vmatprep.subr.bf16.mxu0 0
        %2402 = vmatpush1.bf16.msra.mxu0 0
        %2403 = vmatprep.subr.bf16.mxu0 0
        %2404 = vmatpush1.bf16.msra.mxu0 0
        %2405 = vmatprep.subr.bf16.mxu0 0
        %2406 = vmatpush1.bf16.msra.mxu0 0
        %2407 = vmatprep.subr.bf16.mxu0 0
        %2408 = vmatpush1.bf16.msra.mxu0 0
        %2409 = vmatprep.subr.bf16.mxu0 0
        %2410 = vmatpush1.bf16.msra.mxu0 0
        %2411 = vmatprep.mubr.bf16.mxu0 0
        %2412 = vmatmul.mubr.bf16.gmra.mrb[0].mxu0 %v2343
        %v2413 = vpop.f32.mrb[0].mxu0
        %v2414 = vadd.f32 0.0, %v2413
        %v2415 = vpop.f32.mrb[0].mxu0
        %v2416 = vpop.f32.mrb[0].mxu0
        %v2417 = vadd.f32 0.0, %v2416
        %v2418 = vpop.f32.mrb[0].mxu0
        %2419 = vmatprep.mubr.bf16.mxu0 0
        %2420 = vmatmul.mubr.bf16.gmra.mrb[0].mxu0 %v2345
        %v2421 = vpop.f32.mrb[0].mxu0
        %v2422 = vadd.f32 0.0, %v2421
        %v2423 = vpop.f32.mrb[0].mxu0
        %v2424 = vpop.f32.mrb[0].mxu0
        %v2425 = vadd.f32 0.0, %v2424
        %v2426 = vpop.f32.mrb[0].mxu0
        %2427 = vmatprep.mubr.bf16.mxu0 0
        %2428 = vmatmul.mubr.bf16.gmra.mrb[0].mxu0 %v2347
        %v2429 = vpop.f32.mrb[0].mxu0
        %v2430 = vadd.f32 0.0, %v2429
        %v2431 = vpop.f32.mrb[0].mxu0
        %v2432 = vpop.f32.mrb[0].mxu0
        %v2433 = vadd.f32 0.0, %v2432
        %v2434 = vpop.f32.mrb[0].mxu0
        %2435 = vmatprep.mubr.bf16.mxu0 0
        %2436 = vmatmul.mubr.bf16.gmra.mrb[0].mxu0 %v2349
        %v2437 = vpop.f32.mrb[0].mxu0
        %v2438 = vadd.f32 0.0, %v2437
        %v2439 = vpop.f32.mrb[0].mxu0
        %v2440 = vpop.f32.mrb[0].mxu0
        %v2441 = vadd.f32 0.0, %v2440
        %v2442 = vpop.f32.mrb[0].mxu0
        %2443 = vmatprep.mubr.bf16.mxu0 0
        %2444 = vmatmul.mubr.bf16.gmra.mrb[0].mxu0 %v2351
        %v2445 = vpop.f32.mrb[0].mxu0
        %v2446 = vadd.f32 0.0, %v2445
        %v2447 = vpop.f32.mrb[0].mxu0
        %v2448 = vpop.f32.mrb[0].mxu0
        %v2449 = vadd.f32 0.0, %v2448
        %v2450 = vpop.f32.mrb[0].mxu0
        %2451 = vmatprep.mubr.bf16.mxu0 0
        %2452 = vmatmul.mubr.bf16.gmra.mrb[0].mxu0 %v2353
        %v2453 = vpop.f32.mrb[0].mxu0
        %v2454 = vadd.f32 0.0, %v2453
        %v2455 = vpop.f32.mrb[0].mxu0
        %v2456 = vpop.f32.mrb[0].mxu0
        %v2457 = vadd.f32 0.0, %v2456
        %v2458 = vpop.f32.mrb[0].mxu0
        %2459 = vmatprep.mubr.bf16.mxu0 0
        %2460 = vmatmul.mubr.bf16.gmra.mrb[0].mxu0 %v2355
        %v2461 = vpop.f32.mrb[0].mxu0
        %v2462 = vadd.f32 0.0, %v2461
        %v2463 = vpop.f32.mrb[0].mxu0
        %v2464 = vpop.f32.mrb[0].mxu0
        %v2465 = vadd.f32 0.0, %v2464
        %v2466 = vpop.f32.mrb[0].mxu0
        %2467 = vmatprep.mubr.bf16.mxu0 0
        %2468 = vmatmul.mubr.bf16.gmra.mrb[0].mxu0 %v2357
        %v2469 = vpop.f32.mrb[0].mxu0
        %v2470 = vadd.f32 0.0, %v2469
        %v2471 = vpop.f32.mrb[0].mxu0
        %v2472 = vpop.f32.mrb[0].mxu0
        %v2473 = vadd.f32 0.0, %v2472
        %v2474 = vpop.f32.mrb[0].mxu0
        %2475 = vmatprep.mubr.bf16.mxu0 0
        %2476 = vmatmul.mubr.bf16.gmra.mrb[0].mxu0 %v2359
        %v2477 = vpop.f32.mrb[0].mxu0
        %v2478 = vadd.f32 0.0, %v2477
        %v2479 = vpop.f32.mrb[0].mxu0
        %v2480 = vpop.f32.mrb[0].mxu0
        %v2481 = vadd.f32 0.0, %v2480
        %v2482 = vpop.f32.mrb[0].mxu0
        %2483 = vmatprep.mubr.bf16.mxu0 0
        %2484 = vmatmul.mubr.bf16.gmra.mrb[0].mxu0 %v2361
        %v2485 = vpop.f32.mrb[0].mxu0
        %v2486 = vadd.f32 0.0, %v2485
        %v2487 = vpop.f32.mrb[0].mxu0
        %v2488 = vpop.f32.mrb[0].mxu0
        %v2489 = vadd.f32 0.0, %v2488
        %v2490 = vpop.f32.mrb[0].mxu0
        %2491 = vmatprep.mubr.bf16.mxu0 0
        %2492 = vmatmul.mubr.bf16.gmra.mrb[0].mxu0 %v2363
        %v2493 = vpop.f32.mrb[0].mxu0
        %v2494 = vadd.f32 0.0, %v2493
        %v2495 = vpop.f32.mrb[0].mxu0
        %v2496 = vpop.f32.mrb[0].mxu0
        %v2497 = vadd.f32 0.0, %v2496
        %v2498 = vpop.f32.mrb[0].mxu0
        %2499 = vmatprep.mubr.bf16.mxu0 0
        %2500 = vmatmul.mubr.bf16.gmra.mrb[0].mxu0 %v2365
        %v2501 = vpop.f32.mrb[0].mxu0
        %v2502 = vadd.f32 0.0, %v2501
        %v2503 = vpop.f32.mrb[0].mxu0
        %v2504 = vpop.f32.mrb[0].mxu0
        %v2505 = vadd.f32 0.0, %v2504
        %v2506 = vpop.f32.mrb[0].mxu0
        %2507 = vmatprep.mubr.bf16.mxu0 0
        %2508 = vmatmul.mubr.bf16.gmra.mrb[0].mxu0 %v2367
        %v2509 = vpop.f32.mrb[0].mxu0
        %v2510 = vadd.f32 0.0, %v2509
        %v2511 = vpop.f32.mrb[0].mxu0
        %v2512 = vpop.f32.mrb[0].mxu0
        %v2513 = vadd.f32 0.0, %v2512
        %v2514 = vpop.f32.mrb[0].mxu0
        %2515 = vmatprep.mubr.bf16.mxu0 0
        %2516 = vmatmul.mubr.bf16.gmra.mrb[0].mxu0 %v2369
        %v2517 = vpop.f32.mrb[0].mxu0
        %v2518 = vadd.f32 0.0, %v2517
        %v2519 = vpop.f32.mrb[0].mxu0
        %v2520 = vpop.f32.mrb[0].mxu0
        %v2521 = vadd.f32 0.0, %v2520
        %v2522 = vpop.f32.mrb[0].mxu0
        %2523 = vmatprep.mubr.bf16.mxu0 0
        %2524 = vmatmul.mubr.bf16.gmra.mrb[0].mxu0 %v2371
        %v2525 = vpop.f32.mrb[0].mxu0
        %v2526 = vadd.f32 0.0, %v2525
        %v2527 = vpop.f32.mrb[0].mxu0
        %v2528 = vpop.f32.mrb[0].mxu0
        %v2529 = vadd.f32 0.0, %v2528
        %v2530 = vpop.f32.mrb[0].mxu0
        %2531 = vmatprep.mubr.bf16.mxu0 0
        %2532 = vmatmul.mubr.bf16.gmra.mrb[0].mxu0 %v2373
        %v2533 = vpop.f32.mrb[0].mxu0
        %v2534 = vadd.f32 0.0, %v2533
        %v2535 = vpop.f32.mrb[0].mxu0
        %v2536 = vpop.f32.mrb[0].mxu0
        %v2537 = vadd.f32 0.0, %v2536
        %v2538 = vpop.f32.mrb[0].mxu0
        %2539 = vdwg.mxu0
        %v2542 = vunpack.c.l.b16 %v1724
        %v2543 = vunpack.c.l.b16 %v1725
        %v2544 = vpack.c.b16 %v2543, %v2542
        %v2545 = vsel %vm2342, %v1693, 0
        %v2547 = vsel %vm2342, %v1695, 0
        %v2549 = vsel %vm2342, %v1697, 0
        %v2551 = vsel %vm2342, %v1699, 0
        %v2553 = vsel %vm2342, %v1701, 0
        %v2555 = vsel %vm2342, %v1703, 0
        %v2557 = vsel %vm2342, %v1705, 0
        %v2559 = vsel %vm2342, %v1707, 0
        %v2561 = vsel %vm2342, %v1709, 0
        %v2563 = vsel %vm2342, %v1711, 0
        %v2565 = vsel %vm2342, %v1713, 0
        %v2567 = vsel %vm2342, %v1715, 0
        %v2569 = vsel %vm2342, %v1717, 0
        %v2571 = vsel %vm2342, %v1719, 0
        %v2573 = vsel %vm2342, %v1721, 0
        %v2575 = vsel %vm2342, %v1723, 0
        %v2578 = vsel %vm2375, %v2544, 0
        %2580 = vmatprep.subr.bf16.mxu0 0
        %2581 = vmatpush1.bf16.msra.mxu0 %v2578
        %2582 = vmatprep.subr.bf16.mxu0 0
        %2583 = vmatpush1.bf16.msra.mxu0 0
        %2584 = vmatprep.subr.bf16.mxu0 0
        %2585 = vmatpush1.bf16.msra.mxu0 0
        %2586 = vmatprep.subr.bf16.mxu0 0
        %2587 = vmatpush1.bf16.msra.mxu0 0
        %2588 = vmatprep.subr.bf16.mxu0 0
        %2589 = vmatpush1.bf16.msra.mxu0 0
        %2590 = vmatprep.subr.bf16.mxu0 0
        %2591 = vmatpush1.bf16.msra.mxu0 0
        %2592 = vmatprep.subr.bf16.mxu0 0
        %2593 = vmatpush1.bf16.msra.mxu0 0
        %2594 = vmatprep.subr.bf16.mxu0 0
        %2595 = vmatpush1.bf16.msra.mxu0 0
        %2596 = vmatprep.subr.bf16.mxu0 0
        %2597 = vmatpush1.bf16.msra.mxu0 0
        %2598 = vmatprep.subr.bf16.mxu0 0
        %2599 = vmatpush1.bf16.msra.mxu0 0
        %2600 = vmatprep.subr.bf16.mxu0 0
        %2601 = vmatpush1.bf16.msra.mxu0 0
        %2602 = vmatprep.subr.bf16.mxu0 0
        %2603 = vmatpush1.bf16.msra.mxu0 0
        %2604 = vmatprep.subr.bf16.mxu0 0
        %2605 = vmatpush1.bf16.msra.mxu0 0
        %2606 = vmatprep.subr.bf16.mxu0 0
        %2607 = vmatpush1.bf16.msra.mxu0 0
        %2608 = vmatprep.subr.bf16.mxu0 0
        %2609 = vmatpush1.bf16.msra.mxu0 0
        %2610 = vmatprep.subr.bf16.mxu0 0
        %2611 = vmatpush1.bf16.msra.mxu0 0
        %2612 = vmatprep.mubr.bf16.mxu0 0
        %2613 = vmatmul.mubr.bf16.gmra.mrb[0].mxu0 %v2545
        %v2614 = vpop.f32.mrb[0].mxu0
        %v2615 = vadd.f32 %v2414, %v2614
        %v2616 = vpop.f32.mrb[0].mxu0
        %v2617 = vpop.f32.mrb[0].mxu0
        %v2618 = vadd.f32 %v2417, %v2617
        %v2619 = vpop.f32.mrb[0].mxu0
        %2620 = vmatprep.mubr.bf16.mxu0 0
        %2621 = vmatmul.mubr.bf16.gmra.mrb[0].mxu0 %v2547
        %v2622 = vpop.f32.mrb[0].mxu0
        %v2623 = vadd.f32 %v2422, %v2622
        %v2624 = vpop.f32.mrb[0].mxu0
        %v2625 = vpop.f32.mrb[0].mxu0
        %v2626 = vadd.f32 %v2425, %v2625
        %v2627 = vpop.f32.mrb[0].mxu0
        %2628 = vmatprep.mubr.bf16.mxu0 0
        %2629 = vmatmul.mubr.bf16.gmra.mrb[0].mxu0 %v2549
        %v2630 = vpop.f32.mrb[0].mxu0
        %v2631 = vadd.f32 %v2430, %v2630
        %v2632 = vpop.f32.mrb[0].mxu0
        %v2633 = vpop.f32.mrb[0].mxu0
        %v2634 = vadd.f32 %v2433, %v2633
        %v2635 = vpop.f32.mrb[0].mxu0
        %2636 = vmatprep.mubr.bf16.mxu0 0
        %2637 = vmatmul.mubr.bf16.gmra.mrb[0].mxu0 %v2551
        %v2638 = vpop.f32.mrb[0].mxu0
        %v2639 = vadd.f32 %v2438, %v2638
        %v2640 = vpop.f32.mrb[0].mxu0
        %v2641 = vpop.f32.mrb[0].mxu0
        %v2642 = vadd.f32 %v2441, %v2641
        %v2643 = vpop.f32.mrb[0].mxu0
        %2644 = vmatprep.mubr.bf16.mxu0 0
        %2645 = vmatmul.mubr.bf16.gmra.mrb[0].mxu0 %v2553
        %v2646 = vpop.f32.mrb[0].mxu0
        %v2647 = vadd.f32 %v2446, %v2646
        %v2648 = vpop.f32.mrb[0].mxu0
        %v2649 = vpop.f32.mrb[0].mxu0
        %v2650 = vadd.f32 %v2449, %v2649
        %v2651 = vpop.f32.mrb[0].mxu0
        %2652 = vmatprep.mubr.bf16.mxu0 0
        %2653 = vmatmul.mubr.bf16.gmra.mrb[0].mxu0 %v2555
        %v2654 = vpop.f32.mrb[0].mxu0
        %v2655 = vadd.f32 %v2454, %v2654
        %v2656 = vpop.f32.mrb[0].mxu0
        %v2657 = vpop.f32.mrb[0].mxu0
        %v2658 = vadd.f32 %v2457, %v2657
        %v2659 = vpop.f32.mrb[0].mxu0
        %2660 = vmatprep.mubr.bf16.mxu0 0
        %2661 = vmatmul.mubr.bf16.gmra.mrb[0].mxu0 %v2557
        %v2662 = vpop.f32.mrb[0].mxu0
        %v2663 = vadd.f32 %v2462, %v2662
        %v2664 = vpop.f32.mrb[0].mxu0
        %v2665 = vpop.f32.mrb[0].mxu0
        %v2666 = vadd.f32 %v2465, %v2665
        %v2667 = vpop.f32.mrb[0].mxu0
        %2668 = vmatprep.mubr.bf16.mxu0 0
        %2669 = vmatmul.mubr.bf16.gmra.mrb[0].mxu0 %v2559
        %v2670 = vpop.f32.mrb[0].mxu0
        %v2671 = vadd.f32 %v2470, %v2670
        %v2672 = vpop.f32.mrb[0].mxu0
        %v2673 = vpop.f32.mrb[0].mxu0
        %v2674 = vadd.f32 %v2473, %v2673
        %v2675 = vpop.f32.mrb[0].mxu0
        %2676 = vmatprep.mubr.bf16.mxu0 0
        %2677 = vmatmul.mubr.bf16.gmra.mrb[0].mxu0 %v2561
        %v2678 = vpop.f32.mrb[0].mxu0
        %v2679 = vadd.f32 %v2478, %v2678
        %v2680 = vpop.f32.mrb[0].mxu0
        %v2681 = vpop.f32.mrb[0].mxu0
        %v2682 = vadd.f32 %v2481, %v2681
        %v2683 = vpop.f32.mrb[0].mxu0
        %2684 = vmatprep.mubr.bf16.mxu0 0
        %2685 = vmatmul.mubr.bf16.gmra.mrb[0].mxu0 %v2563
        %v2686 = vpop.f32.mrb[0].mxu0
        %v2687 = vadd.f32 %v2486, %v2686
        %v2688 = vpop.f32.mrb[0].mxu0
        %v2689 = vpop.f32.mrb[0].mxu0
        %v2690 = vadd.f32 %v2489, %v2689
        %v2691 = vpop.f32.mrb[0].mxu0
        %2692 = vmatprep.mubr.bf16.mxu0 0
        %2693 = vmatmul.mubr.bf16.gmra.mrb[0].mxu0 %v2565
        %v2694 = vpop.f32.mrb[0].mxu0
        %v2695 = vadd.f32 %v2494, %v2694
        %v2696 = vpop.f32.mrb[0].mxu0
        %v2697 = vpop.f32.mrb[0].mxu0
        %v2698 = vadd.f32 %v2497, %v2697
        %v2699 = vpop.f32.mrb[0].mxu0
        %2700 = vmatprep.mubr.bf16.mxu0 0
        %2701 = vmatmul.mubr.bf16.gmra.mrb[0].mxu0 %v2567
        %v2702 = vpop.f32.mrb[0].mxu0
        %v2703 = vadd.f32 %v2502, %v2702
        %v2704 = vpop.f32.mrb[0].mxu0
        %v2705 = vpop.f32.mrb[0].mxu0
        %v2706 = vadd.f32 %v2505, %v2705
        %v2707 = vpop.f32.mrb[0].mxu0
        %2708 = vmatprep.mubr.bf16.mxu0 0
        %2709 = vmatmul.mubr.bf16.gmra.mrb[0].mxu0 %v2569
        %v2710 = vpop.f32.mrb[0].mxu0
        %v2711 = vadd.f32 %v2510, %v2710
        %v2712 = vpop.f32.mrb[0].mxu0
        %v2713 = vpop.f32.mrb[0].mxu0
        %v2714 = vadd.f32 %v2513, %v2713
        %v2715 = vpop.f32.mrb[0].mxu0
        %2716 = vmatprep.mubr.bf16.mxu0 0
        %2717 = vmatmul.mubr.bf16.gmra.mrb[0].mxu0 %v2571
        %v2718 = vpop.f32.mrb[0].mxu0
        %v2719 = vadd.f32 %v2518, %v2718
        %v2720 = vpop.f32.mrb[0].mxu0
        %v2721 = vpop.f32.mrb[0].mxu0
        %v2722 = vadd.f32 %v2521, %v2721
        %v2723 = vpop.f32.mrb[0].mxu0
        %2724 = vmatprep.mubr.bf16.mxu0 0
        %2725 = vmatmul.mubr.bf16.gmra.mrb[0].mxu0 %v2573
        %v2726 = vpop.f32.mrb[0].mxu0
        %v2727 = vadd.f32 %v2526, %v2726
        %v2728 = vpop.f32.mrb[0].mxu0
        %v2729 = vpop.f32.mrb[0].mxu0
        %v2730 = vadd.f32 %v2529, %v2729
        %v2731 = vpop.f32.mrb[0].mxu0
        %2732 = vmatprep.mubr.bf16.mxu0 0
        %2733 = vmatmul.mubr.bf16.gmra.mrb[0].mxu0 %v2575
        %v2734 = vpop.f32.mrb[0].mxu0
        %v2735 = vadd.f32 %v2534, %v2734
        %v2736 = vpop.f32.mrb[0].mxu0
        %v2737 = vpop.f32.mrb[0].mxu0
        %v2738 = vadd.f32 %v2537, %v2737
        %v2739 = vpop.f32.mrb[0].mxu0
        %2740 = vdwg.mxu0
        %s2741 = scalar_lea.vmem [#allocation2], 24
        %v2742 = vld [vmem:[%s2741] sm:$0xf]
        %v2743 = vld [vmem:[%s2741 + $0x4] sm:$0xf]
        %v2744 = vld [vmem:[%s2741 + $0xc] sm:$0xf]
        %v2745 = vld [vmem:[%s2741 + $0x10] sm:$0xf]
        %v2746 = vld [vmem:[%s2741 + $0x18] sm:$0xf]
        %v2747 = vld [vmem:[%s2741 + $0x1c] sm:$0xf]
        %v2748 = vld [vmem:[%s2741 + $0x24] sm:$0xf]
        %v2749 = vld [vmem:[%s2741 + $0x28] sm:$0xf]
        %v2750 = vld [vmem:[%s2741 + $0x30] sm:$0xf]
        %v2751 = vld [vmem:[%s2741 + $0x34] sm:$0xf]
        %v2752 = vld [vmem:[%s2741 + $0x3c] sm:$0xf]
        %v2753 = vld [vmem:[%s2741 + $0x40] sm:$0xf]
        %v2754 = vld [vmem:[%s2741 + $0x48] sm:$0xf]
        %v2755 = vld [vmem:[%s2741 + $0x4c] sm:$0xf]
        %v2756 = vld [vmem:[%s2741 + $0x54] sm:$0xf]
        %v2757 = vld [vmem:[%s2741 + $0x58] sm:$0xf]
        %v2758 = vld [vmem:[%s2741 + $0x60] sm:$0xf]
        %v2759 = vld [vmem:[%s2741 + $0x64] sm:$0xf]
        %v2760 = vld [vmem:[%s2741 + $0x6c] sm:$0xf]
        %v2761 = vld [vmem:[%s2741 + $0x70] sm:$0xf]
        %v2762 = vld [vmem:[%s2741 + $0x78] sm:$0xf]
        %v2763 = vld [vmem:[%s2741 + $0x7c] sm:$0xf]
        %v2764 = vld [vmem:[%s2741 + $0x84] sm:$0xf]
        %v2765 = vld [vmem:[%s2741 + $0x88] sm:$0xf]
        %v2766 = vld [vmem:[%s2741 + $0x90] sm:$0xf]
        %v2767 = vld [vmem:[%s2741 + $0x94] sm:$0xf]
        %v2768 = vld [vmem:[%s2741 + $0x9c] sm:$0xf]
        %v2769 = vld [vmem:[%s2741 + $0xa0] sm:$0xf]
        %v2770 = vld [vmem:[%s2741 + $0xa8] sm:$0xf]
        %v2771 = vld [vmem:[%s2741 + $0xac] sm:$0xf]
        %v2772 = vld [vmem:[%s2741 + $0xb4] sm:$0xf]
        %v2773 = vld [vmem:[%s2741 + $0xb8] sm:$0xf]
        %v2774 = vld [vmem:[%s2741 + $0x8] sm:$0x1]
        %v2775 = vld [vmem:[%s2741 + $0x14] sm:$0x1]
        %v2776 = vld [vmem:[%s2741 + $0x20] sm:$0x1]
        %v2777 = vld [vmem:[%s2741 + $0x2c] sm:$0x1]
        %v2778 = vld [vmem:[%s2741 + $0x38] sm:$0x1]
        %v2779 = vld [vmem:[%s2741 + $0x44] sm:$0x1]
        %v2780 = vld [vmem:[%s2741 + $0x50] sm:$0x1]
        %v2781 = vld [vmem:[%s2741 + $0x5c] sm:$0x1]
        %v2782 = vld [vmem:[%s2741 + $0x68] sm:$0x1]
        %v2783 = vld [vmem:[%s2741 + $0x74] sm:$0x1]
        %v2784 = vld [vmem:[%s2741 + $0x80] sm:$0x1]
        %v2785 = vld [vmem:[%s2741 + $0x8c] sm:$0x1]
        %v2786 = vld [vmem:[%s2741 + $0x98] sm:$0x1]
        %v2787 = vld [vmem:[%s2741 + $0xa4] sm:$0x1]
        %v2788 = vld [vmem:[%s2741 + $0xb0] sm:$0x1]
        %v2789 = vld [vmem:[%s2741 + $0xbc] sm:$0x1]
        %v2790 = vld [vmem:[%s2741] sm:$0xe]
        %v2791 = vld [vmem:[%s2741 + $0xc] sm:$0xe]
        %v2792 = vld [vmem:[%s2741 + $0x18] sm:$0xe]
        %v2793 = vld [vmem:[%s2741 + $0x24] sm:$0xe]
        %v2794 = vld [vmem:[%s2741 + $0x30] sm:$0xe]
        %v2795 = vld [vmem:[%s2741 + $0x3c] sm:$0xe]
        %v2796 = vld [vmem:[%s2741 + $0x48] sm:$0xe]
        %v2797 = vld [vmem:[%s2741 + $0x54] sm:$0xe]
        %v2798 = vld [vmem:[%s2741 + $0x60] sm:$0xe]
        %v2799 = vld [vmem:[%s2741 + $0x6c] sm:$0xe]
        %v2800 = vld [vmem:[%s2741 + $0x78] sm:$0xe]
        %v2801 = vld [vmem:[%s2741 + $0x84] sm:$0xe]
        %v2802 = vld [vmem:[%s2741 + $0x90] sm:$0xe]
        %v2803 = vld [vmem:[%s2741 + $0x9c] sm:$0xe]
        %v2804 = vld [vmem:[%s2741 + $0xa8] sm:$0xe]
        %v2805 = vld [vmem:[%s2741 + $0xb4] sm:$0xe]
        %v2838 = vunpack.c.l.b16 %v2742
        %v2839 = vunpack.c.l.b16 %v2743
        %v2840 = vunpack.c.l.b16 %v2744
        %v2841 = vunpack.c.l.b16 %v2745
        %v2842 = vunpack.c.l.b16 %v2746
        %v2843 = vunpack.c.l.b16 %v2747
        %v2844 = vunpack.c.l.b16 %v2748
        %v2845 = vunpack.c.l.b16 %v2749
        %v2846 = vunpack.c.l.b16 %v2750
        %v2847 = vunpack.c.l.b16 %v2751
        %v2848 = vunpack.c.l.b16 %v2752
        %v2849 = vunpack.c.l.b16 %v2753
        %v2850 = vunpack.c.l.b16 %v2754
        %v2851 = vunpack.c.l.b16 %v2755
        %v2852 = vunpack.c.l.b16 %v2756
        %v2853 = vunpack.c.l.b16 %v2757
        %v2854 = vunpack.c.l.b16 %v2758
        %v2855 = vunpack.c.l.b16 %v2759
        %v2856 = vunpack.c.l.b16 %v2760
        %v2857 = vunpack.c.l.b16 %v2761
        %v2858 = vunpack.c.l.b16 %v2762
        %v2859 = vunpack.c.l.b16 %v2763
        %v2860 = vunpack.c.l.b16 %v2764
        %v2861 = vunpack.c.l.b16 %v2765
        %v2862 = vunpack.c.l.b16 %v2766
        %v2863 = vunpack.c.l.b16 %v2767
        %v2864 = vunpack.c.l.b16 %v2768
        %v2865 = vunpack.c.l.b16 %v2769
        %v2866 = vunpack.c.l.b16 %v2770
        %v2867 = vunpack.c.l.b16 %v2771
        %v2868 = vunpack.c.l.b16 %v2772
        %v2869 = vunpack.c.l.b16 %v2773
        %v2870 = vpack.c.b16 %v2839, %v2838
        %v2871 = vpack.c.b16 %v2841, %v2840
        %v2872 = vpack.c.b16 %v2843, %v2842
        %v2873 = vpack.c.b16 %v2845, %v2844
        %v2874 = vpack.c.b16 %v2847, %v2846
        %v2875 = vpack.c.b16 %v2849, %v2848
        %v2876 = vpack.c.b16 %v2851, %v2850
        %v2877 = vpack.c.b16 %v2853, %v2852
        %v2878 = vpack.c.b16 %v2855, %v2854
        %v2879 = vpack.c.b16 %v2857, %v2856
        %v2880 = vpack.c.b16 %v2859, %v2858
        %v2881 = vpack.c.b16 %v2861, %v2860
        %v2882 = vpack.c.b16 %v2863, %v2862
        %v2883 = vpack.c.b16 %v2865, %v2864
        %v2884 = vpack.c.b16 %v2867, %v2866
        %v2885 = vpack.c.b16 %v2869, %v2868
        %v2902 = vunpack.c.l.b16 %v2774
        %v2903 = vunpack.c.l.b16 %v2775
        %v2904 = vunpack.c.l.b16 %v2776
        %v2905 = vunpack.c.l.b16 %v2777
        %v2906 = vunpack.c.l.b16 %v2778
        %v2907 = vunpack.c.l.b16 %v2779
        %v2908 = vunpack.c.l.b16 %v2780
        %v2909 = vunpack.c.l.b16 %v2781
        %v2910 = vunpack.c.l.b16 %v2782
        %v2911 = vunpack.c.l.b16 %v2783
        %v2912 = vunpack.c.l.b16 %v2784
        %v2913 = vunpack.c.l.b16 %v2785
        %v2914 = vunpack.c.l.b16 %v2786
        %v2915 = vunpack.c.l.b16 %v2787
        %v2916 = vunpack.c.l.b16 %v2788
        %v2917 = vunpack.c.l.b16 %v2789
        %v2918 = vpack.c.b16 %v2902, %v2902
        %v2919 = vpack.c.b16 %v2903, %v2903
        %v2920 = vpack.c.b16 %v2904, %v2904
        %v2921 = vpack.c.b16 %v2905, %v2905
        %v2922 = vpack.c.b16 %v2906, %v2906
        %v2923 = vpack.c.b16 %v2907, %v2907
        %v2924 = vpack.c.b16 %v2908, %v2908
        %v2925 = vpack.c.b16 %v2909, %v2909
        %v2926 = vpack.c.b16 %v2910, %v2910
        %v2927 = vpack.c.b16 %v2911, %v2911
        %v2928 = vpack.c.b16 %v2912, %v2912
        %v2929 = vpack.c.b16 %v2913, %v2913
        %v2930 = vpack.c.b16 %v2914, %v2914
        %v2931 = vpack.c.b16 %v2915, %v2915
        %v2932 = vpack.c.b16 %v2916, %v2916
        %v2933 = vpack.c.b16 %v2917, %v2917
        %v2935 = vshrl.u32 %v2870, 16
        %v2937 = vshll.u32 %v2870, 16
        %v2939 = vrot.slane %v2937, 1
        %v2940 = vor.u32 %v2935, %v2939
        %v2942 = vshll.u32 %v2918, 16
        %v2944 = vrot.slane %v2942, 1
        %v2945 = vsel %vm1304, %v2940, %v2944
        %v2947 = vshrl.u32 %v2871, 16
        %v2949 = vshll.u32 %v2871, 16
        %v2951 = vrot.slane %v2949, 1
        %v2952 = vor.u32 %v2947, %v2951
        %v2954 = vshll.u32 %v2919, 16
        %v2956 = vrot.slane %v2954, 1
        %v2957 = vsel %vm1304, %v2952, %v2956
        %v2959 = vshrl.u32 %v2872, 16
        %v2961 = vshll.u32 %v2872, 16
        %v2963 = vrot.slane %v2961, 1
        %v2964 = vor.u32 %v2959, %v2963
        %v2966 = vshll.u32 %v2920, 16
        %v2968 = vrot.slane %v2966, 1
        %v2969 = vsel %vm1304, %v2964, %v2968
        %v2971 = vshrl.u32 %v2873, 16
        %v2973 = vshll.u32 %v2873, 16
        %v2975 = vrot.slane %v2973, 1
        %v2976 = vor.u32 %v2971, %v2975
        %v2978 = vshll.u32 %v2921, 16
        %v2980 = vrot.slane %v2978, 1
        %v2981 = vsel %vm1304, %v2976, %v2980
        %v2983 = vshrl.u32 %v2874, 16
        %v2985 = vshll.u32 %v2874, 16
        %v2987 = vrot.slane %v2985, 1
        %v2988 = vor.u32 %v2983, %v2987
        %v2990 = vshll.u32 %v2922, 16
        %v2992 = vrot.slane %v2990, 1
        %v2993 = vsel %vm1304, %v2988, %v2992
        %v2995 = vshrl.u32 %v2875, 16
        %v2997 = vshll.u32 %v2875, 16
        %v2999 = vrot.slane %v2997, 1
        %v3000 = vor.u32 %v2995, %v2999
        %v3002 = vshll.u32 %v2923, 16
        %v3004 = vrot.slane %v3002, 1
        %v3005 = vsel %vm1304, %v3000, %v3004
        %v3007 = vshrl.u32 %v2876, 16
        %v3009 = vshll.u32 %v2876, 16
        %v3011 = vrot.slane %v3009, 1
        %v3012 = vor.u32 %v3007, %v3011
        %v3014 = vshll.u32 %v2924, 16
        %v3016 = vrot.slane %v3014, 1
        %v3017 = vsel %vm1304, %v3012, %v3016
        %v3019 = vshrl.u32 %v2877, 16
        %v3021 = vshll.u32 %v2877, 16
        %v3023 = vrot.slane %v3021, 1
        %v3024 = vor.u32 %v3019, %v3023
        %v3026 = vshll.u32 %v2925, 16
        %v3028 = vrot.slane %v3026, 1
        %v3029 = vsel %vm1304, %v3024, %v3028
        %v3031 = vshrl.u32 %v2878, 16
        %v3033 = vshll.u32 %v2878, 16
        %v3035 = vrot.slane %v3033, 1
        %v3036 = vor.u32 %v3031, %v3035
        %v3038 = vshll.u32 %v2926, 16
        %v3040 = vrot.slane %v3038, 1
        %v3041 = vsel %vm1304, %v3036, %v3040
        %v3043 = vshrl.u32 %v2879, 16
        %v3045 = vshll.u32 %v2879, 16
        %v3047 = vrot.slane %v3045, 1
        %v3048 = vor.u32 %v3043, %v3047
        %v3050 = vshll.u32 %v2927, 16
        %v3052 = vrot.slane %v3050, 1
        %v3053 = vsel %vm1304, %v3048, %v3052
        %v3055 = vshrl.u32 %v2880, 16
        %v3057 = vshll.u32 %v2880, 16
        %v3059 = vrot.slane %v3057, 1
        %v3060 = vor.u32 %v3055, %v3059
        %v3062 = vshll.u32 %v2928, 16
        %v3064 = vrot.slane %v3062, 1
        %v3065 = vsel %vm1304, %v3060, %v3064
        %v3067 = vshrl.u32 %v2881, 16
        %v3069 = vshll.u32 %v2881, 16
        %v3071 = vrot.slane %v3069, 1
        %v3072 = vor.u32 %v3067, %v3071
        %v3074 = vshll.u32 %v2929, 16
        %v3076 = vrot.slane %v3074, 1
        %v3077 = vsel %vm1304, %v3072, %v3076
        %v3079 = vshrl.u32 %v2882, 16
        %v3081 = vshll.u32 %v2882, 16
        %v3083 = vrot.slane %v3081, 1
        %v3084 = vor.u32 %v3079, %v3083
        %v3086 = vshll.u32 %v2930, 16
        %v3088 = vrot.slane %v3086, 1
        %v3089 = vsel %vm1304, %v3084, %v3088
        %v3091 = vshrl.u32 %v2883, 16
        %v3093 = vshll.u32 %v2883, 16
        %v3095 = vrot.slane %v3093, 1
        %v3096 = vor.u32 %v3091, %v3095
        %v3098 = vshll.u32 %v2931, 16
        %v3100 = vrot.slane %v3098, 1
        %v3101 = vsel %vm1304, %v3096, %v3100
        %v3103 = vshrl.u32 %v2884, 16
        %v3105 = vshll.u32 %v2884, 16
        %v3107 = vrot.slane %v3105, 1
        %v3108 = vor.u32 %v3103, %v3107
        %v3110 = vshll.u32 %v2932, 16
        %v3112 = vrot.slane %v3110, 1
        %v3113 = vsel %vm1304, %v3108, %v3112
        %v3115 = vshrl.u32 %v2885, 16
        %v3117 = vshll.u32 %v2885, 16
        %v3119 = vrot.slane %v3117, 1
        %v3120 = vor.u32 %v3115, %v3119
        %v3122 = vshll.u32 %v2933, 16
        %v3124 = vrot.slane %v3122, 1
        %v3125 = vsel %vm1304, %v3120, %v3124
        %3126 = vrot.lane.b32.xlu0 %v2945, 4
        %v3127 = vpop.permute.xlu0 %3126
        %3128 = vrot.lane.b32.xlu0 %v2957, 4
        %v3129 = vpop.permute.xlu0 %3128
        %3130 = vrot.lane.b32.xlu0 %v2969, 4
        %v3131 = vpop.permute.xlu0 %3130
        %3132 = vrot.lane.b32.xlu0 %v2981, 4
        %v3133 = vpop.permute.xlu0 %3132
        %3134 = vrot.lane.b32.xlu0 %v2993, 4
        %v3135 = vpop.permute.xlu0 %3134
        %3136 = vrot.lane.b32.xlu0 %v3005, 4
        %v3137 = vpop.permute.xlu0 %3136
        %3138 = vrot.lane.b32.xlu0 %v3017, 4
        %v3139 = vpop.permute.xlu0 %3138
        %3140 = vrot.lane.b32.xlu0 %v3029, 4
        %v3141 = vpop.permute.xlu0 %3140
        %3142 = vrot.lane.b32.xlu0 %v3041, 4
        %v3143 = vpop.permute.xlu0 %3142
        %3144 = vrot.lane.b32.xlu0 %v3053, 4
        %v3145 = vpop.permute.xlu0 %3144
        %3146 = vrot.lane.b32.xlu0 %v3065, 4
        %v3147 = vpop.permute.xlu0 %3146
        %3148 = vrot.lane.b32.xlu0 %v3077, 4
        %v3149 = vpop.permute.xlu0 %3148
        %3150 = vrot.lane.b32.xlu0 %v3089, 4
        %v3151 = vpop.permute.xlu0 %3150
        %3152 = vrot.lane.b32.xlu0 %v3101, 4
        %v3153 = vpop.permute.xlu0 %3152
        %3154 = vrot.lane.b32.xlu0 %v3113, 4
        %v3155 = vpop.permute.xlu0 %3154
        %3156 = vrot.lane.b32.xlu0 %v3125, 4
        %v3157 = vpop.permute.xlu0 %3156
        %v3174 = vunpack.c.l.b16 %v2790
        %v3175 = vunpack.c.l.b16 %v2791
        %v3176 = vunpack.c.l.b16 %v2792
        %v3177 = vunpack.c.l.b16 %v2793
        %v3178 = vunpack.c.l.b16 %v2794
        %v3179 = vunpack.c.l.b16 %v2795
        %v3180 = vunpack.c.l.b16 %v2796
        %v3181 = vunpack.c.l.b16 %v2797
        %v3182 = vunpack.c.l.b16 %v2798
        %v3183 = vunpack.c.l.b16 %v2799
        %v3184 = vunpack.c.l.b16 %v2800
        %v3185 = vunpack.c.l.b16 %v2801
        %v3186 = vunpack.c.l.b16 %v2802
        %v3187 = vunpack.c.l.b16 %v2803
        %v3188 = vunpack.c.l.b16 %v2804
        %v3189 = vunpack.c.l.b16 %v2805
        %v3190 = vpack.c.b16 %v2839, %v3174
        %v3191 = vpack.c.b16 %v2841, %v3175
        %v3192 = vpack.c.b16 %v2843, %v3176
        %v3193 = vpack.c.b16 %v2845, %v3177
        %v3194 = vpack.c.b16 %v2847, %v3178
        %v3195 = vpack.c.b16 %v2849, %v3179
        %v3196 = vpack.c.b16 %v2851, %v3180
        %v3197 = vpack.c.b16 %v2853, %v3181
        %v3198 = vpack.c.b16 %v2855, %v3182
        %v3199 = vpack.c.b16 %v2857, %v3183
        %v3200 = vpack.c.b16 %v2859, %v3184
        %v3201 = vpack.c.b16 %v2861, %v3185
        %v3202 = vpack.c.b16 %v2863, %v3186
        %v3203 = vpack.c.b16 %v2865, %v3187
        %v3204 = vpack.c.b16 %v2867, %v3188
        %v3205 = vpack.c.b16 %v2869, %v3189
        %v3206 = vrot.slane %v3190, 1
        %v3207 = vrot.slane %v2918, 1
        %v3208 = vsel %vm1577, %v3206, %v3207
        %v3209 = vrot.slane %v3191, 1
        %v3210 = vrot.slane %v2919, 1
        %v3211 = vsel %vm1577, %v3209, %v3210
        %v3212 = vrot.slane %v3192, 1
        %v3213 = vrot.slane %v2920, 1
        %v3214 = vsel %vm1577, %v3212, %v3213
        %v3215 = vrot.slane %v3193, 1
        %v3216 = vrot.slane %v2921, 1
        %v3217 = vsel %vm1577, %v3215, %v3216
        %v3218 = vrot.slane %v3194, 1
        %v3219 = vrot.slane %v2922, 1
        %v3220 = vsel %vm1577, %v3218, %v3219
        %v3221 = vrot.slane %v3195, 1
        %v3222 = vrot.slane %v2923, 1
        %v3223 = vsel %vm1577, %v3221, %v3222
        %v3224 = vrot.slane %v3196, 1
        %v3225 = vrot.slane %v2924, 1
        %v3226 = vsel %vm1577, %v3224, %v3225
        %v3227 = vrot.slane %v3197, 1
        %v3228 = vrot.slane %v2925, 1
        %v3229 = vsel %vm1577, %v3227, %v3228
        %v3230 = vrot.slane %v3198, 1
        %v3231 = vrot.slane %v2926, 1
        %v3232 = vsel %vm1577, %v3230, %v3231
        %v3233 = vrot.slane %v3199, 1
        %v3234 = vrot.slane %v2927, 1
        %v3235 = vsel %vm1577, %v3233, %v3234
        %v3236 = vrot.slane %v3200, 1
        %v3237 = vrot.slane %v2928, 1
        %v3238 = vsel %vm1577, %v3236, %v3237
        %v3239 = vrot.slane %v3201, 1
        %v3240 = vrot.slane %v2929, 1
        %v3241 = vsel %vm1577, %v3239, %v3240
        %v3242 = vrot.slane %v3202, 1
        %v3243 = vrot.slane %v2930, 1
        %v3244 = vsel %vm1577, %v3242, %v3243
        %v3245 = vrot.slane %v3203, 1
        %v3246 = vrot.slane %v2931, 1
        %v3247 = vsel %vm1577, %v3245, %v3246
        %v3248 = vrot.slane %v3204, 1
        %v3249 = vrot.slane %v2932, 1
        %v3250 = vsel %vm1577, %v3248, %v3249
        %v3251 = vrot.slane %v3205, 1
        %v3252 = vrot.slane %v2933, 1
        %v3253 = vsel %vm1577, %v3251, %v3252
        %3254 = vrot.lane.b32.xlu0 %v3208, 8
        %v3255 = vpop.permute.xlu0 %3254
        %3256 = vrot.lane.b32.xlu0 %v3211, 8
        %v3257 = vpop.permute.xlu0 %3256
        %3258 = vrot.lane.b32.xlu0 %v3214, 8
        %v3259 = vpop.permute.xlu0 %3258
        %3260 = vrot.lane.b32.xlu0 %v3217, 8
        %v3261 = vpop.permute.xlu0 %3260
        %3262 = vrot.lane.b32.xlu0 %v3220, 8
        %v3263 = vpop.permute.xlu0 %3262
        %3264 = vrot.lane.b32.xlu0 %v3223, 8
        %v3265 = vpop.permute.xlu0 %3264
        %3266 = vrot.lane.b32.xlu0 %v3226, 8
        %v3267 = vpop.permute.xlu0 %3266
        %3268 = vrot.lane.b32.xlu0 %v3229, 8
        %v3269 = vpop.permute.xlu0 %3268
        %3270 = vrot.lane.b32.xlu0 %v3232, 8
        %v3271 = vpop.permute.xlu0 %3270
        %3272 = vrot.lane.b32.xlu0 %v3235, 8
        %v3273 = vpop.permute.xlu0 %3272
        %3274 = vrot.lane.b32.xlu0 %v3238, 8
        %v3275 = vpop.permute.xlu0 %3274
        %3276 = vrot.lane.b32.xlu0 %v3241, 8
        %v3277 = vpop.permute.xlu0 %3276
        %3278 = vrot.lane.b32.xlu0 %v3244, 8
        %v3279 = vpop.permute.xlu0 %3278
        %3280 = vrot.lane.b32.xlu0 %v3247, 8
        %v3281 = vpop.permute.xlu0 %3280
        %3282 = vrot.lane.b32.xlu0 %v3250, 8
        %v3283 = vpop.permute.xlu0 %3282
        %3284 = vrot.lane.b32.xlu0 %v3253, 8
        %v3285 = vpop.permute.xlu0 %3284
        %v3287 = vsel %vm1658, %v2870, %v3127
        %v3289 = vsel %vm1658, %v2871, %v3129
        %v3291 = vsel %vm1658, %v2872, %v3131
        %v3293 = vsel %vm1658, %v2873, %v3133
        %v3295 = vsel %vm1658, %v2874, %v3135
        %v3297 = vsel %vm1658, %v2875, %v3137
        %v3299 = vsel %vm1658, %v2876, %v3139
        %v3301 = vsel %vm1658, %v2877, %v3141
        %v3303 = vsel %vm1658, %v2878, %v3143
        %v3305 = vsel %vm1658, %v2879, %v3145
        %v3307 = vsel %vm1658, %v2880, %v3147
        %v3309 = vsel %vm1658, %v2881, %v3149
        %v3311 = vsel %vm1658, %v2882, %v3151
        %v3313 = vsel %vm1658, %v2883, %v3153
        %v3315 = vsel %vm1658, %v2884, %v3155
        %v3317 = vsel %vm1658, %v2885, %v3157
        %v3319 = vsel %vm1691, %v3287, %v3255
        %v3321 = vsel %vm1691, %v3289, %v3257
        %v3323 = vsel %vm1691, %v3291, %v3259
        %v3325 = vsel %vm1691, %v3293, %v3261
        %v3327 = vsel %vm1691, %v3295, %v3263
        %v3329 = vsel %vm1691, %v3297, %v3265
        %v3331 = vsel %vm1691, %v3299, %v3267
        %v3333 = vsel %vm1691, %v3301, %v3269
        %v3335 = vsel %vm1691, %v3303, %v3271
        %v3337 = vsel %vm1691, %v3305, %v3273
        %v3339 = vsel %vm1691, %v3307, %v3275
        %v3341 = vsel %vm1691, %v3309, %v3277
        %v3343 = vsel %vm1691, %v3311, %v3279
        %v3345 = vsel %vm1691, %v3313, %v3281
        %v3347 = vsel %vm1691, %v3315, %v3283
        %v3349 = vsel %vm1691, %v3317, %v3285
        %s3350 = scalar_lea.vmem [#allocation9], 16
        %v3351 = vld [vmem:[%s3350] sm:$0xf]
        %v3352 = vld [vmem:[%s3350 + $0x4] sm:$0x3]
        %v3355 = vunpack.c.l.b16 %v3351
        %v3356 = vunpack.c.l.b16 %v3352
        %v3357 = vpack.c.b16 %v3356, %v3355
        %v3358 = vsel %vm2342, %v3319, 0
        %v3360 = vsel %vm2342, %v3321, 0
        %v3362 = vsel %vm2342, %v3323, 0
        %v3364 = vsel %vm2342, %v3325, 0
        %v3366 = vsel %vm2342, %v3327, 0
        %v3368 = vsel %vm2342, %v3329, 0
        %v3370 = vsel %vm2342, %v3331, 0
        %v3372 = vsel %vm2342, %v3333, 0
        %v3374 = vsel %vm2342, %v3335, 0
        %v3376 = vsel %vm2342, %v3337, 0
        %v3378 = vsel %vm2342, %v3339, 0
        %v3380 = vsel %vm2342, %v3341, 0
        %v3382 = vsel %vm2342, %v3343, 0
        %v3384 = vsel %vm2342, %v3345, 0
        %v3386 = vsel %vm2342, %v3347, 0
        %v3388 = vsel %vm2342, %v3349, 0
        %v3391 = vsel %vm2375, %v3357, 0
        %3393 = vmatprep.subr.bf16.mxu0 0
        %3394 = vmatpush1.bf16.msra.mxu0 %v3391
        %3395 = vmatprep.subr.bf16.mxu0 0
        %3396 = vmatpush1.bf16.msra.mxu0 0
        %3397 = vmatprep.subr.bf16.mxu0 0
        %3398 = vmatpush1.bf16.msra.mxu0 0
        %3399 = vmatprep.subr.bf16.mxu0 0
        %3400 = vmatpush1.bf16.msra.mxu0 0
        %3401 = vmatprep.subr.bf16.mxu0 0
        %3402 = vmatpush1.bf16.msra.mxu0 0
        %3403 = vmatprep.subr.bf16.mxu0 0
        %3404 = vmatpush1.bf16.msra.mxu0 0
        %3405 = vmatprep.subr.bf16.mxu0 0
        %3406 = vmatpush1.bf16.msra.mxu0 0
        %3407 = vmatprep.subr.bf16.mxu0 0
        %3408 = vmatpush1.bf16.msra.mxu0 0
        %3409 = vmatprep.subr.bf16.mxu0 0
        %3410 = vmatpush1.bf16.msra.mxu0 0
        %3411 = vmatprep.subr.bf16.mxu0 0
        %3412 = vmatpush1.bf16.msra.mxu0 0
        %3413 = vmatprep.subr.bf16.mxu0 0
        %3414 = vmatpush1.bf16.msra.mxu0 0
        %3415 = vmatprep.subr.bf16.mxu0 0
        %3416 = vmatpush1.bf16.msra.mxu0 0
        %3417 = vmatprep.subr.bf16.mxu0 0
        %3418 = vmatpush1.bf16.msra.mxu0 0
        %3419 = vmatprep.subr.bf16.mxu0 0
        %3420 = vmatpush1.bf16.msra.mxu0 0
        %3421 = vmatprep.subr.bf16.mxu0 0
        %3422 = vmatpush1.bf16.msra.mxu0 0
        %3423 = vmatprep.subr.bf16.mxu0 0
        %3424 = vmatpush1.bf16.msra.mxu0 0
        %3425 = vmatprep.mubr.bf16.mxu0 0
        %3426 = vmatmul.mubr.bf16.gmra.mrb[0].mxu0 %v3358
        %v3427 = vpop.f32.mrb[0].mxu0
        %v3428 = vadd.f32 0.0, %v3427
        %v3429 = vpop.f32.mrb[0].mxu0
        %v3430 = vpop.f32.mrb[0].mxu0
        %v3431 = vadd.f32 0.0, %v3430
        %v3432 = vpop.f32.mrb[0].mxu0
        %3433 = vmatprep.mubr.bf16.mxu0 0
        %3434 = vmatmul.mubr.bf16.gmra.mrb[0].mxu0 %v3360
        %v3435 = vpop.f32.mrb[0].mxu0
        %v3436 = vadd.f32 0.0, %v3435
        %v3437 = vpop.f32.mrb[0].mxu0
        %v3438 = vpop.f32.mrb[0].mxu0
        %v3439 = vadd.f32 0.0, %v3438
        %v3440 = vpop.f32.mrb[0].mxu0
        %3441 = vmatprep.mubr.bf16.mxu0 0
        %3442 = vmatmul.mubr.bf16.gmra.mrb[0].mxu0 %v3362
        %v3443 = vpop.f32.mrb[0].mxu0
        %v3444 = vadd.f32 0.0, %v3443
        %v3445 = vpop.f32.mrb[0].mxu0
        %v3446 = vpop.f32.mrb[0].mxu0
        %v3447 = vadd.f32 0.0, %v3446
        %v3448 = vpop.f32.mrb[0].mxu0
        %3449 = vmatprep.mubr.bf16.mxu0 0
        %3450 = vmatmul.mubr.bf16.gmra.mrb[0].mxu0 %v3364
        %v3451 = vpop.f32.mrb[0].mxu0
        %v3452 = vadd.f32 0.0, %v3451
        %v3453 = vpop.f32.mrb[0].mxu0
        %v3454 = vpop.f32.mrb[0].mxu0
        %v3455 = vadd.f32 0.0, %v3454
        %v3456 = vpop.f32.mrb[0].mxu0
        %3457 = vmatprep.mubr.bf16.mxu0 0
        %3458 = vmatmul.mubr.bf16.gmra.mrb[0].mxu0 %v3366
        %v3459 = vpop.f32.mrb[0].mxu0
        %v3460 = vadd.f32 0.0, %v3459
        %v3461 = vpop.f32.mrb[0].mxu0
        %v3462 = vpop.f32.mrb[0].mxu0
        %v3463 = vadd.f32 0.0, %v3462
        %v3464 = vpop.f32.mrb[0].mxu0
        %3465 = vmatprep.mubr.bf16.mxu0 0
        %3466 = vmatmul.mubr.bf16.gmra.mrb[0].mxu0 %v3368
        %v3467 = vpop.f32.mrb[0].mxu0
        %v3468 = vadd.f32 0.0, %v3467
        %v3469 = vpop.f32.mrb[0].mxu0
        %v3470 = vpop.f32.mrb[0].mxu0
        %v3471 = vadd.f32 0.0, %v3470
        %v3472 = vpop.f32.mrb[0].mxu0
        %3473 = vmatprep.mubr.bf16.mxu0 0
        %3474 = vmatmul.mubr.bf16.gmra.mrb[0].mxu0 %v3370
        %v3475 = vpop.f32.mrb[0].mxu0
        %v3476 = vadd.f32 0.0, %v3475
        %v3477 = vpop.f32.mrb[0].mxu0
        %v3478 = vpop.f32.mrb[0].mxu0
        %v3479 = vadd.f32 0.0, %v3478
        %v3480 = vpop.f32.mrb[0].mxu0
        %3481 = vmatprep.mubr.bf16.mxu0 0
        %3482 = vmatmul.mubr.bf16.gmra.mrb[0].mxu0 %v3372
        %v3483 = vpop.f32.mrb[0].mxu0
        %v3484 = vadd.f32 0.0, %v3483
        %v3485 = vpop.f32.mrb[0].mxu0
        %v3486 = vpop.f32.mrb[0].mxu0
        %v3487 = vadd.f32 0.0, %v3486
        %v3488 = vpop.f32.mrb[0].mxu0
        %3489 = vmatprep.mubr.bf16.mxu0 0
        %3490 = vmatmul.mubr.bf16.gmra.mrb[0].mxu0 %v3374
        %v3491 = vpop.f32.mrb[0].mxu0
        %v3492 = vadd.f32 0.0, %v3491
        %v3493 = vpop.f32.mrb[0].mxu0
        %v3494 = vpop.f32.mrb[0].mxu0
        %v3495 = vadd.f32 0.0, %v3494
        %v3496 = vpop.f32.mrb[0].mxu0
        %3497 = vmatprep.mubr.bf16.mxu0 0
        %3498 = vmatmul.mubr.bf16.gmra.mrb[0].mxu0 %v3376
        %v3499 = vpop.f32.mrb[0].mxu0
        %v3500 = vadd.f32 0.0, %v3499
        %v3501 = vpop.f32.mrb[0].mxu0
        %v3502 = vpop.f32.mrb[0].mxu0
        %v3503 = vadd.f32 0.0, %v3502
        %v3504 = vpop.f32.mrb[0].mxu0
        %3505 = vmatprep.mubr.bf16.mxu0 0
        %3506 = vmatmul.mubr.bf16.gmra.mrb[0].mxu0 %v3378
        %v3507 = vpop.f32.mrb[0].mxu0
        %v3508 = vadd.f32 0.0, %v3507
        %v3509 = vpop.f32.mrb[0].mxu0
        %v3510 = vpop.f32.mrb[0].mxu0
        %v3511 = vadd.f32 0.0, %v3510
        %v3512 = vpop.f32.mrb[0].mxu0
        %3513 = vmatprep.mubr.bf16.mxu0 0
        %3514 = vmatmul.mubr.bf16.gmra.mrb[0].mxu0 %v3380
        %v3515 = vpop.f32.mrb[0].mxu0
        %v3516 = vadd.f32 0.0, %v3515
        %v3517 = vpop.f32.mrb[0].mxu0
        %v3518 = vpop.f32.mrb[0].mxu0
        %v3519 = vadd.f32 0.0, %v3518
        %v3520 = vpop.f32.mrb[0].mxu0
        %3521 = vmatprep.mubr.bf16.mxu0 0
        %3522 = vmatmul.mubr.bf16.gmra.mrb[0].mxu0 %v3382
        %v3523 = vpop.f32.mrb[0].mxu0
        %v3524 = vadd.f32 0.0, %v3523
        %v3525 = vpop.f32.mrb[0].mxu0
        %v3526 = vpop.f32.mrb[0].mxu0
        %v3527 = vadd.f32 0.0, %v3526
        %v3528 = vpop.f32.mrb[0].mxu0
        %3529 = vmatprep.mubr.bf16.mxu0 0
        %3530 = vmatmul.mubr.bf16.gmra.mrb[0].mxu0 %v3384
        %v3531 = vpop.f32.mrb[0].mxu0
        %v3532 = vadd.f32 0.0, %v3531
        %v3533 = vpop.f32.mrb[0].mxu0
        %v3534 = vpop.f32.mrb[0].mxu0
        %v3535 = vadd.f32 0.0, %v3534
        %v3536 = vpop.f32.mrb[0].mxu0
        %3537 = vmatprep.mubr.bf16.mxu0 0
        %3538 = vmatmul.mubr.bf16.gmra.mrb[0].mxu0 %v3386
        %v3539 = vpop.f32.mrb[0].mxu0
        %v3540 = vadd.f32 0.0, %v3539
        %v3541 = vpop.f32.mrb[0].mxu0
        %v3542 = vpop.f32.mrb[0].mxu0
        %v3543 = vadd.f32 0.0, %v3542
        %v3544 = vpop.f32.mrb[0].mxu0
        %3545 = vmatprep.mubr.bf16.mxu0 0
        %3546 = vmatmul.mubr.bf16.gmra.mrb[0].mxu0 %v3388
        %v3547 = vpop.f32.mrb[0].mxu0
        %v3548 = vadd.f32 0.0, %v3547
        %v3549 = vpop.f32.mrb[0].mxu0
        %v3550 = vpop.f32.mrb[0].mxu0
        %v3551 = vadd.f32 0.0, %v3550
        %v3552 = vpop.f32.mrb[0].mxu0
        %3553 = vdwg.mxu0
        %v3554 = vadd.f32 %v2615, %v3428
        %v3555 = vadd.f32 %v2618, %v3431
        %v3556 = vadd.f32 %v2623, %v3436
        %v3557 = vadd.f32 %v2626, %v3439
        %v3558 = vadd.f32 %v2631, %v3444
        %v3559 = vadd.f32 %v2634, %v3447
        %v3560 = vadd.f32 %v2639, %v3452
        %v3561 = vadd.f32 %v2642, %v3455
        %v3562 = vadd.f32 %v2647, %v3460
        %v3563 = vadd.f32 %v2650, %v3463
        %v3564 = vadd.f32 %v2655, %v3468
        %v3565 = vadd.f32 %v2658, %v3471
        %v3566 = vadd.f32 %v2663, %v3476
        %v3567 = vadd.f32 %v2666, %v3479
        %v3568 = vadd.f32 %v2671, %v3484
        %v3569 = vadd.f32 %v2674, %v3487
        %v3570 = vadd.f32 %v2679, %v3492
        %v3571 = vadd.f32 %v2682, %v3495
        %v3572 = vadd.f32 %v2687, %v3500
        %v3573 = vadd.f32 %v2690, %v3503
        %v3574 = vadd.f32 %v2695, %v3508
        %v3575 = vadd.f32 %v2698, %v3511
        %v3576 = vadd.f32 %v2703, %v3516
        %v3577 = vadd.f32 %v2706, %v3519
        %v3578 = vadd.f32 %v2711, %v3524
        %v3579 = vadd.f32 %v2714, %v3527
        %v3580 = vadd.f32 %v2719, %v3532
        %v3581 = vadd.f32 %v2722, %v3535
        %v3582 = vadd.f32 %v2727, %v3540
        %v3583 = vadd.f32 %v2730, %v3543
        %v3584 = vadd.f32 %v2735, %v3548
        %v3585 = vadd.f32 %v2738, %v3551
        %v3586 = vsel %vm1658, %v3554, 0.0
        %v3587 = vsel %vm1658, %v3555, 0.0
        %v3588 = vadd.f32 %v3586, %v3587
        %v3589 = vsel %vm1658, %v3556, 0.0
        %v3590 = vadd.f32 %v3588, %v3589
        %v3591 = vsel %vm1658, %v3557, 0.0
        %v3592 = vadd.f32 %v3590, %v3591
        %v3593 = vsel %vm1658, %v3558, 0.0
        %v3594 = vadd.f32 %v3592, %v3593
        %v3595 = vsel %vm1658, %v3559, 0.0
        %v3596 = vadd.f32 %v3594, %v3595
        %v3597 = vsel %vm1658, %v3560, 0.0
        %v3598 = vadd.f32 %v3596, %v3597
        %v3599 = vsel %vm1658, %v3561, 0.0
        %v3600 = vadd.f32 %v3598, %v3599
        %v3601 = vsel %vm1658, %v3562, 0.0
        %v3602 = vadd.f32 %v3600, %v3601
        %v3603 = vsel %vm1658, %v3563, 0.0
        %v3604 = vadd.f32 %v3602, %v3603
        %v3605 = vsel %vm1658, %v3564, 0.0
        %v3606 = vadd.f32 %v3604, %v3605
        %v3607 = vsel %vm1658, %v3565, 0.0
        %v3608 = vadd.f32 %v3606, %v3607
        %v3609 = vsel %vm1658, %v3566, 0.0
        %v3610 = vadd.f32 %v3608, %v3609
        %v3611 = vsel %vm1658, %v3567, 0.0
        %v3612 = vadd.f32 %v3610, %v3611
        %v3613 = vsel %vm1658, %v3568, 0.0
        %v3614 = vadd.f32 %v3612, %v3613
        %v3615 = vsel %vm1658, %v3569, 0.0
        %v3616 = vadd.f32 %v3614, %v3615
        %v3617 = vsel %vm1658, %v3570, 0.0
        %v3618 = vadd.f32 %v3616, %v3617
        %v3619 = vsel %vm1658, %v3571, 0.0
        %v3620 = vadd.f32 %v3618, %v3619
        %v3621 = vsel %vm1658, %v3572, 0.0
        %v3622 = vadd.f32 %v3620, %v3621
        %v3623 = vsel %vm1658, %v3573, 0.0
        %v3624 = vadd.f32 %v3622, %v3623
        %v3625 = vsel %vm1658, %v3574, 0.0
        %v3626 = vadd.f32 %v3624, %v3625
        %v3627 = vsel %vm1658, %v3575, 0.0
        %v3628 = vadd.f32 %v3626, %v3627
        %v3629 = vsel %vm1658, %v3576, 0.0
        %v3630 = vadd.f32 %v3628, %v3629
        %v3631 = vsel %vm1658, %v3577, 0.0
        %v3632 = vadd.f32 %v3630, %v3631
        %v3633 = vsel %vm1658, %v3578, 0.0
        %v3634 = vadd.f32 %v3632, %v3633
        %v3635 = vsel %vm1658, %v3579, 0.0
        %v3636 = vadd.f32 %v3634, %v3635
        %v3637 = vsel %vm1658, %v3580, 0.0
        %v3638 = vadd.f32 %v3636, %v3637
        %v3639 = vsel %vm1658, %v3581, 0.0
        %v3640 = vadd.f32 %v3638, %v3639
        %v3641 = vsel %vm1658, %v3582, 0.0
        %v3642 = vadd.f32 %v3640, %v3641
        %v3643 = vsel %vm1658, %v3583, 0.0
        %v3644 = vadd.f32 %v3642, %v3643
        %v3645 = vsel %vm1658, %v3584, 0.0
        %v3646 = vadd.f32 %v3644, %v3645
        %v3647 = vsel %vm1658, %v3585, 0.0
        %v3648 = vadd.f32 %v3646, %v3647
        %v3649 = vrot.slane %v3648, 4
        %v3650 = vadd.f32 %v3648, %v3649
        %v3651 = vrot.slane %v3650, 2
        %v3652 = vadd.f32 %v3650, %v3651
        %v3653 = vrot.slane %v3652, 1
        %v3654 = vadd.f32 %v3652, %v3653
        %v3655 = vmul.f32 %v3654, 0.00390625
        %v3656 = vsub.f32 %v3554, %v3655
        %v3657 = vsub.f32 %v3555, %v3655
        %v3658 = vsub.f32 %v3556, %v3655
        %v3659 = vsub.f32 %v3557, %v3655
        %v3660 = vsub.f32 %v3558, %v3655
        %v3661 = vsub.f32 %v3559, %v3655
        %v3662 = vsub.f32 %v3560, %v3655
        %v3663 = vsub.f32 %v3561, %v3655
        %v3664 = vsub.f32 %v3562, %v3655
        %v3665 = vsub.f32 %v3563, %v3655
        %v3666 = vsub.f32 %v3564, %v3655
        %v3667 = vsub.f32 %v3565, %v3655
        %v3668 = vsub.f32 %v3566, %v3655
        %v3669 = vsub.f32 %v3567, %v3655
        %v3670 = vsub.f32 %v3568, %v3655
        %v3671 = vsub.f32 %v3569, %v3655
        %v3672 = vsub.f32 %v3570, %v3655
        %v3673 = vsub.f32 %v3571, %v3655
        %v3674 = vsub.f32 %v3572, %v3655
        %v3675 = vsub.f32 %v3573, %v3655
        %v3676 = vsub.f32 %v3574, %v3655
        %v3677 = vsub.f32 %v3575, %v3655
        %v3678 = vsub.f32 %v3576, %v3655
        %v3679 = vsub.f32 %v3577, %v3655
        %v3680 = vsub.f32 %v3578, %v3655
        %v3681 = vsub.f32 %v3579, %v3655
        %v3682 = vsub.f32 %v3580, %v3655
        %v3683 = vsub.f32 %v3581, %v3655
        %v3684 = vsub.f32 %v3582, %v3655
        %v3685 = vsub.f32 %v3583, %v3655
        %v3686 = vsub.f32 %v3584, %v3655
        %v3687 = vsub.f32 %v3585, %v3655
        %v3688 = vmul.f32 %v3656, %v3656
        %v3689 = vmul.f32 %v3657, %v3657
        %v3690 = vmul.f32 %v3658, %v3658
        %v3691 = vmul.f32 %v3659, %v3659
        %v3692 = vmul.f32 %v3660, %v3660
        %v3693 = vmul.f32 %v3661, %v3661
        %v3694 = vmul.f32 %v3662, %v3662
        %v3695 = vmul.f32 %v3663, %v3663
        %v3696 = vmul.f32 %v3664, %v3664
        %v3697 = vmul.f32 %v3665, %v3665
        %v3698 = vmul.f32 %v3666, %v3666
        %v3699 = vmul.f32 %v3667, %v3667
        %v3700 = vmul.f32 %v3668, %v3668
        %v3701 = vmul.f32 %v3669, %v3669
        %v3702 = vmul.f32 %v3670, %v3670
        %v3703 = vmul.f32 %v3671, %v3671
        %v3704 = vmul.f32 %v3672, %v3672
        %v3705 = vmul.f32 %v3673, %v3673
        %v3706 = vmul.f32 %v3674, %v3674
        %v3707 = vmul.f32 %v3675, %v3675
        %v3708 = vmul.f32 %v3676, %v3676
        %v3709 = vmul.f32 %v3677, %v3677
        %v3710 = vmul.f32 %v3678, %v3678
        %v3711 = vmul.f32 %v3679, %v3679
        %v3712 = vmul.f32 %v3680, %v3680
        %v3713 = vmul.f32 %v3681, %v3681
        %v3714 = vmul.f32 %v3682, %v3682
        %v3715 = vmul.f32 %v3683, %v3683
        %v3716 = vmul.f32 %v3684, %v3684
        %v3717 = vmul.f32 %v3685, %v3685
        %v3718 = vmul.f32 %v3686, %v3686
        %v3719 = vmul.f32 %v3687, %v3687
        %v3720 = vsel %vm1658, %v3688, 0.0
        %v3721 = vsel %vm1658, %v3689, 0.0
        %v3722 = vadd.f32 %v3720, %v3721
        %v3723 = vsel %vm1658, %v3690, 0.0
        %v3724 = vadd.f32 %v3722, %v3723
        %v3725 = vsel %vm1658, %v3691, 0.0
        %v3726 = vadd.f32 %v3724, %v3725
        %v3727 = vsel %vm1658, %v3692, 0.0
        %v3728 = vadd.f32 %v3726, %v3727
        %v3729 = vsel %vm1658, %v3693, 0.0
        %v3730 = vadd.f32 %v3728, %v3729
        %v3731 = vsel %vm1658, %v3694, 0.0
        %v3732 = vadd.f32 %v3730, %v3731
        %v3733 = vsel %vm1658, %v3695, 0.0
        %v3734 = vadd.f32 %v3732, %v3733
        %v3735 = vsel %vm1658, %v3696, 0.0
        %v3736 = vadd.f32 %v3734, %v3735
        %v3737 = vsel %vm1658, %v3697, 0.0
        %v3738 = vadd.f32 %v3736, %v3737
        %v3739 = vsel %vm1658, %v3698, 0.0
        %v3740 = vadd.f32 %v3738, %v3739
        %v3741 = vsel %vm1658, %v3699, 0.0
        %v3742 = vadd.f32 %v3740, %v3741
        %v3743 = vsel %vm1658, %v3700, 0.0
        %v3744 = vadd.f32 %v3742, %v3743
        %v3745 = vsel %vm1658, %v3701, 0.0
        %v3746 = vadd.f32 %v3744, %v3745
        %v3747 = vsel %vm1658, %v3702, 0.0
        %v3748 = vadd.f32 %v3746, %v3747
        %v3749 = vsel %vm1658, %v3703, 0.0
        %v3750 = vadd.f32 %v3748, %v3749
        %v3751 = vsel %vm1658, %v3704, 0.0
        %v3752 = vadd.f32 %v3750, %v3751
        %v3753 = vsel %vm1658, %v3705, 0.0
        %v3754 = vadd.f32 %v3752, %v3753
        %v3755 = vsel %vm1658, %v3706, 0.0
        %v3756 = vadd.f32 %v3754, %v3755
        %v3757 = vsel %vm1658, %v3707, 0.0
        %v3758 = vadd.f32 %v3756, %v3757
        %v3759 = vsel %vm1658, %v3708, 0.0
        %v3760 = vadd.f32 %v3758, %v3759
        %v3761 = vsel %vm1658, %v3709, 0.0
        %v3762 = vadd.f32 %v3760, %v3761
        %v3763 = vsel %vm1658, %v3710, 0.0
        %v3764 = vadd.f32 %v3762, %v3763
        %v3765 = vsel %vm1658, %v3711, 0.0
        %v3766 = vadd.f32 %v3764, %v3765
        %v3767 = vsel %vm1658, %v3712, 0.0
        %v3768 = vadd.f32 %v3766, %v3767
        %v3769 = vsel %vm1658, %v3713, 0.0
        %v3770 = vadd.f32 %v3768, %v3769
        %v3771 = vsel %vm1658, %v3714, 0.0
        %v3772 = vadd.f32 %v3770, %v3771
        %v3773 = vsel %vm1658, %v3715, 0.0
        %v3774 = vadd.f32 %v3772, %v3773
        %v3775 = vsel %vm1658, %v3716, 0.0
        %v3776 = vadd.f32 %v3774, %v3775
        %v3777 = vsel %vm1658, %v3717, 0.0
        %v3778 = vadd.f32 %v3776, %v3777
        %v3779 = vsel %vm1658, %v3718, 0.0
        %v3780 = vadd.f32 %v3778, %v3779
        %v3781 = vsel %vm1658, %v3719, 0.0
        %v3782 = vadd.f32 %v3780, %v3781
        %v3783 = vrot.slane %v3782, 4
        %v3784 = vadd.f32 %v3782, %v3783
        %v3785 = vrot.slane %v3784, 2
        %v3786 = vadd.f32 %v3784, %v3785
        %v3787 = vrot.slane %v3786, 1
        %v3788 = vadd.f32 %v3786, %v3787
        %vm3789 = vcmask 1040384
        %v3790 = vsel %vm3789, %v3654, %v3788
        %vm3791 = vcmask 25600
        %3792 = vst.msk [vmem:[%s293] sm:$0x3] %vm3791, %v3790
        %v3793 = vpack.c.bf16 %v3555, %v3554
        %v3794 = vpack.c.bf16 %v3557, %v3556
        %v3795 = vpack.c.bf16 %v3559, %v3558
        %v3796 = vpack.c.bf16 %v3561, %v3560
        %v3797 = vpack.c.bf16 %v3563, %v3562
        %v3798 = vpack.c.bf16 %v3565, %v3564
        %v3799 = vpack.c.bf16 %v3567, %v3566
        %v3800 = vpack.c.bf16 %v3569, %v3568
        %v3801 = vpack.c.bf16 %v3571, %v3570
        %v3802 = vpack.c.bf16 %v3573, %v3572
        %v3803 = vpack.c.bf16 %v3575, %v3574
        %v3804 = vpack.c.bf16 %v3577, %v3576
        %v3805 = vpack.c.bf16 %v3579, %v3578
        %v3806 = vpack.c.bf16 %v3581, %v3580
        %v3807 = vpack.c.bf16 %v3583, %v3582
        %v3808 = vpack.c.bf16 %v3585, %v3584
        %v3825 = vunpack.c.l.b16 %v3793
        %v3826 = vunpack.c.h.b16 %v3793
        %v3827 = vunpack.c.l.b16 %v3794
        %v3828 = vunpack.c.h.b16 %v3794
        %v3829 = vunpack.c.l.b16 %v3795
        %v3830 = vunpack.c.h.b16 %v3795
        %v3831 = vunpack.c.l.b16 %v3796
        %v3832 = vunpack.c.h.b16 %v3796
        %v3833 = vunpack.c.l.b16 %v3797
        %v3834 = vunpack.c.h.b16 %v3797
        %v3835 = vunpack.c.l.b16 %v3798
        %v3836 = vunpack.c.h.b16 %v3798
        %v3837 = vunpack.c.l.b16 %v3799
        %v3838 = vunpack.c.h.b16 %v3799
        %v3839 = vunpack.c.l.b16 %v3800
        %v3840 = vunpack.c.h.b16 %v3800
        %v3841 = vunpack.c.l.b16 %v3801
        %v3842 = vunpack.c.h.b16 %v3801
        %v3843 = vunpack.c.l.b16 %v3802
        %v3844 = vunpack.c.h.b16 %v3802
        %v3845 = vunpack.c.l.b16 %v3803
        %v3846 = vunpack.c.h.b16 %v3803
        %v3847 = vunpack.c.l.b16 %v3804
        %v3848 = vunpack.c.h.b16 %v3804
        %v3849 = vunpack.c.l.b16 %v3805
        %v3850 = vunpack.c.h.b16 %v3805
        %v3851 = vunpack.c.l.b16 %v3806
        %v3852 = vunpack.c.h.b16 %v3806
        %v3853 = vunpack.c.l.b16 %v3807
        %v3854 = vunpack.c.h.b16 %v3807
        %v3855 = vunpack.c.l.b16 %v3808
        %v3856 = vunpack.c.h.b16 %v3808
        %v3857 = vpack.c.b16 %v3825, %v3825
        %v3858 = vpack.c.b16 %v3826, %v3826
        %v3859 = vpack.c.b16 %v3827, %v3827
        %v3860 = vpack.c.b16 %v3828, %v3828
        %v3861 = vpack.c.b16 %v3829, %v3829
        %v3862 = vpack.c.b16 %v3830, %v3830
        %v3863 = vpack.c.b16 %v3831, %v3831
        %v3864 = vpack.c.b16 %v3832, %v3832
        %v3865 = vpack.c.b16 %v3833, %v3833
        %v3866 = vpack.c.b16 %v3834, %v3834
        %v3867 = vpack.c.b16 %v3835, %v3835
        %v3868 = vpack.c.b16 %v3836, %v3836
        %v3869 = vpack.c.b16 %v3837, %v3837
        %v3870 = vpack.c.b16 %v3838, %v3838
        %v3871 = vpack.c.b16 %v3839, %v3839
        %v3872 = vpack.c.b16 %v3840, %v3840
        %v3873 = vpack.c.b16 %v3841, %v3841
        %v3874 = vpack.c.b16 %v3842, %v3842
        %v3875 = vpack.c.b16 %v3843, %v3843
        %v3876 = vpack.c.b16 %v3844, %v3844
        %v3877 = vpack.c.b16 %v3845, %v3845
        %v3878 = vpack.c.b16 %v3846, %v3846
        %v3879 = vpack.c.b16 %v3847, %v3847
        %v3880 = vpack.c.b16 %v3848, %v3848
        %v3881 = vpack.c.b16 %v3849, %v3849
        %v3882 = vpack.c.b16 %v3850, %v3850
        %v3883 = vpack.c.b16 %v3851, %v3851
        %v3884 = vpack.c.b16 %v3852, %v3852
        %v3885 = vpack.c.b16 %v3853, %v3853
        %v3886 = vpack.c.b16 %v3854, %v3854
        %v3887 = vpack.c.b16 %v3855, %v3855
        %v3888 = vpack.c.b16 %v3856, %v3856
        %3921 = vst.msk [vmem:[%s286] sm:$0xf] %vm469, %v3857
        %3922 = vst.msk [vmem:[%s286 + $0x4] sm:$0xf] %vm469, %v3858
        %3923 = vst.msk [vmem:[%s286 + $0x8] sm:$0xf] %vm469, %v3859
        %3924 = vst.msk [vmem:[%s286 + $0xc] sm:$0xf] %vm469, %v3860
        %3925 = vst.msk [vmem:[%s286 + $0x10] sm:$0xf] %vm469, %v3861
        %3926 = vst.msk [vmem:[%s286 + $0x14] sm:$0xf] %vm469, %v3862
        %3927 = vst.msk [vmem:[%s286 + $0x18] sm:$0xf] %vm469, %v3863
        %3928 = vst.msk [vmem:[%s286 + $0x1c] sm:$0xf] %vm469, %v3864
        %3929 = vst.msk [vmem:[%s286 + $0x20] sm:$0xf] %vm469, %v3865
        %3930 = vst.msk [vmem:[%s286 + $0x24] sm:$0xf] %vm469, %v3866
        %3931 = vst.msk [vmem:[%s286 + $0x28] sm:$0xf] %vm469, %v3867
        %3932 = vst.msk [vmem:[%s286 + $0x2c] sm:$0xf] %vm469, %v3868
        %3933 = vst.msk [vmem:[%s286 + $0x30] sm:$0xf] %vm469, %v3869
        %3934 = vst.msk [vmem:[%s286 + $0x34] sm:$0xf] %vm469, %v3870
        %3935 = vst.msk [vmem:[%s286 + $0x38] sm:$0xf] %vm469, %v3871
        %3936 = vst.msk [vmem:[%s286 + $0x3c] sm:$0xf] %vm469, %v3872
        %3937 = vst.msk [vmem:[%s286 + $0x40] sm:$0xf] %vm469, %v3873
        %3938 = vst.msk [vmem:[%s286 + $0x44] sm:$0xf] %vm469, %v3874
        %3939 = vst.msk [vmem:[%s286 + $0x48] sm:$0xf] %vm469, %v3875
        %3940 = vst.msk [vmem:[%s286 + $0x4c] sm:$0xf] %vm469, %v3876
        %3941 = vst.msk [vmem:[%s286 + $0x50] sm:$0xf] %vm469, %v3877
        %3942 = vst.msk [vmem:[%s286 + $0x54] sm:$0xf] %vm469, %v3878
        %3943 = vst.msk [vmem:[%s286 + $0x58] sm:$0xf] %vm469, %v3879
        %3944 = vst.msk [vmem:[%s286 + $0x5c] sm:$0xf] %vm469, %v3880
        %3945 = vst.msk [vmem:[%s286 + $0x60] sm:$0xf] %vm469, %v3881
        %3946 = vst.msk [vmem:[%s286 + $0x64] sm:$0xf] %vm469, %v3882
        %3947 = vst.msk [vmem:[%s286 + $0x68] sm:$0xf] %vm469, %v3883
        %3948 = vst.msk [vmem:[%s286 + $0x6c] sm:$0xf] %vm469, %v3884
        %3949 = vst.msk [vmem:[%s286 + $0x70] sm:$0xf] %vm469, %v3885
        %3950 = vst.msk [vmem:[%s286 + $0x74] sm:$0xf] %vm469, %v3886
        %3951 = vst.msk [vmem:[%s286 + $0x78] sm:$0xf] %vm469, %v3887
        %3952 = vst.msk [vmem:[%s286 + $0x7c] sm:$0xf] %vm469, %v3888
        %s3953 = sand.u32 %s125, 1
        %s3954 = scalar_lea.sflag [#allocation5], %s3953
        %s3955 = sand.u32 %s125, 1
        %s3956 = smul.addr %s3955, 128
        %s3957 = scalar_lea.vmem [#allocation11], %s3956
        %s3958 = sand.u32 %s151, 1
        %s3959 = scalar_lea.sflag [#allocation13], %s3958
        %s3960 = sand.u32 %s151, 1
        %s3961 = smul.addr %s3960, 2
        %s3962 = scalar_lea.vmem [#allocation12], %s3961
        // Predicated region
        $region53: #{block_forward.4} parent=35 // pred_check
          %p3963 = pneg %p135
        $region54: #{block_forward.4} parent=35 // pred_check_branch
          %3965 = sbr.rel (%p3963) target = $region56
        $region55: #{block_forward.4} parent=35 // pred_region
          %s3967 = ssub.s32 2048, 2048
          %3968 = vsyncadd %s3954, %s3967
          %s3969 = smul.addr %s28, 32
          %s3970 = smul.addr %s3969, 64
          %s3971 = scalar_lea.hbm %s4, %s3970
          %s3972 = sshll.u32 %s3957, 4
          %s3973 = int_to_ptr.vmem [resolvable:$true] %s3972
          %3978 = dma.vmem_to_hbm [thread:$0]  %s3973, 2048, %s3971, %s3954, 64, 64, 4
        $region56: #{block_forward.4} parent=35 // pred_fallthru
          _
        // Predicated region
        $region57: #{block_forward.4} parent=35 // pred_check
          %p3979 = pneg %p161
        $region58: #{block_forward.4} parent=35 // pred_check_branch
          %3981 = sbr.rel (%p3979) target = $region60
        $region59: #{block_forward.4} parent=35 // pred_region
          %s3983 = ssub.s32 32, 32
          %3984 = vsyncadd %s3959, %s3983
          %s3985 = smul.addr %s28, 32
          %s3986 = scalar_lea.hbm %s5, %s3985
          %s3988 = sshll.u32 %s3962, 4
          %s3989 = int_to_ptr.vmem [resolvable:$true] %s3988
          %3991 = dma.vmem_to_hbm [thread:$0]  %s3989, 32, %s3986, %s3959
        $region60: #{block_forward.4} parent=35 // pred_fallthru
          _
      $region36: #{block_forward.4} parent=5 // pred_fallthru
        _
      %p3992 = scmp.le.s32.totalorder 2, %s23
      // Predicated region
      $region61: #{block_forward.4} parent=5 // pred_check
        %p3993 = pneg %p3992
      $region62: #{block_forward.4} parent=5 // pred_check_branch
        %3995 = sbr.rel (%p3993) target = $region64
      $region63: #{block_forward.4} parent=5 // pred_region
        %s3996 = ssub.s32 %s23, 2
        // Predicated region
        $region65: #{block_forward.4} parent=63 // pred_check
          %p3997 = pneg %p141
        $region66: #{block_forward.4} parent=63 // pred_check_branch
          %3999 = sbr.rel (%p3997) target = $region68
        $region67: #{block_forward.4} parent=63 // pred_region
          %s4000 = sand.u32 %s126, 1
          %s4001 = scalar_lea.sflag [#allocation5], %s4000
          %s4002 = sand.u32 %s126, 1
          %s4003 = smul.addr %s4002, 128
          %s4004 = scalar_lea.vmem [#allocation11], %s4003
          %4005 = dma.done %s4001, 2048
        $region68: #{block_forward.4} parent=63 // pred_fallthru
          _
        // Predicated region
        $region69: #{block_forward.4} parent=63 // pred_check
          %p4006 = pneg %p167
        $region70: #{block_forward.4} parent=63 // pred_check_branch
          %4008 = sbr.rel (%p4006) target = $region72
        $region71: #{block_forward.4} parent=63 // pred_region
          %s4009 = sand.u32 %s152, 1
          %s4010 = scalar_lea.sflag [#allocation13], %s4009
          %s4011 = sand.u32 %s152, 1
          %s4012 = smul.addr %s4011, 2
          %s4013 = scalar_lea.vmem [#allocation12], %s4012
          %4014 = dma.done %s4010, 32
        $region72: #{block_forward.4} parent=63 // pred_fallthru
          _
      $region64: #{block_forward.4} parent=5 // pred_fallthru
        _
    $region6: #{block_forward.4} parent=1 // loop_footer
      %s27 = sadd.s32 1, %s23
    $region7: #{block_forward.4} parent=1 // loop_footer_branch
      %22 = sbr.rel target = $region3
    $region8: #{block_forward.4} parent=1 // loop_exit
      _
    %4015 = vsyncpa [#allocation4], 1
    %s4016 = scalar_lea.sflag [#allocation4], 1
    %4017 = vsyncpa %s4016, 1
    %4018 = vsyncpa [#allocation7], 1
    %4019 = vsyncpa [#allocation10], 1
    %4020 = vsyncpa [#allocation5], 1
    %s4021 = scalar_lea.sflag [#allocation5], 1
    %4022 = vsyncpa %s4021, 1
    %4023 = vsyncpa [#allocation13], 1
    %s4024 = scalar_lea.sflag [#allocation13], 1
    %4025 = vsyncpa %s4024, 1

</llo_original>
